<compile_context>
chip_gen: v5e
topology: v5e:2x2
jax: 0.10.0
libtpu: 0.0.40
codegen_flags: <defaults>
</compile_context>

<pallas_src>
import functools

import numpy as np

import jax
import jax.numpy as jnp
from jax import lax
from jax.experimental import pallas as pl
from jax.experimental.pallas import tpu as pltpu


# ---------------------------------------------------------------------------
# Fused Pallas kernel: res_block.forward1 for one (batch, D-slab) grid point.
# ---------------------------------------------------------------------------
def _res_block_kernel(x_ref, mask_ref, w1_ref, sh1_ref, alpha_ref,
                      wr_ref, shr_ref, w3_ref, sh2_ref, w2_ref, sho_ref,
                      out_ref, spad_ref,
                      *, hp_wp, wp, slab_vol, core_len, margin):
    f32 = jnp.float32
    x = x_ref[...]                       # (1, slab_vol)  spatial on lanes
    keep = mask_ref[...] > 0.0           # (1, slab_vol)  True on real voxels
    alpha = alpha_ref[...]               # (1, 1)         learnable PReLU weight

    prelu = lambda v: jnp.where(v >= 0, v, alpha * v)
    elu = lambda v: jnp.where(v > 0, v, jnp.exp(jnp.minimum(v, 0.0)) - 1.0)

    # ---- point1 (Cin=1, 1x1x1) as lane-dense broadcast FMA + BN + PReLU ----
    a = prelu(w1_ref[...] * x + sh1_ref[...])                 # (16, slab_vol)

    # ---- slicon inputs [x1, x1+x2, x2+x3]; zero at pad / global-halo voxels ----
    x1 = a[4:8, :]
    x2 = a[8:12, :]
    x3 = a[12:16, :]
    g1 = jnp.where(keep, x1, 0.0)
    g12 = jnp.where(keep, x1 + x2, 0.0)
    g23 = jnp.where(keep, x2 + x3, 0.0)

    # ---- write the three padded volumes back-to-back along lanes; the tiny
    #      zero margins only feed discarded (pad/halo) output positions ----
    L = 3 * slab_vol
    spad_ref[:, 0:margin] = jnp.zeros((4, margin), f32)
    spad_ref[:, margin + L:2 * margin + L] = jnp.zeros((4, margin), f32)
    spad_ref[:, margin:margin + slab_vol] = g1
    spad_ref[:, margin + slab_vol:margin + 2 * slab_vol] = g12
    spad_ref[:, margin + 2 * slab_vol:margin + 3 * slab_vol] = g23

    # ---- 3x3x3 slicon for all three groups at once: accumulate 27 shifted taps,
    #      each a (4,4) @ (4, 3*slab_vol) matmul (the large dim is lane-minor N).
    #      Boundary handling is free: pads/halos in the scratch are already zero. ----
    w3 = w3_ref[...]                                          # (4, 27*4)
    acc = jnp.zeros((4, L), f32)
    t = 0
    for kd in range(3):
        for kh in range(3):
            for kw in range(3):
                off = (kd - 1) * hp_wp + (kh - 1) * wp + (kw - 1)
                sl = spad_ref[:, margin + off:margin + off + L]
                acc = acc + jnp.dot(w3[:, 4 * t:4 * t + 4], sl,
                                    preferred_element_type=f32)
                t += 1
    y = prelu(acc + sh2_ref[...])                             # (4, 3*slab_vol)

    # ---- point2 (16->16, 1x1x1) on the core planes; concat never materialized ----
    w2 = w2_ref[...]                                          # (16_out, 16_in)
    c0 = hp_wp                                                # first core-plane pos
    o = jnp.dot(w2[:, 0:4], a[0:4, c0:c0 + core_len],
                preferred_element_type=f32)                   # (16, core_len)
    for g in range(3):
        yg = y[:, g * slab_vol + c0:g * slab_vol + c0 + core_len]
        o = o + jnp.dot(w2[:, 4 * (g + 1):4 * (g + 2)], yg,
                        preferred_element_type=f32)
    o = elu(o + sho_ref[...])        # bn1 shift + ELU; Dropout3d = identity (eval)

    # ---- residual path: conv5 (Cin=1, 1x1x1) + BN + ELU on the core planes ----
    res = elu(wr_ref[...] * x[:, c0:c0 + core_len] + shr_ref[...])   # (16, core_len)

    out_ref[...] = (res + o).astype(out_ref.dtype)


def _fused_forward1_call(x_slabs, mask, w1, sh1, alpha, wr, shr, w3, sh2, w2, sho,
                         *, n, n_slabs, hp, wp, slab_vol, core_len):
    hp_wp = hp * wp
    margin = ((hp_wp + wp + 1 + 127) // 128) * 128   # >= max |tap offset|, 128-aligned
    c_out = w2.shape[0]
    kern = functools.partial(_res_block_kernel, hp_wp=hp_wp, wp=wp,
                             slab_vol=slab_vol, core_len=core_len, margin=margin)
    const = lambda b, s: (0, 0)
    return pl.pallas_call(
        kern,
        out_shape=jax.ShapeDtypeStruct((n, n_slabs, c_out, core_len), jnp.float32),
        grid=(n, n_slabs),
        in_specs=[
            pl.BlockSpec((None, None, 1, slab_vol),
                         lambda b, s: (b, s, 0, 0)),        # x slab (+1-plane halo)
            pl.BlockSpec((None, 1, slab_vol),
                         lambda b, s: (s, 0, 0)),           # keep-mask (per slab)
            pl.BlockSpec(w1.shape, const),                  # point1 w * bn1 scale
            pl.BlockSpec(sh1.shape, const),                 # point1/bn1 shift
            pl.BlockSpec(alpha.shape, const),               # PReLU alpha
            pl.BlockSpec(wr.shape, const),                  # res conv5 w * bn scale
            pl.BlockSpec(shr.shape, const),                 # res shift
            pl.BlockSpec(w3.shape, const),                  # slicon w * bn2 scale
            pl.BlockSpec(sh2.shape, const),                 # slicon/bn2 shift
            pl.BlockSpec(w2.shape, const),                  # point2 w * bn1 scale
            pl.BlockSpec(sho.shape, const),                 # point2/bn1 shift
        ],
        out_specs=pl.BlockSpec((None, None, c_out, core_len),
                               lambda b, s: (b, s, 0, 0)),
        scratch_shapes=[pltpu.VMEM((4, 2 * margin + 3 * slab_vol), jnp.float32)],
        compiler_params=pltpu.CompilerParams(
            dimension_semantics=("parallel", "parallel"),   # dual-TC on v7x
            vmem_limit_bytes=32 * 1024 * 1024),
    )(x_slabs, mask, w1, sh1, alpha, wr, shr, w3, sh2, w2, sho)


# ---------------------------------------------------------------------------
# Wrapper glue: BN folding, halo-slab construction, compile-time keep masks.
# ---------------------------------------------------------------------------
def bn_fold(conv_bias, bn, eps=1e-5):
    """Fold conv bias + eval-mode BatchNorm into per-channel (scale, shift)."""
    gamma, beta, mean, var = bn
    s = gamma * lax.rsqrt(var + eps)
    return s, s * (conv_bias - mean) + beta


def _build_slab_masks(n_slabs, ts, d, h, w):
    """(n_slabs, 1, (ts+2)*(h+2)*(w+2)) f32: 1 on real voxels, 0 on h/w pads and on
    d-halo planes that fall outside the volume (compile-time numpy constant)."""
    hp, wp = h + 2, w + 2
    hw_ok = np.zeros((hp, wp), np.float32)
    hw_ok[1:h + 1, 1:w + 1] = 1.0
    masks = []
    for s in range(n_slabs):
        m = np.zeros((ts + 2, hp, wp), np.float32)
        for t in range(ts + 2):
            gd = s * ts + t                    # plane index in the d-padded volume
            if 1 <= gd <= d:
                m[t] = hw_ok
        masks.append(m.reshape(1, -1))
    return np.stack(masks, axis=0)


def _pick_d_tile(d, h, w, budget_bytes=24 << 20):
    """Largest divisor of D whose per-grid-step VMEM working set fits a v7x-safe
    budget (64 MiB physical / TC, double-buffered I/O blocks)."""
    hp, wp = h + 2, w + 2
    pick = 1
    for ts in range(1, d + 1):
        if d % ts:
            continue
        slab_vol = (ts + 2) * hp * wp
        core_len = ts * hp * wp
        est = 4 * (16 * slab_vol              # point1 activations
                   + 2 * 12 * slab_vol        # slicon scratch + tap accumulator
                   + 2 * 2 * slab_vol         # x + mask blocks (double-buffered)
                   + 2 * 16 * core_len        # output block (double-buffered)
                   + 4 * 256)                 # scratch margins
        if est <= budget_bytes:
            pick = ts
    return pick


def res_block_forward1(x_ncdhw, params, *, d_tile=None):
    """res_block(in_c=1, out_c=16, lei='forward1'), eval-mode forward."""
    n, cin, d, h, w = x_ncdhw.shape
    assert cin == 1, "this fused kernel implements the in_c=1 forward1 variant"
    if d_tile is None:
        d_tile = _pick_d_tile(d, h, w)
    assert d % d_tile == 0, "d_tile must divide D"
    n_slabs = d // d_tile
    hp, wp = h + 2, w + 2
    slab_vol = (d_tile + 2) * hp * wp
    core_len = d_tile * hp * wp

    # Zero-pad once (h/w pads + global d pads double as end-slab halos), then
    # materialize the overlapping (d_tile+2)-plane slabs so BlockSpec blocks are
    # disjoint.  This is cheap XLA-side layout plumbing.
    xp = jnp.pad(x_ncdhw.astype(jnp.float32),
                 ((0, 0), (0, 0), (1, 1), (1, 1), (1, 1)))
    slabs = [xp[:, :, s * d_tile:s * d_tile + d_tile + 2] for s in range(n_slabs)]
    x_slabs = jnp.stack(slabs, axis=1).reshape(n, n_slabs, 1, slab_vol)

    mask = jnp.asarray(_build_slab_masks(n_slabs, d_tile, d, h, w))

    cp, rp = params["conv1"], params["res1"]
    co = cp["point2_w"].shape[0]
    cg = cp["slicon_w"].shape[0]

    # point1 (1x1x1) folded with r2_block.bn1 (scale into weight, shift separate).
    s1, b1 = bn_fold(cp["point1_b"], cp["bn1"])
    w1 = (cp["point1_w"].reshape(-1) * s1)[:, None]
    sh1 = b1[:, None]

    # residual path: conv5 (1x1x1) folded with the fresh res_block's bn1.
    sr, br = bn_fold(rp["conv5_b"], rp["bn1"])
    wr = (rp["conv5_w"].reshape(-1) * sr)[:, None]
    shr = br[:, None]

    # slicon (3x3x3) folded with bn2; columns ordered (kd, kh, kw, cin).
    s2, b2 = bn_fold(cp["slicon_b"], cp["bn2"])
    w3 = (jnp.transpose(cp["slicon_w"], (0, 2, 3, 4, 1)).reshape(cg, 27 * cg)
          * s2[:, None])
    sh2 = b2[:, None]

    # point2 (1x1x1) folded with the outer res_block.bn1.
    so, bo = bn_fold(cp["point2_b"], params["bn1"])
    w2 = cp["point2_w"].reshape(co, 4 * cg) * so[:, None]
    sho = bo[:, None]

    # PReLU alpha as a (1,1) traced array (learnable parameter).
    alpha = jnp.asarray(cp["prelu_alpha"], jnp.float32).reshape(1, 1)

    out = _fused_forward1_call(x_slabs, mask, w1, sh1, alpha, wr, shr,
                               w3, sh2, w2, sho,
                               n=n, n_slabs=n_slabs, hp=hp, wp=wp,
                               slab_vol=slab_vol, core_len=core_len)
    # (n, n_slabs, 16, d_tile*hp*wp) -> (n, 16, D, H, W) interior
    out = out.reshape(n, n_slabs, co, d_tile, hp, wp)
    out = jnp.transpose(out, (0, 2, 1, 3, 4, 5)).reshape(n, co, d, hp, wp)
    return out[:, :, :, 1:h + 1, 1:w + 1]


# ---------------------------------------------------------------------------
# Deterministic parameter init (shapes from r2_block(1,16) / res_block(1,16))
# ---------------------------------------------------------------------------
def _u(key, shape, scale=0.2):
    return jax.random.uniform(key, shape, jnp.float32, -scale, scale)


def _bn(key, c):
    k1, k2, k3, k4 = jax.random.split(key, 4)
    return (1.0 + 0.1 * _u(k1, (c,)),          # gamma
            0.1 * _u(k2, (c,)),                # beta
            0.1 * _u(k3, (c,)),                # running mean
            1.0 + 0.1 * jax.random.uniform(k4, (c,), jnp.float32))   # running var


def init_params(key, in_c=1, out_c=16):
    ks = jax.random.split(key, 12)
    conv1 = dict(
        point1_w=_u(ks[0], (16, in_c, 1, 1, 1)),
        point1_b=_u(ks[1], (16,)),
        bn1=_bn(ks[2], 16),
        slicon_w=_u(ks[3], (4, 4, 3, 3, 3)),
        slicon_b=_u(ks[4], (4,)),
        bn2=_bn(ks[5], 4),
        point2_w=_u(ks[6], (out_c, 16, 1, 1, 1)),
        point2_b=_u(ks[7], (out_c,)),
        prelu_alpha=jnp.float32(0.25),   # nn.PReLU() default init (learnable)
    )
    res1 = dict(                          # fresh res_block(in_c, out_c, 'pointconv')
        conv5_w=_u(ks[8], (out_c, in_c, 1, 1, 1)),
        conv5_b=_u(ks[9], (out_c,)),
        bn1=_bn(ks[10], out_c),
    )
    return dict(conv1=conv1, res1=res1, bn1=_bn(ks[11], out_c))


# ---------------------------------------------------------------------------
# Pure-JAX reference (XLA convs) for a numerical self-check.
# ---------------------------------------------------------------------------
def _reference_forward1(x, params, eps=1e-5):
    dn = ('NCDHW', 'OIDHW', 'NCDHW')

    def bn(v, p):
        g, b, m, var = p
        s = g * lax.rsqrt(var + eps)
        return v * s[None, :, None, None, None] + (b - m * s)[None, :, None, None, None]

    def conv(v, wt, b, padding):
        out = lax.conv_general_dilated(v, wt, (1, 1, 1), padding,
                                       dimension_numbers=dn)
        return out + b[None, :, None, None, None]

    prelu = lambda v, a: jnp.where(v >= 0, v, a * v)
    elu = lambda v: jnp.where(v > 0, v, jnp.exp(jnp.minimum(v, 0.0)) - 1.0)

    x = x.astype(jnp.float32)
    cp, rp = params["conv1"], params["res1"]
    alpha = jnp.asarray(cp["prelu_alpha"], jnp.float32)

    res = elu(bn(conv(x, rp["conv5_w"], rp["conv5_b"], 'VALID'), rp["bn1"]))

    a = prelu(bn(conv(x, cp["point1_w"], cp["point1_b"], 'VALID'), cp["bn1"]), alpha)
    x0, x1, x2, x3 = jnp.split(a, 4, axis=1)
    slic = lambda v: prelu(bn(conv(v, cp["slicon_w"], cp["slicon_b"],
                                   [(1, 1)] * 3), cp["bn2"]), alpha)
    cat = jnp.concatenate([x0, slic(x1), slic(x1 + x2), slic(x2 + x3)], axis=1)
    out = elu(bn(conv(cat, cp["point2_w"], cp["point2_b"], 'VALID'), params["bn1"]))
    return res + out


# ---------------------------------------------------------------------------
if __name__ == "__main__":
    key = jax.random.PRNGKey(0)
    kx, kp = jax.random.split(key)

    # res_block(i_channel=1, o_channel=16, lei='forward1'); input NCDHW
    x = jax.random.normal(kx, (2, 1, 8, 8, 8), dtype=jnp.float32)
    params = init_params(kp, in_c=1, out_c=16)

    # d_tile=4 -> grid (batch=2, d_slabs=2), exercising the halo'd spatial axis.
    fwd = jax.jit(functools.partial(res_block_forward1, d_tile=4))
    out = jax.block_until_ready(fwd(x, params))
    assert out.shape == (2, 16, 8, 8, 8), out.shape
    assert bool(jnp.all(jnp.isfinite(out)))

    ref = jax.block_until_ready(jax.jit(_reference_forward1)(x, params))
    np.testing.assert_allclose(np.asarray(out), np.asarray(ref),
                               rtol=2e-3, atol=2e-3)
    print("KERNEL_OK")
</pallas_src>

<mosaic_0001>
module attributes {stable_mosaic.version = 11 : i64} {
  func.func @_res_block_kernel(%arg0: i32, %arg1: i32, %arg2: memref<1x1x1x600xf32, #tpu.memory_space<vmem>>, %arg3: memref<1x1x600xf32, #tpu.memory_space<vmem>>, %arg4: memref<16x1xf32, #tpu.memory_space<vmem>>, %arg5: memref<16x1xf32, #tpu.memory_space<vmem>>, %arg6: memref<1x1xf32, #tpu.memory_space<vmem>>, %arg7: memref<16x1xf32, #tpu.memory_space<vmem>>, %arg8: memref<16x1xf32, #tpu.memory_space<vmem>>, %arg9: memref<4x108xf32, #tpu.memory_space<vmem>>, %arg10: memref<4x1xf32, #tpu.memory_space<vmem>>, %arg11: memref<16x16xf32, #tpu.memory_space<vmem>>, %arg12: memref<16x1xf32, #tpu.memory_space<vmem>>, %arg13: memref<1x1x16x400xf32, #tpu.memory_space<vmem>>, %arg14: memref<4x2056xf32, #tpu.memory_space<vmem>>) attributes {dimension_semantics = [#tpu.dimension_semantics<parallel>, #tpu.dimension_semantics<parallel>], iteration_bounds = array<i64: 2, 2>, scalar_prefetch = 0 : i64, scratch_operands = 1 : i64, tpu.core_type = #tpu.core_type<tc>, window_params = [{transform_indices = @transform_0, window_bounds = array<i64: 1, 1, 1, 600>}, {transform_indices = @transform_1, window_bounds = array<i64: 1, 1, 600>}, {pipeline_mode = #tpu.pipeline_mode<synchronous>, transform_indices = @transform_2, window_bounds = array<i64: 16, 1>}, {pipeline_mode = #tpu.pipeline_mode<synchronous>, transform_indices = @transform_3, window_bounds = array<i64: 16, 1>}, {pipeline_mode = #tpu.pipeline_mode<synchronous>, transform_indices = @transform_4, window_bounds = array<i64: 1, 1>}, {pipeline_mode = #tpu.pipeline_mode<synchronous>, transform_indices = @transform_5, window_bounds = array<i64: 16, 1>}, {pipeline_mode = #tpu.pipeline_mode<synchronous>, transform_indices = @transform_6, window_bounds = array<i64: 16, 1>}, {pipeline_mode = #tpu.pipeline_mode<synchronous>, transform_indices = @transform_7, window_bounds = array<i64: 4, 108>}, {pipeline_mode = #tpu.pipeline_mode<synchronous>, transform_indices = @transform_8, window_bounds = array<i64: 4, 1>}, {pipeline_mode = #tpu.pipeline_mode<synchronous>, transform_indices = @transform_9, window_bounds = array<i64: 16, 16>}, {pipeline_mode = #tpu.pipeline_mode<synchronous>, transform_indices = @transform_10, window_bounds = array<i64: 16, 1>}, {transform_indices = @transform_11, window_bounds = array<i64: 1, 1, 16, 400>}]} {
    %c0 = arith.constant 0 : index
    %c0_0 = arith.constant 0 : index
    %c0_1 = arith.constant 0 : index
    %c0_2 = arith.constant 0 : index
    %0 = vector.load %arg2[%c0, %c0_0, %c0_1, %c0_2] : memref<1x1x1x600xf32, #tpu.memory_space<vmem>>, vector<1x1x1x600xf32>
    %1 = vector.shape_cast %0 : vector<1x1x1x600xf32> to vector<1x600xf32>
    %c0_3 = arith.constant 0 : index
    %c0_4 = arith.constant 0 : index
    %c0_5 = arith.constant 0 : index
    %2 = vector.load %arg3[%c0_3, %c0_4, %c0_5] : memref<1x1x600xf32, #tpu.memory_space<vmem>>, vector<1x1x600xf32>
    %3 = vector.shape_cast %2 : vector<1x1x600xf32> to vector<1x600xf32>
    %cst = arith.constant 0.000000e+00 : f32
    %4 = vector.broadcast %cst : f32 to vector<1x600xf32>
    %5 = arith.cmpf ogt, %3, %4 : vector<1x600xf32>
    %c0_6 = arith.constant 0 : index
    %c0_7 = arith.constant 0 : index
    %6 = vector.load %arg6[%c0_6, %c0_7] : memref<1x1xf32, #tpu.memory_space<vmem>>, vector<1x1xf32>
    %c0_8 = arith.constant 0 : index
    %c0_9 = arith.constant 0 : index
    %7 = vector.load %arg4[%c0_8, %c0_9] : memref<16x1xf32, #tpu.memory_space<vmem>>, vector<16x1xf32>
    %8 = vector.broadcast %7 : vector<16x1xf32> to vector<16x600xf32>
    %9 = vector.broadcast %1 : vector<1x600xf32> to vector<16x600xf32>
    %10 = arith.mulf %8, %9 : vector<16x600xf32>
    %c0_10 = arith.constant 0 : index
    %c0_11 = arith.constant 0 : index
    %11 = vector.load %arg5[%c0_10, %c0_11] : memref<16x1xf32, #tpu.memory_space<vmem>>, vector<16x1xf32>
    %12 = vector.broadcast %11 : vector<16x1xf32> to vector<16x600xf32>
    %13 = arith.addf %10, %12 : vector<16x600xf32>
    %cst_12 = arith.constant 0.000000e+00 : f32
    %14 = vector.broadcast %cst_12 : f32 to vector<16x600xf32>
    %15 = arith.cmpf oge, %13, %14 : vector<16x600xf32>
    %16 = vector.broadcast %6 : vector<1x1xf32> to vector<16x600xf32>
    %17 = arith.mulf %16, %13 : vector<16x600xf32>
    %18 = arith.select %15, %13, %17 : vector<16x600xi1>, vector<16x600xf32>
    %19 = vector.extract_strided_slice %18 {offsets = [4, 0], sizes = [4, 600], strides = [1, 1]} : vector<16x600xf32> to vector<4x600xf32>
    %20 = vector.extract_strided_slice %18 {offsets = [8, 0], sizes = [4, 600], strides = [1, 1]} : vector<16x600xf32> to vector<4x600xf32>
    %21 = vector.extract_strided_slice %18 {offsets = [12, 0], sizes = [4, 600], strides = [1, 1]} : vector<16x600xf32> to vector<4x600xf32>
    %cst_13 = arith.constant 0.000000e+00 : f32
    %22 = vector.shape_cast %5 : vector<1x600xi1> to vector<1x600xi1>
    %23 = vector.broadcast %22 : vector<1x600xi1> to vector<4x600xi1>
    %24 = vector.broadcast %cst_13 : f32 to vector<4x600xf32>
    %25 = arith.select %23, %19, %24 : vector<4x600xi1>, vector<4x600xf32>
    %26 = arith.addf %19, %20 : vector<4x600xf32>
    %cst_14 = arith.constant 0.000000e+00 : f32
    %27 = vector.shape_cast %5 : vector<1x600xi1> to vector<1x600xi1>
    %28 = vector.broadcast %27 : vector<1x600xi1> to vector<4x600xi1>
    %29 = vector.broadcast %cst_14 : f32 to vector<4x600xf32>
    %30 = arith.select %28, %26, %29 : vector<4x600xi1>, vector<4x600xf32>
    %31 = arith.addf %20, %21 : vector<4x600xf32>
    %cst_15 = arith.constant 0.000000e+00 : f32
    %32 = vector.shape_cast %5 : vector<1x600xi1> to vector<1x600xi1>
    %33 = vector.broadcast %32 : vector<1x600xi1> to vector<4x600xi1>
    %34 = vector.broadcast %cst_15 : f32 to vector<4x600xf32>
    %35 = arith.select %33, %31, %34 : vector<4x600xi1>, vector<4x600xf32>
    %cst_16 = arith.constant 0.000000e+00 : f32
    %36 = vector.broadcast %cst_16 : f32 to vector<4x128xf32>
    %c0_17 = arith.constant 0 : index
    %c0_18 = arith.constant 0 : index
    %37 = vector.load %arg14[%c0_17, %c0_18] : memref<4x2056xf32, #tpu.memory_space<vmem>>, vector<4x128xf32>
    tpu.vector_store %arg14[%c0_17, %c0_18], %36 {strides = array<i32>} : memref<4x2056xf32, #tpu.memory_space<vmem>>, vector<4x128xf32>,
    %cst_19 = arith.constant 0.000000e+00 : f32
    %38 = vector.broadcast %cst_19 : f32 to vector<4x128xf32>
    %c0_20 = arith.constant 0 : index
    %c1928 = arith.constant 1928 : index
    %39 = vector.load %arg14[%c0_20, %c1928] : memref<4x2056xf32, #tpu.memory_space<vmem>>, vector<4x128xf32>
    tpu.vector_store %arg14[%c0_20, %c1928], %38 {strides = array<i32>} : memref<4x2056xf32, #tpu.memory_space<vmem>>, vector<4x128xf32>,
    %c0_21 = arith.constant 0 : index
    %c128 = arith.constant 128 : index
    %40 = vector.load %arg14[%c0_21, %c128] : memref<4x2056xf32, #tpu.memory_space<vmem>>, vector<4x600xf32>
    tpu.vector_store %arg14[%c0_21, %c128], %25 {strides = array<i32>} : memref<4x2056xf32, #tpu.memory_space<vmem>>, vector<4x600xf32>,
    %c0_22 = arith.constant 0 : index
    %c728 = arith.constant 728 : index
    %41 = vector.load %arg14[%c0_22, %c728] : memref<4x2056xf32, #tpu.memory_space<vmem>>, vector<4x600xf32>
    tpu.vector_store %arg14[%c0_22, %c728], %30 {strides = array<i32>} : memref<4x2056xf32, #tpu.memory_space<vmem>>, vector<4x600xf32>,
    %c0_23 = arith.constant 0 : index
    %c1328 = arith.constant 1328 : index
    %42 = vector.load %arg14[%c0_23, %c1328] : memref<4x2056xf32, #tpu.memory_space<vmem>>, vector<4x600xf32>
    tpu.vector_store %arg14[%c0_23, %c1328], %35 {strides = array<i32>} : memref<4x2056xf32, #tpu.memory_space<vmem>>, vector<4x600xf32>,
    %c0_24 = arith.constant 0 : index
    %c0_25 = arith.constant 0 : index
    %43 = vector.load %arg9[%c0_24, %c0_25] : memref<4x108xf32, #tpu.memory_space<vmem>>, vector<4x108xf32>
    %cst_26 = arith.constant 0.000000e+00 : f32
    %44 = vector.broadcast %cst_26 : f32 to vector<4x1800xf32>
    %c0_27 = arith.constant 0 : index
    %c17 = arith.constant 17 : index
    %45 = vector.load %arg14[%c0_27, %c17] : memref<4x2056xf32, #tpu.memory_space<vmem>>, vector<4x1800xf32>
    %46 = vector.extract_strided_slice %43 {offsets = [0, 0], sizes = [4, 4], strides = [1, 1]} : vector<4x108xf32> to vector<4x4xf32>
    %cst_28 = arith.constant dense<0.000000e+00> : vector<4x1800xf32>
    %47 = tpu.matmul %46, %45, %cst_28 {dimension_numbers = #tpu.dot_dimension_numbers<[1], [0], [0], [1], [0, 0, 1, 1], [], []>} : vector<4x4xf32>, vector<4x1800xf32>, vector<4x1800xf32> -> vector<4x1800xf32>
    %48 = arith.addf %44, %47 : vector<4x1800xf32>
    %c0_29 = arith.constant 0 : index
    %c18 = arith.constant 18 : index
    %49 = vector.load %arg14[%c0_29, %c18] : memref<4x2056xf32, #tpu.memory_space<vmem>>, vector<4x1800xf32>
    %50 = vector.extract_strided_slice %43 {offsets = [0, 4], sizes = [4, 4], strides = [1, 1]} : vector<4x108xf32> to vector<4x4xf32>
    %cst_30 = arith.constant dense<0.000000e+00> : vector<4x1800xf32>
    %51 = tpu.matmul %50, %49, %cst_30 {dimension_numbers = #tpu.dot_dimension_numbers<[1], [0], [0], [1], [0, 0, 1, 1], [], []>} : vector<4x4xf32>, vector<4x1800xf32>, vector<4x1800xf32> -> vector<4x1800xf32>
    %52 = arith.addf %48, %51 : vector<4x1800xf32>
    %c0_31 = arith.constant 0 : index
    %c19 = arith.constant 19 : index
    %53 = vector.load %arg14[%c0_31, %c19] : memref<4x2056xf32, #tpu.memory_space<vmem>>, vector<4x1800xf32>
    %54 = vector.extract_strided_slice %43 {offsets = [0, 8], sizes = [4, 4], strides = [1, 1]} : vector<4x108xf32> to vector<4x4xf32>
    %cst_32 = arith.constant dense<0.000000e+00> : vector<4x1800xf32>
    %55 = tpu.matmul %54, %53, %cst_32 {dimension_numbers = #tpu.dot_dimension_numbers<[1], [0], [0], [1], [0, 0, 1, 1], [], []>} : vector<4x4xf32>, vector<4x1800xf32>, vector<4x1800xf32> -> vector<4x1800xf32>
    %56 = arith.addf %52, %55 : vector<4x1800xf32>
    %c0_33 = arith.constant 0 : index
    %c27 = arith.constant 27 : index
    %57 = vector.load %arg14[%c0_33, %c27] : memref<4x2056xf32, #tpu.memory_space<vmem>>, vector<4x1800xf32>
    %58 = vector.extract_strided_slice %43 {offsets = [0, 12], sizes = [4, 4], strides = [1, 1]} : vector<4x108xf32> to vector<4x4xf32>
    %cst_34 = arith.constant dense<0.000000e+00> : vector<4x1800xf32>
    %59 = tpu.matmul %58, %57, %cst_34 {dimension_numbers = #tpu.dot_dimension_numbers<[1], [0], [0], [1], [0, 0, 1, 1], [], []>} : vector<4x4xf32>, vector<4x1800xf32>, vector<4x1800xf32> -> vector<4x1800xf32>
    %60 = arith.addf %56, %59 : vector<4x1800xf32>
    %c0_35 = arith.constant 0 : index
    %c28 = arith.constant 28 : index
    %61 = vector.load %arg14[%c0_35, %c28] : memref<4x2056xf32, #tpu.memory_space<vmem>>, vector<4x1800xf32>
    %62 = vector.extract_strided_slice %43 {offsets = [0, 16], sizes = [4, 4], strides = [1, 1]} : vector<4x108xf32> to vector<4x4xf32>
    %cst_36 = arith.constant dense<0.000000e+00> : vector<4x1800xf32>
    %63 = tpu.matmul %62, %61, %cst_36 {dimension_numbers = #tpu.dot_dimension_numbers<[1], [0], [0], [1], [0, 0, 1, 1], [], []>} : vector<4x4xf32>, vector<4x1800xf32>, vector<4x1800xf32> -> vector<4x1800xf32>
    %64 = arith.addf %60, %63 : vector<4x1800xf32>
    %c0_37 = arith.constant 0 : index
    %c29 = arith.constant 29 : index
    %65 = vector.load %arg14[%c0_37, %c29] : memref<4x2056xf32, #tpu.memory_space<vmem>>, vector<4x1800xf32>
    %66 = vector.extract_strided_slice %43 {offsets = [0, 20], sizes = [4, 4], strides = [1, 1]} : vector<4x108xf32> to vector<4x4xf32>
    %cst_38 = arith.constant dense<0.000000e+00> : vector<4x1800xf32>
    %67 = tpu.matmul %66, %65, %cst_38 {dimension_numbers = #tpu.dot_dimension_numbers<[1], [0], [0], [1], [0, 0, 1, 1], [], []>} : vector<4x4xf32>, vector<4x1800xf32>, vector<4x1800xf32> -> vector<4x1800xf32>
    %68 = arith.addf %64, %67 : vector<4x1800xf32>
    %c0_39 = arith.constant 0 : index
    %c37 = arith.constant 37 : index
    %69 = vector.load %arg14[%c0_39, %c37] : memref<4x2056xf32, #tpu.memory_space<vmem>>, vector<4x1800xf32>
    %70 = vector.extract_strided_slice %43 {offsets = [0, 24], sizes = [4, 4], strides = [1, 1]} : vector<4x108xf32> to vector<4x4xf32>
    %cst_40 = arith.constant dense<0.000000e+00> : vector<4x1800xf32>
    %71 = tpu.matmul %70, %69, %cst_40 {dimension_numbers = #tpu.dot_dimension_numbers<[1], [0], [0], [1], [0, 0, 1, 1], [], []>} : vector<4x4xf32>, vector<4x1800xf32>, vector<4x1800xf32> -> vector<4x1800xf32>
    %72 = arith.addf %68, %71 : vector<4x1800xf32>
    %c0_41 = arith.constant 0 : index
    %c38 = arith.constant 38 : index
    %73 = vector.load %arg14[%c0_41, %c38] : memref<4x2056xf32, #tpu.memory_space<vmem>>, vector<4x1800xf32>
    %74 = vector.extract_strided_slice %43 {offsets = [0, 28], sizes = [4, 4], strides = [1, 1]} : vector<4x108xf32> to vector<4x4xf32>
    %cst_42 = arith.constant dense<0.000000e+00> : vector<4x1800xf32>
    %75 = tpu.matmul %74, %73, %cst_42 {dimension_numbers = #tpu.dot_dimension_numbers<[1], [0], [0], [1], [0, 0, 1, 1], [], []>} : vector<4x4xf32>, vector<4x1800xf32>, vector<4x1800xf32> -> vector<4x1800xf32>
    %76 = arith.addf %72, %75 : vector<4x1800xf32>
    %c0_43 = arith.constant 0 : index
    %c39 = arith.constant 39 : index
    %77 = vector.load %arg14[%c0_43, %c39] : memref<4x2056xf32, #tpu.memory_space<vmem>>, vector<4x1800xf32>
    %78 = vector.extract_strided_slice %43 {offsets = [0, 32], sizes = [4, 4], strides = [1, 1]} : vector<4x108xf32> to vector<4x4xf32>
    %cst_44 = arith.constant dense<0.000000e+00> : vector<4x1800xf32>
    %79 = tpu.matmul %78, %77, %cst_44 {dimension_numbers = #tpu.dot_dimension_numbers<[1], [0], [0], [1], [0, 0, 1, 1], [], []>} : vector<4x4xf32>, vector<4x1800xf32>, vector<4x1800xf32> -> vector<4x1800xf32>
    %80 = arith.addf %76, %79 : vector<4x1800xf32>
    %c0_45 = arith.constant 0 : index
    %c117 = arith.constant 117 : index
    %81 = vector.load %arg14[%c0_45, %c117] : memref<4x2056xf32, #tpu.memory_space<vmem>>, vector<4x1800xf32>
    %82 = vector.extract_strided_slice %43 {offsets = [0, 36], sizes = [4, 4], strides = [1, 1]} : vector<4x108xf32> to vector<4x4xf32>
    %cst_46 = arith.constant dense<0.000000e+00> : vector<4x1800xf32>
    %83 = tpu.matmul %82, %81, %cst_46 {dimension_numbers = #tpu.dot_dimension_numbers<[1], [0], [0], [1], [0, 0, 1, 1], [], []>} : vector<4x4xf32>, vector<4x1800xf32>, vector<4x1800xf32> -> vector<4x1800xf32>
    %84 = arith.addf %80, %83 : vector<4x1800xf32>
    %c0_47 = arith.constant 0 : index
    %c118 = arith.constant 118 : index
    %85 = vector.load %arg14[%c0_47, %c118] : memref<4x2056xf32, #tpu.memory_space<vmem>>, vector<4x1800xf32>
    %86 = vector.extract_strided_slice %43 {offsets = [0, 40], sizes = [4, 4], strides = [1, 1]} : vector<4x108xf32> to vector<4x4xf32>
    %cst_48 = arith.constant dense<0.000000e+00> : vector<4x1800xf32>
    %87 = tpu.matmul %86, %85, %cst_48 {dimension_numbers = #tpu.dot_dimension_numbers<[1], [0], [0], [1], [0, 0, 1, 1], [], []>} : vector<4x4xf32>, vector<4x1800xf32>, vector<4x1800xf32> -> vector<4x1800xf32>
    %88 = arith.addf %84, %87 : vector<4x1800xf32>
    %c0_49 = arith.constant 0 : index
    %c119 = arith.constant 119 : index
    %89 = vector.load %arg14[%c0_49, %c119] : memref<4x2056xf32, #tpu.memory_space<vmem>>, vector<4x1800xf32>
    %90 = vector.extract_strided_slice %43 {offsets = [0, 44], sizes = [4, 4], strides = [1, 1]} : vector<4x108xf32> to vector<4x4xf32>
    %cst_50 = arith.constant dense<0.000000e+00> : vector<4x1800xf32>
    %91 = tpu.matmul %90, %89, %cst_50 {dimension_numbers = #tpu.dot_dimension_numbers<[1], [0], [0], [1], [0, 0, 1, 1], [], []>} : vector<4x4xf32>, vector<4x1800xf32>, vector<4x1800xf32> -> vector<4x1800xf32>
    %92 = arith.addf %88, %91 : vector<4x1800xf32>
    %c0_51 = arith.constant 0 : index
    %c127 = arith.constant 127 : index
    %93 = vector.load %arg14[%c0_51, %c127] : memref<4x2056xf32, #tpu.memory_space<vmem>>, vector<4x1800xf32>
    %94 = vector.extract_strided_slice %43 {offsets = [0, 48], sizes = [4, 4], strides = [1, 1]} : vector<4x108xf32> to vector<4x4xf32>
    %cst_52 = arith.constant dense<0.000000e+00> : vector<4x1800xf32>
    %95 = tpu.matmul %94, %93, %cst_52 {dimension_numbers = #tpu.dot_dimension_numbers<[1], [0], [0], [1], [0, 0, 1, 1], [], []>} : vector<4x4xf32>, vector<4x1800xf32>, vector<4x1800xf32> -> vector<4x1800xf32>
    %96 = arith.addf %92, %95 : vector<4x1800xf32>
    %c0_53 = arith.constant 0 : index
    %c128_54 = arith.constant 128 : index
    %97 = vector.load %arg14[%c0_53, %c128_54] : memref<4x2056xf32, #tpu.memory_space<vmem>>, vector<4x1800xf32>
    %98 = vector.extract_strided_slice %43 {offsets = [0, 52], sizes = [4, 4], strides = [1, 1]} : vector<4x108xf32> to vector<4x4xf32>
    %cst_55 = arith.constant dense<0.000000e+00> : vector<4x1800xf32>
    %99 = tpu.matmul %98, %97, %cst_55 {dimension_numbers = #tpu.dot_dimension_numbers<[1], [0], [0], [1], [0, 0, 1, 1], [], []>} : vector<4x4xf32>, vector<4x1800xf32>, vector<4x1800xf32> -> vector<4x1800xf32>
    %100 = arith.addf %96, %99 : vector<4x1800xf32>
    %c0_56 = arith.constant 0 : index
    %c129 = arith.constant 129 : index
    %101 = vector.load %arg14[%c0_56, %c129] : memref<4x2056xf32, #tpu.memory_space<vmem>>, vector<4x1800xf32>
    %102 = vector.extract_strided_slice %43 {offsets = [0, 56], sizes = [4, 4], strides = [1, 1]} : vector<4x108xf32> to vector<4x4xf32>
    %cst_57 = arith.constant dense<0.000000e+00> : vector<4x1800xf32>
    %103 = tpu.matmul %102, %101, %cst_57 {dimension_numbers = #tpu.dot_dimension_numbers<[1], [0], [0], [1], [0, 0, 1, 1], [], []>} : vector<4x4xf32>, vector<4x1800xf32>, vector<4x1800xf32> -> vector<4x1800xf32>
    %104 = arith.addf %100, %103 : vector<4x1800xf32>
    %c0_58 = arith.constant 0 : index
    %c137 = arith.constant 137 : index
    %105 = vector.load %arg14[%c0_58, %c137] : memref<4x2056xf32, #tpu.memory_space<vmem>>, vector<4x1800xf32>
    %106 = vector.extract_strided_slice %43 {offsets = [0, 60], sizes = [4, 4], strides = [1, 1]} : vector<4x108xf32> to vector<4x4xf32>
    %cst_59 = arith.constant dense<0.000000e+00> : vector<4x1800xf32>
    %107 = tpu.matmul %106, %105, %cst_59 {dimension_numbers = #tpu.dot_dimension_numbers<[1], [0], [0], [1], [0, 0, 1, 1], [], []>} : vector<4x4xf32>, vector<4x1800xf32>, vector<4x1800xf32> -> vector<4x1800xf32>
    %108 = arith.addf %104, %107 : vector<4x1800xf32>
    %c0_60 = arith.constant 0 : index
    %c138 = arith.constant 138 : index
    %109 = vector.load %arg14[%c0_60, %c138] : memref<4x2056xf32, #tpu.memory_space<vmem>>, vector<4x1800xf32>
    %110 = vector.extract_strided_slice %43 {offsets = [0, 64], sizes = [4, 4], strides = [1, 1]} : vector<4x108xf32> to vector<4x4xf32>
    %cst_61 = arith.constant dense<0.000000e+00> : vector<4x1800xf32>
    %111 = tpu.matmul %110, %109, %cst_61 {dimension_numbers = #tpu.dot_dimension_numbers<[1], [0], [0], [1], [0, 0, 1, 1], [], []>} : vector<4x4xf32>, vector<4x1800xf32>, vector<4x1800xf32> -> vector<4x1800xf32>
    %112 = arith.addf %108, %111 : vector<4x1800xf32>
    %c0_62 = arith.constant 0 : index
    %c139 = arith.constant 139 : index
    %113 = vector.load %arg14[%c0_62, %c139] : memref<4x2056xf32, #tpu.memory_space<vmem>>, vector<4x1800xf32>
    %114 = vector.extract_strided_slice %43 {offsets = [0, 68], sizes = [4, 4], strides = [1, 1]} : vector<4x108xf32> to vector<4x4xf32>
    %cst_63 = arith.constant dense<0.000000e+00> : vector<4x1800xf32>
    %115 = tpu.matmul %114, %113, %cst_63 {dimension_numbers = #tpu.dot_dimension_numbers<[1], [0], [0], [1], [0, 0, 1, 1], [], []>} : vector<4x4xf32>, vector<4x1800xf32>, vector<4x1800xf32> -> vector<4x1800xf32>
    %116 = arith.addf %112, %115 : vector<4x1800xf32>
    %c0_64 = arith.constant 0 : index
    %c217 = arith.constant 217 : index
    %117 = vector.load %arg14[%c0_64, %c217] : memref<4x2056xf32, #tpu.memory_space<vmem>>, vector<4x1800xf32>
    %118 = vector.extract_strided_slice %43 {offsets = [0, 72], sizes = [4, 4], strides = [1, 1]} : vector<4x108xf32> to vector<4x4xf32>
    %cst_65 = arith.constant dense<0.000000e+00> : vector<4x1800xf32>
    %119 = tpu.matmul %118, %117, %cst_65 {dimension_numbers = #tpu.dot_dimension_numbers<[1], [0], [0], [1], [0, 0, 1, 1], [], []>} : vector<4x4xf32>, vector<4x1800xf32>, vector<4x1800xf32> -> vector<4x1800xf32>
    %120 = arith.addf %116, %119 : vector<4x1800xf32>
    %c0_66 = arith.constant 0 : index
    %c218 = arith.constant 218 : index
    %121 = vector.load %arg14[%c0_66, %c218] : memref<4x2056xf32, #tpu.memory_space<vmem>>, vector<4x1800xf32>
    %122 = vector.extract_strided_slice %43 {offsets = [0, 76], sizes = [4, 4], strides = [1, 1]} : vector<4x108xf32> to vector<4x4xf32>
    %cst_67 = arith.constant dense<0.000000e+00> : vector<4x1800xf32>
    %123 = tpu.matmul %122, %121, %cst_67 {dimension_numbers = #tpu.dot_dimension_numbers<[1], [0], [0], [1], [0, 0, 1, 1], [], []>} : vector<4x4xf32>, vector<4x1800xf32>, vector<4x1800xf32> -> vector<4x1800xf32>
    %124 = arith.addf %120, %123 : vector<4x1800xf32>
    %c0_68 = arith.constant 0 : index
    %c219 = arith.constant 219 : index
    %125 = vector.load %arg14[%c0_68, %c219] : memref<4x2056xf32, #tpu.memory_space<vmem>>, vector<4x1800xf32>
    %126 = vector.extract_strided_slice %43 {offsets = [0, 80], sizes = [4, 4], strides = [1, 1]} : vector<4x108xf32> to vector<4x4xf32>
    %cst_69 = arith.constant dense<0.000000e+00> : vector<4x1800xf32>
    %127 = tpu.matmul %126, %125, %cst_69 {dimension_numbers = #tpu.dot_dimension_numbers<[1], [0], [0], [1], [0, 0, 1, 1], [], []>} : vector<4x4xf32>, vector<4x1800xf32>, vector<4x1800xf32> -> vector<4x1800xf32>
    %128 = arith.addf %124, %127 : vector<4x1800xf32>
    %c0_70 = arith.constant 0 : index
    %c227 = arith.constant 227 : index
    %129 = vector.load %arg14[%c0_70, %c227] : memref<4x2056xf32, #tpu.memory_space<vmem>>, vector<4x1800xf32>
    %130 = vector.extract_strided_slice %43 {offsets = [0, 84], sizes = [4, 4], strides = [1, 1]} : vector<4x108xf32> to vector<4x4xf32>
    %cst_71 = arith.constant dense<0.000000e+00> : vector<4x1800xf32>
    %131 = tpu.matmul %130, %129, %cst_71 {dimension_numbers = #tpu.dot_dimension_numbers<[1], [0], [0], [1], [0, 0, 1, 1], [], []>} : vector<4x4xf32>, vector<4x1800xf32>, vector<4x1800xf32> -> vector<4x1800xf32>
    %132 = arith.addf %128, %131 : vector<4x1800xf32>
    %c0_72 = arith.constant 0 : index
    %c228 = arith.constant 228 : index
    %133 = vector.load %arg14[%c0_72, %c228] : memref<4x2056xf32, #tpu.memory_space<vmem>>, vector<4x1800xf32>
    %134 = vector.extract_strided_slice %43 {offsets = [0, 88], sizes = [4, 4], strides = [1, 1]} : vector<4x108xf32> to vector<4x4xf32>
    %cst_73 = arith.constant dense<0.000000e+00> : vector<4x1800xf32>
    %135 = tpu.matmul %134, %133, %cst_73 {dimension_numbers = #tpu.dot_dimension_numbers<[1], [0], [0], [1], [0, 0, 1, 1], [], []>} : vector<4x4xf32>, vector<4x1800xf32>, vector<4x1800xf32> -> vector<4x1800xf32>
    %136 = arith.addf %132, %135 : vector<4x1800xf32>
    %c0_74 = arith.constant 0 : index
    %c229 = arith.constant 229 : index
    %137 = vector.load %arg14[%c0_74, %c229] : memref<4x2056xf32, #tpu.memory_space<vmem>>, vector<4x1800xf32>
    %138 = vector.extract_strided_slice %43 {offsets = [0, 92], sizes = [4, 4], strides = [1, 1]} : vector<4x108xf32> to vector<4x4xf32>
    %cst_75 = arith.constant dense<0.000000e+00> : vector<4x1800xf32>
    %139 = tpu.matmul %138, %137, %cst_75 {dimension_numbers = #tpu.dot_dimension_numbers<[1], [0], [0], [1], [0, 0, 1, 1], [], []>} : vector<4x4xf32>, vector<4x1800xf32>, vector<4x1800xf32> -> vector<4x1800xf32>
    %140 = arith.addf %136, %139 : vector<4x1800xf32>
    %c0_76 = arith.constant 0 : index
    %c237 = arith.constant 237 : index
    %141 = vector.load %arg14[%c0_76, %c237] : memref<4x2056xf32, #tpu.memory_space<vmem>>, vector<4x1800xf32>
    %142 = vector.extract_strided_slice %43 {offsets = [0, 96], sizes = [4, 4], strides = [1, 1]} : vector<4x108xf32> to vector<4x4xf32>
    %cst_77 = arith.constant dense<0.000000e+00> : vector<4x1800xf32>
    %143 = tpu.matmul %142, %141, %cst_77 {dimension_numbers = #tpu.dot_dimension_numbers<[1], [0], [0], [1], [0, 0, 1, 1], [], []>} : vector<4x4xf32>, vector<4x1800xf32>, vector<4x1800xf32> -> vector<4x1800xf32>
    %144 = arith.addf %140, %143 : vector<4x1800xf32>
    %c0_78 = arith.constant 0 : index
    %c238 = arith.constant 238 : index
    %145 = vector.load %arg14[%c0_78, %c238] : memref<4x2056xf32, #tpu.memory_space<vmem>>, vector<4x1800xf32>
    %146 = vector.extract_strided_slice %43 {offsets = [0, 100], sizes = [4, 4], strides = [1, 1]} : vector<4x108xf32> to vector<4x4xf32>
    %cst_79 = arith.constant dense<0.000000e+00> : vector<4x1800xf32>
    %147 = tpu.matmul %146, %145, %cst_79 {dimension_numbers = #tpu.dot_dimension_numbers<[1], [0], [0], [1], [0, 0, 1, 1], [], []>} : vector<4x4xf32>, vector<4x1800xf32>, vector<4x1800xf32> -> vector<4x1800xf32>
    %148 = arith.addf %144, %147 : vector<4x1800xf32>
    %c0_80 = arith.constant 0 : index
    %c239 = arith.constant 239 : index
    %149 = vector.load %arg14[%c0_80, %c239] : memref<4x2056xf32, #tpu.memory_space<vmem>>, vector<4x1800xf32>
    %150 = vector.extract_strided_slice %43 {offsets = [0, 104], sizes = [4, 4], strides = [1, 1]} : vector<4x108xf32> to vector<4x4xf32>
    %cst_81 = arith.constant dense<0.000000e+00> : vector<4x1800xf32>
    %151 = tpu.matmul %150, %149, %cst_81 {dimension_numbers = #tpu.dot_dimension_numbers<[1], [0], [0], [1], [0, 0, 1, 1], [], []>} : vector<4x4xf32>, vector<4x1800xf32>, vector<4x1800xf32> -> vector<4x1800xf32>
    %152 = arith.addf %148, %151 : vector<4x1800xf32>
    %c0_82 = arith.constant 0 : index
    %c0_83 = arith.constant 0 : index
    %153 = vector.load %arg10[%c0_82, %c0_83] : memref<4x1xf32, #tpu.memory_space<vmem>>, vector<4x1xf32>
    %154 = vector.broadcast %153 : vector<4x1xf32> to vector<4x1800xf32>
    %155 = arith.addf %152, %154 : vector<4x1800xf32>
    %cst_84 = arith.constant 0.000000e+00 : f32
    %156 = vector.broadcast %cst_84 : f32 to vector<4x1800xf32>
    %157 = arith.cmpf oge, %155, %156 : vector<4x1800xf32>
    %158 = vector.broadcast %6 : vector<1x1xf32> to vector<4x1800xf32>
    %159 = arith.mulf %158, %155 : vector<4x1800xf32>
    %160 = arith.select %157, %155, %159 : vector<4x1800xi1>, vector<4x1800xf32>
    %c0_85 = arith.constant 0 : index
    %c0_86 = arith.constant 0 : index
    %161 = vector.load %arg11[%c0_85, %c0_86] : memref<16x16xf32, #tpu.memory_space<vmem>>, vector<16x16xf32>
    %162 = vector.extract_strided_slice %161 {offsets = [0, 0], sizes = [16, 4], strides = [1, 1]} : vector<16x16xf32> to vector<16x4xf32>
    %163 = vector.extract_strided_slice %18 {offsets = [0, 100], sizes = [4, 400], strides = [1, 1]} : vector<16x600xf32> to vector<4x400xf32>
    %cst_87 = arith.constant dense<0.000000e+00> : vector<16x400xf32>
    %164 = tpu.matmul %162, %163, %cst_87 {dimension_numbers = #tpu.dot_dimension_numbers<[1], [0], [0], [1], [0, 0, 1, 1], [], []>} : vector<16x4xf32>, vector<4x400xf32>, vector<16x400xf32> -> vector<16x400xf32>
    %165 = vector.extract_strided_slice %160 {offsets = [0, 100], sizes = [4, 400], strides = [1, 1]} : vector<4x1800xf32> to vector<4x400xf32>
    %166 = vector.extract_strided_slice %161 {offsets = [0, 4], sizes = [16, 4], strides = [1, 1]} : vector<16x16xf32> to vector<16x4xf32>
    %cst_88 = arith.constant dense<0.000000e+00> : vector<16x400xf32>
    %167 = tpu.matmul %166, %165, %cst_88 {dimension_numbers = #tpu.dot_dimension_numbers<[1], [0], [0], [1], [0, 0, 1, 1], [], []>} : vector<16x4xf32>, vector<4x400xf32>, vector<16x400xf32> -> vector<16x400xf32>
    %168 = arith.addf %164, %167 : vector<16x400xf32>
    %169 = vector.extract_strided_slice %160 {offsets = [0, 700], sizes = [4, 400], strides = [1, 1]} : vector<4x1800xf32> to vector<4x400xf32>
    %170 = vector.extract_strided_slice %161 {offsets = [0, 8], sizes = [16, 4], strides = [1, 1]} : vector<16x16xf32> to vector<16x4xf32>
    %cst_89 = arith.constant dense<0.000000e+00> : vector<16x400xf32>
    %171 = tpu.matmul %170, %169, %cst_89 {dimension_numbers = #tpu.dot_dimension_numbers<[1], [0], [0], [1], [0, 0, 1, 1], [], []>} : vector<16x4xf32>, vector<4x400xf32>, vector<16x400xf32> -> vector<16x400xf32>
    %172 = arith.addf %168, %171 : vector<16x400xf32>
    %173 = vector.extract_strided_slice %160 {offsets = [0, 1300], sizes = [4, 400], strides = [1, 1]} : vector<4x1800xf32> to vector<4x400xf32>
    %174 = vector.extract_strided_slice %161 {offsets = [0, 12], sizes = [16, 4], strides = [1, 1]} : vector<16x16xf32> to vector<16x4xf32>
    %cst_90 = arith.constant dense<0.000000e+00> : vector<16x400xf32>
    %175 = tpu.matmul %174, %173, %cst_90 {dimension_numbers = #tpu.dot_dimension_numbers<[1], [0], [0], [1], [0, 0, 1, 1], [], []>} : vector<16x4xf32>, vector<4x400xf32>, vector<16x400xf32> -> vector<16x400xf32>
    %176 = arith.addf %172, %175 : vector<16x400xf32>
    %c0_91 = arith.constant 0 : index
    %c0_92 = arith.constant 0 : index
    %177 = vector.load %arg12[%c0_91, %c0_92] : memref<16x1xf32, #tpu.memory_space<vmem>>, vector<16x1xf32>
    %178 = vector.broadcast %177 : vector<16x1xf32> to vector<16x400xf32>
    %179 = arith.addf %176, %178 : vector<16x400xf32>
    %cst_93 = arith.constant 0.000000e+00 : f32
    %180 = vector.broadcast %cst_93 : f32 to vector<16x400xf32>
    %181 = arith.cmpf ogt, %179, %180 : vector<16x400xf32>
    %cst_94 = arith.constant 0.000000e+00 : f32
    %182 = vector.broadcast %cst_94 : f32 to vector<16x400xf32>
    %183 = arith.minimumf %179, %182 : vector<16x400xf32>
    %184 = math.exp %183 : vector<16x400xf32>
    %cst_95 = arith.constant 1.000000e+00 : f32
    %185 = vector.broadcast %cst_95 : f32 to vector<16x400xf32>
    %186 = arith.subf %184, %185 : vector<16x400xf32>
    %187 = arith.select %181, %179, %186 : vector<16x400xi1>, vector<16x400xf32>
    %c0_96 = arith.constant 0 : index
    %c0_97 = arith.constant 0 : index
    %188 = vector.load %arg7[%c0_96, %c0_97] : memref<16x1xf32, #tpu.memory_space<vmem>>, vector<16x1xf32>
    %189 = vector.extract_strided_slice %1 {offsets = [0, 100], sizes = [1, 400], strides = [1, 1]} : vector<1x600xf32> to vector<1x400xf32>
    %190 = vector.broadcast %188 : vector<16x1xf32> to vector<16x400xf32>
    %191 = vector.broadcast %189 : vector<1x400xf32> to vector<16x400xf32>
    %192 = arith.mulf %190, %191 : vector<16x400xf32>
    %c0_98 = arith.constant 0 : index
    %c0_99 = arith.constant 0 : index
    %193 = vector.load %arg8[%c0_98, %c0_99] : memref<16x1xf32, #tpu.memory_space<vmem>>, vector<16x1xf32>
    %194 = vector.broadcast %193 : vector<16x1xf32> to vector<16x400xf32>
    %195 = arith.addf %192, %194 : vector<16x400xf32>
    %cst_100 = arith.constant 0.000000e+00 : f32
    %196 = vector.broadcast %cst_100 : f32 to vector<16x400xf32>
    %197 = arith.cmpf ogt, %195, %196 : vector<16x400xf32>
    %cst_101 = arith.constant 0.000000e+00 : f32
    %198 = vector.broadcast %cst_101 : f32 to vector<16x400xf32>
    %199 = arith.minimumf %195, %198 : vector<16x400xf32>
    %200 = math.exp %199 : vector<16x400xf32>
    %cst_102 = arith.constant 1.000000e+00 : f32
    %201 = vector.broadcast %cst_102 : f32 to vector<16x400xf32>
    %202 = arith.subf %200, %201 : vector<16x400xf32>
    %203 = arith.select %197, %195, %202 : vector<16x400xi1>, vector<16x400xf32>
    %204 = arith.addf %203, %187 : vector<16x400xf32>
    %c0_103 = arith.constant 0 : index
    %c0_104 = arith.constant 0 : index
    %c0_105 = arith.constant 0 : index
    %c0_106 = arith.constant 0 : index
    %205 = vector.load %arg13[%c0_103, %c0_104, %c0_105, %c0_106] : memref<1x1x16x400xf32, #tpu.memory_space<vmem>>, vector<1x1x16x400xf32>
    %206 = vector.shape_cast %205 : vector<1x1x16x400xf32> to vector<16x400xf32>
    %207 = vector.shape_cast %204 : vector<16x400xf32> to vector<1x1x16x400xf32>
    tpu.vector_store %arg13[%c0_103, %c0_104, %c0_105, %c0_106], %207 {strides = array<i32>} : memref<1x1x16x400xf32, #tpu.memory_space<vmem>>, vector<1x1x16x400xf32>,
    return
  }
  func.func @transform_0(%arg0: i32, %arg1: i32) -> (i32, i32, i32, i32) {
    %c0_i32 = arith.constant 0 : i32
    %c0_i32_0 = arith.constant 0 : i32
    %c0_i32_1 = arith.constant 0 : i32
    return %arg0, %arg1, %c0_i32, %c0_i32_0 : i32, i32, i32, i32
  }
  func.func @transform_1(%arg0: i32, %arg1: i32) -> (i32, i32, i32) {
    %c0_i32 = arith.constant 0 : i32
    %c0_i32_0 = arith.constant 0 : i32
    %c0_i32_1 = arith.constant 0 : i32
    return %arg1, %c0_i32, %c0_i32_0 : i32, i32, i32
  }
  func.func @transform_2(%arg0: i32, %arg1: i32) -> (i32, i32) {
    %c0_i32 = arith.constant 0 : i32
    %c0_i32_0 = arith.constant 0 : i32
    %c0_i32_1 = arith.constant 0 : i32
    return %c0_i32, %c0_i32_0 : i32, i32
  }
  func.func @transform_3(%arg0: i32, %arg1: i32) -> (i32, i32) {
    %c0_i32 = arith.constant 0 : i32
    %c0_i32_0 = arith.constant 0 : i32
    %c0_i32_1 = arith.constant 0 : i32
    return %c0_i32, %c0_i32_0 : i32, i32
  }
  func.func @transform_4(%arg0: i32, %arg1: i32) -> (i32, i32) {
    %c0_i32 = arith.constant 0 : i32
    %c0_i32_0 = arith.constant 0 : i32
    %c0_i32_1 = arith.constant 0 : i32
    return %c0_i32, %c0_i32_0 : i32, i32
  }
  func.func @transform_5(%arg0: i32, %arg1: i32) -> (i32, i32) {
    %c0_i32 = arith.constant 0 : i32
    %c0_i32_0 = arith.constant 0 : i32
    %c0_i32_1 = arith.constant 0 : i32
    return %c0_i32, %c0_i32_0 : i32, i32
  }
  func.func @transform_6(%arg0: i32, %arg1: i32) -> (i32, i32) {
    %c0_i32 = arith.constant 0 : i32
    %c0_i32_0 = arith.constant 0 : i32
    %c0_i32_1 = arith.constant 0 : i32
    return %c0_i32, %c0_i32_0 : i32, i32
  }
  func.func @transform_7(%arg0: i32, %arg1: i32) -> (i32, i32) {
    %c0_i32 = arith.constant 0 : i32
    %c0_i32_0 = arith.constant 0 : i32
    %c0_i32_1 = arith.constant 0 : i32
    return %c0_i32, %c0_i32_0 : i32, i32
  }
  func.func @transform_8(%arg0: i32, %arg1: i32) -> (i32, i32) {
    %c0_i32 = arith.constant 0 : i32
    %c0_i32_0 = arith.constant 0 : i32
    %c0_i32_1 = arith.constant 0 : i32
    return %c0_i32, %c0_i32_0 : i32, i32
  }
  func.func @transform_9(%arg0: i32, %arg1: i32) -> (i32, i32) {
    %c0_i32 = arith.constant 0 : i32
    %c0_i32_0 = arith.constant 0 : i32
    %c0_i32_1 = arith.constant 0 : i32
    return %c0_i32, %c0_i32_0 : i32, i32
  }
  func.func @transform_10(%arg0: i32, %arg1: i32) -> (i32, i32) {
    %c0_i32 = arith.constant 0 : i32
    %c0_i32_0 = arith.constant 0 : i32
    %c0_i32_1 = arith.constant 0 : i32
    return %c0_i32, %c0_i32_0 : i32, i32
  }
  func.func @transform_11(%arg0: i32, %arg1: i32) -> (i32, i32, i32, i32) {
    %c0_i32 = arith.constant 0 : i32
    %c0_i32_0 = arith.constant 0 : i32
    %c0_i32_1 = arith.constant 0 : i32
    return %arg0, %arg1, %c0_i32, %c0_i32_0 : i32, i32, i32, i32
  }
}

</mosaic_0001>

<llo_original>
// kernel: res_block_forward1.1
$region0: #{res_block_forward1.1}
  #allocation0 [shape = 'u32[]', space=smem, size = 0x4, offset = 0x4, fixed_abs, tag = 'smem constant byte address 0x4 - core index']
  #allocation1 [shape = 'u32[72,128]{1,0:T(1,128)}', space=vmem, size = 0x9000, scoped, tag = 'internal scratch']
  #allocation2 [shape = 'f32[4,2056]{1,0:T(4,128)}', space=vmem, size = 0x8800, scoped, tag = 'scratch operand']
  #allocation3 [shape = 'f32[1,1]{1,0:T(1,128)S(1)}', space=vmem, size = 0x200, scoped, tag = 'scoped memory for res_block_forward1.1']
  %s0 = inlined_call_operand.vmem [shape: f32[2,2,1,600], index: 0, kind: input, shape index: {}]
  %s1 = inlined_call_operand.vmem [shape: f32[2,1,600], index: 1, kind: input, shape index: {}]
  %s2 = inlined_call_operand.vmem [shape: f32[16,1], index: 2, kind: input, shape index: {}]
  %s3 = inlined_call_operand.vmem [shape: f32[16,1], index: 3, kind: input, shape index: {}]
  %s4 = inlined_call_operand.<no memory space> [shape: f32[1,1], index: 4, kind: input, shape index: {}]
  %s5 = inlined_call_operand.vmem [shape: f32[16,1], index: 5, kind: input, shape index: {}]
  %s6 = inlined_call_operand.vmem [shape: f32[16,1], index: 6, kind: input, shape index: {}]
  %s7 = inlined_call_operand.vmem [shape: f32[4,108], index: 7, kind: input, shape index: {}]
  %s8 = inlined_call_operand.vmem [shape: f32[4,1], index: 8, kind: input, shape index: {}]
  %s9 = inlined_call_operand.vmem [shape: f32[16,16], index: 9, kind: input, shape index: {}]
  %s10 = inlined_call_operand.vmem [shape: f32[16,1], index: 10, kind: input, shape index: {}]
  %s11 = inlined_call_operand.vmem [shape: f32[2,2,16,400], index: 11, kind: output, shape index: {}]
  %s12 = sld [smem:[#allocation0]]
  $region77: #{res_block_forward1.1} parent=0
    _
  %s14 = ssub.s32 1, %s12
  %s15 = scalar_select 0, %s14, %s12
  %v16 = vstv %s4
  %17 = vst [vmem:[#allocation3] sm:$0x1] %v16
  loop: start=0, step=1, limit=6
  $region2: #{res_block_forward1.1} parent=0 // loop_pre_header
    _
  $region3: #{res_block_forward1.1} parent=0 // loop_header
    %s19 = sphi 0, %s23
    %p20 = scmp.ge.s32.totalorder %s19, 6
    %s26 = sphi 0, %s38
    %s27 = sphi 0, %s34
    %s28 = sphi 0, %s26
    %s29 = sphi 0, %s27
    %s30 = sphi 0, %s28
    %s31 = sphi 0, %s29
    %s43 = sphi 0, %s45
    %s46 = sphi 0, %s43
    %s47 = sphi 0, %s46
    %s63 = sphi 0, %s47
    %s69 = sphi 0, %s71
    %s72 = sphi 0, %s69
    %s73 = sphi 0, %s72
    %s89 = sphi 0, %s73
    %s93 = sphi 0, %s93
    %s95 = sphi 0, %s93
    %s96 = sphi 0, %s95
    %s110 = sphi 0, %s96
    %s114 = sphi 0, %s114
    %s116 = sphi 0, %s114
    %s117 = sphi 0, %s116
    %s131 = sphi 0, %s117
    %s135 = sphi 0, %s135
    %s137 = sphi 0, %s135
    %s138 = sphi 0, %s137
    %s152 = sphi 0, %s138
    %s156 = sphi 0, %s156
    %s158 = sphi 0, %s156
    %s159 = sphi 0, %s158
    %s173 = sphi 0, %s159
    %s177 = sphi 0, %s177
    %s179 = sphi 0, %s177
    %s180 = sphi 0, %s179
    %s194 = sphi 0, %s180
    %s198 = sphi 0, %s198
    %s200 = sphi 0, %s198
    %s201 = sphi 0, %s200
    %s215 = sphi 0, %s201
    %s219 = sphi 0, %s219
    %s221 = sphi 0, %s219
    %s222 = sphi 0, %s221
    %s236 = sphi 0, %s222
    %s240 = sphi 0, %s240
    %s242 = sphi 0, %s240
    %s243 = sphi 0, %s242
    %s257 = sphi 0, %s243
    %s261 = sphi 0, %s261
    %s263 = sphi 0, %s261
    %s264 = sphi 0, %s263
    %s278 = sphi 0, %s264
    %s286 = sphi 0, %s288
    %s289 = sphi 0, %s286
    %s290 = sphi 0, %s289
    %s306 = sphi 0, %s290
  $region4: #{res_block_forward1.1} parent=0 // loop_header_branch
    %22 = sbr.rel (%p20) target = $region8
  $region5: #{res_block_forward1.1} parent=0 // loop_body
    %s24 = ssub.s32 %s19, 1
    %s25 = ssub.s32 %s19, 2
    %s32 = sadd.s32 1, %s27
    %p33 = scmp.ge.s32.totalorder %s32, 2
    %s34 = scalar_select %p33, 0, %s32
    %s35 = sadd.s32 1, %s26
    %s36 = scalar_select %p33, %s35, %s26
    %p37 = scmp.ge.s32.totalorder %s36, 2
    %s38 = scalar_select %p37, 0, %s36
    %s39 = ssub.s32 %s26, %s38
    %s40 = ssub.s32 %s27, %s34
    %s41 = sor.u32 %s39, %s40
    %p42 = scmp.eq.s32.totalorder %s41, 0
    %s44 = sadd.s32 %s43, 1
    %s45 = scalar_select %p42, %s43, %s44
    %p48 = pneg %p42
    %p49 = scmp.eq.s32.totalorder %s19, 3
    %p50 = por %p48, %p49
    %p51 = scmp.ne.s32.totalorder %s43, %s46
    %p52 = scmp.eq.s32.totalorder %s19, 0
    %p53 = por %p51, %p52
    %p54 = scmp.ne.s32.totalorder %s43, %s46
    %p55 = scmp.eq.s32.totalorder %s24, 3
    %p56 = por %p54, %p55
    %p57 = scmp.ne.s32.totalorder %s46, %s47
    %p58 = scmp.eq.s32.totalorder %s24, 0
    %p59 = por %p57, %p58
    %p60 = scmp.ne.s32.totalorder %s46, %s47
    %p61 = scmp.eq.s32.totalorder %s25, 3
    %p62 = por %p60, %p61
    %p64 = scmp.ne.s32.totalorder %s47, %s63
    %p65 = scmp.eq.s32.totalorder %s25, 0
    %p66 = por %p64, %p65
    %s67 = ssub.s32 %s27, %s34
    %p68 = scmp.eq.s32.totalorder %s67, 0
    %s70 = sadd.s32 %s69, 1
    %s71 = scalar_select %p68, %s69, %s70
    %p74 = pneg %p68
    %p75 = scmp.eq.s32.totalorder %s19, 3
    %p76 = por %p74, %p75
    %p77 = scmp.ne.s32.totalorder %s69, %s72
    %p78 = scmp.eq.s32.totalorder %s19, 0
    %p79 = por %p77, %p78
    %p80 = scmp.ne.s32.totalorder %s69, %s72
    %p81 = scmp.eq.s32.totalorder %s24, 3
    %p82 = por %p80, %p81
    %p83 = scmp.ne.s32.totalorder %s72, %s73
    %p84 = scmp.eq.s32.totalorder %s24, 0
    %p85 = por %p83, %p84
    %p86 = scmp.ne.s32.totalorder %s72, %s73
    %p87 = scmp.eq.s32.totalorder %s25, 3
    %p88 = por %p86, %p87
    %p90 = scmp.ne.s32.totalorder %s73, %s89
    %p91 = scmp.eq.s32.totalorder %s25, 0
    %p92 = por %p90, %p91
    %s94 = sadd.s32 %s93, 1
    %p97 = scmp.eq.s32.totalorder %s19, 3
    %p98 = scmp.ne.s32.totalorder %s93, %s95
    %p99 = scmp.eq.s32.totalorder %s19, 0
    %p100 = por %p98, %p99
    %p101 = scmp.ne.s32.totalorder %s93, %s95
    %p102 = scmp.eq.s32.totalorder %s24, 3
    %p103 = por %p101, %p102
    %p104 = scmp.ne.s32.totalorder %s95, %s96
    %p105 = scmp.eq.s32.totalorder %s24, 0
    %p106 = por %p104, %p105
    %p107 = scmp.ne.s32.totalorder %s95, %s96
    %p108 = scmp.eq.s32.totalorder %s25, 3
    %p109 = por %p107, %p108
    %p111 = scmp.ne.s32.totalorder %s96, %s110
    %p112 = scmp.eq.s32.totalorder %s25, 0
    %p113 = por %p111, %p112
    %s115 = sadd.s32 %s114, 1
    %p118 = scmp.eq.s32.totalorder %s19, 3
    %p119 = scmp.ne.s32.totalorder %s114, %s116
    %p120 = scmp.eq.s32.totalorder %s19, 0
    %p121 = por %p119, %p120
    %p122 = scmp.ne.s32.totalorder %s114, %s116
    %p123 = scmp.eq.s32.totalorder %s24, 3
    %p124 = por %p122, %p123
    %p125 = scmp.ne.s32.totalorder %s116, %s117
    %p126 = scmp.eq.s32.totalorder %s24, 0
    %p127 = por %p125, %p126
    %p128 = scmp.ne.s32.totalorder %s116, %s117
    %p129 = scmp.eq.s32.totalorder %s25, 3
    %p130 = por %p128, %p129
    %p132 = scmp.ne.s32.totalorder %s117, %s131
    %p133 = scmp.eq.s32.totalorder %s25, 0
    %p134 = por %p132, %p133
    %s136 = sadd.s32 %s135, 1
    %p139 = scmp.eq.s32.totalorder %s19, 3
    %p140 = scmp.ne.s32.totalorder %s135, %s137
    %p141 = scmp.eq.s32.totalorder %s19, 0
    %p142 = por %p140, %p141
    %p143 = scmp.ne.s32.totalorder %s135, %s137
    %p144 = scmp.eq.s32.totalorder %s24, 3
    %p145 = por %p143, %p144
    %p146 = scmp.ne.s32.totalorder %s137, %s138
    %p147 = scmp.eq.s32.totalorder %s24, 0
    %p148 = por %p146, %p147
    %p149 = scmp.ne.s32.totalorder %s137, %s138
    %p150 = scmp.eq.s32.totalorder %s25, 3
    %p151 = por %p149, %p150
    %p153 = scmp.ne.s32.totalorder %s138, %s152
    %p154 = scmp.eq.s32.totalorder %s25, 0
    %p155 = por %p153, %p154
    %s157 = sadd.s32 %s156, 1
    %p160 = scmp.eq.s32.totalorder %s19, 3
    %p161 = scmp.ne.s32.totalorder %s156, %s158
    %p162 = scmp.eq.s32.totalorder %s19, 0
    %p163 = por %p161, %p162
    %p164 = scmp.ne.s32.totalorder %s156, %s158
    %p165 = scmp.eq.s32.totalorder %s24, 3
    %p166 = por %p164, %p165
    %p167 = scmp.ne.s32.totalorder %s158, %s159
    %p168 = scmp.eq.s32.totalorder %s24, 0
    %p169 = por %p167, %p168
    %p170 = scmp.ne.s32.totalorder %s158, %s159
    %p171 = scmp.eq.s32.totalorder %s25, 3
    %p172 = por %p170, %p171
    %p174 = scmp.ne.s32.totalorder %s159, %s173
    %p175 = scmp.eq.s32.totalorder %s25, 0
    %p176 = por %p174, %p175
    %s178 = sadd.s32 %s177, 1
    %p181 = scmp.eq.s32.totalorder %s19, 3
    %p182 = scmp.ne.s32.totalorder %s177, %s179
    %p183 = scmp.eq.s32.totalorder %s19, 0
    %p184 = por %p182, %p183
    %p185 = scmp.ne.s32.totalorder %s177, %s179
    %p186 = scmp.eq.s32.totalorder %s24, 3
    %p187 = por %p185, %p186
    %p188 = scmp.ne.s32.totalorder %s179, %s180
    %p189 = scmp.eq.s32.totalorder %s24, 0
    %p190 = por %p188, %p189
    %p191 = scmp.ne.s32.totalorder %s179, %s180
    %p192 = scmp.eq.s32.totalorder %s25, 3
    %p193 = por %p191, %p192
    %p195 = scmp.ne.s32.totalorder %s180, %s194
    %p196 = scmp.eq.s32.totalorder %s25, 0
    %p197 = por %p195, %p196
    %s199 = sadd.s32 %s198, 1
    %p202 = scmp.eq.s32.totalorder %s19, 3
    %p203 = scmp.ne.s32.totalorder %s198, %s200
    %p204 = scmp.eq.s32.totalorder %s19, 0
    %p205 = por %p203, %p204
    %p206 = scmp.ne.s32.totalorder %s198, %s200
    %p207 = scmp.eq.s32.totalorder %s24, 3
    %p208 = por %p206, %p207
    %p209 = scmp.ne.s32.totalorder %s200, %s201
    %p210 = scmp.eq.s32.totalorder %s24, 0
    %p211 = por %p209, %p210
    %p212 = scmp.ne.s32.totalorder %s200, %s201
    %p213 = scmp.eq.s32.totalorder %s25, 3
    %p214 = por %p212, %p213
    %p216 = scmp.ne.s32.totalorder %s201, %s215
    %p217 = scmp.eq.s32.totalorder %s25, 0
    %p218 = por %p216, %p217
    %s220 = sadd.s32 %s219, 1
    %p223 = scmp.eq.s32.totalorder %s19, 3
    %p224 = scmp.ne.s32.totalorder %s219, %s221
    %p225 = scmp.eq.s32.totalorder %s19, 0
    %p226 = por %p224, %p225
    %p227 = scmp.ne.s32.totalorder %s219, %s221
    %p228 = scmp.eq.s32.totalorder %s24, 3
    %p229 = por %p227, %p228
    %p230 = scmp.ne.s32.totalorder %s221, %s222
    %p231 = scmp.eq.s32.totalorder %s24, 0
    %p232 = por %p230, %p231
    %p233 = scmp.ne.s32.totalorder %s221, %s222
    %p234 = scmp.eq.s32.totalorder %s25, 3
    %p235 = por %p233, %p234
    %p237 = scmp.ne.s32.totalorder %s222, %s236
    %p238 = scmp.eq.s32.totalorder %s25, 0
    %p239 = por %p237, %p238
    %s241 = sadd.s32 %s240, 1
    %p244 = scmp.eq.s32.totalorder %s19, 3
    %p245 = scmp.ne.s32.totalorder %s240, %s242
    %p246 = scmp.eq.s32.totalorder %s19, 0
    %p247 = por %p245, %p246
    %p248 = scmp.ne.s32.totalorder %s240, %s242
    %p249 = scmp.eq.s32.totalorder %s24, 3
    %p250 = por %p248, %p249
    %p251 = scmp.ne.s32.totalorder %s242, %s243
    %p252 = scmp.eq.s32.totalorder %s24, 0
    %p253 = por %p251, %p252
    %p254 = scmp.ne.s32.totalorder %s242, %s243
    %p255 = scmp.eq.s32.totalorder %s25, 3
    %p256 = por %p254, %p255
    %p258 = scmp.ne.s32.totalorder %s243, %s257
    %p259 = scmp.eq.s32.totalorder %s25, 0
    %p260 = por %p258, %p259
    %s262 = sadd.s32 %s261, 1
    %p265 = scmp.eq.s32.totalorder %s19, 3
    %p266 = scmp.ne.s32.totalorder %s261, %s263
    %p267 = scmp.eq.s32.totalorder %s19, 0
    %p268 = por %p266, %p267
    %p269 = scmp.ne.s32.totalorder %s261, %s263
    %p270 = scmp.eq.s32.totalorder %s24, 3
    %p271 = por %p269, %p270
    %p272 = scmp.ne.s32.totalorder %s263, %s264
    %p273 = scmp.eq.s32.totalorder %s24, 0
    %p274 = por %p272, %p273
    %p275 = scmp.ne.s32.totalorder %s263, %s264
    %p276 = scmp.eq.s32.totalorder %s25, 3
    %p277 = por %p275, %p276
    %p279 = scmp.ne.s32.totalorder %s264, %s278
    %p280 = scmp.eq.s32.totalorder %s25, 0
    %p281 = por %p279, %p280
    %s282 = ssub.s32 %s26, %s38
    %s283 = ssub.s32 %s27, %s34
    %s284 = sor.u32 %s282, %s283
    %p285 = scmp.eq.s32.totalorder %s284, 0
    %s287 = sadd.s32 %s286, 1
    %s288 = scalar_select %p285, %s286, %s287
    %p291 = pneg %p285
    %p292 = scmp.eq.s32.totalorder %s19, 3
    %p293 = por %p291, %p292
    %p294 = scmp.ne.s32.totalorder %s286, %s289
    %p295 = scmp.eq.s32.totalorder %s19, 0
    %p296 = por %p294, %p295
    %p297 = scmp.ne.s32.totalorder %s286, %s289
    %p298 = scmp.eq.s32.totalorder %s24, 3
    %p299 = por %p297, %p298
    %p300 = scmp.ne.s32.totalorder %s289, %s290
    %p301 = scmp.eq.s32.totalorder %s24, 0
    %p302 = por %p300, %p301
    %p303 = scmp.ne.s32.totalorder %s289, %s290
    %p304 = scmp.eq.s32.totalorder %s25, 3
    %p305 = por %p303, %p304
    %p307 = scmp.ne.s32.totalorder %s290, %s306
    %p308 = scmp.eq.s32.totalorder %s25, 0
    %p309 = por %p307, %p308
    %p310 = scmp.le.s32.totalorder 1, %s19
    %p311 = scmp.lt.s32.totalorder %s19, 5
    %p312 = pnand %p310, %p311
    %p313 = pneg %p312
    // Predicated region
    $region9: #{res_block_forward1.1} parent=5 // pred_check
      _
    $region10: #{res_block_forward1.1} parent=5 // pred_check_branch
      %315 = sbr.rel (%p312) target = $region12
    $region11: #{res_block_forward1.1} parent=5 // pred_region
      %s316 = ssub.s32 %s19, 1
      // Predicated region
      $region13: #{res_block_forward1.1} parent=11 // pred_check
        %p317 = pneg %p106
      $region14: #{res_block_forward1.1} parent=11 // pred_check_branch
        %319 = sbr.rel (%p317) target = $region16
      $region15: #{res_block_forward1.1} parent=11 // pred_region
        _
      $region16: #{res_block_forward1.1} parent=11 // pred_fallthru
        _
      // Predicated region
      $region17: #{res_block_forward1.1} parent=11 // pred_check
        %p320 = pneg %p127
      $region18: #{res_block_forward1.1} parent=11 // pred_check_branch
        %322 = sbr.rel (%p320) target = $region20
      $region19: #{res_block_forward1.1} parent=11 // pred_region
        _
      $region20: #{res_block_forward1.1} parent=11 // pred_fallthru
        _
      // Predicated region
      $region21: #{res_block_forward1.1} parent=11 // pred_check
        %p323 = pneg %p148
      $region22: #{res_block_forward1.1} parent=11 // pred_check_branch
        %325 = sbr.rel (%p323) target = $region24
      $region23: #{res_block_forward1.1} parent=11 // pred_region
        _
      $region24: #{res_block_forward1.1} parent=11 // pred_fallthru
        _
      // Predicated region
      $region25: #{res_block_forward1.1} parent=11 // pred_check
        %p326 = pneg %p169
      $region26: #{res_block_forward1.1} parent=11 // pred_check_branch
        %328 = sbr.rel (%p326) target = $region28
      $region27: #{res_block_forward1.1} parent=11 // pred_region
        _
      $region28: #{res_block_forward1.1} parent=11 // pred_fallthru
        _
      // Predicated region
      $region29: #{res_block_forward1.1} parent=11 // pred_check
        %p329 = pneg %p190
      $region30: #{res_block_forward1.1} parent=11 // pred_check_branch
        %331 = sbr.rel (%p329) target = $region32
      $region31: #{res_block_forward1.1} parent=11 // pred_region
        _
      $region32: #{res_block_forward1.1} parent=11 // pred_fallthru
        _
      // Predicated region
      $region33: #{res_block_forward1.1} parent=11 // pred_check
        %p332 = pneg %p211
      $region34: #{res_block_forward1.1} parent=11 // pred_check_branch
        %334 = sbr.rel (%p332) target = $region36
      $region35: #{res_block_forward1.1} parent=11 // pred_region
        _
      $region36: #{res_block_forward1.1} parent=11 // pred_fallthru
        _
      // Predicated region
      $region37: #{res_block_forward1.1} parent=11 // pred_check
        %p335 = pneg %p232
      $region38: #{res_block_forward1.1} parent=11 // pred_check_branch
        %337 = sbr.rel (%p335) target = $region40
      $region39: #{res_block_forward1.1} parent=11 // pred_region
        _
      $region40: #{res_block_forward1.1} parent=11 // pred_fallthru
        _
      // Predicated region
      $region41: #{res_block_forward1.1} parent=11 // pred_check
        %p338 = pneg %p253
      $region42: #{res_block_forward1.1} parent=11 // pred_check_branch
        %340 = sbr.rel (%p338) target = $region44
      $region43: #{res_block_forward1.1} parent=11 // pred_region
        _
      $region44: #{res_block_forward1.1} parent=11 // pred_fallthru
        _
      // Predicated region
      $region45: #{res_block_forward1.1} parent=11 // pred_check
        %p341 = pneg %p274
      $region46: #{res_block_forward1.1} parent=11 // pred_check_branch
        %343 = sbr.rel (%p341) target = $region48
      $region47: #{res_block_forward1.1} parent=11 // pred_region
        _
      $region48: #{res_block_forward1.1} parent=11 // pred_fallthru
        _
    $region12: #{res_block_forward1.1} parent=5 // pred_fallthru
      _
    %p344 = scmp.lt.s32.totalorder %s19, 4
    // Predicated region
    $region49: #{res_block_forward1.1} parent=5 // pred_check
      %p345 = pneg %p344
    $region50: #{res_block_forward1.1} parent=5 // pred_check_branch
      %347 = sbr.rel (%p345) target = $region52
    $region51: #{res_block_forward1.1} parent=5 // pred_region
      // Predicated region
      $region53: #{res_block_forward1.1} parent=51 // pred_check
        %p348 = pneg %p53
      $region54: #{res_block_forward1.1} parent=51 // pred_check_branch
        %350 = sbr.rel (%p348) target = $region56
      $region55: #{res_block_forward1.1} parent=51 // pred_region
        %p351 = scmp.lt.s32.totalorder %s26, 1
        %s352 = scalar_select %p351, %s26, 1
        %p353 = scmp.lt.s32.totalorder %s27, 1
        %s354 = scalar_select %p353, %s27, 1
        %s355 = smul.addr %s354, 5
        %s356 = smul.addr %s352, 10
        %s357 = sadd.s32 %s355, %s356
        %s358 = scalar_lea.vmem %s0, %s357
      $region56: #{res_block_forward1.1} parent=51 // pred_fallthru
        _
      // Predicated region
      $region57: #{res_block_forward1.1} parent=51 // pred_check
        %p359 = pneg %p79
      $region58: #{res_block_forward1.1} parent=51 // pred_check_branch
        %361 = sbr.rel (%p359) target = $region60
      $region59: #{res_block_forward1.1} parent=51 // pred_region
        %p362 = scmp.lt.s32.totalorder %s27, 1
        %s363 = scalar_select %p362, %s27, 1
        %s364 = smul.addr %s363, 5
        %s365 = scalar_lea.vmem %s1, %s364
      $region60: #{res_block_forward1.1} parent=51 // pred_fallthru
        _
    $region52: #{res_block_forward1.1} parent=5 // pred_fallthru
      _
    %p366 = scmp.le.s32.totalorder 1, %s19
    %p367 = scmp.lt.s32.totalorder %s19, 5
    %p368 = pnand %p366, %p367
    %p369 = pneg %p368
    // Predicated region
    $region61: #{res_block_forward1.1} parent=5 // pred_check
      _
    $region62: #{res_block_forward1.1} parent=5 // pred_check_branch
      %371 = sbr.rel (%p368) target = $region64
    $region63: #{res_block_forward1.1} parent=5 // pred_region
      %s372 = ssub.s32 %s19, 1
      %p373 = scmp.lt.s32.totalorder %s28, 1
      %s374 = scalar_select %p373, %s28, 1
      %p375 = scmp.lt.s32.totalorder %s29, 1
      %s376 = scalar_select %p375, %s29, 1
      %s377 = smul.addr %s376, 5
      %s378 = smul.addr %s374, 10
      %s379 = sadd.s32 %s377, %s378
      %s380 = scalar_lea.vmem %s0, %s379
      %p381 = pneg %p59
      %p382 = pneg %p56
      %p383 = scmp.lt.s32.totalorder %s29, 1
      %s384 = scalar_select %p383, %s29, 1
      %s385 = smul.addr %s384, 5
      %s386 = scalar_lea.vmem %s1, %s385
      %p387 = pneg %p85
      %p388 = pneg %p82
      %p389 = pneg %p106
      %p390 = pneg %p103
      %p391 = pneg %p127
      %p392 = pneg %p124
      %p393 = pneg %p148
      %p394 = pneg %p145
      %p395 = pneg %p169
      %p396 = pneg %p166
      %p397 = pneg %p190
      %p398 = pneg %p187
      %p399 = pneg %p211
      %p400 = pneg %p208
      %p401 = pneg %p232
      %p402 = pneg %p229
      %p403 = pneg %p253
      %p404 = pneg %p250
      %p405 = pneg %p274
      %p406 = pneg %p271
      %p407 = pneg %p302
      %p408 = pneg %p299
      %p409 = scmp.lt.s32.totalorder %s28, 1
      %s410 = scalar_select %p409, %s28, 1
      %p411 = scmp.lt.s32.totalorder %s29, 1
      %s412 = scalar_select %p411, %s29, 1
      %s413 = smul.addr %s412, 8
      %s414 = smul.addr %s410, 16
      %s415 = sadd.s32 %s413, %s414
      %s416 = smul.addr %s415, 8
      %s417 = scalar_lea.vmem %s11, %s416
      %p418 = scmp.lt.s32.totalorder %s28, 1
      %s419 = scalar_select %p418, %s28, 1
      %p420 = scmp.lt.s32.totalorder %s29, 1
      %s421 = scalar_select %p420, %s29, 1
      %s422 = smul.addr %s421, 5
      %s423 = smul.addr %s419, 10
      %s424 = sadd.s32 %s422, %s423
      %s425 = scalar_lea.vmem %s0, %s424
      %p426 = scmp.lt.s32.totalorder %s29, 1
      %s427 = scalar_select %p426, %s29, 1
      %s428 = smul.addr %s427, 5
      %s429 = scalar_lea.vmem %s1, %s428
      %p430 = scmp.lt.s32.totalorder %s28, 1
      %s431 = scalar_select %p430, %s28, 1
      %p432 = scmp.lt.s32.totalorder %s29, 1
      %s433 = scalar_select %p432, %s29, 1
      %s434 = smul.addr %s433, 8
      %s435 = smul.addr %s431, 16
      %s436 = sadd.s32 %s434, %s435
      %s437 = smul.addr %s436, 8
      %s438 = scalar_lea.vmem %s11, %s437
      %v439 = vld [vmem:[%s425] sm:$0x1f]
      %v440 = vld [vmem:[%s429] sm:$0x1f]
      %vm441 = vcmp.gt.f32.partialorder %v440, 0.0
      %v442 = vld [vmem:[#allocation3] sm:$0x1]
      %v443 = vld [vmem:[%s2] sm:$0xff]
      %v444 = vld [vmem:[%s2 + $0x8] sm:$0xff]
      %446 = vset.pattern.permute.xlu0 0
      %447 = vperm.xlu0 %446, %v443
      %v448 = vpop.permute.xlu0 %447
      %451 = vset.pattern.permute.xlu0 0
      %452 = vperm.xlu0 %451, %v444
      %v453 = vpop.permute.xlu0 %452
      %v456 = vperm.slane %v439, 0
      %v457 = vperm.slane %v439, 1
      %v458 = vperm.slane %v439, 2
      %v459 = vperm.slane %v439, 3
      %v460 = vperm.slane %v439, 4
      %v466 = vmul.f32 %v448, %v456
      %v467 = vmul.f32 %v448, %v457
      %v468 = vmul.f32 %v448, %v458
      %v469 = vmul.f32 %v448, %v459
      %v470 = vmul.f32 %v448, %v460
      %v471 = vmul.f32 %v453, %v456
      %v472 = vmul.f32 %v453, %v457
      %v473 = vmul.f32 %v453, %v458
      %v474 = vmul.f32 %v453, %v459
      %v475 = vmul.f32 %v453, %v460
      %v476 = vld [vmem:[%s3] sm:$0xff]
      %v477 = vld [vmem:[%s3 + $0x8] sm:$0xff]
      %479 = vset.pattern.permute.xlu0 0
      %480 = vperm.xlu0 %479, %v476
      %v481 = vpop.permute.xlu0 %480
      %484 = vset.pattern.permute.xlu0 0
      %485 = vperm.xlu0 %484, %v477
      %v486 = vpop.permute.xlu0 %485
      %v488 = vadd.f32 %v466, %v481
      %v489 = vadd.f32 %v467, %v481
      %v490 = vadd.f32 %v468, %v481
      %v491 = vadd.f32 %v469, %v481
      %v492 = vadd.f32 %v470, %v481
      %v493 = vadd.f32 %v471, %v486
      %v494 = vadd.f32 %v472, %v486
      %v495 = vadd.f32 %v473, %v486
      %v496 = vadd.f32 %v474, %v486
      %v497 = vadd.f32 %v475, %v486
      %vm498 = vcmp.ge.f32.partialorder %v488, 0.0
      %vm499 = vcmp.ge.f32.partialorder %v489, 0.0
      %vm500 = vcmp.ge.f32.partialorder %v490, 0.0
      %vm501 = vcmp.ge.f32.partialorder %v491, 0.0
      %vm502 = vcmp.ge.f32.partialorder %v492, 0.0
      %vm503 = vcmp.ge.f32.partialorder %v493, 0.0
      %vm504 = vcmp.ge.f32.partialorder %v494, 0.0
      %vm505 = vcmp.ge.f32.partialorder %v495, 0.0
      %vm506 = vcmp.ge.f32.partialorder %v496, 0.0
      %vm507 = vcmp.ge.f32.partialorder %v497, 0.0
      %v509 = vperm.slane %v442, 0
      %510 = vset.pattern.permute.xlu0 0
      %511 = vperm.xlu0 %510, %v509
      %v512 = vpop.permute.xlu0 %511
      %v514 = vmul.f32 %v512, %v488
      %v515 = vmul.f32 %v512, %v489
      %v516 = vmul.f32 %v512, %v490
      %v517 = vmul.f32 %v512, %v491
      %v518 = vmul.f32 %v512, %v492
      %v519 = vmul.f32 %v512, %v493
      %v520 = vmul.f32 %v512, %v494
      %v521 = vmul.f32 %v512, %v495
      %v522 = vmul.f32 %v512, %v496
      %v523 = vmul.f32 %v512, %v497
      %v524 = vsel %vm498, %v488, %v514
      %v525 = vsel %vm499, %v489, %v515
      %v526 = vsel %vm500, %v490, %v516
      %v527 = vsel %vm501, %v491, %v517
      %v528 = vsel %vm502, %v492, %v518
      %v529 = vsel %vm503, %v493, %v519
      %v530 = vsel %vm504, %v494, %v520
      %v531 = vsel %vm505, %v495, %v521
      %v532 = vsel %vm506, %v496, %v522
      %v533 = vsel %vm507, %v497, %v523
      %v534 = vsel %vm441, 1, 0
      %v535 = vperm.slane %v534, 0
      %v536 = vperm.slane %v534, 1
      %v537 = vperm.slane %v534, 2
      %v538 = vperm.slane %v534, 3
      %v539 = vperm.slane %v534, 4
      %vm540 = vcmp.eq.s32.totalorder %v535, 1
      %vm541 = vcmp.eq.s32.totalorder %v536, 1
      %vm542 = vcmp.eq.s32.totalorder %v537, 1
      %vm543 = vcmp.eq.s32.totalorder %v538, 1
      %vm544 = vcmp.eq.s32.totalorder %v539, 1
      %v545 = vsel %vm540, %v524, 0.0
      %v546 = vsel %vm541, %v525, 0.0
      %v547 = vsel %vm542, %v526, 0.0
      %v548 = vsel %vm543, %v527, 0.0
      %v549 = vsel %vm544, %v528, 0.0
      %v555 = vrot.slane %v529, 4
      %v556 = vrot.slane %v530, 4
      %v557 = vrot.slane %v531, 4
      %v558 = vrot.slane %v532, 4
      %v559 = vrot.slane %v533, 4
      %v565 = vadd.f32 %v524, %v555
      %v566 = vadd.f32 %v525, %v556
      %v567 = vadd.f32 %v526, %v557
      %v568 = vadd.f32 %v527, %v558
      %v569 = vadd.f32 %v528, %v559
      %v570 = vsel %vm540, %v565, 0.0
      %v571 = vsel %vm541, %v566, 0.0
      %v572 = vsel %vm542, %v567, 0.0
      %v573 = vsel %vm543, %v568, 0.0
      %v574 = vsel %vm544, %v569, 0.0
      %v575 = vadd.f32 %v529, %v555
      %v576 = vadd.f32 %v530, %v556
      %v577 = vadd.f32 %v531, %v557
      %v578 = vadd.f32 %v532, %v558
      %v579 = vadd.f32 %v533, %v559
      %v580 = vsel %vm540, %v575, 0.0
      %v581 = vsel %vm541, %v576, 0.0
      %v582 = vsel %vm542, %v577, 0.0
      %v583 = vsel %vm543, %v578, 0.0
      %v584 = vsel %vm544, %v579, 0.0
      %585 = vst [vmem:[#allocation2] sm:$0xf] 0.0
      %vm586 = vcmask 1043520
      %vm587 = vcmask 64516
      %vm588 = vmor %vm587, %vm586
      %589 = vst.msk [vmem:[#allocation2 + $0x3c] sm:$0xff] %vm588, 0.0
      %595 = vst.sshfl [vmem:[#allocation1] sm:$0xff pattern:$0x75316420] %v545
      %596 = vst.sshfl [vmem:[#allocation1 + $0x8] sm:$0xff pattern:$0x75316420] %v546
      %597 = vst.sshfl [vmem:[#allocation1 + $0x10] sm:$0xff pattern:$0x75316420] %v547
      %598 = vst.sshfl [vmem:[#allocation1 + $0x18] sm:$0xff pattern:$0x75316420] %v548
      %599 = vst.sshfl [vmem:[#allocation1 + $0x20] sm:$0xff pattern:$0x75316420] %v549
      %s600 = scalar_lea.vmem [#allocation1], 1
      %v601 = vld [vmem:[%s600] ss:$2 sm:$0xff]
      %s602 = scalar_lea.vmem [#allocation1], 17
      %v603 = vld [vmem:[%s602] ss:$2 sm:$0xff]
      %s604 = scalar_lea.vmem [#allocation1], 33
      %v605 = vld [vmem:[%s604] ss:$2 sm:$0xff]
      %609 = vst [vmem:[#allocation2 + $0x4] sm:$0xff] %v601
      %610 = vst [vmem:[#allocation2 + $0xc] sm:$0xff] %v603
      %vm611 = vcmask 715776
      %612 = vst.msk [vmem:[#allocation2 + $0x14] sm:$0xf] %vm611, %v605
      %618 = vst.sshfl [vmem:[#allocation1] sm:$0xff pattern:$0x75316420] %v570
      %619 = vst.sshfl [vmem:[#allocation1 + $0x8] sm:$0xff pattern:$0x75316420] %v571
      %620 = vst.sshfl [vmem:[#allocation1 + $0x10] sm:$0xff pattern:$0x75316420] %v572
      %621 = vst.sshfl [vmem:[#allocation1 + $0x18] sm:$0xff pattern:$0x75316420] %v573
      %622 = vst.sshfl [vmem:[#allocation1 + $0x20] sm:$0xff pattern:$0x75316420] %v574
      %s623 = scalar_lea.vmem [#allocation1], 1
      %v624 = vld [vmem:[%s623] ss:$2 sm:$0xff]
      %s625 = scalar_lea.vmem [#allocation1], 17
      %v626 = vld [vmem:[%s625] ss:$2 sm:$0xff]
      %s627 = scalar_lea.vmem [#allocation1], 33
      %v628 = vld [vmem:[%s627] ss:$2 sm:$0xff]
      %629 = vrot.lane.b32.xlu0 %v624, 88
      %v630 = vpop.permute.xlu0 %629
      %631 = vrot.lane.b32.xlu0 %v626, 88
      %v632 = vpop.permute.xlu0 %631
      %633 = vrot.lane.b32.xlu0 %v628, 88
      %v634 = vpop.permute.xlu0 %633
      %v635 = vrot.slane %v630, 4
      %v636 = vrot.slane %v632, 4
      %v637 = vrot.slane %v634, 4
      %vm638 = vcmask 719872
      %v639 = vsel %vm638, %v635, %v630
      %vm640 = vcmask 1043456
      %v641 = vsel %vm640, %v635, %v636
      %v642 = vsel %vm638, %v641, %v632
      %v643 = vsel %vm640, %v636, %v637
      %v644 = vsel %vm638, %v643, %v634
      %vm648 = vcmask 1044160
      %vm649 = vcmask 1047556
      %vm650 = vmor %vm649, %vm648
      %651 = vst.msk [vmem:[#allocation2 + $0x14] sm:$0xff] %vm650, %v639
      %652 = vst [vmem:[#allocation2 + $0x1c] sm:$0xff] %v642
      %vm653 = vcmask 392196
      %vm654 = vmor %vm653, %vm640
      %655 = vst.msk [vmem:[#allocation2 + $0x24] sm:$0xff] %vm654, %v644
      %v661 = vrot.slane %v581, 4
      %v662 = vrot.slane %v583, 4
      %v663 = vsel %vm640, %v580, %v661
      %v664 = vsel %vm640, %v582, %v662
      %665 = vrot.lane.b32.xlu0 %v663, 48
      %v666 = vpop.permute.xlu0 %665
      %667 = vrot.lane.b32.xlu0 %v664, 48
      %v668 = vpop.permute.xlu0 %667
      %669 = vrot.lane.b32.xlu0 %v584, 48
      %v670 = vpop.permute.xlu0 %669
      %v671 = vrot.slane %v666, 4
      %v672 = vrot.slane %v668, 4
      %v673 = vrot.slane %v670, 4
      %vm674 = vcmask 392192
      %v675 = vsel %vm674, %v671, %v666
      %v676 = vsel %vm640, %v671, %v672
      %v677 = vsel %vm674, %v676, %v668
      %v678 = vsel %vm640, %v672, %v673
      %v679 = vsel %vm674, %v678, %v670
      %vm683 = vcmask 1043840
      %vm684 = vmor %vm649, %vm683
      %685 = vst.msk [vmem:[#allocation2 + $0x28] sm:$0xff] %vm684, %v675
      %686 = vst [vmem:[#allocation2 + $0x30] sm:$0xff] %v677
      %vm687 = vmor %vm587, %vm640
      %688 = vst.msk [vmem:[#allocation2 + $0x38] sm:$0xff] %vm687, %v679
      %v689 = vld [vmem:[%s7] sm:$0xf]
      %v690 = vld [vmem:[#allocation2] sm:$0xff]
      %v691 = vld [vmem:[#allocation2 + $0x8] sm:$0xff]
      %v692 = vld [vmem:[#allocation2 + $0x10] sm:$0xff]
      %v693 = vld [vmem:[#allocation2 + $0x18] sm:$0xff]
      %v694 = vld [vmem:[#allocation2 + $0x20] sm:$0xff]
      %v695 = vld [vmem:[#allocation2 + $0x28] sm:$0xff]
      %v696 = vld [vmem:[#allocation2 + $0x30] sm:$0xff]
      %v697 = vld [vmem:[#allocation2 + $0x38] sm:$0xf]
      %699 = vrot.lane.b32.xlu0 %v689, 124
      %v700 = vpop.permute.xlu0 %699
      %709 = vst [vmem:[#allocation1] ss:$2 sm:$0xff] %v690
      %s710 = scalar_lea.vmem [#allocation1], 16
      %711 = vst [vmem:[%s710] ss:$2 sm:$0xff] %v691
      %s712 = scalar_lea.vmem [#allocation1], 32
      %713 = vst [vmem:[%s712] ss:$2 sm:$0xff] %v692
      %s714 = scalar_lea.vmem [#allocation1], 48
      %715 = vst [vmem:[%s714] ss:$2 sm:$0xff] %v693
      %v716 = vld.sshfl [vmem:[#allocation1] sm:$0xff pattern:$0x75316420]
      %v717 = vld.sshfl [vmem:[#allocation1 + $0x8] sm:$0xff pattern:$0x75316420]
      %v718 = vld.sshfl [vmem:[#allocation1 + $0x10] sm:$0xff pattern:$0x75316420]
      %v719 = vld.sshfl [vmem:[#allocation1 + $0x18] sm:$0xff pattern:$0x75316420]
      %v720 = vld.sshfl [vmem:[#allocation1 + $0x20] sm:$0xff pattern:$0x75316420]
      %v721 = vld.sshfl [vmem:[#allocation1 + $0x28] sm:$0xff pattern:$0x75316420]
      %v722 = vld.sshfl [vmem:[#allocation1 + $0x30] sm:$0xff pattern:$0x75316420]
      %v723 = vld.sshfl [vmem:[#allocation1 + $0x38] sm:$0xff pattern:$0x75316420]
      %724 = vst [vmem:[#allocation1] ss:$2 sm:$0xff] %v694
      %725 = vst [vmem:[%s710] ss:$2 sm:$0xff] %v695
      %726 = vst [vmem:[%s712] ss:$2 sm:$0xff] %v696
      %727 = vst [vmem:[%s714] ss:$2 sm:$0xff] %v697
      %v728 = vld.sshfl [vmem:[#allocation1] sm:$0xff pattern:$0x75316420]
      %v729 = vld.sshfl [vmem:[#allocation1 + $0x8] sm:$0xff pattern:$0x75316420]
      %v730 = vld.sshfl [vmem:[#allocation1 + $0x10] sm:$0xff pattern:$0x75316420]
      %v731 = vld.sshfl [vmem:[#allocation1 + $0x18] sm:$0xff pattern:$0x75316420]
      %v732 = vld.sshfl [vmem:[#allocation1 + $0x20] sm:$0xff pattern:$0x75316420]
      %v733 = vld.sshfl [vmem:[#allocation1 + $0x28] sm:$0xff pattern:$0x75316420]
      %v734 = vld.sshfl [vmem:[#allocation1 + $0x30] sm:$0xff pattern:$0x75316420]
      %735 = vrot.lane.b32.xlu0 %v716, 110
      %v736 = vpop.permute.xlu0 %735
      %737 = vrot.lane.b32.xlu0 %v717, 110
      %v738 = vpop.permute.xlu0 %737
      %739 = vrot.lane.b32.xlu0 %v718, 110
      %v740 = vpop.permute.xlu0 %739
      %741 = vrot.lane.b32.xlu0 %v719, 110
      %v742 = vpop.permute.xlu0 %741
      %743 = vrot.lane.b32.xlu0 %v720, 110
      %v744 = vpop.permute.xlu0 %743
      %745 = vrot.lane.b32.xlu0 %v721, 110
      %v746 = vpop.permute.xlu0 %745
      %747 = vrot.lane.b32.xlu0 %v722, 110
      %v748 = vpop.permute.xlu0 %747
      %749 = vrot.lane.b32.xlu0 %v723, 110
      %v750 = vpop.permute.xlu0 %749
      %751 = vrot.lane.b32.xlu0 %v728, 110
      %v752 = vpop.permute.xlu0 %751
      %753 = vrot.lane.b32.xlu0 %v729, 110
      %v754 = vpop.permute.xlu0 %753
      %755 = vrot.lane.b32.xlu0 %v730, 110
      %v756 = vpop.permute.xlu0 %755
      %757 = vrot.lane.b32.xlu0 %v731, 110
      %v758 = vpop.permute.xlu0 %757
      %759 = vrot.lane.b32.xlu0 %v732, 110
      %v760 = vpop.permute.xlu0 %759
      %761 = vrot.lane.b32.xlu0 %v733, 110
      %v762 = vpop.permute.xlu0 %761
      %763 = vrot.lane.b32.xlu0 %v734, 110
      %v764 = vpop.permute.xlu0 %763
      %vm765 = vcmask 900096
      %v766 = vsel %vm765, %v736, %v738
      %v767 = vsel %vm765, %v738, %v740
      %v768 = vsel %vm765, %v740, %v742
      %v769 = vsel %vm765, %v742, %v744
      %v770 = vsel %vm765, %v746, %v748
      %v771 = vsel %vm765, %v748, %v750
      %v772 = vsel %vm765, %v750, %v752
      %v773 = vsel %vm765, %v752, %v754
      %v774 = vsel %vm765, %v756, %v758
      %v775 = vsel %vm765, %v758, %v760
      %v776 = vsel %vm765, %v760, %v762
      %v777 = vsel %vm765, %v762, %v764
      %vm778 = vcmask 31744
      %v779 = vsel %vm778, %v700, 0
      %v781 = vsel %vm640, %v766, 0
      %v783 = vsel %vm640, %v767, 0
      %v785 = vsel %vm640, %v768, 0
      %v787 = vsel %vm640, %v769, 0
      %v789 = vsel %vm640, %v770, 0
      %v791 = vsel %vm640, %v771, 0
      %v793 = vsel %vm640, %v772, 0
      %v795 = vsel %vm640, %v773, 0
      %v797 = vsel %vm640, %v774, 0
      %v799 = vsel %vm640, %v775, 0
      %v801 = vsel %vm640, %v776, 0
      %v803 = vsel %vm640, %v777, 0
      %805 = vmatpush.msra.mxu0 0.0
      %806 = vmatpush.msra.mxu0 0.0
      %807 = vmatpush.msra.mxu0 0.0
      %808 = vmatpush.msra.mxu0 0.0
      %809 = vmatpush.msra.mxu0 0.0
      %810 = vmatpush.msra.mxu0 0.0
      %811 = vmatpush.msra.mxu0 0.0
      %812 = vmatpush.msra.mxu0 0.0
      %813 = vmatpush.msra.mxu0 0.0
      %814 = vmatpush.msra.mxu0 0.0
      %815 = vmatpush.msra.mxu0 0.0
      %816 = vmatpush.msra.mxu0 0.0
      %817 = vmatpush.msra.mxu0 0.0
      %818 = vmatpush.msra.mxu0 0.0
      %819 = vmatpush.msra.mxu0 0.0
      %820 = vmatpush.msra.mxu0 %v781
      %821 = vmatmul.f32.gmra.mxu0 %v779
      %v822 = vpop.f32.mrf.mxu0
      %v823 = vadd.f32 0.0, %v822
      %824 = vdwg.mxu0
      %825 = vmatpush.msra.mxu0 0.0
      %826 = vmatpush.msra.mxu0 0.0
      %827 = vmatpush.msra.mxu0 0.0
      %828 = vmatpush.msra.mxu0 0.0
      %829 = vmatpush.msra.mxu0 0.0
      %830 = vmatpush.msra.mxu0 0.0
      %831 = vmatpush.msra.mxu0 0.0
      %832 = vmatpush.msra.mxu0 0.0
      %833 = vmatpush.msra.mxu0 0.0
      %834 = vmatpush.msra.mxu0 0.0
      %835 = vmatpush.msra.mxu0 0.0
      %836 = vmatpush.msra.mxu0 0.0
      %837 = vmatpush.msra.mxu0 0.0
      %838 = vmatpush.msra.mxu0 0.0
      %839 = vmatpush.msra.mxu0 0.0
      %840 = vmatpush.msra.mxu0 %v783
      %841 = vmatmul.f32.gmra.mxu0 %v779
      %v842 = vpop.f32.mrf.mxu0
      %v843 = vadd.f32 0.0, %v842
      %844 = vdwg.mxu0
      %845 = vmatpush.msra.mxu0 0.0
      %846 = vmatpush.msra.mxu0 0.0
      %847 = vmatpush.msra.mxu0 0.0
      %848 = vmatpush.msra.mxu0 0.0
      %849 = vmatpush.msra.mxu0 0.0
      %850 = vmatpush.msra.mxu0 0.0
      %851 = vmatpush.msra.mxu0 0.0
      %852 = vmatpush.msra.mxu0 0.0
      %853 = vmatpush.msra.mxu0 0.0
      %854 = vmatpush.msra.mxu0 0.0
      %855 = vmatpush.msra.mxu0 0.0
      %856 = vmatpush.msra.mxu0 0.0
      %857 = vmatpush.msra.mxu0 0.0
      %858 = vmatpush.msra.mxu0 0.0
      %859 = vmatpush.msra.mxu0 0.0
      %860 = vmatpush.msra.mxu0 %v785
      %861 = vmatmul.f32.gmra.mxu0 %v779
      %v862 = vpop.f32.mrf.mxu0
      %v863 = vadd.f32 0.0, %v862
      %864 = vdwg.mxu0
      %865 = vmatpush.msra.mxu0 0.0
      %866 = vmatpush.msra.mxu0 0.0
      %867 = vmatpush.msra.mxu0 0.0
      %868 = vmatpush.msra.mxu0 0.0
      %869 = vmatpush.msra.mxu0 0.0
      %870 = vmatpush.msra.mxu0 0.0
      %871 = vmatpush.msra.mxu0 0.0
      %872 = vmatpush.msra.mxu0 0.0
      %873 = vmatpush.msra.mxu0 0.0
      %874 = vmatpush.msra.mxu0 0.0
      %875 = vmatpush.msra.mxu0 0.0
      %876 = vmatpush.msra.mxu0 0.0
      %877 = vmatpush.msra.mxu0 0.0
      %878 = vmatpush.msra.mxu0 0.0
      %879 = vmatpush.msra.mxu0 0.0
      %880 = vmatpush.msra.mxu0 %v787
      %881 = vmatmul.f32.gmra.mxu0 %v779
      %v882 = vpop.f32.mrf.mxu0
      %v883 = vadd.f32 0.0, %v882
      %884 = vdwg.mxu0
      %885 = vmatpush.msra.mxu0 0.0
      %886 = vmatpush.msra.mxu0 0.0
      %887 = vmatpush.msra.mxu0 0.0
      %888 = vmatpush.msra.mxu0 0.0
      %889 = vmatpush.msra.mxu0 0.0
      %890 = vmatpush.msra.mxu0 0.0
      %891 = vmatpush.msra.mxu0 0.0
      %892 = vmatpush.msra.mxu0 0.0
      %893 = vmatpush.msra.mxu0 0.0
      %894 = vmatpush.msra.mxu0 0.0
      %895 = vmatpush.msra.mxu0 0.0
      %896 = vmatpush.msra.mxu0 0.0
      %897 = vmatpush.msra.mxu0 0.0
      %898 = vmatpush.msra.mxu0 0.0
      %899 = vmatpush.msra.mxu0 0.0
      %900 = vmatpush.msra.mxu0 %v789
      %901 = vmatmul.f32.gmra.mxu0 %v779
      %v902 = vpop.f32.mrf.mxu0
      %v903 = vadd.f32 0.0, %v902
      %904 = vdwg.mxu0
      %905 = vmatpush.msra.mxu0 0.0
      %906 = vmatpush.msra.mxu0 0.0
      %907 = vmatpush.msra.mxu0 0.0
      %908 = vmatpush.msra.mxu0 0.0
      %909 = vmatpush.msra.mxu0 0.0
      %910 = vmatpush.msra.mxu0 0.0
      %911 = vmatpush.msra.mxu0 0.0
      %912 = vmatpush.msra.mxu0 0.0
      %913 = vmatpush.msra.mxu0 0.0
      %914 = vmatpush.msra.mxu0 0.0
      %915 = vmatpush.msra.mxu0 0.0
      %916 = vmatpush.msra.mxu0 0.0
      %917 = vmatpush.msra.mxu0 0.0
      %918 = vmatpush.msra.mxu0 0.0
      %919 = vmatpush.msra.mxu0 0.0
      %920 = vmatpush.msra.mxu0 %v791
      %921 = vmatmul.f32.gmra.mxu0 %v779
      %v922 = vpop.f32.mrf.mxu0
      %v923 = vadd.f32 0.0, %v922
      %924 = vdwg.mxu0
      %925 = vmatpush.msra.mxu0 0.0
      %926 = vmatpush.msra.mxu0 0.0
      %927 = vmatpush.msra.mxu0 0.0
      %928 = vmatpush.msra.mxu0 0.0
      %929 = vmatpush.msra.mxu0 0.0
      %930 = vmatpush.msra.mxu0 0.0
      %931 = vmatpush.msra.mxu0 0.0
      %932 = vmatpush.msra.mxu0 0.0
      %933 = vmatpush.msra.mxu0 0.0
      %934 = vmatpush.msra.mxu0 0.0
      %935 = vmatpush.msra.mxu0 0.0
      %936 = vmatpush.msra.mxu0 0.0
      %937 = vmatpush.msra.mxu0 0.0
      %938 = vmatpush.msra.mxu0 0.0
      %939 = vmatpush.msra.mxu0 0.0
      %940 = vmatpush.msra.mxu0 %v793
      %941 = vmatmul.f32.gmra.mxu0 %v779
      %v942 = vpop.f32.mrf.mxu0
      %v943 = vadd.f32 0.0, %v942
      %944 = vdwg.mxu0
      %945 = vmatpush.msra.mxu0 0.0
      %946 = vmatpush.msra.mxu0 0.0
      %947 = vmatpush.msra.mxu0 0.0
      %948 = vmatpush.msra.mxu0 0.0
      %949 = vmatpush.msra.mxu0 0.0
      %950 = vmatpush.msra.mxu0 0.0
      %951 = vmatpush.msra.mxu0 0.0
      %952 = vmatpush.msra.mxu0 0.0
      %953 = vmatpush.msra.mxu0 0.0
      %954 = vmatpush.msra.mxu0 0.0
      %955 = vmatpush.msra.mxu0 0.0
      %956 = vmatpush.msra.mxu0 0.0
      %957 = vmatpush.msra.mxu0 0.0
      %958 = vmatpush.msra.mxu0 0.0
      %959 = vmatpush.msra.mxu0 0.0
      %960 = vmatpush.msra.mxu0 %v795
      %961 = vmatmul.f32.gmra.mxu0 %v779
      %v962 = vpop.f32.mrf.mxu0
      %v963 = vadd.f32 0.0, %v962
      %964 = vdwg.mxu0
      %965 = vmatpush.msra.mxu0 0.0
      %966 = vmatpush.msra.mxu0 0.0
      %967 = vmatpush.msra.mxu0 0.0
      %968 = vmatpush.msra.mxu0 0.0
      %969 = vmatpush.msra.mxu0 0.0
      %970 = vmatpush.msra.mxu0 0.0
      %971 = vmatpush.msra.mxu0 0.0
      %972 = vmatpush.msra.mxu0 0.0
      %973 = vmatpush.msra.mxu0 0.0
      %974 = vmatpush.msra.mxu0 0.0
      %975 = vmatpush.msra.mxu0 0.0
      %976 = vmatpush.msra.mxu0 0.0
      %977 = vmatpush.msra.mxu0 0.0
      %978 = vmatpush.msra.mxu0 0.0
      %979 = vmatpush.msra.mxu0 0.0
      %980 = vmatpush.msra.mxu0 %v797
      %981 = vmatmul.f32.gmra.mxu0 %v779
      %v982 = vpop.f32.mrf.mxu0
      %v983 = vadd.f32 0.0, %v982
      %984 = vdwg.mxu0
      %985 = vmatpush.msra.mxu0 0.0
      %986 = vmatpush.msra.mxu0 0.0
      %987 = vmatpush.msra.mxu0 0.0
      %988 = vmatpush.msra.mxu0 0.0
      %989 = vmatpush.msra.mxu0 0.0
      %990 = vmatpush.msra.mxu0 0.0
      %991 = vmatpush.msra.mxu0 0.0
      %992 = vmatpush.msra.mxu0 0.0
      %993 = vmatpush.msra.mxu0 0.0
      %994 = vmatpush.msra.mxu0 0.0
      %995 = vmatpush.msra.mxu0 0.0
      %996 = vmatpush.msra.mxu0 0.0
      %997 = vmatpush.msra.mxu0 0.0
      %998 = vmatpush.msra.mxu0 0.0
      %999 = vmatpush.msra.mxu0 0.0
      %1000 = vmatpush.msra.mxu0 %v799
      %1001 = vmatmul.f32.gmra.mxu0 %v779
      %v1002 = vpop.f32.mrf.mxu0
      %v1003 = vadd.f32 0.0, %v1002
      %1004 = vdwg.mxu0
      %1005 = vmatpush.msra.mxu0 0.0
      %1006 = vmatpush.msra.mxu0 0.0
      %1007 = vmatpush.msra.mxu0 0.0
      %1008 = vmatpush.msra.mxu0 0.0
      %1009 = vmatpush.msra.mxu0 0.0
      %1010 = vmatpush.msra.mxu0 0.0
      %1011 = vmatpush.msra.mxu0 0.0
      %1012 = vmatpush.msra.mxu0 0.0
      %1013 = vmatpush.msra.mxu0 0.0
      %1014 = vmatpush.msra.mxu0 0.0
      %1015 = vmatpush.msra.mxu0 0.0
      %1016 = vmatpush.msra.mxu0 0.0
      %1017 = vmatpush.msra.mxu0 0.0
      %1018 = vmatpush.msra.mxu0 0.0
      %1019 = vmatpush.msra.mxu0 0.0
      %1020 = vmatpush.msra.mxu0 %v801
      %1021 = vmatmul.f32.gmra.mxu0 %v779
      %v1022 = vpop.f32.mrf.mxu0
      %v1023 = vadd.f32 0.0, %v1022
      %1024 = vdwg.mxu0
      %1025 = vmatpush.msra.mxu0 0.0
      %1026 = vmatpush.msra.mxu0 0.0
      %1027 = vmatpush.msra.mxu0 0.0
      %1028 = vmatpush.msra.mxu0 0.0
      %1029 = vmatpush.msra.mxu0 0.0
      %1030 = vmatpush.msra.mxu0 0.0
      %1031 = vmatpush.msra.mxu0 0.0
      %1032 = vmatpush.msra.mxu0 0.0
      %1033 = vmatpush.msra.mxu0 0.0
      %1034 = vmatpush.msra.mxu0 0.0
      %1035 = vmatpush.msra.mxu0 0.0
      %1036 = vmatpush.msra.mxu0 0.0
      %1037 = vmatpush.msra.mxu0 0.0
      %1038 = vmatpush.msra.mxu0 0.0
      %1039 = vmatpush.msra.mxu0 0.0
      %1040 = vmatpush.msra.mxu0 %v803
      %1041 = vmatmul.f32.gmra.mxu0 %v779
      %v1042 = vpop.f32.mrf.mxu0
      %v1043 = vadd.f32 0.0, %v1042
      %1044 = vdwg.mxu0
      %1045 = vst [vmem:[#allocation1] ss:$2 sm:$0xff] %v690
      %s1046 = scalar_lea.vmem [#allocation1], 16
      %1047 = vst [vmem:[%s1046] ss:$2 sm:$0xff] %v691
      %s1048 = scalar_lea.vmem [#allocation1], 32
      %1049 = vst [vmem:[%s1048] ss:$2 sm:$0xff] %v692
      %s1050 = scalar_lea.vmem [#allocation1], 48
      %1051 = vst [vmem:[%s1050] ss:$2 sm:$0xff] %v693
      %v1052 = vld.sshfl [vmem:[#allocation1] sm:$0xff pattern:$0x75316420]
      %v1053 = vld.sshfl [vmem:[#allocation1 + $0x8] sm:$0xff pattern:$0x75316420]
      %v1054 = vld.sshfl [vmem:[#allocation1 + $0x10] sm:$0xff pattern:$0x75316420]
      %v1055 = vld.sshfl [vmem:[#allocation1 + $0x18] sm:$0xff pattern:$0x75316420]
      %v1056 = vld.sshfl [vmem:[#allocation1 + $0x20] sm:$0xff pattern:$0x75316420]
      %v1057 = vld.sshfl [vmem:[#allocation1 + $0x28] sm:$0xff pattern:$0x75316420]
      %v1058 = vld.sshfl [vmem:[#allocation1 + $0x30] sm:$0xff pattern:$0x75316420]
      %v1059 = vld.sshfl [vmem:[#allocation1 + $0x38] sm:$0xff pattern:$0x75316420]
      %1060 = vst [vmem:[#allocation1] ss:$2 sm:$0xff] %v694
      %1061 = vst [vmem:[%s1046] ss:$2 sm:$0xff] %v695
      %1062 = vst [vmem:[%s1048] ss:$2 sm:$0xff] %v696
      %1063 = vst [vmem:[%s1050] ss:$2 sm:$0xff] %v697
      %v1064 = vld.sshfl [vmem:[#allocation1] sm:$0xff pattern:$0x75316420]
      %v1065 = vld.sshfl [vmem:[#allocation1 + $0x8] sm:$0xff pattern:$0x75316420]
      %v1066 = vld.sshfl [vmem:[#allocation1 + $0x10] sm:$0xff pattern:$0x75316420]
      %v1067 = vld.sshfl [vmem:[#allocation1 + $0x18] sm:$0xff pattern:$0x75316420]
      %v1068 = vld.sshfl [vmem:[#allocation1 + $0x20] sm:$0xff pattern:$0x75316420]
      %v1069 = vld.sshfl [vmem:[#allocation1 + $0x28] sm:$0xff pattern:$0x75316420]
      %v1070 = vld.sshfl [vmem:[#allocation1 + $0x30] sm:$0xff pattern:$0x75316420]
      %1071 = vrot.lane.b32.xlu0 %v1052, 111
      %v1072 = vpop.permute.xlu0 %1071
      %1073 = vrot.lane.b32.xlu0 %v1053, 111
      %v1074 = vpop.permute.xlu0 %1073
      %1075 = vrot.lane.b32.xlu0 %v1054, 111
      %v1076 = vpop.permute.xlu0 %1075
      %1077 = vrot.lane.b32.xlu0 %v1055, 111
      %v1078 = vpop.permute.xlu0 %1077
      %1079 = vrot.lane.b32.xlu0 %v1056, 111
      %v1080 = vpop.permute.xlu0 %1079
      %1081 = vrot.lane.b32.xlu0 %v1057, 111
      %v1082 = vpop.permute.xlu0 %1081
      %1083 = vrot.lane.b32.xlu0 %v1058, 111
      %v1084 = vpop.permute.xlu0 %1083
      %1085 = vrot.lane.b32.xlu0 %v1059, 111
      %v1086 = vpop.permute.xlu0 %1085
      %1087 = vrot.lane.b32.xlu0 %v1064, 111
      %v1088 = vpop.permute.xlu0 %1087
      %1089 = vrot.lane.b32.xlu0 %v1065, 111
      %v1090 = vpop.permute.xlu0 %1089
      %1091 = vrot.lane.b32.xlu0 %v1066, 111
      %v1092 = vpop.permute.xlu0 %1091
      %1093 = vrot.lane.b32.xlu0 %v1067, 111
      %v1094 = vpop.permute.xlu0 %1093
      %1095 = vrot.lane.b32.xlu0 %v1068, 111
      %v1096 = vpop.permute.xlu0 %1095
      %1097 = vrot.lane.b32.xlu0 %v1069, 111
      %v1098 = vpop.permute.xlu0 %1097
      %1099 = vrot.lane.b32.xlu0 %v1070, 111
      %v1100 = vpop.permute.xlu0 %1099
      %vm1101 = vcmask 908288
      %v1102 = vsel %vm1101, %v1072, %v1074
      %v1103 = vsel %vm1101, %v1074, %v1076
      %v1104 = vsel %vm1101, %v1076, %v1078
      %v1105 = vsel %vm1101, %v1078, %v1080
      %v1106 = vsel %vm1101, %v1082, %v1084
      %v1107 = vsel %vm1101, %v1084, %v1086
      %v1108 = vsel %vm1101, %v1086, %v1088
      %v1109 = vsel %vm1101, %v1088, %v1090
      %v1110 = vsel %vm1101, %v1092, %v1094
      %v1111 = vsel %vm1101, %v1094, %v1096
      %v1112 = vsel %vm1101, %v1096, %v1098
      %v1113 = vsel %vm1101, %v1098, %v1100
      %v1114 = vsel %vm778, %v689, 0
      %v1116 = vsel %vm640, %v1102, 0
      %v1118 = vsel %vm640, %v1103, 0
      %v1120 = vsel %vm640, %v1104, 0
      %v1122 = vsel %vm640, %v1105, 0
      %v1124 = vsel %vm640, %v1106, 0
      %v1126 = vsel %vm640, %v1107, 0
      %v1128 = vsel %vm640, %v1108, 0
      %v1130 = vsel %vm640, %v1109, 0
      %v1132 = vsel %vm640, %v1110, 0
      %v1134 = vsel %vm640, %v1111, 0
      %v1136 = vsel %vm640, %v1112, 0
      %v1138 = vsel %vm640, %v1113, 0
      %1140 = vmatpush.msra.mxu0 0.0
      %1141 = vmatpush.msra.mxu0 0.0
      %1142 = vmatpush.msra.mxu0 0.0
      %1143 = vmatpush.msra.mxu0 0.0
      %1144 = vmatpush.msra.mxu0 0.0
      %1145 = vmatpush.msra.mxu0 0.0
      %1146 = vmatpush.msra.mxu0 0.0
      %1147 = vmatpush.msra.mxu0 0.0
      %1148 = vmatpush.msra.mxu0 0.0
      %1149 = vmatpush.msra.mxu0 0.0
      %1150 = vmatpush.msra.mxu0 0.0
      %1151 = vmatpush.msra.mxu0 0.0
      %1152 = vmatpush.msra.mxu0 0.0
      %1153 = vmatpush.msra.mxu0 0.0
      %1154 = vmatpush.msra.mxu0 0.0
      %1155 = vmatpush.msra.mxu0 %v1116
      %1156 = vmatmul.f32.gmra.mxu0 %v1114
      %v1157 = vpop.f32.mrf.mxu0
      %v1158 = vadd.f32 %v823, %v1157
      %1159 = vdwg.mxu0
      %1160 = vmatpush.msra.mxu0 0.0
      %1161 = vmatpush.msra.mxu0 0.0
      %1162 = vmatpush.msra.mxu0 0.0
      %1163 = vmatpush.msra.mxu0 0.0
      %1164 = vmatpush.msra.mxu0 0.0
      %1165 = vmatpush.msra.mxu0 0.0
      %1166 = vmatpush.msra.mxu0 0.0
      %1167 = vmatpush.msra.mxu0 0.0
      %1168 = vmatpush.msra.mxu0 0.0
      %1169 = vmatpush.msra.mxu0 0.0
      %1170 = vmatpush.msra.mxu0 0.0
      %1171 = vmatpush.msra.mxu0 0.0
      %1172 = vmatpush.msra.mxu0 0.0
      %1173 = vmatpush.msra.mxu0 0.0
      %1174 = vmatpush.msra.mxu0 0.0
      %1175 = vmatpush.msra.mxu0 %v1118
      %1176 = vmatmul.f32.gmra.mxu0 %v1114
      %v1177 = vpop.f32.mrf.mxu0
      %v1178 = vadd.f32 %v843, %v1177
      %1179 = vdwg.mxu0
      %1180 = vmatpush.msra.mxu0 0.0
      %1181 = vmatpush.msra.mxu0 0.0
      %1182 = vmatpush.msra.mxu0 0.0
      %1183 = vmatpush.msra.mxu0 0.0
      %1184 = vmatpush.msra.mxu0 0.0
      %1185 = vmatpush.msra.mxu0 0.0
      %1186 = vmatpush.msra.mxu0 0.0
      %1187 = vmatpush.msra.mxu0 0.0
      %1188 = vmatpush.msra.mxu0 0.0
      %1189 = vmatpush.msra.mxu0 0.0
      %1190 = vmatpush.msra.mxu0 0.0
      %1191 = vmatpush.msra.mxu0 0.0
      %1192 = vmatpush.msra.mxu0 0.0
      %1193 = vmatpush.msra.mxu0 0.0
      %1194 = vmatpush.msra.mxu0 0.0
      %1195 = vmatpush.msra.mxu0 %v1120
      %1196 = vmatmul.f32.gmra.mxu0 %v1114
      %v1197 = vpop.f32.mrf.mxu0
      %v1198 = vadd.f32 %v863, %v1197
      %1199 = vdwg.mxu0
      %1200 = vmatpush.msra.mxu0 0.0
      %1201 = vmatpush.msra.mxu0 0.0
      %1202 = vmatpush.msra.mxu0 0.0
      %1203 = vmatpush.msra.mxu0 0.0
      %1204 = vmatpush.msra.mxu0 0.0
      %1205 = vmatpush.msra.mxu0 0.0
      %1206 = vmatpush.msra.mxu0 0.0
      %1207 = vmatpush.msra.mxu0 0.0
      %1208 = vmatpush.msra.mxu0 0.0
      %1209 = vmatpush.msra.mxu0 0.0
      %1210 = vmatpush.msra.mxu0 0.0
      %1211 = vmatpush.msra.mxu0 0.0
      %1212 = vmatpush.msra.mxu0 0.0
      %1213 = vmatpush.msra.mxu0 0.0
      %1214 = vmatpush.msra.mxu0 0.0
      %1215 = vmatpush.msra.mxu0 %v1122
      %1216 = vmatmul.f32.gmra.mxu0 %v1114
      %v1217 = vpop.f32.mrf.mxu0
      %v1218 = vadd.f32 %v883, %v1217
      %1219 = vdwg.mxu0
      %1220 = vmatpush.msra.mxu0 0.0
      %1221 = vmatpush.msra.mxu0 0.0
      %1222 = vmatpush.msra.mxu0 0.0
      %1223 = vmatpush.msra.mxu0 0.0
      %1224 = vmatpush.msra.mxu0 0.0
      %1225 = vmatpush.msra.mxu0 0.0
      %1226 = vmatpush.msra.mxu0 0.0
      %1227 = vmatpush.msra.mxu0 0.0
      %1228 = vmatpush.msra.mxu0 0.0
      %1229 = vmatpush.msra.mxu0 0.0
      %1230 = vmatpush.msra.mxu0 0.0
      %1231 = vmatpush.msra.mxu0 0.0
      %1232 = vmatpush.msra.mxu0 0.0
      %1233 = vmatpush.msra.mxu0 0.0
      %1234 = vmatpush.msra.mxu0 0.0
      %1235 = vmatpush.msra.mxu0 %v1124
      %1236 = vmatmul.f32.gmra.mxu0 %v1114
      %v1237 = vpop.f32.mrf.mxu0
      %v1238 = vadd.f32 %v903, %v1237
      %1239 = vdwg.mxu0
      %1240 = vmatpush.msra.mxu0 0.0
      %1241 = vmatpush.msra.mxu0 0.0
      %1242 = vmatpush.msra.mxu0 0.0
      %1243 = vmatpush.msra.mxu0 0.0
      %1244 = vmatpush.msra.mxu0 0.0
      %1245 = vmatpush.msra.mxu0 0.0
      %1246 = vmatpush.msra.mxu0 0.0
      %1247 = vmatpush.msra.mxu0 0.0
      %1248 = vmatpush.msra.mxu0 0.0
      %1249 = vmatpush.msra.mxu0 0.0
      %1250 = vmatpush.msra.mxu0 0.0
      %1251 = vmatpush.msra.mxu0 0.0
      %1252 = vmatpush.msra.mxu0 0.0
      %1253 = vmatpush.msra.mxu0 0.0
      %1254 = vmatpush.msra.mxu0 0.0
      %1255 = vmatpush.msra.mxu0 %v1126
      %1256 = vmatmul.f32.gmra.mxu0 %v1114
      %v1257 = vpop.f32.mrf.mxu0
      %v1258 = vadd.f32 %v923, %v1257
      %1259 = vdwg.mxu0
      %1260 = vmatpush.msra.mxu0 0.0
      %1261 = vmatpush.msra.mxu0 0.0
      %1262 = vmatpush.msra.mxu0 0.0
      %1263 = vmatpush.msra.mxu0 0.0
      %1264 = vmatpush.msra.mxu0 0.0
      %1265 = vmatpush.msra.mxu0 0.0
      %1266 = vmatpush.msra.mxu0 0.0
      %1267 = vmatpush.msra.mxu0 0.0
      %1268 = vmatpush.msra.mxu0 0.0
      %1269 = vmatpush.msra.mxu0 0.0
      %1270 = vmatpush.msra.mxu0 0.0
      %1271 = vmatpush.msra.mxu0 0.0
      %1272 = vmatpush.msra.mxu0 0.0
      %1273 = vmatpush.msra.mxu0 0.0
      %1274 = vmatpush.msra.mxu0 0.0
      %1275 = vmatpush.msra.mxu0 %v1128
      %1276 = vmatmul.f32.gmra.mxu0 %v1114
      %v1277 = vpop.f32.mrf.mxu0
      %v1278 = vadd.f32 %v943, %v1277
      %1279 = vdwg.mxu0
      %1280 = vmatpush.msra.mxu0 0.0
      %1281 = vmatpush.msra.mxu0 0.0
      %1282 = vmatpush.msra.mxu0 0.0
      %1283 = vmatpush.msra.mxu0 0.0
      %1284 = vmatpush.msra.mxu0 0.0
      %1285 = vmatpush.msra.mxu0 0.0
      %1286 = vmatpush.msra.mxu0 0.0
      %1287 = vmatpush.msra.mxu0 0.0
      %1288 = vmatpush.msra.mxu0 0.0
      %1289 = vmatpush.msra.mxu0 0.0
      %1290 = vmatpush.msra.mxu0 0.0
      %1291 = vmatpush.msra.mxu0 0.0
      %1292 = vmatpush.msra.mxu0 0.0
      %1293 = vmatpush.msra.mxu0 0.0
      %1294 = vmatpush.msra.mxu0 0.0
      %1295 = vmatpush.msra.mxu0 %v1130
      %1296 = vmatmul.f32.gmra.mxu0 %v1114
      %v1297 = vpop.f32.mrf.mxu0
      %v1298 = vadd.f32 %v963, %v1297
      %1299 = vdwg.mxu0
      %1300 = vmatpush.msra.mxu0 0.0
      %1301 = vmatpush.msra.mxu0 0.0
      %1302 = vmatpush.msra.mxu0 0.0
      %1303 = vmatpush.msra.mxu0 0.0
      %1304 = vmatpush.msra.mxu0 0.0
      %1305 = vmatpush.msra.mxu0 0.0
      %1306 = vmatpush.msra.mxu0 0.0
      %1307 = vmatpush.msra.mxu0 0.0
      %1308 = vmatpush.msra.mxu0 0.0
      %1309 = vmatpush.msra.mxu0 0.0
      %1310 = vmatpush.msra.mxu0 0.0
      %1311 = vmatpush.msra.mxu0 0.0
      %1312 = vmatpush.msra.mxu0 0.0
      %1313 = vmatpush.msra.mxu0 0.0
      %1314 = vmatpush.msra.mxu0 0.0
      %1315 = vmatpush.msra.mxu0 %v1132
      %1316 = vmatmul.f32.gmra.mxu0 %v1114
      %v1317 = vpop.f32.mrf.mxu0
      %v1318 = vadd.f32 %v983, %v1317
      %1319 = vdwg.mxu0
      %1320 = vmatpush.msra.mxu0 0.0
      %1321 = vmatpush.msra.mxu0 0.0
      %1322 = vmatpush.msra.mxu0 0.0
      %1323 = vmatpush.msra.mxu0 0.0
      %1324 = vmatpush.msra.mxu0 0.0
      %1325 = vmatpush.msra.mxu0 0.0
      %1326 = vmatpush.msra.mxu0 0.0
      %1327 = vmatpush.msra.mxu0 0.0
      %1328 = vmatpush.msra.mxu0 0.0
      %1329 = vmatpush.msra.mxu0 0.0
      %1330 = vmatpush.msra.mxu0 0.0
      %1331 = vmatpush.msra.mxu0 0.0
      %1332 = vmatpush.msra.mxu0 0.0
      %1333 = vmatpush.msra.mxu0 0.0
      %1334 = vmatpush.msra.mxu0 0.0
      %1335 = vmatpush.msra.mxu0 %v1134
      %1336 = vmatmul.f32.gmra.mxu0 %v1114
      %v1337 = vpop.f32.mrf.mxu0
      %v1338 = vadd.f32 %v1003, %v1337
      %1339 = vdwg.mxu0
      %1340 = vmatpush.msra.mxu0 0.0
      %1341 = vmatpush.msra.mxu0 0.0
      %1342 = vmatpush.msra.mxu0 0.0
      %1343 = vmatpush.msra.mxu0 0.0
      %1344 = vmatpush.msra.mxu0 0.0
      %1345 = vmatpush.msra.mxu0 0.0
      %1346 = vmatpush.msra.mxu0 0.0
      %1347 = vmatpush.msra.mxu0 0.0
      %1348 = vmatpush.msra.mxu0 0.0
      %1349 = vmatpush.msra.mxu0 0.0
      %1350 = vmatpush.msra.mxu0 0.0
      %1351 = vmatpush.msra.mxu0 0.0
      %1352 = vmatpush.msra.mxu0 0.0
      %1353 = vmatpush.msra.mxu0 0.0
      %1354 = vmatpush.msra.mxu0 0.0
      %1355 = vmatpush.msra.mxu0 %v1136
      %1356 = vmatmul.f32.gmra.mxu0 %v1114
      %v1357 = vpop.f32.mrf.mxu0
      %v1358 = vadd.f32 %v1023, %v1357
      %1359 = vdwg.mxu0
      %1360 = vmatpush.msra.mxu0 0.0
      %1361 = vmatpush.msra.mxu0 0.0
      %1362 = vmatpush.msra.mxu0 0.0
      %1363 = vmatpush.msra.mxu0 0.0
      %1364 = vmatpush.msra.mxu0 0.0
      %1365 = vmatpush.msra.mxu0 0.0
      %1366 = vmatpush.msra.mxu0 0.0
      %1367 = vmatpush.msra.mxu0 0.0
      %1368 = vmatpush.msra.mxu0 0.0
      %1369 = vmatpush.msra.mxu0 0.0
      %1370 = vmatpush.msra.mxu0 0.0
      %1371 = vmatpush.msra.mxu0 0.0
      %1372 = vmatpush.msra.mxu0 0.0
      %1373 = vmatpush.msra.mxu0 0.0
      %1374 = vmatpush.msra.mxu0 0.0
      %1375 = vmatpush.msra.mxu0 %v1138
      %1376 = vmatmul.f32.gmra.mxu0 %v1114
      %v1377 = vpop.f32.mrf.mxu0
      %v1378 = vadd.f32 %v1043, %v1377
      %1379 = vdwg.mxu0
      %v1380 = vld [vmem:[#allocation2] sm:$0xff]
      %v1381 = vld [vmem:[#allocation2 + $0x8] sm:$0xff]
      %v1382 = vld [vmem:[#allocation2 + $0x10] sm:$0xff]
      %v1383 = vld [vmem:[#allocation2 + $0x18] sm:$0xff]
      %v1384 = vld [vmem:[#allocation2 + $0x20] sm:$0xff]
      %v1385 = vld [vmem:[#allocation2 + $0x28] sm:$0xff]
      %v1386 = vld [vmem:[#allocation2 + $0x30] sm:$0xff]
      %v1387 = vld [vmem:[#allocation2 + $0x38] sm:$0xf]
      %1388 = vrot.lane.b32.xlu0 %v689, 120
      %v1389 = vpop.permute.xlu0 %1388
      %1398 = vst [vmem:[#allocation1] ss:$2 sm:$0xff] %v1380
      %s1399 = scalar_lea.vmem [#allocation1], 16
      %1400 = vst [vmem:[%s1399] ss:$2 sm:$0xff] %v1381
      %s1401 = scalar_lea.vmem [#allocation1], 32
      %1402 = vst [vmem:[%s1401] ss:$2 sm:$0xff] %v1382
      %s1403 = scalar_lea.vmem [#allocation1], 48
      %1404 = vst [vmem:[%s1403] ss:$2 sm:$0xff] %v1383
      %v1405 = vld.sshfl [vmem:[#allocation1] sm:$0xff pattern:$0x75316420]
      %v1406 = vld.sshfl [vmem:[#allocation1 + $0x8] sm:$0xff pattern:$0x75316420]
      %v1407 = vld.sshfl [vmem:[#allocation1 + $0x10] sm:$0xff pattern:$0x75316420]
      %v1408 = vld.sshfl [vmem:[#allocation1 + $0x18] sm:$0xff pattern:$0x75316420]
      %v1409 = vld.sshfl [vmem:[#allocation1 + $0x20] sm:$0xff pattern:$0x75316420]
      %v1410 = vld.sshfl [vmem:[#allocation1 + $0x28] sm:$0xff pattern:$0x75316420]
      %v1411 = vld.sshfl [vmem:[#allocation1 + $0x30] sm:$0xff pattern:$0x75316420]
      %v1412 = vld.sshfl [vmem:[#allocation1 + $0x38] sm:$0xff pattern:$0x75316420]
      %1413 = vst [vmem:[#allocation1] ss:$2 sm:$0xff] %v1384
      %1414 = vst [vmem:[%s1399] ss:$2 sm:$0xff] %v1385
      %1415 = vst [vmem:[%s1401] ss:$2 sm:$0xff] %v1386
      %1416 = vst [vmem:[%s1403] ss:$2 sm:$0xff] %v1387
      %v1417 = vld.sshfl [vmem:[#allocation1] sm:$0xff pattern:$0x75316420]
      %v1418 = vld.sshfl [vmem:[#allocation1 + $0x8] sm:$0xff pattern:$0x75316420]
      %v1419 = vld.sshfl [vmem:[#allocation1 + $0x10] sm:$0xff pattern:$0x75316420]
      %v1420 = vld.sshfl [vmem:[#allocation1 + $0x18] sm:$0xff pattern:$0x75316420]
      %v1421 = vld.sshfl [vmem:[#allocation1 + $0x20] sm:$0xff pattern:$0x75316420]
      %v1422 = vld.sshfl [vmem:[#allocation1 + $0x28] sm:$0xff pattern:$0x75316420]
      %v1423 = vld.sshfl [vmem:[#allocation1 + $0x30] sm:$0xff pattern:$0x75316420]
      %1424 = vrot.lane.b32.xlu0 %v1405, 109
      %v1425 = vpop.permute.xlu0 %1424
      %1426 = vrot.lane.b32.xlu0 %v1406, 109
      %v1427 = vpop.permute.xlu0 %1426
      %1428 = vrot.lane.b32.xlu0 %v1407, 109
      %v1429 = vpop.permute.xlu0 %1428
      %1430 = vrot.lane.b32.xlu0 %v1408, 109
      %v1431 = vpop.permute.xlu0 %1430
      %1432 = vrot.lane.b32.xlu0 %v1409, 109
      %v1433 = vpop.permute.xlu0 %1432
      %1434 = vrot.lane.b32.xlu0 %v1410, 109
      %v1435 = vpop.permute.xlu0 %1434
      %1436 = vrot.lane.b32.xlu0 %v1411, 109
      %v1437 = vpop.permute.xlu0 %1436
      %1438 = vrot.lane.b32.xlu0 %v1412, 109
      %v1439 = vpop.permute.xlu0 %1438
      %1440 = vrot.lane.b32.xlu0 %v1417, 109
      %v1441 = vpop.permute.xlu0 %1440
      %1442 = vrot.lane.b32.xlu0 %v1418, 109
      %v1443 = vpop.permute.xlu0 %1442
      %1444 = vrot.lane.b32.xlu0 %v1419, 109
      %v1445 = vpop.permute.xlu0 %1444
      %1446 = vrot.lane.b32.xlu0 %v1420, 109
      %v1447 = vpop.permute.xlu0 %1446
      %1448 = vrot.lane.b32.xlu0 %v1421, 109
      %v1449 = vpop.permute.xlu0 %1448
      %1450 = vrot.lane.b32.xlu0 %v1422, 109
      %v1451 = vpop.permute.xlu0 %1450
      %1452 = vrot.lane.b32.xlu0 %v1423, 109
      %v1453 = vpop.permute.xlu0 %1452
      %vm1454 = vcmask 891904
      %v1455 = vsel %vm1454, %v1425, %v1427
      %v1456 = vsel %vm1454, %v1427, %v1429
      %v1457 = vsel %vm1454, %v1429, %v1431
      %v1458 = vsel %vm1454, %v1431, %v1433
      %v1459 = vsel %vm1454, %v1435, %v1437
      %v1460 = vsel %vm1454, %v1437, %v1439
      %v1461 = vsel %vm1454, %v1439, %v1441
      %v1462 = vsel %vm1454, %v1441, %v1443
      %v1463 = vsel %vm1454, %v1445, %v1447
      %v1464 = vsel %vm1454, %v1447, %v1449
      %v1465 = vsel %vm1454, %v1449, %v1451
      %v1466 = vsel %vm1454, %v1451, %v1453
      %v1467 = vsel %vm778, %v1389, 0
      %v1469 = vsel %vm640, %v1455, 0
      %v1471 = vsel %vm640, %v1456, 0
      %v1473 = vsel %vm640, %v1457, 0
      %v1475 = vsel %vm640, %v1458, 0
      %v1477 = vsel %vm640, %v1459, 0
      %v1479 = vsel %vm640, %v1460, 0
      %v1481 = vsel %vm640, %v1461, 0
      %v1483 = vsel %vm640, %v1462, 0
      %v1485 = vsel %vm640, %v1463, 0
      %v1487 = vsel %vm640, %v1464, 0
      %v1489 = vsel %vm640, %v1465, 0
      %v1491 = vsel %vm640, %v1466, 0
      %1493 = vmatpush.msra.mxu0 0.0
      %1494 = vmatpush.msra.mxu0 0.0
      %1495 = vmatpush.msra.mxu0 0.0
      %1496 = vmatpush.msra.mxu0 0.0
      %1497 = vmatpush.msra.mxu0 0.0
      %1498 = vmatpush.msra.mxu0 0.0
      %1499 = vmatpush.msra.mxu0 0.0
      %1500 = vmatpush.msra.mxu0 0.0
      %1501 = vmatpush.msra.mxu0 0.0
      %1502 = vmatpush.msra.mxu0 0.0
      %1503 = vmatpush.msra.mxu0 0.0
      %1504 = vmatpush.msra.mxu0 0.0
      %1505 = vmatpush.msra.mxu0 0.0
      %1506 = vmatpush.msra.mxu0 0.0
      %1507 = vmatpush.msra.mxu0 0.0
      %1508 = vmatpush.msra.mxu0 %v1469
      %1509 = vmatmul.f32.gmra.mxu0 %v1467
      %v1510 = vpop.f32.mrf.mxu0
      %v1511 = vadd.f32 0.0, %v1510
      %1512 = vdwg.mxu0
      %1513 = vmatpush.msra.mxu0 0.0
      %1514 = vmatpush.msra.mxu0 0.0
      %1515 = vmatpush.msra.mxu0 0.0
      %1516 = vmatpush.msra.mxu0 0.0
      %1517 = vmatpush.msra.mxu0 0.0
      %1518 = vmatpush.msra.mxu0 0.0
      %1519 = vmatpush.msra.mxu0 0.0
      %1520 = vmatpush.msra.mxu0 0.0
      %1521 = vmatpush.msra.mxu0 0.0
      %1522 = vmatpush.msra.mxu0 0.0
      %1523 = vmatpush.msra.mxu0 0.0
      %1524 = vmatpush.msra.mxu0 0.0
      %1525 = vmatpush.msra.mxu0 0.0
      %1526 = vmatpush.msra.mxu0 0.0
      %1527 = vmatpush.msra.mxu0 0.0
      %1528 = vmatpush.msra.mxu0 %v1471
      %1529 = vmatmul.f32.gmra.mxu0 %v1467
      %v1530 = vpop.f32.mrf.mxu0
      %v1531 = vadd.f32 0.0, %v1530
      %1532 = vdwg.mxu0
      %1533 = vmatpush.msra.mxu0 0.0
      %1534 = vmatpush.msra.mxu0 0.0
      %1535 = vmatpush.msra.mxu0 0.0
      %1536 = vmatpush.msra.mxu0 0.0
      %1537 = vmatpush.msra.mxu0 0.0
      %1538 = vmatpush.msra.mxu0 0.0
      %1539 = vmatpush.msra.mxu0 0.0
      %1540 = vmatpush.msra.mxu0 0.0
      %1541 = vmatpush.msra.mxu0 0.0
      %1542 = vmatpush.msra.mxu0 0.0
      %1543 = vmatpush.msra.mxu0 0.0
      %1544 = vmatpush.msra.mxu0 0.0
      %1545 = vmatpush.msra.mxu0 0.0
      %1546 = vmatpush.msra.mxu0 0.0
      %1547 = vmatpush.msra.mxu0 0.0
      %1548 = vmatpush.msra.mxu0 %v1473
      %1549 = vmatmul.f32.gmra.mxu0 %v1467
      %v1550 = vpop.f32.mrf.mxu0
      %v1551 = vadd.f32 0.0, %v1550
      %1552 = vdwg.mxu0
      %1553 = vmatpush.msra.mxu0 0.0
      %1554 = vmatpush.msra.mxu0 0.0
      %1555 = vmatpush.msra.mxu0 0.0
      %1556 = vmatpush.msra.mxu0 0.0
      %1557 = vmatpush.msra.mxu0 0.0
      %1558 = vmatpush.msra.mxu0 0.0
      %1559 = vmatpush.msra.mxu0 0.0
      %1560 = vmatpush.msra.mxu0 0.0
      %1561 = vmatpush.msra.mxu0 0.0
      %1562 = vmatpush.msra.mxu0 0.0
      %1563 = vmatpush.msra.mxu0 0.0
      %1564 = vmatpush.msra.mxu0 0.0
      %1565 = vmatpush.msra.mxu0 0.0
      %1566 = vmatpush.msra.mxu0 0.0
      %1567 = vmatpush.msra.mxu0 0.0
      %1568 = vmatpush.msra.mxu0 %v1475
      %1569 = vmatmul.f32.gmra.mxu0 %v1467
      %v1570 = vpop.f32.mrf.mxu0
      %v1571 = vadd.f32 0.0, %v1570
      %1572 = vdwg.mxu0
      %1573 = vmatpush.msra.mxu0 0.0
      %1574 = vmatpush.msra.mxu0 0.0
      %1575 = vmatpush.msra.mxu0 0.0
      %1576 = vmatpush.msra.mxu0 0.0
      %1577 = vmatpush.msra.mxu0 0.0
      %1578 = vmatpush.msra.mxu0 0.0
      %1579 = vmatpush.msra.mxu0 0.0
      %1580 = vmatpush.msra.mxu0 0.0
      %1581 = vmatpush.msra.mxu0 0.0
      %1582 = vmatpush.msra.mxu0 0.0
      %1583 = vmatpush.msra.mxu0 0.0
      %1584 = vmatpush.msra.mxu0 0.0
      %1585 = vmatpush.msra.mxu0 0.0
      %1586 = vmatpush.msra.mxu0 0.0
      %1587 = vmatpush.msra.mxu0 0.0
      %1588 = vmatpush.msra.mxu0 %v1477
      %1589 = vmatmul.f32.gmra.mxu0 %v1467
      %v1590 = vpop.f32.mrf.mxu0
      %v1591 = vadd.f32 0.0, %v1590
      %1592 = vdwg.mxu0
      %1593 = vmatpush.msra.mxu0 0.0
      %1594 = vmatpush.msra.mxu0 0.0
      %1595 = vmatpush.msra.mxu0 0.0
      %1596 = vmatpush.msra.mxu0 0.0
      %1597 = vmatpush.msra.mxu0 0.0
      %1598 = vmatpush.msra.mxu0 0.0
      %1599 = vmatpush.msra.mxu0 0.0
      %1600 = vmatpush.msra.mxu0 0.0
      %1601 = vmatpush.msra.mxu0 0.0
      %1602 = vmatpush.msra.mxu0 0.0
      %1603 = vmatpush.msra.mxu0 0.0
      %1604 = vmatpush.msra.mxu0 0.0
      %1605 = vmatpush.msra.mxu0 0.0
      %1606 = vmatpush.msra.mxu0 0.0
      %1607 = vmatpush.msra.mxu0 0.0
      %1608 = vmatpush.msra.mxu0 %v1479
      %1609 = vmatmul.f32.gmra.mxu0 %v1467
      %v1610 = vpop.f32.mrf.mxu0
      %v1611 = vadd.f32 0.0, %v1610
      %1612 = vdwg.mxu0
      %1613 = vmatpush.msra.mxu0 0.0
      %1614 = vmatpush.msra.mxu0 0.0
      %1615 = vmatpush.msra.mxu0 0.0
      %1616 = vmatpush.msra.mxu0 0.0
      %1617 = vmatpush.msra.mxu0 0.0
      %1618 = vmatpush.msra.mxu0 0.0
      %1619 = vmatpush.msra.mxu0 0.0
      %1620 = vmatpush.msra.mxu0 0.0
      %1621 = vmatpush.msra.mxu0 0.0
      %1622 = vmatpush.msra.mxu0 0.0
      %1623 = vmatpush.msra.mxu0 0.0
      %1624 = vmatpush.msra.mxu0 0.0
      %1625 = vmatpush.msra.mxu0 0.0
      %1626 = vmatpush.msra.mxu0 0.0
      %1627 = vmatpush.msra.mxu0 0.0
      %1628 = vmatpush.msra.mxu0 %v1481
      %1629 = vmatmul.f32.gmra.mxu0 %v1467
      %v1630 = vpop.f32.mrf.mxu0
      %v1631 = vadd.f32 0.0, %v1630
      %1632 = vdwg.mxu0
      %1633 = vmatpush.msra.mxu0 0.0
      %1634 = vmatpush.msra.mxu0 0.0
      %1635 = vmatpush.msra.mxu0 0.0
      %1636 = vmatpush.msra.mxu0 0.0
      %1637 = vmatpush.msra.mxu0 0.0
      %1638 = vmatpush.msra.mxu0 0.0
      %1639 = vmatpush.msra.mxu0 0.0
      %1640 = vmatpush.msra.mxu0 0.0
      %1641 = vmatpush.msra.mxu0 0.0
      %1642 = vmatpush.msra.mxu0 0.0
      %1643 = vmatpush.msra.mxu0 0.0
      %1644 = vmatpush.msra.mxu0 0.0
      %1645 = vmatpush.msra.mxu0 0.0
      %1646 = vmatpush.msra.mxu0 0.0
      %1647 = vmatpush.msra.mxu0 0.0
      %1648 = vmatpush.msra.mxu0 %v1483
      %1649 = vmatmul.f32.gmra.mxu0 %v1467
      %v1650 = vpop.f32.mrf.mxu0
      %v1651 = vadd.f32 0.0, %v1650
      %1652 = vdwg.mxu0
      %1653 = vmatpush.msra.mxu0 0.0
      %1654 = vmatpush.msra.mxu0 0.0
      %1655 = vmatpush.msra.mxu0 0.0
      %1656 = vmatpush.msra.mxu0 0.0
      %1657 = vmatpush.msra.mxu0 0.0
      %1658 = vmatpush.msra.mxu0 0.0
      %1659 = vmatpush.msra.mxu0 0.0
      %1660 = vmatpush.msra.mxu0 0.0
      %1661 = vmatpush.msra.mxu0 0.0
      %1662 = vmatpush.msra.mxu0 0.0
      %1663 = vmatpush.msra.mxu0 0.0
      %1664 = vmatpush.msra.mxu0 0.0
      %1665 = vmatpush.msra.mxu0 0.0
      %1666 = vmatpush.msra.mxu0 0.0
      %1667 = vmatpush.msra.mxu0 0.0
      %1668 = vmatpush.msra.mxu0 %v1485
      %1669 = vmatmul.f32.gmra.mxu0 %v1467
      %v1670 = vpop.f32.mrf.mxu0
      %v1671 = vadd.f32 0.0, %v1670
      %1672 = vdwg.mxu0
      %1673 = vmatpush.msra.mxu0 0.0
      %1674 = vmatpush.msra.mxu0 0.0
      %1675 = vmatpush.msra.mxu0 0.0
      %1676 = vmatpush.msra.mxu0 0.0
      %1677 = vmatpush.msra.mxu0 0.0
      %1678 = vmatpush.msra.mxu0 0.0
      %1679 = vmatpush.msra.mxu0 0.0
      %1680 = vmatpush.msra.mxu0 0.0
      %1681 = vmatpush.msra.mxu0 0.0
      %1682 = vmatpush.msra.mxu0 0.0
      %1683 = vmatpush.msra.mxu0 0.0
      %1684 = vmatpush.msra.mxu0 0.0
      %1685 = vmatpush.msra.mxu0 0.0
      %1686 = vmatpush.msra.mxu0 0.0
      %1687 = vmatpush.msra.mxu0 0.0
      %1688 = vmatpush.msra.mxu0 %v1487
      %1689 = vmatmul.f32.gmra.mxu0 %v1467
      %v1690 = vpop.f32.mrf.mxu0
      %v1691 = vadd.f32 0.0, %v1690
      %1692 = vdwg.mxu0
      %1693 = vmatpush.msra.mxu0 0.0
      %1694 = vmatpush.msra.mxu0 0.0
      %1695 = vmatpush.msra.mxu0 0.0
      %1696 = vmatpush.msra.mxu0 0.0
      %1697 = vmatpush.msra.mxu0 0.0
      %1698 = vmatpush.msra.mxu0 0.0
      %1699 = vmatpush.msra.mxu0 0.0
      %1700 = vmatpush.msra.mxu0 0.0
      %1701 = vmatpush.msra.mxu0 0.0
      %1702 = vmatpush.msra.mxu0 0.0
      %1703 = vmatpush.msra.mxu0 0.0
      %1704 = vmatpush.msra.mxu0 0.0
      %1705 = vmatpush.msra.mxu0 0.0
      %1706 = vmatpush.msra.mxu0 0.0
      %1707 = vmatpush.msra.mxu0 0.0
      %1708 = vmatpush.msra.mxu0 %v1489
      %1709 = vmatmul.f32.gmra.mxu0 %v1467
      %v1710 = vpop.f32.mrf.mxu0
      %v1711 = vadd.f32 0.0, %v1710
      %1712 = vdwg.mxu0
      %1713 = vmatpush.msra.mxu0 0.0
      %1714 = vmatpush.msra.mxu0 0.0
      %1715 = vmatpush.msra.mxu0 0.0
      %1716 = vmatpush.msra.mxu0 0.0
      %1717 = vmatpush.msra.mxu0 0.0
      %1718 = vmatpush.msra.mxu0 0.0
      %1719 = vmatpush.msra.mxu0 0.0
      %1720 = vmatpush.msra.mxu0 0.0
      %1721 = vmatpush.msra.mxu0 0.0
      %1722 = vmatpush.msra.mxu0 0.0
      %1723 = vmatpush.msra.mxu0 0.0
      %1724 = vmatpush.msra.mxu0 0.0
      %1725 = vmatpush.msra.mxu0 0.0
      %1726 = vmatpush.msra.mxu0 0.0
      %1727 = vmatpush.msra.mxu0 0.0
      %1728 = vmatpush.msra.mxu0 %v1491
      %1729 = vmatmul.f32.gmra.mxu0 %v1467
      %v1730 = vpop.f32.mrf.mxu0
      %v1731 = vadd.f32 0.0, %v1730
      %1732 = vdwg.mxu0
      %v1733 = vadd.f32 %v1158, %v1511
      %v1734 = vadd.f32 %v1178, %v1531
      %v1735 = vadd.f32 %v1198, %v1551
      %v1736 = vadd.f32 %v1218, %v1571
      %v1737 = vadd.f32 %v1238, %v1591
      %v1738 = vadd.f32 %v1258, %v1611
      %v1739 = vadd.f32 %v1278, %v1631
      %v1740 = vadd.f32 %v1298, %v1651
      %v1741 = vadd.f32 %v1318, %v1671
      %v1742 = vadd.f32 %v1338, %v1691
      %v1743 = vadd.f32 %v1358, %v1711
      %v1744 = vadd.f32 %v1378, %v1731
      %v1745 = vld [vmem:[#allocation2] sm:$0xff]
      %v1746 = vld [vmem:[#allocation2 + $0x8] sm:$0xff]
      %v1747 = vld [vmem:[#allocation2 + $0x10] sm:$0xff]
      %v1748 = vld [vmem:[#allocation2 + $0x18] sm:$0xff]
      %v1749 = vld [vmem:[#allocation2 + $0x20] sm:$0xff]
      %v1750 = vld [vmem:[#allocation2 + $0x28] sm:$0xff]
      %v1751 = vld [vmem:[#allocation2 + $0x30] sm:$0xff]
      %v1752 = vld [vmem:[#allocation2 + $0x38] sm:$0xf]
      %1753 = vrot.lane.b32.xlu0 %v689, 116
      %v1754 = vpop.permute.xlu0 %1753
      %1763 = vst [vmem:[#allocation1] ss:$2 sm:$0xff] %v1745
      %s1764 = scalar_lea.vmem [#allocation1], 16
      %1765 = vst [vmem:[%s1764] ss:$2 sm:$0xff] %v1746
      %s1766 = scalar_lea.vmem [#allocation1], 32
      %1767 = vst [vmem:[%s1766] ss:$2 sm:$0xff] %v1747
      %s1768 = scalar_lea.vmem [#allocation1], 48
      %1769 = vst [vmem:[%s1768] ss:$2 sm:$0xff] %v1748
      %v1770 = vld.sshfl [vmem:[#allocation1] sm:$0xff pattern:$0x75316420]
      %v1771 = vld.sshfl [vmem:[#allocation1 + $0x8] sm:$0xff pattern:$0x75316420]
      %v1772 = vld.sshfl [vmem:[#allocation1 + $0x10] sm:$0xff pattern:$0x75316420]
      %v1773 = vld.sshfl [vmem:[#allocation1 + $0x18] sm:$0xff pattern:$0x75316420]
      %v1774 = vld.sshfl [vmem:[#allocation1 + $0x20] sm:$0xff pattern:$0x75316420]
      %v1775 = vld.sshfl [vmem:[#allocation1 + $0x28] sm:$0xff pattern:$0x75316420]
      %v1776 = vld.sshfl [vmem:[#allocation1 + $0x30] sm:$0xff pattern:$0x75316420]
      %v1777 = vld.sshfl [vmem:[#allocation1 + $0x38] sm:$0xff pattern:$0x75316420]
      %1778 = vst [vmem:[#allocation1] ss:$2 sm:$0xff] %v1749
      %1779 = vst [vmem:[%s1764] ss:$2 sm:$0xff] %v1750
      %1780 = vst [vmem:[%s1766] ss:$2 sm:$0xff] %v1751
      %1781 = vst [vmem:[%s1768] ss:$2 sm:$0xff] %v1752
      %v1782 = vld.sshfl [vmem:[#allocation1] sm:$0xff pattern:$0x75316420]
      %v1783 = vld.sshfl [vmem:[#allocation1 + $0x8] sm:$0xff pattern:$0x75316420]
      %v1784 = vld.sshfl [vmem:[#allocation1 + $0x10] sm:$0xff pattern:$0x75316420]
      %v1785 = vld.sshfl [vmem:[#allocation1 + $0x18] sm:$0xff pattern:$0x75316420]
      %v1786 = vld.sshfl [vmem:[#allocation1 + $0x20] sm:$0xff pattern:$0x75316420]
      %v1787 = vld.sshfl [vmem:[#allocation1 + $0x28] sm:$0xff pattern:$0x75316420]
      %v1788 = vld.sshfl [vmem:[#allocation1 + $0x30] sm:$0xff pattern:$0x75316420]
      %1789 = vrot.lane.b32.xlu0 %v1770, 101
      %v1790 = vpop.permute.xlu0 %1789
      %1791 = vrot.lane.b32.xlu0 %v1771, 101
      %v1792 = vpop.permute.xlu0 %1791
      %1793 = vrot.lane.b32.xlu0 %v1772, 101
      %v1794 = vpop.permute.xlu0 %1793
      %1795 = vrot.lane.b32.xlu0 %v1773, 101
      %v1796 = vpop.permute.xlu0 %1795
      %1797 = vrot.lane.b32.xlu0 %v1774, 101
      %v1798 = vpop.permute.xlu0 %1797
      %1799 = vrot.lane.b32.xlu0 %v1775, 101
      %v1800 = vpop.permute.xlu0 %1799
      %1801 = vrot.lane.b32.xlu0 %v1776, 101
      %v1802 = vpop.permute.xlu0 %1801
      %1803 = vrot.lane.b32.xlu0 %v1777, 101
      %v1804 = vpop.permute.xlu0 %1803
      %1805 = vrot.lane.b32.xlu0 %v1782, 101
      %v1806 = vpop.permute.xlu0 %1805
      %1807 = vrot.lane.b32.xlu0 %v1783, 101
      %v1808 = vpop.permute.xlu0 %1807
      %1809 = vrot.lane.b32.xlu0 %v1784, 101
      %v1810 = vpop.permute.xlu0 %1809
      %1811 = vrot.lane.b32.xlu0 %v1785, 101
      %v1812 = vpop.permute.xlu0 %1811
      %1813 = vrot.lane.b32.xlu0 %v1786, 101
      %v1814 = vpop.permute.xlu0 %1813
      %1815 = vrot.lane.b32.xlu0 %v1787, 101
      %v1816 = vpop.permute.xlu0 %1815
      %1817 = vrot.lane.b32.xlu0 %v1788, 101
      %v1818 = vpop.permute.xlu0 %1817
      %vm1819 = vcmask 826368
      %v1820 = vsel %vm1819, %v1790, %v1792
      %v1821 = vsel %vm1819, %v1792, %v1794
      %v1822 = vsel %vm1819, %v1794, %v1796
      %v1823 = vsel %vm1819, %v1796, %v1798
      %v1824 = vsel %vm1819, %v1800, %v1802
      %v1825 = vsel %vm1819, %v1802, %v1804
      %v1826 = vsel %vm1819, %v1804, %v1806
      %v1827 = vsel %vm1819, %v1806, %v1808
      %v1828 = vsel %vm1819, %v1810, %v1812
      %v1829 = vsel %vm1819, %v1812, %v1814
      %v1830 = vsel %vm1819, %v1814, %v1816
      %v1831 = vsel %vm1819, %v1816, %v1818
      %v1832 = vsel %vm778, %v1754, 0
      %v1834 = vsel %vm640, %v1820, 0
      %v1836 = vsel %vm640, %v1821, 0
      %v1838 = vsel %vm640, %v1822, 0
      %v1840 = vsel %vm640, %v1823, 0
      %v1842 = vsel %vm640, %v1824, 0
      %v1844 = vsel %vm640, %v1825, 0
      %v1846 = vsel %vm640, %v1826, 0
      %v1848 = vsel %vm640, %v1827, 0
      %v1850 = vsel %vm640, %v1828, 0
      %v1852 = vsel %vm640, %v1829, 0
      %v1854 = vsel %vm640, %v1830, 0
      %v1856 = vsel %vm640, %v1831, 0
      %1858 = vmatpush.msra.mxu0 0.0
      %1859 = vmatpush.msra.mxu0 0.0
      %1860 = vmatpush.msra.mxu0 0.0
      %1861 = vmatpush.msra.mxu0 0.0
      %1862 = vmatpush.msra.mxu0 0.0
      %1863 = vmatpush.msra.mxu0 0.0
      %1864 = vmatpush.msra.mxu0 0.0
      %1865 = vmatpush.msra.mxu0 0.0
      %1866 = vmatpush.msra.mxu0 0.0
      %1867 = vmatpush.msra.mxu0 0.0
      %1868 = vmatpush.msra.mxu0 0.0
      %1869 = vmatpush.msra.mxu0 0.0
      %1870 = vmatpush.msra.mxu0 0.0
      %1871 = vmatpush.msra.mxu0 0.0
      %1872 = vmatpush.msra.mxu0 0.0
      %1873 = vmatpush.msra.mxu0 %v1834
      %1874 = vmatmul.f32.gmra.mxu0 %v1832
      %v1875 = vpop.f32.mrf.mxu0
      %v1876 = vadd.f32 0.0, %v1875
      %1877 = vdwg.mxu0
      %1878 = vmatpush.msra.mxu0 0.0
      %1879 = vmatpush.msra.mxu0 0.0
      %1880 = vmatpush.msra.mxu0 0.0
      %1881 = vmatpush.msra.mxu0 0.0
      %1882 = vmatpush.msra.mxu0 0.0
      %1883 = vmatpush.msra.mxu0 0.0
      %1884 = vmatpush.msra.mxu0 0.0
      %1885 = vmatpush.msra.mxu0 0.0
      %1886 = vmatpush.msra.mxu0 0.0
      %1887 = vmatpush.msra.mxu0 0.0
      %1888 = vmatpush.msra.mxu0 0.0
      %1889 = vmatpush.msra.mxu0 0.0
      %1890 = vmatpush.msra.mxu0 0.0
      %1891 = vmatpush.msra.mxu0 0.0
      %1892 = vmatpush.msra.mxu0 0.0
      %1893 = vmatpush.msra.mxu0 %v1836
      %1894 = vmatmul.f32.gmra.mxu0 %v1832
      %v1895 = vpop.f32.mrf.mxu0
      %v1896 = vadd.f32 0.0, %v1895
      %1897 = vdwg.mxu0
      %1898 = vmatpush.msra.mxu0 0.0
      %1899 = vmatpush.msra.mxu0 0.0
      %1900 = vmatpush.msra.mxu0 0.0
      %1901 = vmatpush.msra.mxu0 0.0
      %1902 = vmatpush.msra.mxu0 0.0
      %1903 = vmatpush.msra.mxu0 0.0
      %1904 = vmatpush.msra.mxu0 0.0
      %1905 = vmatpush.msra.mxu0 0.0
      %1906 = vmatpush.msra.mxu0 0.0
      %1907 = vmatpush.msra.mxu0 0.0
      %1908 = vmatpush.msra.mxu0 0.0
      %1909 = vmatpush.msra.mxu0 0.0
      %1910 = vmatpush.msra.mxu0 0.0
      %1911 = vmatpush.msra.mxu0 0.0
      %1912 = vmatpush.msra.mxu0 0.0
      %1913 = vmatpush.msra.mxu0 %v1838
      %1914 = vmatmul.f32.gmra.mxu0 %v1832
      %v1915 = vpop.f32.mrf.mxu0
      %v1916 = vadd.f32 0.0, %v1915
      %1917 = vdwg.mxu0
      %1918 = vmatpush.msra.mxu0 0.0
      %1919 = vmatpush.msra.mxu0 0.0
      %1920 = vmatpush.msra.mxu0 0.0
      %1921 = vmatpush.msra.mxu0 0.0
      %1922 = vmatpush.msra.mxu0 0.0
      %1923 = vmatpush.msra.mxu0 0.0
      %1924 = vmatpush.msra.mxu0 0.0
      %1925 = vmatpush.msra.mxu0 0.0
      %1926 = vmatpush.msra.mxu0 0.0
      %1927 = vmatpush.msra.mxu0 0.0
      %1928 = vmatpush.msra.mxu0 0.0
      %1929 = vmatpush.msra.mxu0 0.0
      %1930 = vmatpush.msra.mxu0 0.0
      %1931 = vmatpush.msra.mxu0 0.0
      %1932 = vmatpush.msra.mxu0 0.0
      %1933 = vmatpush.msra.mxu0 %v1840
      %1934 = vmatmul.f32.gmra.mxu0 %v1832
      %v1935 = vpop.f32.mrf.mxu0
      %v1936 = vadd.f32 0.0, %v1935
      %1937 = vdwg.mxu0
      %1938 = vmatpush.msra.mxu0 0.0
      %1939 = vmatpush.msra.mxu0 0.0
      %1940 = vmatpush.msra.mxu0 0.0
      %1941 = vmatpush.msra.mxu0 0.0
      %1942 = vmatpush.msra.mxu0 0.0
      %1943 = vmatpush.msra.mxu0 0.0
      %1944 = vmatpush.msra.mxu0 0.0
      %1945 = vmatpush.msra.mxu0 0.0
      %1946 = vmatpush.msra.mxu0 0.0
      %1947 = vmatpush.msra.mxu0 0.0
      %1948 = vmatpush.msra.mxu0 0.0
      %1949 = vmatpush.msra.mxu0 0.0
      %1950 = vmatpush.msra.mxu0 0.0
      %1951 = vmatpush.msra.mxu0 0.0
      %1952 = vmatpush.msra.mxu0 0.0
      %1953 = vmatpush.msra.mxu0 %v1842
      %1954 = vmatmul.f32.gmra.mxu0 %v1832
      %v1955 = vpop.f32.mrf.mxu0
      %v1956 = vadd.f32 0.0, %v1955
      %1957 = vdwg.mxu0
      %1958 = vmatpush.msra.mxu0 0.0
      %1959 = vmatpush.msra.mxu0 0.0
      %1960 = vmatpush.msra.mxu0 0.0
      %1961 = vmatpush.msra.mxu0 0.0
      %1962 = vmatpush.msra.mxu0 0.0
      %1963 = vmatpush.msra.mxu0 0.0
      %1964 = vmatpush.msra.mxu0 0.0
      %1965 = vmatpush.msra.mxu0 0.0
      %1966 = vmatpush.msra.mxu0 0.0
      %1967 = vmatpush.msra.mxu0 0.0
      %1968 = vmatpush.msra.mxu0 0.0
      %1969 = vmatpush.msra.mxu0 0.0
      %1970 = vmatpush.msra.mxu0 0.0
      %1971 = vmatpush.msra.mxu0 0.0
      %1972 = vmatpush.msra.mxu0 0.0
      %1973 = vmatpush.msra.mxu0 %v1844
      %1974 = vmatmul.f32.gmra.mxu0 %v1832
      %v1975 = vpop.f32.mrf.mxu0
      %v1976 = vadd.f32 0.0, %v1975
      %1977 = vdwg.mxu0
      %1978 = vmatpush.msra.mxu0 0.0
      %1979 = vmatpush.msra.mxu0 0.0
      %1980 = vmatpush.msra.mxu0 0.0
      %1981 = vmatpush.msra.mxu0 0.0
      %1982 = vmatpush.msra.mxu0 0.0
      %1983 = vmatpush.msra.mxu0 0.0
      %1984 = vmatpush.msra.mxu0 0.0
      %1985 = vmatpush.msra.mxu0 0.0
      %1986 = vmatpush.msra.mxu0 0.0
      %1987 = vmatpush.msra.mxu0 0.0
      %1988 = vmatpush.msra.mxu0 0.0
      %1989 = vmatpush.msra.mxu0 0.0
      %1990 = vmatpush.msra.mxu0 0.0
      %1991 = vmatpush.msra.mxu0 0.0
      %1992 = vmatpush.msra.mxu0 0.0
      %1993 = vmatpush.msra.mxu0 %v1846
      %1994 = vmatmul.f32.gmra.mxu0 %v1832
      %v1995 = vpop.f32.mrf.mxu0
      %v1996 = vadd.f32 0.0, %v1995
      %1997 = vdwg.mxu0
      %1998 = vmatpush.msra.mxu0 0.0
      %1999 = vmatpush.msra.mxu0 0.0
      %2000 = vmatpush.msra.mxu0 0.0
      %2001 = vmatpush.msra.mxu0 0.0
      %2002 = vmatpush.msra.mxu0 0.0
      %2003 = vmatpush.msra.mxu0 0.0
      %2004 = vmatpush.msra.mxu0 0.0
      %2005 = vmatpush.msra.mxu0 0.0
      %2006 = vmatpush.msra.mxu0 0.0
      %2007 = vmatpush.msra.mxu0 0.0
      %2008 = vmatpush.msra.mxu0 0.0
      %2009 = vmatpush.msra.mxu0 0.0
      %2010 = vmatpush.msra.mxu0 0.0
      %2011 = vmatpush.msra.mxu0 0.0
      %2012 = vmatpush.msra.mxu0 0.0
      %2013 = vmatpush.msra.mxu0 %v1848
      %2014 = vmatmul.f32.gmra.mxu0 %v1832
      %v2015 = vpop.f32.mrf.mxu0
      %v2016 = vadd.f32 0.0, %v2015
      %2017 = vdwg.mxu0
      %2018 = vmatpush.msra.mxu0 0.0
      %2019 = vmatpush.msra.mxu0 0.0
      %2020 = vmatpush.msra.mxu0 0.0
      %2021 = vmatpush.msra.mxu0 0.0
      %2022 = vmatpush.msra.mxu0 0.0
      %2023 = vmatpush.msra.mxu0 0.0
      %2024 = vmatpush.msra.mxu0 0.0
      %2025 = vmatpush.msra.mxu0 0.0
      %2026 = vmatpush.msra.mxu0 0.0
      %2027 = vmatpush.msra.mxu0 0.0
      %2028 = vmatpush.msra.mxu0 0.0
      %2029 = vmatpush.msra.mxu0 0.0
      %2030 = vmatpush.msra.mxu0 0.0
      %2031 = vmatpush.msra.mxu0 0.0
      %2032 = vmatpush.msra.mxu0 0.0
      %2033 = vmatpush.msra.mxu0 %v1850
      %2034 = vmatmul.f32.gmra.mxu0 %v1832
      %v2035 = vpop.f32.mrf.mxu0
      %v2036 = vadd.f32 0.0, %v2035
      %2037 = vdwg.mxu0
      %2038 = vmatpush.msra.mxu0 0.0
      %2039 = vmatpush.msra.mxu0 0.0
      %2040 = vmatpush.msra.mxu0 0.0
      %2041 = vmatpush.msra.mxu0 0.0
      %2042 = vmatpush.msra.mxu0 0.0
      %2043 = vmatpush.msra.mxu0 0.0
      %2044 = vmatpush.msra.mxu0 0.0
      %2045 = vmatpush.msra.mxu0 0.0
      %2046 = vmatpush.msra.mxu0 0.0
      %2047 = vmatpush.msra.mxu0 0.0
      %2048 = vmatpush.msra.mxu0 0.0
      %2049 = vmatpush.msra.mxu0 0.0
      %2050 = vmatpush.msra.mxu0 0.0
      %2051 = vmatpush.msra.mxu0 0.0
      %2052 = vmatpush.msra.mxu0 0.0
      %2053 = vmatpush.msra.mxu0 %v1852
      %2054 = vmatmul.f32.gmra.mxu0 %v1832
      %v2055 = vpop.f32.mrf.mxu0
      %v2056 = vadd.f32 0.0, %v2055
      %2057 = vdwg.mxu0
      %2058 = vmatpush.msra.mxu0 0.0
      %2059 = vmatpush.msra.mxu0 0.0
      %2060 = vmatpush.msra.mxu0 0.0
      %2061 = vmatpush.msra.mxu0 0.0
      %2062 = vmatpush.msra.mxu0 0.0
      %2063 = vmatpush.msra.mxu0 0.0
      %2064 = vmatpush.msra.mxu0 0.0
      %2065 = vmatpush.msra.mxu0 0.0
      %2066 = vmatpush.msra.mxu0 0.0
      %2067 = vmatpush.msra.mxu0 0.0
      %2068 = vmatpush.msra.mxu0 0.0
      %2069 = vmatpush.msra.mxu0 0.0
      %2070 = vmatpush.msra.mxu0 0.0
      %2071 = vmatpush.msra.mxu0 0.0
      %2072 = vmatpush.msra.mxu0 0.0
      %2073 = vmatpush.msra.mxu0 %v1854
      %2074 = vmatmul.f32.gmra.mxu0 %v1832
      %v2075 = vpop.f32.mrf.mxu0
      %v2076 = vadd.f32 0.0, %v2075
      %2077 = vdwg.mxu0
      %2078 = vmatpush.msra.mxu0 0.0
      %2079 = vmatpush.msra.mxu0 0.0
      %2080 = vmatpush.msra.mxu0 0.0
      %2081 = vmatpush.msra.mxu0 0.0
      %2082 = vmatpush.msra.mxu0 0.0
      %2083 = vmatpush.msra.mxu0 0.0
      %2084 = vmatpush.msra.mxu0 0.0
      %2085 = vmatpush.msra.mxu0 0.0
      %2086 = vmatpush.msra.mxu0 0.0
      %2087 = vmatpush.msra.mxu0 0.0
      %2088 = vmatpush.msra.mxu0 0.0
      %2089 = vmatpush.msra.mxu0 0.0
      %2090 = vmatpush.msra.mxu0 0.0
      %2091 = vmatpush.msra.mxu0 0.0
      %2092 = vmatpush.msra.mxu0 0.0
      %2093 = vmatpush.msra.mxu0 %v1856
      %2094 = vmatmul.f32.gmra.mxu0 %v1832
      %v2095 = vpop.f32.mrf.mxu0
      %v2096 = vadd.f32 0.0, %v2095
      %2097 = vdwg.mxu0
      %v2098 = vadd.f32 %v1733, %v1876
      %v2099 = vadd.f32 %v1734, %v1896
      %v2100 = vadd.f32 %v1735, %v1916
      %v2101 = vadd.f32 %v1736, %v1936
      %v2102 = vadd.f32 %v1737, %v1956
      %v2103 = vadd.f32 %v1738, %v1976
      %v2104 = vadd.f32 %v1739, %v1996
      %v2105 = vadd.f32 %v1740, %v2016
      %v2106 = vadd.f32 %v1741, %v2036
      %v2107 = vadd.f32 %v1742, %v2056
      %v2108 = vadd.f32 %v1743, %v2076
      %v2109 = vadd.f32 %v1744, %v2096
      %v2110 = vld [vmem:[#allocation2] sm:$0xff]
      %v2111 = vld [vmem:[#allocation2 + $0x8] sm:$0xff]
      %v2112 = vld [vmem:[#allocation2 + $0x10] sm:$0xff]
      %v2113 = vld [vmem:[#allocation2 + $0x18] sm:$0xff]
      %v2114 = vld [vmem:[#allocation2 + $0x20] sm:$0xff]
      %v2115 = vld [vmem:[#allocation2 + $0x28] sm:$0xff]
      %v2116 = vld [vmem:[#allocation2 + $0x30] sm:$0xff]
      %v2117 = vld [vmem:[#allocation2 + $0x38] sm:$0xf]
      %2118 = vrot.lane.b32.xlu0 %v689, 112
      %v2119 = vpop.permute.xlu0 %2118
      %2128 = vst [vmem:[#allocation1] ss:$2 sm:$0xff] %v2110
      %s2129 = scalar_lea.vmem [#allocation1], 16
      %2130 = vst [vmem:[%s2129] ss:$2 sm:$0xff] %v2111
      %s2131 = scalar_lea.vmem [#allocation1], 32
      %2132 = vst [vmem:[%s2131] ss:$2 sm:$0xff] %v2112
      %s2133 = scalar_lea.vmem [#allocation1], 48
      %2134 = vst [vmem:[%s2133] ss:$2 sm:$0xff] %v2113
      %v2135 = vld.sshfl [vmem:[#allocation1] sm:$0xff pattern:$0x75316420]
      %v2136 = vld.sshfl [vmem:[#allocation1 + $0x8] sm:$0xff pattern:$0x75316420]
      %v2137 = vld.sshfl [vmem:[#allocation1 + $0x10] sm:$0xff pattern:$0x75316420]
      %v2138 = vld.sshfl [vmem:[#allocation1 + $0x18] sm:$0xff pattern:$0x75316420]
      %v2139 = vld.sshfl [vmem:[#allocation1 + $0x20] sm:$0xff pattern:$0x75316420]
      %v2140 = vld.sshfl [vmem:[#allocation1 + $0x28] sm:$0xff pattern:$0x75316420]
      %v2141 = vld.sshfl [vmem:[#allocation1 + $0x30] sm:$0xff pattern:$0x75316420]
      %v2142 = vld.sshfl [vmem:[#allocation1 + $0x38] sm:$0xff pattern:$0x75316420]
      %2143 = vst [vmem:[#allocation1] ss:$2 sm:$0xff] %v2114
      %2144 = vst [vmem:[%s2129] ss:$2 sm:$0xff] %v2115
      %2145 = vst [vmem:[%s2131] ss:$2 sm:$0xff] %v2116
      %2146 = vst [vmem:[%s2133] ss:$2 sm:$0xff] %v2117
      %v2147 = vld.sshfl [vmem:[#allocation1] sm:$0xff pattern:$0x75316420]
      %v2148 = vld.sshfl [vmem:[#allocation1 + $0x8] sm:$0xff pattern:$0x75316420]
      %v2149 = vld.sshfl [vmem:[#allocation1 + $0x10] sm:$0xff pattern:$0x75316420]
      %v2150 = vld.sshfl [vmem:[#allocation1 + $0x18] sm:$0xff pattern:$0x75316420]
      %v2151 = vld.sshfl [vmem:[#allocation1 + $0x20] sm:$0xff pattern:$0x75316420]
      %v2152 = vld.sshfl [vmem:[#allocation1 + $0x28] sm:$0xff pattern:$0x75316420]
      %v2153 = vld.sshfl [vmem:[#allocation1 + $0x30] sm:$0xff pattern:$0x75316420]
      %2154 = vrot.lane.b32.xlu0 %v2135, 100
      %v2155 = vpop.permute.xlu0 %2154
      %2156 = vrot.lane.b32.xlu0 %v2136, 100
      %v2157 = vpop.permute.xlu0 %2156
      %2158 = vrot.lane.b32.xlu0 %v2137, 100
      %v2159 = vpop.permute.xlu0 %2158
      %2160 = vrot.lane.b32.xlu0 %v2138, 100
      %v2161 = vpop.permute.xlu0 %2160
      %2162 = vrot.lane.b32.xlu0 %v2139, 100
      %v2163 = vpop.permute.xlu0 %2162
      %2164 = vrot.lane.b32.xlu0 %v2140, 100
      %v2165 = vpop.permute.xlu0 %2164
      %2166 = vrot.lane.b32.xlu0 %v2141, 100
      %v2167 = vpop.permute.xlu0 %2166
      %2168 = vrot.lane.b32.xlu0 %v2142, 100
      %v2169 = vpop.permute.xlu0 %2168
      %2170 = vrot.lane.b32.xlu0 %v2147, 100
      %v2171 = vpop.permute.xlu0 %2170
      %2172 = vrot.lane.b32.xlu0 %v2148, 100
      %v2173 = vpop.permute.xlu0 %2172
      %2174 = vrot.lane.b32.xlu0 %v2149, 100
      %v2175 = vpop.permute.xlu0 %2174
      %2176 = vrot.lane.b32.xlu0 %v2150, 100
      %v2177 = vpop.permute.xlu0 %2176
      %2178 = vrot.lane.b32.xlu0 %v2151, 100
      %v2179 = vpop.permute.xlu0 %2178
      %2180 = vrot.lane.b32.xlu0 %v2152, 100
      %v2181 = vpop.permute.xlu0 %2180
      %2182 = vrot.lane.b32.xlu0 %v2153, 100
      %v2183 = vpop.permute.xlu0 %2182
      %vm2184 = vcmask 818176
      %v2185 = vsel %vm2184, %v2155, %v2157
      %v2186 = vsel %vm2184, %v2157, %v2159
      %v2187 = vsel %vm2184, %v2159, %v2161
      %v2188 = vsel %vm2184, %v2161, %v2163
      %v2189 = vsel %vm2184, %v2165, %v2167
      %v2190 = vsel %vm2184, %v2167, %v2169
      %v2191 = vsel %vm2184, %v2169, %v2171
      %v2192 = vsel %vm2184, %v2171, %v2173
      %v2193 = vsel %vm2184, %v2175, %v2177
      %v2194 = vsel %vm2184, %v2177, %v2179
      %v2195 = vsel %vm2184, %v2179, %v2181
      %v2196 = vsel %vm2184, %v2181, %v2183
      %v2197 = vsel %vm778, %v2119, 0
      %v2199 = vsel %vm640, %v2185, 0
      %v2201 = vsel %vm640, %v2186, 0
      %v2203 = vsel %vm640, %v2187, 0
      %v2205 = vsel %vm640, %v2188, 0
      %v2207 = vsel %vm640, %v2189, 0
      %v2209 = vsel %vm640, %v2190, 0
      %v2211 = vsel %vm640, %v2191, 0
      %v2213 = vsel %vm640, %v2192, 0
      %v2215 = vsel %vm640, %v2193, 0
      %v2217 = vsel %vm640, %v2194, 0
      %v2219 = vsel %vm640, %v2195, 0
      %v2221 = vsel %vm640, %v2196, 0
      %2223 = vmatpush.msra.mxu0 0.0
      %2224 = vmatpush.msra.mxu0 0.0
      %2225 = vmatpush.msra.mxu0 0.0
      %2226 = vmatpush.msra.mxu0 0.0
      %2227 = vmatpush.msra.mxu0 0.0
      %2228 = vmatpush.msra.mxu0 0.0
      %2229 = vmatpush.msra.mxu0 0.0
      %2230 = vmatpush.msra.mxu0 0.0
      %2231 = vmatpush.msra.mxu0 0.0
      %2232 = vmatpush.msra.mxu0 0.0
      %2233 = vmatpush.msra.mxu0 0.0
      %2234 = vmatpush.msra.mxu0 0.0
      %2235 = vmatpush.msra.mxu0 0.0
      %2236 = vmatpush.msra.mxu0 0.0
      %2237 = vmatpush.msra.mxu0 0.0
      %2238 = vmatpush.msra.mxu0 %v2199
      %2239 = vmatmul.f32.gmra.mxu0 %v2197
      %v2240 = vpop.f32.mrf.mxu0
      %v2241 = vadd.f32 0.0, %v2240
      %2242 = vdwg.mxu0
      %2243 = vmatpush.msra.mxu0 0.0
      %2244 = vmatpush.msra.mxu0 0.0
      %2245 = vmatpush.msra.mxu0 0.0
      %2246 = vmatpush.msra.mxu0 0.0
      %2247 = vmatpush.msra.mxu0 0.0
      %2248 = vmatpush.msra.mxu0 0.0
      %2249 = vmatpush.msra.mxu0 0.0
      %2250 = vmatpush.msra.mxu0 0.0
      %2251 = vmatpush.msra.mxu0 0.0
      %2252 = vmatpush.msra.mxu0 0.0
      %2253 = vmatpush.msra.mxu0 0.0
      %2254 = vmatpush.msra.mxu0 0.0
      %2255 = vmatpush.msra.mxu0 0.0
      %2256 = vmatpush.msra.mxu0 0.0
      %2257 = vmatpush.msra.mxu0 0.0
      %2258 = vmatpush.msra.mxu0 %v2201
      %2259 = vmatmul.f32.gmra.mxu0 %v2197
      %v2260 = vpop.f32.mrf.mxu0
      %v2261 = vadd.f32 0.0, %v2260
      %2262 = vdwg.mxu0
      %2263 = vmatpush.msra.mxu0 0.0
      %2264 = vmatpush.msra.mxu0 0.0
      %2265 = vmatpush.msra.mxu0 0.0
      %2266 = vmatpush.msra.mxu0 0.0
      %2267 = vmatpush.msra.mxu0 0.0
      %2268 = vmatpush.msra.mxu0 0.0
      %2269 = vmatpush.msra.mxu0 0.0
      %2270 = vmatpush.msra.mxu0 0.0
      %2271 = vmatpush.msra.mxu0 0.0
      %2272 = vmatpush.msra.mxu0 0.0
      %2273 = vmatpush.msra.mxu0 0.0
      %2274 = vmatpush.msra.mxu0 0.0
      %2275 = vmatpush.msra.mxu0 0.0
      %2276 = vmatpush.msra.mxu0 0.0
      %2277 = vmatpush.msra.mxu0 0.0
      %2278 = vmatpush.msra.mxu0 %v2203
      %2279 = vmatmul.f32.gmra.mxu0 %v2197
      %v2280 = vpop.f32.mrf.mxu0
      %v2281 = vadd.f32 0.0, %v2280
      %2282 = vdwg.mxu0
      %2283 = vmatpush.msra.mxu0 0.0
      %2284 = vmatpush.msra.mxu0 0.0
      %2285 = vmatpush.msra.mxu0 0.0
      %2286 = vmatpush.msra.mxu0 0.0
      %2287 = vmatpush.msra.mxu0 0.0
      %2288 = vmatpush.msra.mxu0 0.0
      %2289 = vmatpush.msra.mxu0 0.0
      %2290 = vmatpush.msra.mxu0 0.0
      %2291 = vmatpush.msra.mxu0 0.0
      %2292 = vmatpush.msra.mxu0 0.0
      %2293 = vmatpush.msra.mxu0 0.0
      %2294 = vmatpush.msra.mxu0 0.0
      %2295 = vmatpush.msra.mxu0 0.0
      %2296 = vmatpush.msra.mxu0 0.0
      %2297 = vmatpush.msra.mxu0 0.0
      %2298 = vmatpush.msra.mxu0 %v2205
      %2299 = vmatmul.f32.gmra.mxu0 %v2197
      %v2300 = vpop.f32.mrf.mxu0
      %v2301 = vadd.f32 0.0, %v2300
      %2302 = vdwg.mxu0
      %2303 = vmatpush.msra.mxu0 0.0
      %2304 = vmatpush.msra.mxu0 0.0
      %2305 = vmatpush.msra.mxu0 0.0
      %2306 = vmatpush.msra.mxu0 0.0
      %2307 = vmatpush.msra.mxu0 0.0
      %2308 = vmatpush.msra.mxu0 0.0
      %2309 = vmatpush.msra.mxu0 0.0
      %2310 = vmatpush.msra.mxu0 0.0
      %2311 = vmatpush.msra.mxu0 0.0
      %2312 = vmatpush.msra.mxu0 0.0
      %2313 = vmatpush.msra.mxu0 0.0
      %2314 = vmatpush.msra.mxu0 0.0
      %2315 = vmatpush.msra.mxu0 0.0
      %2316 = vmatpush.msra.mxu0 0.0
      %2317 = vmatpush.msra.mxu0 0.0
      %2318 = vmatpush.msra.mxu0 %v2207
      %2319 = vmatmul.f32.gmra.mxu0 %v2197
      %v2320 = vpop.f32.mrf.mxu0
      %v2321 = vadd.f32 0.0, %v2320
      %2322 = vdwg.mxu0
      %2323 = vmatpush.msra.mxu0 0.0
      %2324 = vmatpush.msra.mxu0 0.0
      %2325 = vmatpush.msra.mxu0 0.0
      %2326 = vmatpush.msra.mxu0 0.0
      %2327 = vmatpush.msra.mxu0 0.0
      %2328 = vmatpush.msra.mxu0 0.0
      %2329 = vmatpush.msra.mxu0 0.0
      %2330 = vmatpush.msra.mxu0 0.0
      %2331 = vmatpush.msra.mxu0 0.0
      %2332 = vmatpush.msra.mxu0 0.0
      %2333 = vmatpush.msra.mxu0 0.0
      %2334 = vmatpush.msra.mxu0 0.0
      %2335 = vmatpush.msra.mxu0 0.0
      %2336 = vmatpush.msra.mxu0 0.0
      %2337 = vmatpush.msra.mxu0 0.0
      %2338 = vmatpush.msra.mxu0 %v2209
      %2339 = vmatmul.f32.gmra.mxu0 %v2197
      %v2340 = vpop.f32.mrf.mxu0
      %v2341 = vadd.f32 0.0, %v2340
      %2342 = vdwg.mxu0
      %2343 = vmatpush.msra.mxu0 0.0
      %2344 = vmatpush.msra.mxu0 0.0
      %2345 = vmatpush.msra.mxu0 0.0
      %2346 = vmatpush.msra.mxu0 0.0
      %2347 = vmatpush.msra.mxu0 0.0
      %2348 = vmatpush.msra.mxu0 0.0
      %2349 = vmatpush.msra.mxu0 0.0
      %2350 = vmatpush.msra.mxu0 0.0
      %2351 = vmatpush.msra.mxu0 0.0
      %2352 = vmatpush.msra.mxu0 0.0
      %2353 = vmatpush.msra.mxu0 0.0
      %2354 = vmatpush.msra.mxu0 0.0
      %2355 = vmatpush.msra.mxu0 0.0
      %2356 = vmatpush.msra.mxu0 0.0
      %2357 = vmatpush.msra.mxu0 0.0
      %2358 = vmatpush.msra.mxu0 %v2211
      %2359 = vmatmul.f32.gmra.mxu0 %v2197
      %v2360 = vpop.f32.mrf.mxu0
      %v2361 = vadd.f32 0.0, %v2360
      %2362 = vdwg.mxu0
      %2363 = vmatpush.msra.mxu0 0.0
      %2364 = vmatpush.msra.mxu0 0.0
      %2365 = vmatpush.msra.mxu0 0.0
      %2366 = vmatpush.msra.mxu0 0.0
      %2367 = vmatpush.msra.mxu0 0.0
      %2368 = vmatpush.msra.mxu0 0.0
      %2369 = vmatpush.msra.mxu0 0.0
      %2370 = vmatpush.msra.mxu0 0.0
      %2371 = vmatpush.msra.mxu0 0.0
      %2372 = vmatpush.msra.mxu0 0.0
      %2373 = vmatpush.msra.mxu0 0.0
      %2374 = vmatpush.msra.mxu0 0.0
      %2375 = vmatpush.msra.mxu0 0.0
      %2376 = vmatpush.msra.mxu0 0.0
      %2377 = vmatpush.msra.mxu0 0.0
      %2378 = vmatpush.msra.mxu0 %v2213
      %2379 = vmatmul.f32.gmra.mxu0 %v2197
      %v2380 = vpop.f32.mrf.mxu0
      %v2381 = vadd.f32 0.0, %v2380
      %2382 = vdwg.mxu0
      %2383 = vmatpush.msra.mxu0 0.0
      %2384 = vmatpush.msra.mxu0 0.0
      %2385 = vmatpush.msra.mxu0 0.0
      %2386 = vmatpush.msra.mxu0 0.0
      %2387 = vmatpush.msra.mxu0 0.0
      %2388 = vmatpush.msra.mxu0 0.0
      %2389 = vmatpush.msra.mxu0 0.0
      %2390 = vmatpush.msra.mxu0 0.0
      %2391 = vmatpush.msra.mxu0 0.0
      %2392 = vmatpush.msra.mxu0 0.0
      %2393 = vmatpush.msra.mxu0 0.0
      %2394 = vmatpush.msra.mxu0 0.0
      %2395 = vmatpush.msra.mxu0 0.0
      %2396 = vmatpush.msra.mxu0 0.0
      %2397 = vmatpush.msra.mxu0 0.0
      %2398 = vmatpush.msra.mxu0 %v2215
      %2399 = vmatmul.f32.gmra.mxu0 %v2197
      %v2400 = vpop.f32.mrf.mxu0
      %v2401 = vadd.f32 0.0, %v2400
      %2402 = vdwg.mxu0
      %2403 = vmatpush.msra.mxu0 0.0
      %2404 = vmatpush.msra.mxu0 0.0
      %2405 = vmatpush.msra.mxu0 0.0
      %2406 = vmatpush.msra.mxu0 0.0
      %2407 = vmatpush.msra.mxu0 0.0
      %2408 = vmatpush.msra.mxu0 0.0
      %2409 = vmatpush.msra.mxu0 0.0
      %2410 = vmatpush.msra.mxu0 0.0
      %2411 = vmatpush.msra.mxu0 0.0
      %2412 = vmatpush.msra.mxu0 0.0
      %2413 = vmatpush.msra.mxu0 0.0
      %2414 = vmatpush.msra.mxu0 0.0
      %2415 = vmatpush.msra.mxu0 0.0
      %2416 = vmatpush.msra.mxu0 0.0
      %2417 = vmatpush.msra.mxu0 0.0
      %2418 = vmatpush.msra.mxu0 %v2217
      %2419 = vmatmul.f32.gmra.mxu0 %v2197
      %v2420 = vpop.f32.mrf.mxu0
      %v2421 = vadd.f32 0.0, %v2420
      %2422 = vdwg.mxu0
      %2423 = vmatpush.msra.mxu0 0.0
      %2424 = vmatpush.msra.mxu0 0.0
      %2425 = vmatpush.msra.mxu0 0.0
      %2426 = vmatpush.msra.mxu0 0.0
      %2427 = vmatpush.msra.mxu0 0.0
      %2428 = vmatpush.msra.mxu0 0.0
      %2429 = vmatpush.msra.mxu0 0.0
      %2430 = vmatpush.msra.mxu0 0.0
      %2431 = vmatpush.msra.mxu0 0.0
      %2432 = vmatpush.msra.mxu0 0.0
      %2433 = vmatpush.msra.mxu0 0.0
      %2434 = vmatpush.msra.mxu0 0.0
      %2435 = vmatpush.msra.mxu0 0.0
      %2436 = vmatpush.msra.mxu0 0.0
      %2437 = vmatpush.msra.mxu0 0.0
      %2438 = vmatpush.msra.mxu0 %v2219
      %2439 = vmatmul.f32.gmra.mxu0 %v2197
      %v2440 = vpop.f32.mrf.mxu0
      %v2441 = vadd.f32 0.0, %v2440
      %2442 = vdwg.mxu0
      %2443 = vmatpush.msra.mxu0 0.0
      %2444 = vmatpush.msra.mxu0 0.0
      %2445 = vmatpush.msra.mxu0 0.0
      %2446 = vmatpush.msra.mxu0 0.0
      %2447 = vmatpush.msra.mxu0 0.0
      %2448 = vmatpush.msra.mxu0 0.0
      %2449 = vmatpush.msra.mxu0 0.0
      %2450 = vmatpush.msra.mxu0 0.0
      %2451 = vmatpush.msra.mxu0 0.0
      %2452 = vmatpush.msra.mxu0 0.0
      %2453 = vmatpush.msra.mxu0 0.0
      %2454 = vmatpush.msra.mxu0 0.0
      %2455 = vmatpush.msra.mxu0 0.0
      %2456 = vmatpush.msra.mxu0 0.0
      %2457 = vmatpush.msra.mxu0 0.0
      %2458 = vmatpush.msra.mxu0 %v2221
      %2459 = vmatmul.f32.gmra.mxu0 %v2197
      %v2460 = vpop.f32.mrf.mxu0
      %v2461 = vadd.f32 0.0, %v2460
      %2462 = vdwg.mxu0
      %v2463 = vadd.f32 %v2098, %v2241
      %v2464 = vadd.f32 %v2099, %v2261
      %v2465 = vadd.f32 %v2100, %v2281
      %v2466 = vadd.f32 %v2101, %v2301
      %v2467 = vadd.f32 %v2102, %v2321
      %v2468 = vadd.f32 %v2103, %v2341
      %v2469 = vadd.f32 %v2104, %v2361
      %v2470 = vadd.f32 %v2105, %v2381
      %v2471 = vadd.f32 %v2106, %v2401
      %v2472 = vadd.f32 %v2107, %v2421
      %v2473 = vadd.f32 %v2108, %v2441
      %v2474 = vadd.f32 %v2109, %v2461
      %v2475 = vld [vmem:[#allocation2] sm:$0xff]
      %v2476 = vld [vmem:[#allocation2 + $0x8] sm:$0xff]
      %v2477 = vld [vmem:[#allocation2 + $0x10] sm:$0xff]
      %v2478 = vld [vmem:[#allocation2 + $0x18] sm:$0xff]
      %v2479 = vld [vmem:[#allocation2 + $0x20] sm:$0xff]
      %v2480 = vld [vmem:[#allocation2 + $0x28] sm:$0xff]
      %v2481 = vld [vmem:[#allocation2 + $0x30] sm:$0xff]
      %v2482 = vld [vmem:[#allocation2 + $0x38] sm:$0xf]
      %2483 = vrot.lane.b32.xlu0 %v689, 108
      %v2484 = vpop.permute.xlu0 %2483
      %2493 = vst [vmem:[#allocation1] ss:$2 sm:$0xff] %v2475
      %s2494 = scalar_lea.vmem [#allocation1], 16
      %2495 = vst [vmem:[%s2494] ss:$2 sm:$0xff] %v2476
      %s2496 = scalar_lea.vmem [#allocation1], 32
      %2497 = vst [vmem:[%s2496] ss:$2 sm:$0xff] %v2477
      %s2498 = scalar_lea.vmem [#allocation1], 48
      %2499 = vst [vmem:[%s2498] ss:$2 sm:$0xff] %v2478
      %v2500 = vld.sshfl [vmem:[#allocation1] sm:$0xff pattern:$0x75316420]
      %v2501 = vld.sshfl [vmem:[#allocation1 + $0x8] sm:$0xff pattern:$0x75316420]
      %v2502 = vld.sshfl [vmem:[#allocation1 + $0x10] sm:$0xff pattern:$0x75316420]
      %v2503 = vld.sshfl [vmem:[#allocation1 + $0x18] sm:$0xff pattern:$0x75316420]
      %v2504 = vld.sshfl [vmem:[#allocation1 + $0x20] sm:$0xff pattern:$0x75316420]
      %v2505 = vld.sshfl [vmem:[#allocation1 + $0x28] sm:$0xff pattern:$0x75316420]
      %v2506 = vld.sshfl [vmem:[#allocation1 + $0x30] sm:$0xff pattern:$0x75316420]
      %v2507 = vld.sshfl [vmem:[#allocation1 + $0x38] sm:$0xff pattern:$0x75316420]
      %2508 = vst [vmem:[#allocation1] ss:$2 sm:$0xff] %v2479
      %2509 = vst [vmem:[%s2494] ss:$2 sm:$0xff] %v2480
      %2510 = vst [vmem:[%s2496] ss:$2 sm:$0xff] %v2481
      %2511 = vst [vmem:[%s2498] ss:$2 sm:$0xff] %v2482
      %v2512 = vld.sshfl [vmem:[#allocation1] sm:$0xff pattern:$0x75316420]
      %v2513 = vld.sshfl [vmem:[#allocation1 + $0x8] sm:$0xff pattern:$0x75316420]
      %v2514 = vld.sshfl [vmem:[#allocation1 + $0x10] sm:$0xff pattern:$0x75316420]
      %v2515 = vld.sshfl [vmem:[#allocation1 + $0x18] sm:$0xff pattern:$0x75316420]
      %v2516 = vld.sshfl [vmem:[#allocation1 + $0x20] sm:$0xff pattern:$0x75316420]
      %v2517 = vld.sshfl [vmem:[#allocation1 + $0x28] sm:$0xff pattern:$0x75316420]
      %v2518 = vld.sshfl [vmem:[#allocation1 + $0x30] sm:$0xff pattern:$0x75316420]
      %2519 = vrot.lane.b32.xlu0 %v2500, 99
      %v2520 = vpop.permute.xlu0 %2519
      %2521 = vrot.lane.b32.xlu0 %v2501, 99
      %v2522 = vpop.permute.xlu0 %2521
      %2523 = vrot.lane.b32.xlu0 %v2502, 99
      %v2524 = vpop.permute.xlu0 %2523
      %2525 = vrot.lane.b32.xlu0 %v2503, 99
      %v2526 = vpop.permute.xlu0 %2525
      %2527 = vrot.lane.b32.xlu0 %v2504, 99
      %v2528 = vpop.permute.xlu0 %2527
      %2529 = vrot.lane.b32.xlu0 %v2505, 99
      %v2530 = vpop.permute.xlu0 %2529
      %2531 = vrot.lane.b32.xlu0 %v2506, 99
      %v2532 = vpop.permute.xlu0 %2531
      %2533 = vrot.lane.b32.xlu0 %v2507, 99
      %v2534 = vpop.permute.xlu0 %2533
      %2535 = vrot.lane.b32.xlu0 %v2512, 99
      %v2536 = vpop.permute.xlu0 %2535
      %2537 = vrot.lane.b32.xlu0 %v2513, 99
      %v2538 = vpop.permute.xlu0 %2537
      %2539 = vrot.lane.b32.xlu0 %v2514, 99
      %v2540 = vpop.permute.xlu0 %2539
      %2541 = vrot.lane.b32.xlu0 %v2515, 99
      %v2542 = vpop.permute.xlu0 %2541
      %2543 = vrot.lane.b32.xlu0 %v2516, 99
      %v2544 = vpop.permute.xlu0 %2543
      %2545 = vrot.lane.b32.xlu0 %v2517, 99
      %v2546 = vpop.permute.xlu0 %2545
      %2547 = vrot.lane.b32.xlu0 %v2518, 99
      %v2548 = vpop.permute.xlu0 %2547
      %vm2549 = vcmask 809984
      %v2550 = vsel %vm2549, %v2520, %v2522
      %v2551 = vsel %vm2549, %v2522, %v2524
      %v2552 = vsel %vm2549, %v2524, %v2526
      %v2553 = vsel %vm2549, %v2526, %v2528
      %v2554 = vsel %vm2549, %v2530, %v2532
      %v2555 = vsel %vm2549, %v2532, %v2534
      %v2556 = vsel %vm2549, %v2534, %v2536
      %v2557 = vsel %vm2549, %v2536, %v2538
      %v2558 = vsel %vm2549, %v2540, %v2542
      %v2559 = vsel %vm2549, %v2542, %v2544
      %v2560 = vsel %vm2549, %v2544, %v2546
      %v2561 = vsel %vm2549, %v2546, %v2548
      %v2562 = vsel %vm778, %v2484, 0
      %v2564 = vsel %vm640, %v2550, 0
      %v2566 = vsel %vm640, %v2551, 0
      %v2568 = vsel %vm640, %v2552, 0
      %v2570 = vsel %vm640, %v2553, 0
      %v2572 = vsel %vm640, %v2554, 0
      %v2574 = vsel %vm640, %v2555, 0
      %v2576 = vsel %vm640, %v2556, 0
      %v2578 = vsel %vm640, %v2557, 0
      %v2580 = vsel %vm640, %v2558, 0
      %v2582 = vsel %vm640, %v2559, 0
      %v2584 = vsel %vm640, %v2560, 0
      %v2586 = vsel %vm640, %v2561, 0
      %2588 = vmatpush.msra.mxu0 0.0
      %2589 = vmatpush.msra.mxu0 0.0
      %2590 = vmatpush.msra.mxu0 0.0
      %2591 = vmatpush.msra.mxu0 0.0
      %2592 = vmatpush.msra.mxu0 0.0
      %2593 = vmatpush.msra.mxu0 0.0
      %2594 = vmatpush.msra.mxu0 0.0
      %2595 = vmatpush.msra.mxu0 0.0
      %2596 = vmatpush.msra.mxu0 0.0
      %2597 = vmatpush.msra.mxu0 0.0
      %2598 = vmatpush.msra.mxu0 0.0
      %2599 = vmatpush.msra.mxu0 0.0
      %2600 = vmatpush.msra.mxu0 0.0
      %2601 = vmatpush.msra.mxu0 0.0
      %2602 = vmatpush.msra.mxu0 0.0
      %2603 = vmatpush.msra.mxu0 %v2564
      %2604 = vmatmul.f32.gmra.mxu0 %v2562
      %v2605 = vpop.f32.mrf.mxu0
      %v2606 = vadd.f32 0.0, %v2605
      %2607 = vdwg.mxu0
      %2608 = vmatpush.msra.mxu0 0.0
      %2609 = vmatpush.msra.mxu0 0.0
      %2610 = vmatpush.msra.mxu0 0.0
      %2611 = vmatpush.msra.mxu0 0.0
      %2612 = vmatpush.msra.mxu0 0.0
      %2613 = vmatpush.msra.mxu0 0.0
      %2614 = vmatpush.msra.mxu0 0.0
      %2615 = vmatpush.msra.mxu0 0.0
      %2616 = vmatpush.msra.mxu0 0.0
      %2617 = vmatpush.msra.mxu0 0.0
      %2618 = vmatpush.msra.mxu0 0.0
      %2619 = vmatpush.msra.mxu0 0.0
      %2620 = vmatpush.msra.mxu0 0.0
      %2621 = vmatpush.msra.mxu0 0.0
      %2622 = vmatpush.msra.mxu0 0.0
      %2623 = vmatpush.msra.mxu0 %v2566
      %2624 = vmatmul.f32.gmra.mxu0 %v2562
      %v2625 = vpop.f32.mrf.mxu0
      %v2626 = vadd.f32 0.0, %v2625
      %2627 = vdwg.mxu0
      %2628 = vmatpush.msra.mxu0 0.0
      %2629 = vmatpush.msra.mxu0 0.0
      %2630 = vmatpush.msra.mxu0 0.0
      %2631 = vmatpush.msra.mxu0 0.0
      %2632 = vmatpush.msra.mxu0 0.0
      %2633 = vmatpush.msra.mxu0 0.0
      %2634 = vmatpush.msra.mxu0 0.0
      %2635 = vmatpush.msra.mxu0 0.0
      %2636 = vmatpush.msra.mxu0 0.0
      %2637 = vmatpush.msra.mxu0 0.0
      %2638 = vmatpush.msra.mxu0 0.0
      %2639 = vmatpush.msra.mxu0 0.0
      %2640 = vmatpush.msra.mxu0 0.0
      %2641 = vmatpush.msra.mxu0 0.0
      %2642 = vmatpush.msra.mxu0 0.0
      %2643 = vmatpush.msra.mxu0 %v2568
      %2644 = vmatmul.f32.gmra.mxu0 %v2562
      %v2645 = vpop.f32.mrf.mxu0
      %v2646 = vadd.f32 0.0, %v2645
      %2647 = vdwg.mxu0
      %2648 = vmatpush.msra.mxu0 0.0
      %2649 = vmatpush.msra.mxu0 0.0
      %2650 = vmatpush.msra.mxu0 0.0
      %2651 = vmatpush.msra.mxu0 0.0
      %2652 = vmatpush.msra.mxu0 0.0
      %2653 = vmatpush.msra.mxu0 0.0
      %2654 = vmatpush.msra.mxu0 0.0
      %2655 = vmatpush.msra.mxu0 0.0
      %2656 = vmatpush.msra.mxu0 0.0
      %2657 = vmatpush.msra.mxu0 0.0
      %2658 = vmatpush.msra.mxu0 0.0
      %2659 = vmatpush.msra.mxu0 0.0
      %2660 = vmatpush.msra.mxu0 0.0
      %2661 = vmatpush.msra.mxu0 0.0
      %2662 = vmatpush.msra.mxu0 0.0
      %2663 = vmatpush.msra.mxu0 %v2570
      %2664 = vmatmul.f32.gmra.mxu0 %v2562
      %v2665 = vpop.f32.mrf.mxu0
      %v2666 = vadd.f32 0.0, %v2665
      %2667 = vdwg.mxu0
      %2668 = vmatpush.msra.mxu0 0.0
      %2669 = vmatpush.msra.mxu0 0.0
      %2670 = vmatpush.msra.mxu0 0.0
      %2671 = vmatpush.msra.mxu0 0.0
      %2672 = vmatpush.msra.mxu0 0.0
      %2673 = vmatpush.msra.mxu0 0.0
      %2674 = vmatpush.msra.mxu0 0.0
      %2675 = vmatpush.msra.mxu0 0.0
      %2676 = vmatpush.msra.mxu0 0.0
      %2677 = vmatpush.msra.mxu0 0.0
      %2678 = vmatpush.msra.mxu0 0.0
      %2679 = vmatpush.msra.mxu0 0.0
      %2680 = vmatpush.msra.mxu0 0.0
      %2681 = vmatpush.msra.mxu0 0.0
      %2682 = vmatpush.msra.mxu0 0.0
      %2683 = vmatpush.msra.mxu0 %v2572
      %2684 = vmatmul.f32.gmra.mxu0 %v2562
      %v2685 = vpop.f32.mrf.mxu0
      %v2686 = vadd.f32 0.0, %v2685
      %2687 = vdwg.mxu0
      %2688 = vmatpush.msra.mxu0 0.0
      %2689 = vmatpush.msra.mxu0 0.0
      %2690 = vmatpush.msra.mxu0 0.0
      %2691 = vmatpush.msra.mxu0 0.0
      %2692 = vmatpush.msra.mxu0 0.0
      %2693 = vmatpush.msra.mxu0 0.0
      %2694 = vmatpush.msra.mxu0 0.0
      %2695 = vmatpush.msra.mxu0 0.0
      %2696 = vmatpush.msra.mxu0 0.0
      %2697 = vmatpush.msra.mxu0 0.0
      %2698 = vmatpush.msra.mxu0 0.0
      %2699 = vmatpush.msra.mxu0 0.0
      %2700 = vmatpush.msra.mxu0 0.0
      %2701 = vmatpush.msra.mxu0 0.0
      %2702 = vmatpush.msra.mxu0 0.0
      %2703 = vmatpush.msra.mxu0 %v2574
      %2704 = vmatmul.f32.gmra.mxu0 %v2562
      %v2705 = vpop.f32.mrf.mxu0
      %v2706 = vadd.f32 0.0, %v2705
      %2707 = vdwg.mxu0
      %2708 = vmatpush.msra.mxu0 0.0
      %2709 = vmatpush.msra.mxu0 0.0
      %2710 = vmatpush.msra.mxu0 0.0
      %2711 = vmatpush.msra.mxu0 0.0
      %2712 = vmatpush.msra.mxu0 0.0
      %2713 = vmatpush.msra.mxu0 0.0
      %2714 = vmatpush.msra.mxu0 0.0
      %2715 = vmatpush.msra.mxu0 0.0
      %2716 = vmatpush.msra.mxu0 0.0
      %2717 = vmatpush.msra.mxu0 0.0
      %2718 = vmatpush.msra.mxu0 0.0
      %2719 = vmatpush.msra.mxu0 0.0
      %2720 = vmatpush.msra.mxu0 0.0
      %2721 = vmatpush.msra.mxu0 0.0
      %2722 = vmatpush.msra.mxu0 0.0
      %2723 = vmatpush.msra.mxu0 %v2576
      %2724 = vmatmul.f32.gmra.mxu0 %v2562
      %v2725 = vpop.f32.mrf.mxu0
      %v2726 = vadd.f32 0.0, %v2725
      %2727 = vdwg.mxu0
      %2728 = vmatpush.msra.mxu0 0.0
      %2729 = vmatpush.msra.mxu0 0.0
      %2730 = vmatpush.msra.mxu0 0.0
      %2731 = vmatpush.msra.mxu0 0.0
      %2732 = vmatpush.msra.mxu0 0.0
      %2733 = vmatpush.msra.mxu0 0.0
      %2734 = vmatpush.msra.mxu0 0.0
      %2735 = vmatpush.msra.mxu0 0.0
      %2736 = vmatpush.msra.mxu0 0.0
      %2737 = vmatpush.msra.mxu0 0.0
      %2738 = vmatpush.msra.mxu0 0.0
      %2739 = vmatpush.msra.mxu0 0.0
      %2740 = vmatpush.msra.mxu0 0.0
      %2741 = vmatpush.msra.mxu0 0.0
      %2742 = vmatpush.msra.mxu0 0.0
      %2743 = vmatpush.msra.mxu0 %v2578
      %2744 = vmatmul.f32.gmra.mxu0 %v2562
      %v2745 = vpop.f32.mrf.mxu0
      %v2746 = vadd.f32 0.0, %v2745
      %2747 = vdwg.mxu0
      %2748 = vmatpush.msra.mxu0 0.0
      %2749 = vmatpush.msra.mxu0 0.0
      %2750 = vmatpush.msra.mxu0 0.0
      %2751 = vmatpush.msra.mxu0 0.0
      %2752 = vmatpush.msra.mxu0 0.0
      %2753 = vmatpush.msra.mxu0 0.0
      %2754 = vmatpush.msra.mxu0 0.0
      %2755 = vmatpush.msra.mxu0 0.0
      %2756 = vmatpush.msra.mxu0 0.0
      %2757 = vmatpush.msra.mxu0 0.0
      %2758 = vmatpush.msra.mxu0 0.0
      %2759 = vmatpush.msra.mxu0 0.0
      %2760 = vmatpush.msra.mxu0 0.0
      %2761 = vmatpush.msra.mxu0 0.0
      %2762 = vmatpush.msra.mxu0 0.0
      %2763 = vmatpush.msra.mxu0 %v2580
      %2764 = vmatmul.f32.gmra.mxu0 %v2562
      %v2765 = vpop.f32.mrf.mxu0
      %v2766 = vadd.f32 0.0, %v2765
      %2767 = vdwg.mxu0
      %2768 = vmatpush.msra.mxu0 0.0
      %2769 = vmatpush.msra.mxu0 0.0
      %2770 = vmatpush.msra.mxu0 0.0
      %2771 = vmatpush.msra.mxu0 0.0
      %2772 = vmatpush.msra.mxu0 0.0
      %2773 = vmatpush.msra.mxu0 0.0
      %2774 = vmatpush.msra.mxu0 0.0
      %2775 = vmatpush.msra.mxu0 0.0
      %2776 = vmatpush.msra.mxu0 0.0
      %2777 = vmatpush.msra.mxu0 0.0
      %2778 = vmatpush.msra.mxu0 0.0
      %2779 = vmatpush.msra.mxu0 0.0
      %2780 = vmatpush.msra.mxu0 0.0
      %2781 = vmatpush.msra.mxu0 0.0
      %2782 = vmatpush.msra.mxu0 0.0
      %2783 = vmatpush.msra.mxu0 %v2582
      %2784 = vmatmul.f32.gmra.mxu0 %v2562
      %v2785 = vpop.f32.mrf.mxu0
      %v2786 = vadd.f32 0.0, %v2785
      %2787 = vdwg.mxu0
      %2788 = vmatpush.msra.mxu0 0.0
      %2789 = vmatpush.msra.mxu0 0.0
      %2790 = vmatpush.msra.mxu0 0.0
      %2791 = vmatpush.msra.mxu0 0.0
      %2792 = vmatpush.msra.mxu0 0.0
      %2793 = vmatpush.msra.mxu0 0.0
      %2794 = vmatpush.msra.mxu0 0.0
      %2795 = vmatpush.msra.mxu0 0.0
      %2796 = vmatpush.msra.mxu0 0.0
      %2797 = vmatpush.msra.mxu0 0.0
      %2798 = vmatpush.msra.mxu0 0.0
      %2799 = vmatpush.msra.mxu0 0.0
      %2800 = vmatpush.msra.mxu0 0.0
      %2801 = vmatpush.msra.mxu0 0.0
      %2802 = vmatpush.msra.mxu0 0.0
      %2803 = vmatpush.msra.mxu0 %v2584
      %2804 = vmatmul.f32.gmra.mxu0 %v2562
      %v2805 = vpop.f32.mrf.mxu0
      %v2806 = vadd.f32 0.0, %v2805
      %2807 = vdwg.mxu0
      %2808 = vmatpush.msra.mxu0 0.0
      %2809 = vmatpush.msra.mxu0 0.0
      %2810 = vmatpush.msra.mxu0 0.0
      %2811 = vmatpush.msra.mxu0 0.0
      %2812 = vmatpush.msra.mxu0 0.0
      %2813 = vmatpush.msra.mxu0 0.0
      %2814 = vmatpush.msra.mxu0 0.0
      %2815 = vmatpush.msra.mxu0 0.0
      %2816 = vmatpush.msra.mxu0 0.0
      %2817 = vmatpush.msra.mxu0 0.0
      %2818 = vmatpush.msra.mxu0 0.0
      %2819 = vmatpush.msra.mxu0 0.0
      %2820 = vmatpush.msra.mxu0 0.0
      %2821 = vmatpush.msra.mxu0 0.0
      %2822 = vmatpush.msra.mxu0 0.0
      %2823 = vmatpush.msra.mxu0 %v2586
      %2824 = vmatmul.f32.gmra.mxu0 %v2562
      %v2825 = vpop.f32.mrf.mxu0
      %v2826 = vadd.f32 0.0, %v2825
      %2827 = vdwg.mxu0
      %v2828 = vadd.f32 %v2463, %v2606
      %v2829 = vadd.f32 %v2464, %v2626
      %v2830 = vadd.f32 %v2465, %v2646
      %v2831 = vadd.f32 %v2466, %v2666
      %v2832 = vadd.f32 %v2467, %v2686
      %v2833 = vadd.f32 %v2468, %v2706
      %v2834 = vadd.f32 %v2469, %v2726
      %v2835 = vadd.f32 %v2470, %v2746
      %v2836 = vadd.f32 %v2471, %v2766
      %v2837 = vadd.f32 %v2472, %v2786
      %v2838 = vadd.f32 %v2473, %v2806
      %v2839 = vadd.f32 %v2474, %v2826
      %v2840 = vld [vmem:[#allocation2] sm:$0xff]
      %v2841 = vld [vmem:[#allocation2 + $0x8] sm:$0xff]
      %v2842 = vld [vmem:[#allocation2 + $0x10] sm:$0xff]
      %v2843 = vld [vmem:[#allocation2 + $0x18] sm:$0xff]
      %v2844 = vld [vmem:[#allocation2 + $0x20] sm:$0xff]
      %v2845 = vld [vmem:[#allocation2 + $0x28] sm:$0xff]
      %v2846 = vld [vmem:[#allocation2 + $0x30] sm:$0xff]
      %v2847 = vld [vmem:[#allocation2 + $0x38] sm:$0xf]
      %2848 = vrot.lane.b32.xlu0 %v689, 104
      %v2849 = vpop.permute.xlu0 %2848
      %2858 = vst [vmem:[#allocation1] ss:$2 sm:$0xff] %v2840
      %s2859 = scalar_lea.vmem [#allocation1], 16
      %2860 = vst [vmem:[%s2859] ss:$2 sm:$0xff] %v2841
      %s2861 = scalar_lea.vmem [#allocation1], 32
      %2862 = vst [vmem:[%s2861] ss:$2 sm:$0xff] %v2842
      %s2863 = scalar_lea.vmem [#allocation1], 48
      %2864 = vst [vmem:[%s2863] ss:$2 sm:$0xff] %v2843
      %v2865 = vld.sshfl [vmem:[#allocation1] sm:$0xff pattern:$0x75316420]
      %v2866 = vld.sshfl [vmem:[#allocation1 + $0x8] sm:$0xff pattern:$0x75316420]
      %v2867 = vld.sshfl [vmem:[#allocation1 + $0x10] sm:$0xff pattern:$0x75316420]
      %v2868 = vld.sshfl [vmem:[#allocation1 + $0x18] sm:$0xff pattern:$0x75316420]
      %v2869 = vld.sshfl [vmem:[#allocation1 + $0x20] sm:$0xff pattern:$0x75316420]
      %v2870 = vld.sshfl [vmem:[#allocation1 + $0x28] sm:$0xff pattern:$0x75316420]
      %v2871 = vld.sshfl [vmem:[#allocation1 + $0x30] sm:$0xff pattern:$0x75316420]
      %v2872 = vld.sshfl [vmem:[#allocation1 + $0x38] sm:$0xff pattern:$0x75316420]
      %2873 = vst [vmem:[#allocation1] ss:$2 sm:$0xff] %v2844
      %2874 = vst [vmem:[%s2859] ss:$2 sm:$0xff] %v2845
      %2875 = vst [vmem:[%s2861] ss:$2 sm:$0xff] %v2846
      %2876 = vst [vmem:[%s2863] ss:$2 sm:$0xff] %v2847
      %v2877 = vld.sshfl [vmem:[#allocation1] sm:$0xff pattern:$0x75316420]
      %v2878 = vld.sshfl [vmem:[#allocation1 + $0x8] sm:$0xff pattern:$0x75316420]
      %v2879 = vld.sshfl [vmem:[#allocation1 + $0x10] sm:$0xff pattern:$0x75316420]
      %v2880 = vld.sshfl [vmem:[#allocation1 + $0x18] sm:$0xff pattern:$0x75316420]
      %v2881 = vld.sshfl [vmem:[#allocation1 + $0x20] sm:$0xff pattern:$0x75316420]
      %v2882 = vld.sshfl [vmem:[#allocation1 + $0x28] sm:$0xff pattern:$0x75316420]
      %v2883 = vld.sshfl [vmem:[#allocation1 + $0x30] sm:$0xff pattern:$0x75316420]
      %2884 = vrot.lane.b32.xlu0 %v2865, 91
      %v2885 = vpop.permute.xlu0 %2884
      %2886 = vrot.lane.b32.xlu0 %v2866, 91
      %v2887 = vpop.permute.xlu0 %2886
      %2888 = vrot.lane.b32.xlu0 %v2867, 91
      %v2889 = vpop.permute.xlu0 %2888
      %2890 = vrot.lane.b32.xlu0 %v2868, 91
      %v2891 = vpop.permute.xlu0 %2890
      %2892 = vrot.lane.b32.xlu0 %v2869, 91
      %v2893 = vpop.permute.xlu0 %2892
      %2894 = vrot.lane.b32.xlu0 %v2870, 91
      %v2895 = vpop.permute.xlu0 %2894
      %2896 = vrot.lane.b32.xlu0 %v2871, 91
      %v2897 = vpop.permute.xlu0 %2896
      %2898 = vrot.lane.b32.xlu0 %v2872, 91
      %v2899 = vpop.permute.xlu0 %2898
      %2900 = vrot.lane.b32.xlu0 %v2877, 91
      %v2901 = vpop.permute.xlu0 %2900
      %2902 = vrot.lane.b32.xlu0 %v2878, 91
      %v2903 = vpop.permute.xlu0 %2902
      %2904 = vrot.lane.b32.xlu0 %v2879, 91
      %v2905 = vpop.permute.xlu0 %2904
      %2906 = vrot.lane.b32.xlu0 %v2880, 91
      %v2907 = vpop.permute.xlu0 %2906
      %2908 = vrot.lane.b32.xlu0 %v2881, 91
      %v2909 = vpop.permute.xlu0 %2908
      %2910 = vrot.lane.b32.xlu0 %v2882, 91
      %v2911 = vpop.permute.xlu0 %2910
      %2912 = vrot.lane.b32.xlu0 %v2883, 91
      %v2913 = vpop.permute.xlu0 %2912
      %vm2914 = vcmask 744448
      %v2915 = vsel %vm2914, %v2885, %v2887
      %v2916 = vsel %vm2914, %v2887, %v2889
      %v2917 = vsel %vm2914, %v2889, %v2891
      %v2918 = vsel %vm2914, %v2891, %v2893
      %v2919 = vsel %vm2914, %v2895, %v2897
      %v2920 = vsel %vm2914, %v2897, %v2899
      %v2921 = vsel %vm2914, %v2899, %v2901
      %v2922 = vsel %vm2914, %v2901, %v2903
      %v2923 = vsel %vm2914, %v2905, %v2907
      %v2924 = vsel %vm2914, %v2907, %v2909
      %v2925 = vsel %vm2914, %v2909, %v2911
      %v2926 = vsel %vm2914, %v2911, %v2913
      %v2927 = vsel %vm778, %v2849, 0
      %v2929 = vsel %vm640, %v2915, 0
      %v2931 = vsel %vm640, %v2916, 0
      %v2933 = vsel %vm640, %v2917, 0
      %v2935 = vsel %vm640, %v2918, 0
      %v2937 = vsel %vm640, %v2919, 0
      %v2939 = vsel %vm640, %v2920, 0
      %v2941 = vsel %vm640, %v2921, 0
      %v2943 = vsel %vm640, %v2922, 0
      %v2945 = vsel %vm640, %v2923, 0
      %v2947 = vsel %vm640, %v2924, 0
      %v2949 = vsel %vm640, %v2925, 0
      %v2951 = vsel %vm640, %v2926, 0
      %2953 = vmatpush.msra.mxu0 0.0
      %2954 = vmatpush.msra.mxu0 0.0
      %2955 = vmatpush.msra.mxu0 0.0
      %2956 = vmatpush.msra.mxu0 0.0
      %2957 = vmatpush.msra.mxu0 0.0
      %2958 = vmatpush.msra.mxu0 0.0
      %2959 = vmatpush.msra.mxu0 0.0
      %2960 = vmatpush.msra.mxu0 0.0
      %2961 = vmatpush.msra.mxu0 0.0
      %2962 = vmatpush.msra.mxu0 0.0
      %2963 = vmatpush.msra.mxu0 0.0
      %2964 = vmatpush.msra.mxu0 0.0
      %2965 = vmatpush.msra.mxu0 0.0
      %2966 = vmatpush.msra.mxu0 0.0
      %2967 = vmatpush.msra.mxu0 0.0
      %2968 = vmatpush.msra.mxu0 %v2929
      %2969 = vmatmul.f32.gmra.mxu0 %v2927
      %v2970 = vpop.f32.mrf.mxu0
      %v2971 = vadd.f32 0.0, %v2970
      %2972 = vdwg.mxu0
      %2973 = vmatpush.msra.mxu0 0.0
      %2974 = vmatpush.msra.mxu0 0.0
      %2975 = vmatpush.msra.mxu0 0.0
      %2976 = vmatpush.msra.mxu0 0.0
      %2977 = vmatpush.msra.mxu0 0.0
      %2978 = vmatpush.msra.mxu0 0.0
      %2979 = vmatpush.msra.mxu0 0.0
      %2980 = vmatpush.msra.mxu0 0.0
      %2981 = vmatpush.msra.mxu0 0.0
      %2982 = vmatpush.msra.mxu0 0.0
      %2983 = vmatpush.msra.mxu0 0.0
      %2984 = vmatpush.msra.mxu0 0.0
      %2985 = vmatpush.msra.mxu0 0.0
      %2986 = vmatpush.msra.mxu0 0.0
      %2987 = vmatpush.msra.mxu0 0.0
      %2988 = vmatpush.msra.mxu0 %v2931
      %2989 = vmatmul.f32.gmra.mxu0 %v2927
      %v2990 = vpop.f32.mrf.mxu0
      %v2991 = vadd.f32 0.0, %v2990
      %2992 = vdwg.mxu0
      %2993 = vmatpush.msra.mxu0 0.0
      %2994 = vmatpush.msra.mxu0 0.0
      %2995 = vmatpush.msra.mxu0 0.0
      %2996 = vmatpush.msra.mxu0 0.0
      %2997 = vmatpush.msra.mxu0 0.0
      %2998 = vmatpush.msra.mxu0 0.0
      %2999 = vmatpush.msra.mxu0 0.0
      %3000 = vmatpush.msra.mxu0 0.0
      %3001 = vmatpush.msra.mxu0 0.0
      %3002 = vmatpush.msra.mxu0 0.0
      %3003 = vmatpush.msra.mxu0 0.0
      %3004 = vmatpush.msra.mxu0 0.0
      %3005 = vmatpush.msra.mxu0 0.0
      %3006 = vmatpush.msra.mxu0 0.0
      %3007 = vmatpush.msra.mxu0 0.0
      %3008 = vmatpush.msra.mxu0 %v2933
      %3009 = vmatmul.f32.gmra.mxu0 %v2927
      %v3010 = vpop.f32.mrf.mxu0
      %v3011 = vadd.f32 0.0, %v3010
      %3012 = vdwg.mxu0
      %3013 = vmatpush.msra.mxu0 0.0
      %3014 = vmatpush.msra.mxu0 0.0
      %3015 = vmatpush.msra.mxu0 0.0
      %3016 = vmatpush.msra.mxu0 0.0
      %3017 = vmatpush.msra.mxu0 0.0
      %3018 = vmatpush.msra.mxu0 0.0
      %3019 = vmatpush.msra.mxu0 0.0
      %3020 = vmatpush.msra.mxu0 0.0
      %3021 = vmatpush.msra.mxu0 0.0
      %3022 = vmatpush.msra.mxu0 0.0
      %3023 = vmatpush.msra.mxu0 0.0
      %3024 = vmatpush.msra.mxu0 0.0
      %3025 = vmatpush.msra.mxu0 0.0
      %3026 = vmatpush.msra.mxu0 0.0
      %3027 = vmatpush.msra.mxu0 0.0
      %3028 = vmatpush.msra.mxu0 %v2935
      %3029 = vmatmul.f32.gmra.mxu0 %v2927
      %v3030 = vpop.f32.mrf.mxu0
      %v3031 = vadd.f32 0.0, %v3030
      %3032 = vdwg.mxu0
      %3033 = vmatpush.msra.mxu0 0.0
      %3034 = vmatpush.msra.mxu0 0.0
      %3035 = vmatpush.msra.mxu0 0.0
      %3036 = vmatpush.msra.mxu0 0.0
      %3037 = vmatpush.msra.mxu0 0.0
      %3038 = vmatpush.msra.mxu0 0.0
      %3039 = vmatpush.msra.mxu0 0.0
      %3040 = vmatpush.msra.mxu0 0.0
      %3041 = vmatpush.msra.mxu0 0.0
      %3042 = vmatpush.msra.mxu0 0.0
      %3043 = vmatpush.msra.mxu0 0.0
      %3044 = vmatpush.msra.mxu0 0.0
      %3045 = vmatpush.msra.mxu0 0.0
      %3046 = vmatpush.msra.mxu0 0.0
      %3047 = vmatpush.msra.mxu0 0.0
      %3048 = vmatpush.msra.mxu0 %v2937
      %3049 = vmatmul.f32.gmra.mxu0 %v2927
      %v3050 = vpop.f32.mrf.mxu0
      %v3051 = vadd.f32 0.0, %v3050
      %3052 = vdwg.mxu0
      %3053 = vmatpush.msra.mxu0 0.0
      %3054 = vmatpush.msra.mxu0 0.0
      %3055 = vmatpush.msra.mxu0 0.0
      %3056 = vmatpush.msra.mxu0 0.0
      %3057 = vmatpush.msra.mxu0 0.0
      %3058 = vmatpush.msra.mxu0 0.0
      %3059 = vmatpush.msra.mxu0 0.0
      %3060 = vmatpush.msra.mxu0 0.0
      %3061 = vmatpush.msra.mxu0 0.0
      %3062 = vmatpush.msra.mxu0 0.0
      %3063 = vmatpush.msra.mxu0 0.0
      %3064 = vmatpush.msra.mxu0 0.0
      %3065 = vmatpush.msra.mxu0 0.0
      %3066 = vmatpush.msra.mxu0 0.0
      %3067 = vmatpush.msra.mxu0 0.0
      %3068 = vmatpush.msra.mxu0 %v2939
      %3069 = vmatmul.f32.gmra.mxu0 %v2927
      %v3070 = vpop.f32.mrf.mxu0
      %v3071 = vadd.f32 0.0, %v3070
      %3072 = vdwg.mxu0
      %3073 = vmatpush.msra.mxu0 0.0
      %3074 = vmatpush.msra.mxu0 0.0
      %3075 = vmatpush.msra.mxu0 0.0
      %3076 = vmatpush.msra.mxu0 0.0
      %3077 = vmatpush.msra.mxu0 0.0
      %3078 = vmatpush.msra.mxu0 0.0
      %3079 = vmatpush.msra.mxu0 0.0
      %3080 = vmatpush.msra.mxu0 0.0
      %3081 = vmatpush.msra.mxu0 0.0
      %3082 = vmatpush.msra.mxu0 0.0
      %3083 = vmatpush.msra.mxu0 0.0
      %3084 = vmatpush.msra.mxu0 0.0
      %3085 = vmatpush.msra.mxu0 0.0
      %3086 = vmatpush.msra.mxu0 0.0
      %3087 = vmatpush.msra.mxu0 0.0
      %3088 = vmatpush.msra.mxu0 %v2941
      %3089 = vmatmul.f32.gmra.mxu0 %v2927
      %v3090 = vpop.f32.mrf.mxu0
      %v3091 = vadd.f32 0.0, %v3090
      %3092 = vdwg.mxu0
      %3093 = vmatpush.msra.mxu0 0.0
      %3094 = vmatpush.msra.mxu0 0.0
      %3095 = vmatpush.msra.mxu0 0.0
      %3096 = vmatpush.msra.mxu0 0.0
      %3097 = vmatpush.msra.mxu0 0.0
      %3098 = vmatpush.msra.mxu0 0.0
      %3099 = vmatpush.msra.mxu0 0.0
      %3100 = vmatpush.msra.mxu0 0.0
      %3101 = vmatpush.msra.mxu0 0.0
      %3102 = vmatpush.msra.mxu0 0.0
      %3103 = vmatpush.msra.mxu0 0.0
      %3104 = vmatpush.msra.mxu0 0.0
      %3105 = vmatpush.msra.mxu0 0.0
      %3106 = vmatpush.msra.mxu0 0.0
      %3107 = vmatpush.msra.mxu0 0.0
      %3108 = vmatpush.msra.mxu0 %v2943
      %3109 = vmatmul.f32.gmra.mxu0 %v2927
      %v3110 = vpop.f32.mrf.mxu0
      %v3111 = vadd.f32 0.0, %v3110
      %3112 = vdwg.mxu0
      %3113 = vmatpush.msra.mxu0 0.0
      %3114 = vmatpush.msra.mxu0 0.0
      %3115 = vmatpush.msra.mxu0 0.0
      %3116 = vmatpush.msra.mxu0 0.0
      %3117 = vmatpush.msra.mxu0 0.0
      %3118 = vmatpush.msra.mxu0 0.0
      %3119 = vmatpush.msra.mxu0 0.0
      %3120 = vmatpush.msra.mxu0 0.0
      %3121 = vmatpush.msra.mxu0 0.0
      %3122 = vmatpush.msra.mxu0 0.0
      %3123 = vmatpush.msra.mxu0 0.0
      %3124 = vmatpush.msra.mxu0 0.0
      %3125 = vmatpush.msra.mxu0 0.0
      %3126 = vmatpush.msra.mxu0 0.0
      %3127 = vmatpush.msra.mxu0 0.0
      %3128 = vmatpush.msra.mxu0 %v2945
      %3129 = vmatmul.f32.gmra.mxu0 %v2927
      %v3130 = vpop.f32.mrf.mxu0
      %v3131 = vadd.f32 0.0, %v3130
      %3132 = vdwg.mxu0
      %3133 = vmatpush.msra.mxu0 0.0
      %3134 = vmatpush.msra.mxu0 0.0
      %3135 = vmatpush.msra.mxu0 0.0
      %3136 = vmatpush.msra.mxu0 0.0
      %3137 = vmatpush.msra.mxu0 0.0
      %3138 = vmatpush.msra.mxu0 0.0
      %3139 = vmatpush.msra.mxu0 0.0
      %3140 = vmatpush.msra.mxu0 0.0
      %3141 = vmatpush.msra.mxu0 0.0
      %3142 = vmatpush.msra.mxu0 0.0
      %3143 = vmatpush.msra.mxu0 0.0
      %3144 = vmatpush.msra.mxu0 0.0
      %3145 = vmatpush.msra.mxu0 0.0
      %3146 = vmatpush.msra.mxu0 0.0
      %3147 = vmatpush.msra.mxu0 0.0
      %3148 = vmatpush.msra.mxu0 %v2947
      %3149 = vmatmul.f32.gmra.mxu0 %v2927
      %v3150 = vpop.f32.mrf.mxu0
      %v3151 = vadd.f32 0.0, %v3150
      %3152 = vdwg.mxu0
      %3153 = vmatpush.msra.mxu0 0.0
      %3154 = vmatpush.msra.mxu0 0.0
      %3155 = vmatpush.msra.mxu0 0.0
      %3156 = vmatpush.msra.mxu0 0.0
      %3157 = vmatpush.msra.mxu0 0.0
      %3158 = vmatpush.msra.mxu0 0.0
      %3159 = vmatpush.msra.mxu0 0.0
      %3160 = vmatpush.msra.mxu0 0.0
      %3161 = vmatpush.msra.mxu0 0.0
      %3162 = vmatpush.msra.mxu0 0.0
      %3163 = vmatpush.msra.mxu0 0.0
      %3164 = vmatpush.msra.mxu0 0.0
      %3165 = vmatpush.msra.mxu0 0.0
      %3166 = vmatpush.msra.mxu0 0.0
      %3167 = vmatpush.msra.mxu0 0.0
      %3168 = vmatpush.msra.mxu0 %v2949
      %3169 = vmatmul.f32.gmra.mxu0 %v2927
      %v3170 = vpop.f32.mrf.mxu0
      %v3171 = vadd.f32 0.0, %v3170
      %3172 = vdwg.mxu0
      %3173 = vmatpush.msra.mxu0 0.0
      %3174 = vmatpush.msra.mxu0 0.0
      %3175 = vmatpush.msra.mxu0 0.0
      %3176 = vmatpush.msra.mxu0 0.0
      %3177 = vmatpush.msra.mxu0 0.0
      %3178 = vmatpush.msra.mxu0 0.0
      %3179 = vmatpush.msra.mxu0 0.0
      %3180 = vmatpush.msra.mxu0 0.0
      %3181 = vmatpush.msra.mxu0 0.0
      %3182 = vmatpush.msra.mxu0 0.0
      %3183 = vmatpush.msra.mxu0 0.0
      %3184 = vmatpush.msra.mxu0 0.0
      %3185 = vmatpush.msra.mxu0 0.0
      %3186 = vmatpush.msra.mxu0 0.0
      %3187 = vmatpush.msra.mxu0 0.0
      %3188 = vmatpush.msra.mxu0 %v2951
      %3189 = vmatmul.f32.gmra.mxu0 %v2927
      %v3190 = vpop.f32.mrf.mxu0
      %v3191 = vadd.f32 0.0, %v3190
      %3192 = vdwg.mxu0
      %v3193 = vadd.f32 %v2828, %v2971
      %v3194 = vadd.f32 %v2829, %v2991
      %v3195 = vadd.f32 %v2830, %v3011
      %v3196 = vadd.f32 %v2831, %v3031
      %v3197 = vadd.f32 %v2832, %v3051
      %v3198 = vadd.f32 %v2833, %v3071
      %v3199 = vadd.f32 %v2834, %v3091
      %v3200 = vadd.f32 %v2835, %v3111
      %v3201 = vadd.f32 %v2836, %v3131
      %v3202 = vadd.f32 %v2837, %v3151
      %v3203 = vadd.f32 %v2838, %v3171
      %v3204 = vadd.f32 %v2839, %v3191
      %v3205 = vld [vmem:[#allocation2] sm:$0xff]
      %v3206 = vld [vmem:[#allocation2 + $0x8] sm:$0xff]
      %v3207 = vld [vmem:[#allocation2 + $0x10] sm:$0xff]
      %v3208 = vld [vmem:[#allocation2 + $0x18] sm:$0xff]
      %v3209 = vld [vmem:[#allocation2 + $0x20] sm:$0xff]
      %v3210 = vld [vmem:[#allocation2 + $0x28] sm:$0xff]
      %v3211 = vld [vmem:[#allocation2 + $0x30] sm:$0xff]
      %v3212 = vld [vmem:[#allocation2 + $0x38] sm:$0xf]
      %3213 = vrot.lane.b32.xlu0 %v689, 100
      %v3214 = vpop.permute.xlu0 %3213
      %3223 = vst [vmem:[#allocation1] ss:$2 sm:$0xff] %v3205
      %s3224 = scalar_lea.vmem [#allocation1], 16
      %3225 = vst [vmem:[%s3224] ss:$2 sm:$0xff] %v3206
      %s3226 = scalar_lea.vmem [#allocation1], 32
      %3227 = vst [vmem:[%s3226] ss:$2 sm:$0xff] %v3207
      %s3228 = scalar_lea.vmem [#allocation1], 48
      %3229 = vst [vmem:[%s3228] ss:$2 sm:$0xff] %v3208
      %v3230 = vld.sshfl [vmem:[#allocation1] sm:$0xff pattern:$0x75316420]
      %v3231 = vld.sshfl [vmem:[#allocation1 + $0x8] sm:$0xff pattern:$0x75316420]
      %v3232 = vld.sshfl [vmem:[#allocation1 + $0x10] sm:$0xff pattern:$0x75316420]
      %v3233 = vld.sshfl [vmem:[#allocation1 + $0x18] sm:$0xff pattern:$0x75316420]
      %v3234 = vld.sshfl [vmem:[#allocation1 + $0x20] sm:$0xff pattern:$0x75316420]
      %v3235 = vld.sshfl [vmem:[#allocation1 + $0x28] sm:$0xff pattern:$0x75316420]
      %v3236 = vld.sshfl [vmem:[#allocation1 + $0x30] sm:$0xff pattern:$0x75316420]
      %v3237 = vld.sshfl [vmem:[#allocation1 + $0x38] sm:$0xff pattern:$0x75316420]
      %3238 = vst [vmem:[#allocation1] ss:$2 sm:$0xff] %v3209
      %3239 = vst [vmem:[%s3224] ss:$2 sm:$0xff] %v3210
      %3240 = vst [vmem:[%s3226] ss:$2 sm:$0xff] %v3211
      %3241 = vst [vmem:[%s3228] ss:$2 sm:$0xff] %v3212
      %v3242 = vld.sshfl [vmem:[#allocation1] sm:$0xff pattern:$0x75316420]
      %v3243 = vld.sshfl [vmem:[#allocation1 + $0x8] sm:$0xff pattern:$0x75316420]
      %v3244 = vld.sshfl [vmem:[#allocation1 + $0x10] sm:$0xff pattern:$0x75316420]
      %v3245 = vld.sshfl [vmem:[#allocation1 + $0x18] sm:$0xff pattern:$0x75316420]
      %v3246 = vld.sshfl [vmem:[#allocation1 + $0x20] sm:$0xff pattern:$0x75316420]
      %v3247 = vld.sshfl [vmem:[#allocation1 + $0x28] sm:$0xff pattern:$0x75316420]
      %v3248 = vld.sshfl [vmem:[#allocation1 + $0x30] sm:$0xff pattern:$0x75316420]
      %3249 = vrot.lane.b32.xlu0 %v3230, 90
      %v3250 = vpop.permute.xlu0 %3249
      %3251 = vrot.lane.b32.xlu0 %v3231, 90
      %v3252 = vpop.permute.xlu0 %3251
      %3253 = vrot.lane.b32.xlu0 %v3232, 90
      %v3254 = vpop.permute.xlu0 %3253
      %3255 = vrot.lane.b32.xlu0 %v3233, 90
      %v3256 = vpop.permute.xlu0 %3255
      %3257 = vrot.lane.b32.xlu0 %v3234, 90
      %v3258 = vpop.permute.xlu0 %3257
      %3259 = vrot.lane.b32.xlu0 %v3235, 90
      %v3260 = vpop.permute.xlu0 %3259
      %3261 = vrot.lane.b32.xlu0 %v3236, 90
      %v3262 = vpop.permute.xlu0 %3261
      %3263 = vrot.lane.b32.xlu0 %v3237, 90
      %v3264 = vpop.permute.xlu0 %3263
      %3265 = vrot.lane.b32.xlu0 %v3242, 90
      %v3266 = vpop.permute.xlu0 %3265
      %3267 = vrot.lane.b32.xlu0 %v3243, 90
      %v3268 = vpop.permute.xlu0 %3267
      %3269 = vrot.lane.b32.xlu0 %v3244, 90
      %v3270 = vpop.permute.xlu0 %3269
      %3271 = vrot.lane.b32.xlu0 %v3245, 90
      %v3272 = vpop.permute.xlu0 %3271
      %3273 = vrot.lane.b32.xlu0 %v3246, 90
      %v3274 = vpop.permute.xlu0 %3273
      %3275 = vrot.lane.b32.xlu0 %v3247, 90
      %v3276 = vpop.permute.xlu0 %3275
      %3277 = vrot.lane.b32.xlu0 %v3248, 90
      %v3278 = vpop.permute.xlu0 %3277
      %vm3279 = vcmask 736256
      %v3280 = vsel %vm3279, %v3250, %v3252
      %v3281 = vsel %vm3279, %v3252, %v3254
      %v3282 = vsel %vm3279, %v3254, %v3256
      %v3283 = vsel %vm3279, %v3256, %v3258
      %v3284 = vsel %vm3279, %v3260, %v3262
      %v3285 = vsel %vm3279, %v3262, %v3264
      %v3286 = vsel %vm3279, %v3264, %v3266
      %v3287 = vsel %vm3279, %v3266, %v3268
      %v3288 = vsel %vm3279, %v3270, %v3272
      %v3289 = vsel %vm3279, %v3272, %v3274
      %v3290 = vsel %vm3279, %v3274, %v3276
      %v3291 = vsel %vm3279, %v3276, %v3278
      %v3292 = vsel %vm778, %v3214, 0
      %v3294 = vsel %vm640, %v3280, 0
      %v3296 = vsel %vm640, %v3281, 0
      %v3298 = vsel %vm640, %v3282, 0
      %v3300 = vsel %vm640, %v3283, 0
      %v3302 = vsel %vm640, %v3284, 0
      %v3304 = vsel %vm640, %v3285, 0
      %v3306 = vsel %vm640, %v3286, 0
      %v3308 = vsel %vm640, %v3287, 0
      %v3310 = vsel %vm640, %v3288, 0
      %v3312 = vsel %vm640, %v3289, 0
      %v3314 = vsel %vm640, %v3290, 0
      %v3316 = vsel %vm640, %v3291, 0
      %3318 = vmatpush.msra.mxu0 0.0
      %3319 = vmatpush.msra.mxu0 0.0
      %3320 = vmatpush.msra.mxu0 0.0
      %3321 = vmatpush.msra.mxu0 0.0
      %3322 = vmatpush.msra.mxu0 0.0
      %3323 = vmatpush.msra.mxu0 0.0
      %3324 = vmatpush.msra.mxu0 0.0
      %3325 = vmatpush.msra.mxu0 0.0
      %3326 = vmatpush.msra.mxu0 0.0
      %3327 = vmatpush.msra.mxu0 0.0
      %3328 = vmatpush.msra.mxu0 0.0
      %3329 = vmatpush.msra.mxu0 0.0
      %3330 = vmatpush.msra.mxu0 0.0
      %3331 = vmatpush.msra.mxu0 0.0
      %3332 = vmatpush.msra.mxu0 0.0
      %3333 = vmatpush.msra.mxu0 %v3294
      %3334 = vmatmul.f32.gmra.mxu0 %v3292
      %v3335 = vpop.f32.mrf.mxu0
      %v3336 = vadd.f32 0.0, %v3335
      %3337 = vdwg.mxu0
      %3338 = vmatpush.msra.mxu0 0.0
      %3339 = vmatpush.msra.mxu0 0.0
      %3340 = vmatpush.msra.mxu0 0.0
      %3341 = vmatpush.msra.mxu0 0.0
      %3342 = vmatpush.msra.mxu0 0.0
      %3343 = vmatpush.msra.mxu0 0.0
      %3344 = vmatpush.msra.mxu0 0.0
      %3345 = vmatpush.msra.mxu0 0.0
      %3346 = vmatpush.msra.mxu0 0.0
      %3347 = vmatpush.msra.mxu0 0.0
      %3348 = vmatpush.msra.mxu0 0.0
      %3349 = vmatpush.msra.mxu0 0.0
      %3350 = vmatpush.msra.mxu0 0.0
      %3351 = vmatpush.msra.mxu0 0.0
      %3352 = vmatpush.msra.mxu0 0.0
      %3353 = vmatpush.msra.mxu0 %v3296
      %3354 = vmatmul.f32.gmra.mxu0 %v3292
      %v3355 = vpop.f32.mrf.mxu0
      %v3356 = vadd.f32 0.0, %v3355
      %3357 = vdwg.mxu0
      %3358 = vmatpush.msra.mxu0 0.0
      %3359 = vmatpush.msra.mxu0 0.0
      %3360 = vmatpush.msra.mxu0 0.0
      %3361 = vmatpush.msra.mxu0 0.0
      %3362 = vmatpush.msra.mxu0 0.0
      %3363 = vmatpush.msra.mxu0 0.0
      %3364 = vmatpush.msra.mxu0 0.0
      %3365 = vmatpush.msra.mxu0 0.0
      %3366 = vmatpush.msra.mxu0 0.0
      %3367 = vmatpush.msra.mxu0 0.0
      %3368 = vmatpush.msra.mxu0 0.0
      %3369 = vmatpush.msra.mxu0 0.0
      %3370 = vmatpush.msra.mxu0 0.0
      %3371 = vmatpush.msra.mxu0 0.0
      %3372 = vmatpush.msra.mxu0 0.0
      %3373 = vmatpush.msra.mxu0 %v3298
      %3374 = vmatmul.f32.gmra.mxu0 %v3292
      %v3375 = vpop.f32.mrf.mxu0
      %v3376 = vadd.f32 0.0, %v3375
      %3377 = vdwg.mxu0
      %3378 = vmatpush.msra.mxu0 0.0
      %3379 = vmatpush.msra.mxu0 0.0
      %3380 = vmatpush.msra.mxu0 0.0
      %3381 = vmatpush.msra.mxu0 0.0
      %3382 = vmatpush.msra.mxu0 0.0
      %3383 = vmatpush.msra.mxu0 0.0
      %3384 = vmatpush.msra.mxu0 0.0
      %3385 = vmatpush.msra.mxu0 0.0
      %3386 = vmatpush.msra.mxu0 0.0
      %3387 = vmatpush.msra.mxu0 0.0
      %3388 = vmatpush.msra.mxu0 0.0
      %3389 = vmatpush.msra.mxu0 0.0
      %3390 = vmatpush.msra.mxu0 0.0
      %3391 = vmatpush.msra.mxu0 0.0
      %3392 = vmatpush.msra.mxu0 0.0
      %3393 = vmatpush.msra.mxu0 %v3300
      %3394 = vmatmul.f32.gmra.mxu0 %v3292
      %v3395 = vpop.f32.mrf.mxu0
      %v3396 = vadd.f32 0.0, %v3395
      %3397 = vdwg.mxu0
      %3398 = vmatpush.msra.mxu0 0.0
      %3399 = vmatpush.msra.mxu0 0.0
      %3400 = vmatpush.msra.mxu0 0.0
      %3401 = vmatpush.msra.mxu0 0.0
      %3402 = vmatpush.msra.mxu0 0.0
      %3403 = vmatpush.msra.mxu0 0.0
      %3404 = vmatpush.msra.mxu0 0.0
      %3405 = vmatpush.msra.mxu0 0.0
      %3406 = vmatpush.msra.mxu0 0.0
      %3407 = vmatpush.msra.mxu0 0.0
      %3408 = vmatpush.msra.mxu0 0.0
      %3409 = vmatpush.msra.mxu0 0.0
      %3410 = vmatpush.msra.mxu0 0.0
      %3411 = vmatpush.msra.mxu0 0.0
      %3412 = vmatpush.msra.mxu0 0.0
      %3413 = vmatpush.msra.mxu0 %v3302
      %3414 = vmatmul.f32.gmra.mxu0 %v3292
      %v3415 = vpop.f32.mrf.mxu0
      %v3416 = vadd.f32 0.0, %v3415
      %3417 = vdwg.mxu0
      %3418 = vmatpush.msra.mxu0 0.0
      %3419 = vmatpush.msra.mxu0 0.0
      %3420 = vmatpush.msra.mxu0 0.0
      %3421 = vmatpush.msra.mxu0 0.0
      %3422 = vmatpush.msra.mxu0 0.0
      %3423 = vmatpush.msra.mxu0 0.0
      %3424 = vmatpush.msra.mxu0 0.0
      %3425 = vmatpush.msra.mxu0 0.0
      %3426 = vmatpush.msra.mxu0 0.0
      %3427 = vmatpush.msra.mxu0 0.0
      %3428 = vmatpush.msra.mxu0 0.0
      %3429 = vmatpush.msra.mxu0 0.0
      %3430 = vmatpush.msra.mxu0 0.0
      %3431 = vmatpush.msra.mxu0 0.0
      %3432 = vmatpush.msra.mxu0 0.0
      %3433 = vmatpush.msra.mxu0 %v3304
      %3434 = vmatmul.f32.gmra.mxu0 %v3292
      %v3435 = vpop.f32.mrf.mxu0
      %v3436 = vadd.f32 0.0, %v3435
      %3437 = vdwg.mxu0
      %3438 = vmatpush.msra.mxu0 0.0
      %3439 = vmatpush.msra.mxu0 0.0
      %3440 = vmatpush.msra.mxu0 0.0
      %3441 = vmatpush.msra.mxu0 0.0
      %3442 = vmatpush.msra.mxu0 0.0
      %3443 = vmatpush.msra.mxu0 0.0
      %3444 = vmatpush.msra.mxu0 0.0
      %3445 = vmatpush.msra.mxu0 0.0
      %3446 = vmatpush.msra.mxu0 0.0
      %3447 = vmatpush.msra.mxu0 0.0
      %3448 = vmatpush.msra.mxu0 0.0
      %3449 = vmatpush.msra.mxu0 0.0
      %3450 = vmatpush.msra.mxu0 0.0
      %3451 = vmatpush.msra.mxu0 0.0
      %3452 = vmatpush.msra.mxu0 0.0
      %3453 = vmatpush.msra.mxu0 %v3306
      %3454 = vmatmul.f32.gmra.mxu0 %v3292
      %v3455 = vpop.f32.mrf.mxu0
      %v3456 = vadd.f32 0.0, %v3455
      %3457 = vdwg.mxu0
      %3458 = vmatpush.msra.mxu0 0.0
      %3459 = vmatpush.msra.mxu0 0.0
      %3460 = vmatpush.msra.mxu0 0.0
      %3461 = vmatpush.msra.mxu0 0.0
      %3462 = vmatpush.msra.mxu0 0.0
      %3463 = vmatpush.msra.mxu0 0.0
      %3464 = vmatpush.msra.mxu0 0.0
      %3465 = vmatpush.msra.mxu0 0.0
      %3466 = vmatpush.msra.mxu0 0.0
      %3467 = vmatpush.msra.mxu0 0.0
      %3468 = vmatpush.msra.mxu0 0.0
      %3469 = vmatpush.msra.mxu0 0.0
      %3470 = vmatpush.msra.mxu0 0.0
      %3471 = vmatpush.msra.mxu0 0.0
      %3472 = vmatpush.msra.mxu0 0.0
      %3473 = vmatpush.msra.mxu0 %v3308
      %3474 = vmatmul.f32.gmra.mxu0 %v3292
      %v3475 = vpop.f32.mrf.mxu0
      %v3476 = vadd.f32 0.0, %v3475
      %3477 = vdwg.mxu0
      %3478 = vmatpush.msra.mxu0 0.0
      %3479 = vmatpush.msra.mxu0 0.0
      %3480 = vmatpush.msra.mxu0 0.0
      %3481 = vmatpush.msra.mxu0 0.0
      %3482 = vmatpush.msra.mxu0 0.0
      %3483 = vmatpush.msra.mxu0 0.0
      %3484 = vmatpush.msra.mxu0 0.0
      %3485 = vmatpush.msra.mxu0 0.0
      %3486 = vmatpush.msra.mxu0 0.0
      %3487 = vmatpush.msra.mxu0 0.0
      %3488 = vmatpush.msra.mxu0 0.0
      %3489 = vmatpush.msra.mxu0 0.0
      %3490 = vmatpush.msra.mxu0 0.0
      %3491 = vmatpush.msra.mxu0 0.0
      %3492 = vmatpush.msra.mxu0 0.0
      %3493 = vmatpush.msra.mxu0 %v3310
      %3494 = vmatmul.f32.gmra.mxu0 %v3292
      %v3495 = vpop.f32.mrf.mxu0
      %v3496 = vadd.f32 0.0, %v3495
      %3497 = vdwg.mxu0
      %3498 = vmatpush.msra.mxu0 0.0
      %3499 = vmatpush.msra.mxu0 0.0
      %3500 = vmatpush.msra.mxu0 0.0
      %3501 = vmatpush.msra.mxu0 0.0
      %3502 = vmatpush.msra.mxu0 0.0
      %3503 = vmatpush.msra.mxu0 0.0
      %3504 = vmatpush.msra.mxu0 0.0
      %3505 = vmatpush.msra.mxu0 0.0
      %3506 = vmatpush.msra.mxu0 0.0
      %3507 = vmatpush.msra.mxu0 0.0
      %3508 = vmatpush.msra.mxu0 0.0
      %3509 = vmatpush.msra.mxu0 0.0
      %3510 = vmatpush.msra.mxu0 0.0
      %3511 = vmatpush.msra.mxu0 0.0
      %3512 = vmatpush.msra.mxu0 0.0
      %3513 = vmatpush.msra.mxu0 %v3312
      %3514 = vmatmul.f32.gmra.mxu0 %v3292
      %v3515 = vpop.f32.mrf.mxu0
      %v3516 = vadd.f32 0.0, %v3515
      %3517 = vdwg.mxu0
      %3518 = vmatpush.msra.mxu0 0.0
      %3519 = vmatpush.msra.mxu0 0.0
      %3520 = vmatpush.msra.mxu0 0.0
      %3521 = vmatpush.msra.mxu0 0.0
      %3522 = vmatpush.msra.mxu0 0.0
      %3523 = vmatpush.msra.mxu0 0.0
      %3524 = vmatpush.msra.mxu0 0.0
      %3525 = vmatpush.msra.mxu0 0.0
      %3526 = vmatpush.msra.mxu0 0.0
      %3527 = vmatpush.msra.mxu0 0.0
      %3528 = vmatpush.msra.mxu0 0.0
      %3529 = vmatpush.msra.mxu0 0.0
      %3530 = vmatpush.msra.mxu0 0.0
      %3531 = vmatpush.msra.mxu0 0.0
      %3532 = vmatpush.msra.mxu0 0.0
      %3533 = vmatpush.msra.mxu0 %v3314
      %3534 = vmatmul.f32.gmra.mxu0 %v3292
      %v3535 = vpop.f32.mrf.mxu0
      %v3536 = vadd.f32 0.0, %v3535
      %3537 = vdwg.mxu0
      %3538 = vmatpush.msra.mxu0 0.0
      %3539 = vmatpush.msra.mxu0 0.0
      %3540 = vmatpush.msra.mxu0 0.0
      %3541 = vmatpush.msra.mxu0 0.0
      %3542 = vmatpush.msra.mxu0 0.0
      %3543 = vmatpush.msra.mxu0 0.0
      %3544 = vmatpush.msra.mxu0 0.0
      %3545 = vmatpush.msra.mxu0 0.0
      %3546 = vmatpush.msra.mxu0 0.0
      %3547 = vmatpush.msra.mxu0 0.0
      %3548 = vmatpush.msra.mxu0 0.0
      %3549 = vmatpush.msra.mxu0 0.0
      %3550 = vmatpush.msra.mxu0 0.0
      %3551 = vmatpush.msra.mxu0 0.0
      %3552 = vmatpush.msra.mxu0 0.0
      %3553 = vmatpush.msra.mxu0 %v3316
      %3554 = vmatmul.f32.gmra.mxu0 %v3292
      %v3555 = vpop.f32.mrf.mxu0
      %v3556 = vadd.f32 0.0, %v3555
      %3557 = vdwg.mxu0
      %v3558 = vadd.f32 %v3193, %v3336
      %v3559 = vadd.f32 %v3194, %v3356
      %v3560 = vadd.f32 %v3195, %v3376
      %v3561 = vadd.f32 %v3196, %v3396
      %v3562 = vadd.f32 %v3197, %v3416
      %v3563 = vadd.f32 %v3198, %v3436
      %v3564 = vadd.f32 %v3199, %v3456
      %v3565 = vadd.f32 %v3200, %v3476
      %v3566 = vadd.f32 %v3201, %v3496
      %v3567 = vadd.f32 %v3202, %v3516
      %v3568 = vadd.f32 %v3203, %v3536
      %v3569 = vadd.f32 %v3204, %v3556
      %v3570 = vld [vmem:[#allocation2] sm:$0xff]
      %v3571 = vld [vmem:[#allocation2 + $0x8] sm:$0xff]
      %v3572 = vld [vmem:[#allocation2 + $0x10] sm:$0xff]
      %v3573 = vld [vmem:[#allocation2 + $0x18] sm:$0xff]
      %v3574 = vld [vmem:[#allocation2 + $0x20] sm:$0xff]
      %v3575 = vld [vmem:[#allocation2 + $0x28] sm:$0xff]
      %v3576 = vld [vmem:[#allocation2 + $0x30] sm:$0xff]
      %v3577 = vld [vmem:[#allocation2 + $0x38] sm:$0xf]
      %3578 = vrot.lane.b32.xlu0 %v689, 96
      %v3579 = vpop.permute.xlu0 %3578
      %3588 = vst [vmem:[#allocation1] ss:$2 sm:$0xff] %v3570
      %s3589 = scalar_lea.vmem [#allocation1], 16
      %3590 = vst [vmem:[%s3589] ss:$2 sm:$0xff] %v3571
      %s3591 = scalar_lea.vmem [#allocation1], 32
      %3592 = vst [vmem:[%s3591] ss:$2 sm:$0xff] %v3572
      %s3593 = scalar_lea.vmem [#allocation1], 48
      %3594 = vst [vmem:[%s3593] ss:$2 sm:$0xff] %v3573
      %v3595 = vld.sshfl [vmem:[#allocation1] sm:$0xff pattern:$0x75316420]
      %v3596 = vld.sshfl [vmem:[#allocation1 + $0x8] sm:$0xff pattern:$0x75316420]
      %v3597 = vld.sshfl [vmem:[#allocation1 + $0x10] sm:$0xff pattern:$0x75316420]
      %v3598 = vld.sshfl [vmem:[#allocation1 + $0x18] sm:$0xff pattern:$0x75316420]
      %v3599 = vld.sshfl [vmem:[#allocation1 + $0x20] sm:$0xff pattern:$0x75316420]
      %v3600 = vld.sshfl [vmem:[#allocation1 + $0x28] sm:$0xff pattern:$0x75316420]
      %v3601 = vld.sshfl [vmem:[#allocation1 + $0x30] sm:$0xff pattern:$0x75316420]
      %v3602 = vld.sshfl [vmem:[#allocation1 + $0x38] sm:$0xff pattern:$0x75316420]
      %3603 = vst [vmem:[#allocation1] ss:$2 sm:$0xff] %v3574
      %3604 = vst [vmem:[%s3589] ss:$2 sm:$0xff] %v3575
      %3605 = vst [vmem:[%s3591] ss:$2 sm:$0xff] %v3576
      %3606 = vst [vmem:[%s3593] ss:$2 sm:$0xff] %v3577
      %v3607 = vld.sshfl [vmem:[#allocation1] sm:$0xff pattern:$0x75316420]
      %v3608 = vld.sshfl [vmem:[#allocation1 + $0x8] sm:$0xff pattern:$0x75316420]
      %v3609 = vld.sshfl [vmem:[#allocation1 + $0x10] sm:$0xff pattern:$0x75316420]
      %v3610 = vld.sshfl [vmem:[#allocation1 + $0x18] sm:$0xff pattern:$0x75316420]
      %v3611 = vld.sshfl [vmem:[#allocation1 + $0x20] sm:$0xff pattern:$0x75316420]
      %v3612 = vld.sshfl [vmem:[#allocation1 + $0x28] sm:$0xff pattern:$0x75316420]
      %v3613 = vld.sshfl [vmem:[#allocation1 + $0x30] sm:$0xff pattern:$0x75316420]
      %3614 = vrot.lane.b32.xlu0 %v3595, 89
      %v3615 = vpop.permute.xlu0 %3614
      %3616 = vrot.lane.b32.xlu0 %v3596, 89
      %v3617 = vpop.permute.xlu0 %3616
      %3618 = vrot.lane.b32.xlu0 %v3597, 89
      %v3619 = vpop.permute.xlu0 %3618
      %3620 = vrot.lane.b32.xlu0 %v3598, 89
      %v3621 = vpop.permute.xlu0 %3620
      %3622 = vrot.lane.b32.xlu0 %v3599, 89
      %v3623 = vpop.permute.xlu0 %3622
      %3624 = vrot.lane.b32.xlu0 %v3600, 89
      %v3625 = vpop.permute.xlu0 %3624
      %3626 = vrot.lane.b32.xlu0 %v3601, 89
      %v3627 = vpop.permute.xlu0 %3626
      %3628 = vrot.lane.b32.xlu0 %v3602, 89
      %v3629 = vpop.permute.xlu0 %3628
      %3630 = vrot.lane.b32.xlu0 %v3607, 89
      %v3631 = vpop.permute.xlu0 %3630
      %3632 = vrot.lane.b32.xlu0 %v3608, 89
      %v3633 = vpop.permute.xlu0 %3632
      %3634 = vrot.lane.b32.xlu0 %v3609, 89
      %v3635 = vpop.permute.xlu0 %3634
      %3636 = vrot.lane.b32.xlu0 %v3610, 89
      %v3637 = vpop.permute.xlu0 %3636
      %3638 = vrot.lane.b32.xlu0 %v3611, 89
      %v3639 = vpop.permute.xlu0 %3638
      %3640 = vrot.lane.b32.xlu0 %v3612, 89
      %v3641 = vpop.permute.xlu0 %3640
      %3642 = vrot.lane.b32.xlu0 %v3613, 89
      %v3643 = vpop.permute.xlu0 %3642
      %vm3644 = vcmask 728064
      %v3645 = vsel %vm3644, %v3615, %v3617
      %v3646 = vsel %vm3644, %v3617, %v3619
      %v3647 = vsel %vm3644, %v3619, %v3621
      %v3648 = vsel %vm3644, %v3621, %v3623
      %v3649 = vsel %vm3644, %v3625, %v3627
      %v3650 = vsel %vm3644, %v3627, %v3629
      %v3651 = vsel %vm3644, %v3629, %v3631
      %v3652 = vsel %vm3644, %v3631, %v3633
      %v3653 = vsel %vm3644, %v3635, %v3637
      %v3654 = vsel %vm3644, %v3637, %v3639
      %v3655 = vsel %vm3644, %v3639, %v3641
      %v3656 = vsel %vm3644, %v3641, %v3643
      %v3657 = vsel %vm778, %v3579, 0
      %v3659 = vsel %vm640, %v3645, 0
      %v3661 = vsel %vm640, %v3646, 0
      %v3663 = vsel %vm640, %v3647, 0
      %v3665 = vsel %vm640, %v3648, 0
      %v3667 = vsel %vm640, %v3649, 0
      %v3669 = vsel %vm640, %v3650, 0
      %v3671 = vsel %vm640, %v3651, 0
      %v3673 = vsel %vm640, %v3652, 0
      %v3675 = vsel %vm640, %v3653, 0
      %v3677 = vsel %vm640, %v3654, 0
      %v3679 = vsel %vm640, %v3655, 0
      %v3681 = vsel %vm640, %v3656, 0
      %3683 = vmatpush.msra.mxu0 0.0
      %3684 = vmatpush.msra.mxu0 0.0
      %3685 = vmatpush.msra.mxu0 0.0
      %3686 = vmatpush.msra.mxu0 0.0
      %3687 = vmatpush.msra.mxu0 0.0
      %3688 = vmatpush.msra.mxu0 0.0
      %3689 = vmatpush.msra.mxu0 0.0
      %3690 = vmatpush.msra.mxu0 0.0
      %3691 = vmatpush.msra.mxu0 0.0
      %3692 = vmatpush.msra.mxu0 0.0
      %3693 = vmatpush.msra.mxu0 0.0
      %3694 = vmatpush.msra.mxu0 0.0
      %3695 = vmatpush.msra.mxu0 0.0
      %3696 = vmatpush.msra.mxu0 0.0
      %3697 = vmatpush.msra.mxu0 0.0
      %3698 = vmatpush.msra.mxu0 %v3659
      %3699 = vmatmul.f32.gmra.mxu0 %v3657
      %v3700 = vpop.f32.mrf.mxu0
      %v3701 = vadd.f32 0.0, %v3700
      %3702 = vdwg.mxu0
      %3703 = vmatpush.msra.mxu0 0.0
      %3704 = vmatpush.msra.mxu0 0.0
      %3705 = vmatpush.msra.mxu0 0.0
      %3706 = vmatpush.msra.mxu0 0.0
      %3707 = vmatpush.msra.mxu0 0.0
      %3708 = vmatpush.msra.mxu0 0.0
      %3709 = vmatpush.msra.mxu0 0.0
      %3710 = vmatpush.msra.mxu0 0.0
      %3711 = vmatpush.msra.mxu0 0.0
      %3712 = vmatpush.msra.mxu0 0.0
      %3713 = vmatpush.msra.mxu0 0.0
      %3714 = vmatpush.msra.mxu0 0.0
      %3715 = vmatpush.msra.mxu0 0.0
      %3716 = vmatpush.msra.mxu0 0.0
      %3717 = vmatpush.msra.mxu0 0.0
      %3718 = vmatpush.msra.mxu0 %v3661
      %3719 = vmatmul.f32.gmra.mxu0 %v3657
      %v3720 = vpop.f32.mrf.mxu0
      %v3721 = vadd.f32 0.0, %v3720
      %3722 = vdwg.mxu0
      %3723 = vmatpush.msra.mxu0 0.0
      %3724 = vmatpush.msra.mxu0 0.0
      %3725 = vmatpush.msra.mxu0 0.0
      %3726 = vmatpush.msra.mxu0 0.0
      %3727 = vmatpush.msra.mxu0 0.0
      %3728 = vmatpush.msra.mxu0 0.0
      %3729 = vmatpush.msra.mxu0 0.0
      %3730 = vmatpush.msra.mxu0 0.0
      %3731 = vmatpush.msra.mxu0 0.0
      %3732 = vmatpush.msra.mxu0 0.0
      %3733 = vmatpush.msra.mxu0 0.0
      %3734 = vmatpush.msra.mxu0 0.0
      %3735 = vmatpush.msra.mxu0 0.0
      %3736 = vmatpush.msra.mxu0 0.0
      %3737 = vmatpush.msra.mxu0 0.0
      %3738 = vmatpush.msra.mxu0 %v3663
      %3739 = vmatmul.f32.gmra.mxu0 %v3657
      %v3740 = vpop.f32.mrf.mxu0
      %v3741 = vadd.f32 0.0, %v3740
      %3742 = vdwg.mxu0
      %3743 = vmatpush.msra.mxu0 0.0
      %3744 = vmatpush.msra.mxu0 0.0
      %3745 = vmatpush.msra.mxu0 0.0
      %3746 = vmatpush.msra.mxu0 0.0
      %3747 = vmatpush.msra.mxu0 0.0
      %3748 = vmatpush.msra.mxu0 0.0
      %3749 = vmatpush.msra.mxu0 0.0
      %3750 = vmatpush.msra.mxu0 0.0
      %3751 = vmatpush.msra.mxu0 0.0
      %3752 = vmatpush.msra.mxu0 0.0
      %3753 = vmatpush.msra.mxu0 0.0
      %3754 = vmatpush.msra.mxu0 0.0
      %3755 = vmatpush.msra.mxu0 0.0
      %3756 = vmatpush.msra.mxu0 0.0
      %3757 = vmatpush.msra.mxu0 0.0
      %3758 = vmatpush.msra.mxu0 %v3665
      %3759 = vmatmul.f32.gmra.mxu0 %v3657
      %v3760 = vpop.f32.mrf.mxu0
      %v3761 = vadd.f32 0.0, %v3760
      %3762 = vdwg.mxu0
      %3763 = vmatpush.msra.mxu0 0.0
      %3764 = vmatpush.msra.mxu0 0.0
      %3765 = vmatpush.msra.mxu0 0.0
      %3766 = vmatpush.msra.mxu0 0.0
      %3767 = vmatpush.msra.mxu0 0.0
      %3768 = vmatpush.msra.mxu0 0.0
      %3769 = vmatpush.msra.mxu0 0.0
      %3770 = vmatpush.msra.mxu0 0.0
      %3771 = vmatpush.msra.mxu0 0.0
      %3772 = vmatpush.msra.mxu0 0.0
      %3773 = vmatpush.msra.mxu0 0.0
      %3774 = vmatpush.msra.mxu0 0.0
      %3775 = vmatpush.msra.mxu0 0.0
      %3776 = vmatpush.msra.mxu0 0.0
      %3777 = vmatpush.msra.mxu0 0.0
      %3778 = vmatpush.msra.mxu0 %v3667
      %3779 = vmatmul.f32.gmra.mxu0 %v3657
      %v3780 = vpop.f32.mrf.mxu0
      %v3781 = vadd.f32 0.0, %v3780
      %3782 = vdwg.mxu0
      %3783 = vmatpush.msra.mxu0 0.0
      %3784 = vmatpush.msra.mxu0 0.0
      %3785 = vmatpush.msra.mxu0 0.0
      %3786 = vmatpush.msra.mxu0 0.0
      %3787 = vmatpush.msra.mxu0 0.0
      %3788 = vmatpush.msra.mxu0 0.0
      %3789 = vmatpush.msra.mxu0 0.0
      %3790 = vmatpush.msra.mxu0 0.0
      %3791 = vmatpush.msra.mxu0 0.0
      %3792 = vmatpush.msra.mxu0 0.0
      %3793 = vmatpush.msra.mxu0 0.0
      %3794 = vmatpush.msra.mxu0 0.0
      %3795 = vmatpush.msra.mxu0 0.0
      %3796 = vmatpush.msra.mxu0 0.0
      %3797 = vmatpush.msra.mxu0 0.0
      %3798 = vmatpush.msra.mxu0 %v3669
      %3799 = vmatmul.f32.gmra.mxu0 %v3657
      %v3800 = vpop.f32.mrf.mxu0
      %v3801 = vadd.f32 0.0, %v3800
      %3802 = vdwg.mxu0
      %3803 = vmatpush.msra.mxu0 0.0
      %3804 = vmatpush.msra.mxu0 0.0
      %3805 = vmatpush.msra.mxu0 0.0
      %3806 = vmatpush.msra.mxu0 0.0
      %3807 = vmatpush.msra.mxu0 0.0
      %3808 = vmatpush.msra.mxu0 0.0
      %3809 = vmatpush.msra.mxu0 0.0
      %3810 = vmatpush.msra.mxu0 0.0
      %3811 = vmatpush.msra.mxu0 0.0
      %3812 = vmatpush.msra.mxu0 0.0
      %3813 = vmatpush.msra.mxu0 0.0
      %3814 = vmatpush.msra.mxu0 0.0
      %3815 = vmatpush.msra.mxu0 0.0
      %3816 = vmatpush.msra.mxu0 0.0
      %3817 = vmatpush.msra.mxu0 0.0
      %3818 = vmatpush.msra.mxu0 %v3671
      %3819 = vmatmul.f32.gmra.mxu0 %v3657
      %v3820 = vpop.f32.mrf.mxu0
      %v3821 = vadd.f32 0.0, %v3820
      %3822 = vdwg.mxu0
      %3823 = vmatpush.msra.mxu0 0.0
      %3824 = vmatpush.msra.mxu0 0.0
      %3825 = vmatpush.msra.mxu0 0.0
      %3826 = vmatpush.msra.mxu0 0.0
      %3827 = vmatpush.msra.mxu0 0.0
      %3828 = vmatpush.msra.mxu0 0.0
      %3829 = vmatpush.msra.mxu0 0.0
      %3830 = vmatpush.msra.mxu0 0.0
      %3831 = vmatpush.msra.mxu0 0.0
      %3832 = vmatpush.msra.mxu0 0.0
      %3833 = vmatpush.msra.mxu0 0.0
      %3834 = vmatpush.msra.mxu0 0.0
      %3835 = vmatpush.msra.mxu0 0.0
      %3836 = vmatpush.msra.mxu0 0.0
      %3837 = vmatpush.msra.mxu0 0.0
      %3838 = vmatpush.msra.mxu0 %v3673
      %3839 = vmatmul.f32.gmra.mxu0 %v3657
      %v3840 = vpop.f32.mrf.mxu0
      %v3841 = vadd.f32 0.0, %v3840
      %3842 = vdwg.mxu0
      %3843 = vmatpush.msra.mxu0 0.0
      %3844 = vmatpush.msra.mxu0 0.0
      %3845 = vmatpush.msra.mxu0 0.0
      %3846 = vmatpush.msra.mxu0 0.0
      %3847 = vmatpush.msra.mxu0 0.0
      %3848 = vmatpush.msra.mxu0 0.0
      %3849 = vmatpush.msra.mxu0 0.0
      %3850 = vmatpush.msra.mxu0 0.0
      %3851 = vmatpush.msra.mxu0 0.0
      %3852 = vmatpush.msra.mxu0 0.0
      %3853 = vmatpush.msra.mxu0 0.0
      %3854 = vmatpush.msra.mxu0 0.0
      %3855 = vmatpush.msra.mxu0 0.0
      %3856 = vmatpush.msra.mxu0 0.0
      %3857 = vmatpush.msra.mxu0 0.0
      %3858 = vmatpush.msra.mxu0 %v3675
      %3859 = vmatmul.f32.gmra.mxu0 %v3657
      %v3860 = vpop.f32.mrf.mxu0
      %v3861 = vadd.f32 0.0, %v3860
      %3862 = vdwg.mxu0
      %3863 = vmatpush.msra.mxu0 0.0
      %3864 = vmatpush.msra.mxu0 0.0
      %3865 = vmatpush.msra.mxu0 0.0
      %3866 = vmatpush.msra.mxu0 0.0
      %3867 = vmatpush.msra.mxu0 0.0
      %3868 = vmatpush.msra.mxu0 0.0
      %3869 = vmatpush.msra.mxu0 0.0
      %3870 = vmatpush.msra.mxu0 0.0
      %3871 = vmatpush.msra.mxu0 0.0
      %3872 = vmatpush.msra.mxu0 0.0
      %3873 = vmatpush.msra.mxu0 0.0
      %3874 = vmatpush.msra.mxu0 0.0
      %3875 = vmatpush.msra.mxu0 0.0
      %3876 = vmatpush.msra.mxu0 0.0
      %3877 = vmatpush.msra.mxu0 0.0
      %3878 = vmatpush.msra.mxu0 %v3677
      %3879 = vmatmul.f32.gmra.mxu0 %v3657
      %v3880 = vpop.f32.mrf.mxu0
      %v3881 = vadd.f32 0.0, %v3880
      %3882 = vdwg.mxu0
      %3883 = vmatpush.msra.mxu0 0.0
      %3884 = vmatpush.msra.mxu0 0.0
      %3885 = vmatpush.msra.mxu0 0.0
      %3886 = vmatpush.msra.mxu0 0.0
      %3887 = vmatpush.msra.mxu0 0.0
      %3888 = vmatpush.msra.mxu0 0.0
      %3889 = vmatpush.msra.mxu0 0.0
      %3890 = vmatpush.msra.mxu0 0.0
      %3891 = vmatpush.msra.mxu0 0.0
      %3892 = vmatpush.msra.mxu0 0.0
      %3893 = vmatpush.msra.mxu0 0.0
      %3894 = vmatpush.msra.mxu0 0.0
      %3895 = vmatpush.msra.mxu0 0.0
      %3896 = vmatpush.msra.mxu0 0.0
      %3897 = vmatpush.msra.mxu0 0.0
      %3898 = vmatpush.msra.mxu0 %v3679
      %3899 = vmatmul.f32.gmra.mxu0 %v3657
      %v3900 = vpop.f32.mrf.mxu0
      %v3901 = vadd.f32 0.0, %v3900
      %3902 = vdwg.mxu0
      %3903 = vmatpush.msra.mxu0 0.0
      %3904 = vmatpush.msra.mxu0 0.0
      %3905 = vmatpush.msra.mxu0 0.0
      %3906 = vmatpush.msra.mxu0 0.0
      %3907 = vmatpush.msra.mxu0 0.0
      %3908 = vmatpush.msra.mxu0 0.0
      %3909 = vmatpush.msra.mxu0 0.0
      %3910 = vmatpush.msra.mxu0 0.0
      %3911 = vmatpush.msra.mxu0 0.0
      %3912 = vmatpush.msra.mxu0 0.0
      %3913 = vmatpush.msra.mxu0 0.0
      %3914 = vmatpush.msra.mxu0 0.0
      %3915 = vmatpush.msra.mxu0 0.0
      %3916 = vmatpush.msra.mxu0 0.0
      %3917 = vmatpush.msra.mxu0 0.0
      %3918 = vmatpush.msra.mxu0 %v3681
      %3919 = vmatmul.f32.gmra.mxu0 %v3657
      %v3920 = vpop.f32.mrf.mxu0
      %v3921 = vadd.f32 0.0, %v3920
      %3922 = vdwg.mxu0
      %v3923 = vadd.f32 %v3558, %v3701
      %v3924 = vadd.f32 %v3559, %v3721
      %v3925 = vadd.f32 %v3560, %v3741
      %v3926 = vadd.f32 %v3561, %v3761
      %v3927 = vadd.f32 %v3562, %v3781
      %v3928 = vadd.f32 %v3563, %v3801
      %v3929 = vadd.f32 %v3564, %v3821
      %v3930 = vadd.f32 %v3565, %v3841
      %v3931 = vadd.f32 %v3566, %v3861
      %v3932 = vadd.f32 %v3567, %v3881
      %v3933 = vadd.f32 %v3568, %v3901
      %v3934 = vadd.f32 %v3569, %v3921
      %v3935 = vld [vmem:[#allocation2] sm:$0xff]
      %v3936 = vld [vmem:[#allocation2 + $0x8] sm:$0xff]
      %v3937 = vld [vmem:[#allocation2 + $0x10] sm:$0xff]
      %v3938 = vld [vmem:[#allocation2 + $0x18] sm:$0xff]
      %v3939 = vld [vmem:[#allocation2 + $0x20] sm:$0xff]
      %v3940 = vld [vmem:[#allocation2 + $0x28] sm:$0xff]
      %v3941 = vld [vmem:[#allocation2 + $0x30] sm:$0xff]
      %v3942 = vld [vmem:[#allocation2 + $0x38] sm:$0xf]
      %3943 = vrot.lane.b32.xlu0 %v689, 92
      %v3944 = vpop.permute.xlu0 %3943
      %3953 = vst [vmem:[#allocation1] ss:$2 sm:$0xff] %v3935
      %s3954 = scalar_lea.vmem [#allocation1], 16
      %3955 = vst [vmem:[%s3954] ss:$2 sm:$0xff] %v3936
      %s3956 = scalar_lea.vmem [#allocation1], 32
      %3957 = vst [vmem:[%s3956] ss:$2 sm:$0xff] %v3937
      %s3958 = scalar_lea.vmem [#allocation1], 48
      %3959 = vst [vmem:[%s3958] ss:$2 sm:$0xff] %v3938
      %v3960 = vld.sshfl [vmem:[#allocation1] sm:$0xff pattern:$0x75316420]
      %v3961 = vld.sshfl [vmem:[#allocation1 + $0x8] sm:$0xff pattern:$0x75316420]
      %v3962 = vld.sshfl [vmem:[#allocation1 + $0x10] sm:$0xff pattern:$0x75316420]
      %v3963 = vld.sshfl [vmem:[#allocation1 + $0x18] sm:$0xff pattern:$0x75316420]
      %v3964 = vld.sshfl [vmem:[#allocation1 + $0x20] sm:$0xff pattern:$0x75316420]
      %v3965 = vld.sshfl [vmem:[#allocation1 + $0x28] sm:$0xff pattern:$0x75316420]
      %v3966 = vld.sshfl [vmem:[#allocation1 + $0x30] sm:$0xff pattern:$0x75316420]
      %v3967 = vld.sshfl [vmem:[#allocation1 + $0x38] sm:$0xff pattern:$0x75316420]
      %3968 = vst [vmem:[#allocation1] ss:$2 sm:$0xff] %v3939
      %3969 = vst [vmem:[%s3954] ss:$2 sm:$0xff] %v3940
      %3970 = vst [vmem:[%s3956] ss:$2 sm:$0xff] %v3941
      %3971 = vst [vmem:[%s3958] ss:$2 sm:$0xff] %v3942
      %v3972 = vld.sshfl [vmem:[#allocation1] sm:$0xff pattern:$0x75316420]
      %v3973 = vld.sshfl [vmem:[#allocation1 + $0x8] sm:$0xff pattern:$0x75316420]
      %v3974 = vld.sshfl [vmem:[#allocation1 + $0x10] sm:$0xff pattern:$0x75316420]
      %v3975 = vld.sshfl [vmem:[#allocation1 + $0x18] sm:$0xff pattern:$0x75316420]
      %v3976 = vld.sshfl [vmem:[#allocation1 + $0x20] sm:$0xff pattern:$0x75316420]
      %v3977 = vld.sshfl [vmem:[#allocation1 + $0x28] sm:$0xff pattern:$0x75316420]
      %v3978 = vld.sshfl [vmem:[#allocation1 + $0x30] sm:$0xff pattern:$0x75316420]
      %3979 = vrot.lane.b32.xlu0 %v3960, 11
      %v3980 = vpop.permute.xlu0 %3979
      %3981 = vrot.lane.b32.xlu0 %v3961, 11
      %v3982 = vpop.permute.xlu0 %3981
      %3983 = vrot.lane.b32.xlu0 %v3962, 11
      %v3984 = vpop.permute.xlu0 %3983
      %3985 = vrot.lane.b32.xlu0 %v3963, 11
      %v3986 = vpop.permute.xlu0 %3985
      %3987 = vrot.lane.b32.xlu0 %v3964, 11
      %v3988 = vpop.permute.xlu0 %3987
      %3989 = vrot.lane.b32.xlu0 %v3965, 11
      %v3990 = vpop.permute.xlu0 %3989
      %3991 = vrot.lane.b32.xlu0 %v3966, 11
      %v3992 = vpop.permute.xlu0 %3991
      %3993 = vrot.lane.b32.xlu0 %v3967, 11
      %v3994 = vpop.permute.xlu0 %3993
      %3995 = vrot.lane.b32.xlu0 %v3972, 11
      %v3996 = vpop.permute.xlu0 %3995
      %3997 = vrot.lane.b32.xlu0 %v3973, 11
      %v3998 = vpop.permute.xlu0 %3997
      %3999 = vrot.lane.b32.xlu0 %v3974, 11
      %v4000 = vpop.permute.xlu0 %3999
      %4001 = vrot.lane.b32.xlu0 %v3975, 11
      %v4002 = vpop.permute.xlu0 %4001
      %4003 = vrot.lane.b32.xlu0 %v3976, 11
      %v4004 = vpop.permute.xlu0 %4003
      %4005 = vrot.lane.b32.xlu0 %v3977, 11
      %v4006 = vpop.permute.xlu0 %4005
      %4007 = vrot.lane.b32.xlu0 %v3978, 11
      %v4008 = vpop.permute.xlu0 %4007
      %vm4009 = vcmask 89088
      %v4010 = vsel %vm4009, %v3980, %v3982
      %v4011 = vsel %vm4009, %v3982, %v3984
      %v4012 = vsel %vm4009, %v3984, %v3986
      %v4013 = vsel %vm4009, %v3986, %v3988
      %v4014 = vsel %vm4009, %v3990, %v3992
      %v4015 = vsel %vm4009, %v3992, %v3994
      %v4016 = vsel %vm4009, %v3994, %v3996
      %v4017 = vsel %vm4009, %v3996, %v3998
      %v4018 = vsel %vm4009, %v4000, %v4002
      %v4019 = vsel %vm4009, %v4002, %v4004
      %v4020 = vsel %vm4009, %v4004, %v4006
      %v4021 = vsel %vm4009, %v4006, %v4008
      %v4022 = vsel %vm778, %v3944, 0
      %v4024 = vsel %vm640, %v4010, 0
      %v4026 = vsel %vm640, %v4011, 0
      %v4028 = vsel %vm640, %v4012, 0
      %v4030 = vsel %vm640, %v4013, 0
      %v4032 = vsel %vm640, %v4014, 0
      %v4034 = vsel %vm640, %v4015, 0
      %v4036 = vsel %vm640, %v4016, 0
      %v4038 = vsel %vm640, %v4017, 0
      %v4040 = vsel %vm640, %v4018, 0
      %v4042 = vsel %vm640, %v4019, 0
      %v4044 = vsel %vm640, %v4020, 0
      %v4046 = vsel %vm640, %v4021, 0
      %4048 = vmatpush.msra.mxu0 0.0
      %4049 = vmatpush.msra.mxu0 0.0
      %4050 = vmatpush.msra.mxu0 0.0
      %4051 = vmatpush.msra.mxu0 0.0
      %4052 = vmatpush.msra.mxu0 0.0
      %4053 = vmatpush.msra.mxu0 0.0
      %4054 = vmatpush.msra.mxu0 0.0
      %4055 = vmatpush.msra.mxu0 0.0
      %4056 = vmatpush.msra.mxu0 0.0
      %4057 = vmatpush.msra.mxu0 0.0
      %4058 = vmatpush.msra.mxu0 0.0
      %4059 = vmatpush.msra.mxu0 0.0
      %4060 = vmatpush.msra.mxu0 0.0
      %4061 = vmatpush.msra.mxu0 0.0
      %4062 = vmatpush.msra.mxu0 0.0
      %4063 = vmatpush.msra.mxu0 %v4024
      %4064 = vmatmul.f32.gmra.mxu0 %v4022
      %v4065 = vpop.f32.mrf.mxu0
      %v4066 = vadd.f32 0.0, %v4065
      %4067 = vdwg.mxu0
      %4068 = vmatpush.msra.mxu0 0.0
      %4069 = vmatpush.msra.mxu0 0.0
      %4070 = vmatpush.msra.mxu0 0.0
      %4071 = vmatpush.msra.mxu0 0.0
      %4072 = vmatpush.msra.mxu0 0.0
      %4073 = vmatpush.msra.mxu0 0.0
      %4074 = vmatpush.msra.mxu0 0.0
      %4075 = vmatpush.msra.mxu0 0.0
      %4076 = vmatpush.msra.mxu0 0.0
      %4077 = vmatpush.msra.mxu0 0.0
      %4078 = vmatpush.msra.mxu0 0.0
      %4079 = vmatpush.msra.mxu0 0.0
      %4080 = vmatpush.msra.mxu0 0.0
      %4081 = vmatpush.msra.mxu0 0.0
      %4082 = vmatpush.msra.mxu0 0.0
      %4083 = vmatpush.msra.mxu0 %v4026
      %4084 = vmatmul.f32.gmra.mxu0 %v4022
      %v4085 = vpop.f32.mrf.mxu0
      %v4086 = vadd.f32 0.0, %v4085
      %4087 = vdwg.mxu0
      %4088 = vmatpush.msra.mxu0 0.0
      %4089 = vmatpush.msra.mxu0 0.0
      %4090 = vmatpush.msra.mxu0 0.0
      %4091 = vmatpush.msra.mxu0 0.0
      %4092 = vmatpush.msra.mxu0 0.0
      %4093 = vmatpush.msra.mxu0 0.0
      %4094 = vmatpush.msra.mxu0 0.0
      %4095 = vmatpush.msra.mxu0 0.0
      %4096 = vmatpush.msra.mxu0 0.0
      %4097 = vmatpush.msra.mxu0 0.0
      %4098 = vmatpush.msra.mxu0 0.0
      %4099 = vmatpush.msra.mxu0 0.0
      %4100 = vmatpush.msra.mxu0 0.0
      %4101 = vmatpush.msra.mxu0 0.0
      %4102 = vmatpush.msra.mxu0 0.0
      %4103 = vmatpush.msra.mxu0 %v4028
      %4104 = vmatmul.f32.gmra.mxu0 %v4022
      %v4105 = vpop.f32.mrf.mxu0
      %v4106 = vadd.f32 0.0, %v4105
      %4107 = vdwg.mxu0
      %4108 = vmatpush.msra.mxu0 0.0
      %4109 = vmatpush.msra.mxu0 0.0
      %4110 = vmatpush.msra.mxu0 0.0
      %4111 = vmatpush.msra.mxu0 0.0
      %4112 = vmatpush.msra.mxu0 0.0
      %4113 = vmatpush.msra.mxu0 0.0
      %4114 = vmatpush.msra.mxu0 0.0
      %4115 = vmatpush.msra.mxu0 0.0
      %4116 = vmatpush.msra.mxu0 0.0
      %4117 = vmatpush.msra.mxu0 0.0
      %4118 = vmatpush.msra.mxu0 0.0
      %4119 = vmatpush.msra.mxu0 0.0
      %4120 = vmatpush.msra.mxu0 0.0
      %4121 = vmatpush.msra.mxu0 0.0
      %4122 = vmatpush.msra.mxu0 0.0
      %4123 = vmatpush.msra.mxu0 %v4030
      %4124 = vmatmul.f32.gmra.mxu0 %v4022
      %v4125 = vpop.f32.mrf.mxu0
      %v4126 = vadd.f32 0.0, %v4125
      %4127 = vdwg.mxu0
      %4128 = vmatpush.msra.mxu0 0.0
      %4129 = vmatpush.msra.mxu0 0.0
      %4130 = vmatpush.msra.mxu0 0.0
      %4131 = vmatpush.msra.mxu0 0.0
      %4132 = vmatpush.msra.mxu0 0.0
      %4133 = vmatpush.msra.mxu0 0.0
      %4134 = vmatpush.msra.mxu0 0.0
      %4135 = vmatpush.msra.mxu0 0.0
      %4136 = vmatpush.msra.mxu0 0.0
      %4137 = vmatpush.msra.mxu0 0.0
      %4138 = vmatpush.msra.mxu0 0.0
      %4139 = vmatpush.msra.mxu0 0.0
      %4140 = vmatpush.msra.mxu0 0.0
      %4141 = vmatpush.msra.mxu0 0.0
      %4142 = vmatpush.msra.mxu0 0.0
      %4143 = vmatpush.msra.mxu0 %v4032
      %4144 = vmatmul.f32.gmra.mxu0 %v4022
      %v4145 = vpop.f32.mrf.mxu0
      %v4146 = vadd.f32 0.0, %v4145
      %4147 = vdwg.mxu0
      %4148 = vmatpush.msra.mxu0 0.0
      %4149 = vmatpush.msra.mxu0 0.0
      %4150 = vmatpush.msra.mxu0 0.0
      %4151 = vmatpush.msra.mxu0 0.0
      %4152 = vmatpush.msra.mxu0 0.0
      %4153 = vmatpush.msra.mxu0 0.0
      %4154 = vmatpush.msra.mxu0 0.0
      %4155 = vmatpush.msra.mxu0 0.0
      %4156 = vmatpush.msra.mxu0 0.0
      %4157 = vmatpush.msra.mxu0 0.0
      %4158 = vmatpush.msra.mxu0 0.0
      %4159 = vmatpush.msra.mxu0 0.0
      %4160 = vmatpush.msra.mxu0 0.0
      %4161 = vmatpush.msra.mxu0 0.0
      %4162 = vmatpush.msra.mxu0 0.0
      %4163 = vmatpush.msra.mxu0 %v4034
      %4164 = vmatmul.f32.gmra.mxu0 %v4022
      %v4165 = vpop.f32.mrf.mxu0
      %v4166 = vadd.f32 0.0, %v4165
      %4167 = vdwg.mxu0
      %4168 = vmatpush.msra.mxu0 0.0
      %4169 = vmatpush.msra.mxu0 0.0
      %4170 = vmatpush.msra.mxu0 0.0
      %4171 = vmatpush.msra.mxu0 0.0
      %4172 = vmatpush.msra.mxu0 0.0
      %4173 = vmatpush.msra.mxu0 0.0
      %4174 = vmatpush.msra.mxu0 0.0
      %4175 = vmatpush.msra.mxu0 0.0
      %4176 = vmatpush.msra.mxu0 0.0
      %4177 = vmatpush.msra.mxu0 0.0
      %4178 = vmatpush.msra.mxu0 0.0
      %4179 = vmatpush.msra.mxu0 0.0
      %4180 = vmatpush.msra.mxu0 0.0
      %4181 = vmatpush.msra.mxu0 0.0
      %4182 = vmatpush.msra.mxu0 0.0
      %4183 = vmatpush.msra.mxu0 %v4036
      %4184 = vmatmul.f32.gmra.mxu0 %v4022
      %v4185 = vpop.f32.mrf.mxu0
      %v4186 = vadd.f32 0.0, %v4185
      %4187 = vdwg.mxu0
      %4188 = vmatpush.msra.mxu0 0.0
      %4189 = vmatpush.msra.mxu0 0.0
      %4190 = vmatpush.msra.mxu0 0.0
      %4191 = vmatpush.msra.mxu0 0.0
      %4192 = vmatpush.msra.mxu0 0.0
      %4193 = vmatpush.msra.mxu0 0.0
      %4194 = vmatpush.msra.mxu0 0.0
      %4195 = vmatpush.msra.mxu0 0.0
      %4196 = vmatpush.msra.mxu0 0.0
      %4197 = vmatpush.msra.mxu0 0.0
      %4198 = vmatpush.msra.mxu0 0.0
      %4199 = vmatpush.msra.mxu0 0.0
      %4200 = vmatpush.msra.mxu0 0.0
      %4201 = vmatpush.msra.mxu0 0.0
      %4202 = vmatpush.msra.mxu0 0.0
      %4203 = vmatpush.msra.mxu0 %v4038
      %4204 = vmatmul.f32.gmra.mxu0 %v4022
      %v4205 = vpop.f32.mrf.mxu0
      %v4206 = vadd.f32 0.0, %v4205
      %4207 = vdwg.mxu0
      %4208 = vmatpush.msra.mxu0 0.0
      %4209 = vmatpush.msra.mxu0 0.0
      %4210 = vmatpush.msra.mxu0 0.0
      %4211 = vmatpush.msra.mxu0 0.0
      %4212 = vmatpush.msra.mxu0 0.0
      %4213 = vmatpush.msra.mxu0 0.0
      %4214 = vmatpush.msra.mxu0 0.0
      %4215 = vmatpush.msra.mxu0 0.0
      %4216 = vmatpush.msra.mxu0 0.0
      %4217 = vmatpush.msra.mxu0 0.0
      %4218 = vmatpush.msra.mxu0 0.0
      %4219 = vmatpush.msra.mxu0 0.0
      %4220 = vmatpush.msra.mxu0 0.0
      %4221 = vmatpush.msra.mxu0 0.0
      %4222 = vmatpush.msra.mxu0 0.0
      %4223 = vmatpush.msra.mxu0 %v4040
      %4224 = vmatmul.f32.gmra.mxu0 %v4022
      %v4225 = vpop.f32.mrf.mxu0
      %v4226 = vadd.f32 0.0, %v4225
      %4227 = vdwg.mxu0
      %4228 = vmatpush.msra.mxu0 0.0
      %4229 = vmatpush.msra.mxu0 0.0
      %4230 = vmatpush.msra.mxu0 0.0
      %4231 = vmatpush.msra.mxu0 0.0
      %4232 = vmatpush.msra.mxu0 0.0
      %4233 = vmatpush.msra.mxu0 0.0
      %4234 = vmatpush.msra.mxu0 0.0
      %4235 = vmatpush.msra.mxu0 0.0
      %4236 = vmatpush.msra.mxu0 0.0
      %4237 = vmatpush.msra.mxu0 0.0
      %4238 = vmatpush.msra.mxu0 0.0
      %4239 = vmatpush.msra.mxu0 0.0
      %4240 = vmatpush.msra.mxu0 0.0
      %4241 = vmatpush.msra.mxu0 0.0
      %4242 = vmatpush.msra.mxu0 0.0
      %4243 = vmatpush.msra.mxu0 %v4042
      %4244 = vmatmul.f32.gmra.mxu0 %v4022
      %v4245 = vpop.f32.mrf.mxu0
      %v4246 = vadd.f32 0.0, %v4245
      %4247 = vdwg.mxu0
      %4248 = vmatpush.msra.mxu0 0.0
      %4249 = vmatpush.msra.mxu0 0.0
      %4250 = vmatpush.msra.mxu0 0.0
      %4251 = vmatpush.msra.mxu0 0.0
      %4252 = vmatpush.msra.mxu0 0.0
      %4253 = vmatpush.msra.mxu0 0.0
      %4254 = vmatpush.msra.mxu0 0.0
      %4255 = vmatpush.msra.mxu0 0.0
      %4256 = vmatpush.msra.mxu0 0.0
      %4257 = vmatpush.msra.mxu0 0.0
      %4258 = vmatpush.msra.mxu0 0.0
      %4259 = vmatpush.msra.mxu0 0.0
      %4260 = vmatpush.msra.mxu0 0.0
      %4261 = vmatpush.msra.mxu0 0.0
      %4262 = vmatpush.msra.mxu0 0.0
      %4263 = vmatpush.msra.mxu0 %v4044
      %4264 = vmatmul.f32.gmra.mxu0 %v4022
      %v4265 = vpop.f32.mrf.mxu0
      %v4266 = vadd.f32 0.0, %v4265
      %4267 = vdwg.mxu0
      %4268 = vmatpush.msra.mxu0 0.0
      %4269 = vmatpush.msra.mxu0 0.0
      %4270 = vmatpush.msra.mxu0 0.0
      %4271 = vmatpush.msra.mxu0 0.0
      %4272 = vmatpush.msra.mxu0 0.0
      %4273 = vmatpush.msra.mxu0 0.0
      %4274 = vmatpush.msra.mxu0 0.0
      %4275 = vmatpush.msra.mxu0 0.0
      %4276 = vmatpush.msra.mxu0 0.0
      %4277 = vmatpush.msra.mxu0 0.0
      %4278 = vmatpush.msra.mxu0 0.0
      %4279 = vmatpush.msra.mxu0 0.0
      %4280 = vmatpush.msra.mxu0 0.0
      %4281 = vmatpush.msra.mxu0 0.0
      %4282 = vmatpush.msra.mxu0 0.0
      %4283 = vmatpush.msra.mxu0 %v4046
      %4284 = vmatmul.f32.gmra.mxu0 %v4022
      %v4285 = vpop.f32.mrf.mxu0
      %v4286 = vadd.f32 0.0, %v4285
      %4287 = vdwg.mxu0
      %v4288 = vadd.f32 %v3923, %v4066
      %v4289 = vadd.f32 %v3924, %v4086
      %v4290 = vadd.f32 %v3925, %v4106
      %v4291 = vadd.f32 %v3926, %v4126
      %v4292 = vadd.f32 %v3927, %v4146
      %v4293 = vadd.f32 %v3928, %v4166
      %v4294 = vadd.f32 %v3929, %v4186
      %v4295 = vadd.f32 %v3930, %v4206
      %v4296 = vadd.f32 %v3931, %v4226
      %v4297 = vadd.f32 %v3932, %v4246
      %v4298 = vadd.f32 %v3933, %v4266
      %v4299 = vadd.f32 %v3934, %v4286
      %v4300 = vld [vmem:[#allocation2] sm:$0xff]
      %v4301 = vld [vmem:[#allocation2 + $0x8] sm:$0xff]
      %v4302 = vld [vmem:[#allocation2 + $0x10] sm:$0xff]
      %v4303 = vld [vmem:[#allocation2 + $0x18] sm:$0xff]
      %v4304 = vld [vmem:[#allocation2 + $0x20] sm:$0xff]
      %v4305 = vld [vmem:[#allocation2 + $0x28] sm:$0xff]
      %v4306 = vld [vmem:[#allocation2 + $0x30] sm:$0xff]
      %v4307 = vld [vmem:[#allocation2 + $0x38] sm:$0xf]
      %4308 = vrot.lane.b32.xlu0 %v689, 88
      %v4309 = vpop.permute.xlu0 %4308
      %4318 = vst [vmem:[#allocation1] ss:$2 sm:$0xff] %v4300
      %s4319 = scalar_lea.vmem [#allocation1], 16
      %4320 = vst [vmem:[%s4319] ss:$2 sm:$0xff] %v4301
      %s4321 = scalar_lea.vmem [#allocation1], 32
      %4322 = vst [vmem:[%s4321] ss:$2 sm:$0xff] %v4302
      %s4323 = scalar_lea.vmem [#allocation1], 48
      %4324 = vst [vmem:[%s4323] ss:$2 sm:$0xff] %v4303
      %v4325 = vld.sshfl [vmem:[#allocation1] sm:$0xff pattern:$0x75316420]
      %v4326 = vld.sshfl [vmem:[#allocation1 + $0x8] sm:$0xff pattern:$0x75316420]
      %v4327 = vld.sshfl [vmem:[#allocation1 + $0x10] sm:$0xff pattern:$0x75316420]
      %v4328 = vld.sshfl [vmem:[#allocation1 + $0x18] sm:$0xff pattern:$0x75316420]
      %v4329 = vld.sshfl [vmem:[#allocation1 + $0x20] sm:$0xff pattern:$0x75316420]
      %v4330 = vld.sshfl [vmem:[#allocation1 + $0x28] sm:$0xff pattern:$0x75316420]
      %v4331 = vld.sshfl [vmem:[#allocation1 + $0x30] sm:$0xff pattern:$0x75316420]
      %v4332 = vld.sshfl [vmem:[#allocation1 + $0x38] sm:$0xff pattern:$0x75316420]
      %4333 = vst [vmem:[#allocation1] ss:$2 sm:$0xff] %v4304
      %4334 = vst [vmem:[%s4319] ss:$2 sm:$0xff] %v4305
      %4335 = vst [vmem:[%s4321] ss:$2 sm:$0xff] %v4306
      %4336 = vst [vmem:[%s4323] ss:$2 sm:$0xff] %v4307
      %v4337 = vld.sshfl [vmem:[#allocation1] sm:$0xff pattern:$0x75316420]
      %v4338 = vld.sshfl [vmem:[#allocation1 + $0x8] sm:$0xff pattern:$0x75316420]
      %v4339 = vld.sshfl [vmem:[#allocation1 + $0x10] sm:$0xff pattern:$0x75316420]
      %v4340 = vld.sshfl [vmem:[#allocation1 + $0x18] sm:$0xff pattern:$0x75316420]
      %v4341 = vld.sshfl [vmem:[#allocation1 + $0x20] sm:$0xff pattern:$0x75316420]
      %v4342 = vld.sshfl [vmem:[#allocation1 + $0x28] sm:$0xff pattern:$0x75316420]
      %v4343 = vld.sshfl [vmem:[#allocation1 + $0x30] sm:$0xff pattern:$0x75316420]
      %4344 = vrot.lane.b32.xlu0 %v4325, 10
      %v4345 = vpop.permute.xlu0 %4344
      %4346 = vrot.lane.b32.xlu0 %v4326, 10
      %v4347 = vpop.permute.xlu0 %4346
      %4348 = vrot.lane.b32.xlu0 %v4327, 10
      %v4349 = vpop.permute.xlu0 %4348
      %4350 = vrot.lane.b32.xlu0 %v4328, 10
      %v4351 = vpop.permute.xlu0 %4350
      %4352 = vrot.lane.b32.xlu0 %v4329, 10
      %v4353 = vpop.permute.xlu0 %4352
      %4354 = vrot.lane.b32.xlu0 %v4330, 10
      %v4355 = vpop.permute.xlu0 %4354
      %4356 = vrot.lane.b32.xlu0 %v4331, 10
      %v4357 = vpop.permute.xlu0 %4356
      %4358 = vrot.lane.b32.xlu0 %v4332, 10
      %v4359 = vpop.permute.xlu0 %4358
      %4360 = vrot.lane.b32.xlu0 %v4337, 10
      %v4361 = vpop.permute.xlu0 %4360
      %4362 = vrot.lane.b32.xlu0 %v4338, 10
      %v4363 = vpop.permute.xlu0 %4362
      %4364 = vrot.lane.b32.xlu0 %v4339, 10
      %v4365 = vpop.permute.xlu0 %4364
      %4366 = vrot.lane.b32.xlu0 %v4340, 10
      %v4367 = vpop.permute.xlu0 %4366
      %4368 = vrot.lane.b32.xlu0 %v4341, 10
      %v4369 = vpop.permute.xlu0 %4368
      %4370 = vrot.lane.b32.xlu0 %v4342, 10
      %v4371 = vpop.permute.xlu0 %4370
      %4372 = vrot.lane.b32.xlu0 %v4343, 10
      %v4373 = vpop.permute.xlu0 %4372
      %vm4374 = vcmask 80896
      %v4375 = vsel %vm4374, %v4345, %v4347
      %v4376 = vsel %vm4374, %v4347, %v4349
      %v4377 = vsel %vm4374, %v4349, %v4351
      %v4378 = vsel %vm4374, %v4351, %v4353
      %v4379 = vsel %vm4374, %v4355, %v4357
      %v4380 = vsel %vm4374, %v4357, %v4359
      %v4381 = vsel %vm4374, %v4359, %v4361
      %v4382 = vsel %vm4374, %v4361, %v4363
      %v4383 = vsel %vm4374, %v4365, %v4367
      %v4384 = vsel %vm4374, %v4367, %v4369
      %v4385 = vsel %vm4374, %v4369, %v4371
      %v4386 = vsel %vm4374, %v4371, %v4373
      %v4387 = vsel %vm778, %v4309, 0
      %v4389 = vsel %vm640, %v4375, 0
      %v4391 = vsel %vm640, %v4376, 0
      %v4393 = vsel %vm640, %v4377, 0
      %v4395 = vsel %vm640, %v4378, 0
      %v4397 = vsel %vm640, %v4379, 0
      %v4399 = vsel %vm640, %v4380, 0
      %v4401 = vsel %vm640, %v4381, 0
      %v4403 = vsel %vm640, %v4382, 0
      %v4405 = vsel %vm640, %v4383, 0
      %v4407 = vsel %vm640, %v4384, 0
      %v4409 = vsel %vm640, %v4385, 0
      %v4411 = vsel %vm640, %v4386, 0
      %4413 = vmatpush.msra.mxu0 0.0
      %4414 = vmatpush.msra.mxu0 0.0
      %4415 = vmatpush.msra.mxu0 0.0
      %4416 = vmatpush.msra.mxu0 0.0
      %4417 = vmatpush.msra.mxu0 0.0
      %4418 = vmatpush.msra.mxu0 0.0
      %4419 = vmatpush.msra.mxu0 0.0
      %4420 = vmatpush.msra.mxu0 0.0
      %4421 = vmatpush.msra.mxu0 0.0
      %4422 = vmatpush.msra.mxu0 0.0
      %4423 = vmatpush.msra.mxu0 0.0
      %4424 = vmatpush.msra.mxu0 0.0
      %4425 = vmatpush.msra.mxu0 0.0
      %4426 = vmatpush.msra.mxu0 0.0
      %4427 = vmatpush.msra.mxu0 0.0
      %4428 = vmatpush.msra.mxu0 %v4389
      %4429 = vmatmul.f32.gmra.mxu0 %v4387
      %v4430 = vpop.f32.mrf.mxu0
      %v4431 = vadd.f32 0.0, %v4430
      %4432 = vdwg.mxu0
      %4433 = vmatpush.msra.mxu0 0.0
      %4434 = vmatpush.msra.mxu0 0.0
      %4435 = vmatpush.msra.mxu0 0.0
      %4436 = vmatpush.msra.mxu0 0.0
      %4437 = vmatpush.msra.mxu0 0.0
      %4438 = vmatpush.msra.mxu0 0.0
      %4439 = vmatpush.msra.mxu0 0.0
      %4440 = vmatpush.msra.mxu0 0.0
      %4441 = vmatpush.msra.mxu0 0.0
      %4442 = vmatpush.msra.mxu0 0.0
      %4443 = vmatpush.msra.mxu0 0.0
      %4444 = vmatpush.msra.mxu0 0.0
      %4445 = vmatpush.msra.mxu0 0.0
      %4446 = vmatpush.msra.mxu0 0.0
      %4447 = vmatpush.msra.mxu0 0.0
      %4448 = vmatpush.msra.mxu0 %v4391
      %4449 = vmatmul.f32.gmra.mxu0 %v4387
      %v4450 = vpop.f32.mrf.mxu0
      %v4451 = vadd.f32 0.0, %v4450
      %4452 = vdwg.mxu0
      %4453 = vmatpush.msra.mxu0 0.0
      %4454 = vmatpush.msra.mxu0 0.0
      %4455 = vmatpush.msra.mxu0 0.0
      %4456 = vmatpush.msra.mxu0 0.0
      %4457 = vmatpush.msra.mxu0 0.0
      %4458 = vmatpush.msra.mxu0 0.0
      %4459 = vmatpush.msra.mxu0 0.0
      %4460 = vmatpush.msra.mxu0 0.0
      %4461 = vmatpush.msra.mxu0 0.0
      %4462 = vmatpush.msra.mxu0 0.0
      %4463 = vmatpush.msra.mxu0 0.0
      %4464 = vmatpush.msra.mxu0 0.0
      %4465 = vmatpush.msra.mxu0 0.0
      %4466 = vmatpush.msra.mxu0 0.0
      %4467 = vmatpush.msra.mxu0 0.0
      %4468 = vmatpush.msra.mxu0 %v4393
      %4469 = vmatmul.f32.gmra.mxu0 %v4387
      %v4470 = vpop.f32.mrf.mxu0
      %v4471 = vadd.f32 0.0, %v4470
      %4472 = vdwg.mxu0
      %4473 = vmatpush.msra.mxu0 0.0
      %4474 = vmatpush.msra.mxu0 0.0
      %4475 = vmatpush.msra.mxu0 0.0
      %4476 = vmatpush.msra.mxu0 0.0
      %4477 = vmatpush.msra.mxu0 0.0
      %4478 = vmatpush.msra.mxu0 0.0
      %4479 = vmatpush.msra.mxu0 0.0
      %4480 = vmatpush.msra.mxu0 0.0
      %4481 = vmatpush.msra.mxu0 0.0
      %4482 = vmatpush.msra.mxu0 0.0
      %4483 = vmatpush.msra.mxu0 0.0
      %4484 = vmatpush.msra.mxu0 0.0
      %4485 = vmatpush.msra.mxu0 0.0
      %4486 = vmatpush.msra.mxu0 0.0
      %4487 = vmatpush.msra.mxu0 0.0
      %4488 = vmatpush.msra.mxu0 %v4395
      %4489 = vmatmul.f32.gmra.mxu0 %v4387
      %v4490 = vpop.f32.mrf.mxu0
      %v4491 = vadd.f32 0.0, %v4490
      %4492 = vdwg.mxu0
      %4493 = vmatpush.msra.mxu0 0.0
      %4494 = vmatpush.msra.mxu0 0.0
      %4495 = vmatpush.msra.mxu0 0.0
      %4496 = vmatpush.msra.mxu0 0.0
      %4497 = vmatpush.msra.mxu0 0.0
      %4498 = vmatpush.msra.mxu0 0.0
      %4499 = vmatpush.msra.mxu0 0.0
      %4500 = vmatpush.msra.mxu0 0.0
      %4501 = vmatpush.msra.mxu0 0.0
      %4502 = vmatpush.msra.mxu0 0.0
      %4503 = vmatpush.msra.mxu0 0.0
      %4504 = vmatpush.msra.mxu0 0.0
      %4505 = vmatpush.msra.mxu0 0.0
      %4506 = vmatpush.msra.mxu0 0.0
      %4507 = vmatpush.msra.mxu0 0.0
      %4508 = vmatpush.msra.mxu0 %v4397
      %4509 = vmatmul.f32.gmra.mxu0 %v4387
      %v4510 = vpop.f32.mrf.mxu0
      %v4511 = vadd.f32 0.0, %v4510
      %4512 = vdwg.mxu0
      %4513 = vmatpush.msra.mxu0 0.0
      %4514 = vmatpush.msra.mxu0 0.0
      %4515 = vmatpush.msra.mxu0 0.0
      %4516 = vmatpush.msra.mxu0 0.0
      %4517 = vmatpush.msra.mxu0 0.0
      %4518 = vmatpush.msra.mxu0 0.0
      %4519 = vmatpush.msra.mxu0 0.0
      %4520 = vmatpush.msra.mxu0 0.0
      %4521 = vmatpush.msra.mxu0 0.0
      %4522 = vmatpush.msra.mxu0 0.0
      %4523 = vmatpush.msra.mxu0 0.0
      %4524 = vmatpush.msra.mxu0 0.0
      %4525 = vmatpush.msra.mxu0 0.0
      %4526 = vmatpush.msra.mxu0 0.0
      %4527 = vmatpush.msra.mxu0 0.0
      %4528 = vmatpush.msra.mxu0 %v4399
      %4529 = vmatmul.f32.gmra.mxu0 %v4387
      %v4530 = vpop.f32.mrf.mxu0
      %v4531 = vadd.f32 0.0, %v4530
      %4532 = vdwg.mxu0
      %4533 = vmatpush.msra.mxu0 0.0
      %4534 = vmatpush.msra.mxu0 0.0
      %4535 = vmatpush.msra.mxu0 0.0
      %4536 = vmatpush.msra.mxu0 0.0
      %4537 = vmatpush.msra.mxu0 0.0
      %4538 = vmatpush.msra.mxu0 0.0
      %4539 = vmatpush.msra.mxu0 0.0
      %4540 = vmatpush.msra.mxu0 0.0
      %4541 = vmatpush.msra.mxu0 0.0
      %4542 = vmatpush.msra.mxu0 0.0
      %4543 = vmatpush.msra.mxu0 0.0
      %4544 = vmatpush.msra.mxu0 0.0
      %4545 = vmatpush.msra.mxu0 0.0
      %4546 = vmatpush.msra.mxu0 0.0
      %4547 = vmatpush.msra.mxu0 0.0
      %4548 = vmatpush.msra.mxu0 %v4401
      %4549 = vmatmul.f32.gmra.mxu0 %v4387
      %v4550 = vpop.f32.mrf.mxu0
      %v4551 = vadd.f32 0.0, %v4550
      %4552 = vdwg.mxu0
      %4553 = vmatpush.msra.mxu0 0.0
      %4554 = vmatpush.msra.mxu0 0.0
      %4555 = vmatpush.msra.mxu0 0.0
      %4556 = vmatpush.msra.mxu0 0.0
      %4557 = vmatpush.msra.mxu0 0.0
      %4558 = vmatpush.msra.mxu0 0.0
      %4559 = vmatpush.msra.mxu0 0.0
      %4560 = vmatpush.msra.mxu0 0.0
      %4561 = vmatpush.msra.mxu0 0.0
      %4562 = vmatpush.msra.mxu0 0.0
      %4563 = vmatpush.msra.mxu0 0.0
      %4564 = vmatpush.msra.mxu0 0.0
      %4565 = vmatpush.msra.mxu0 0.0
      %4566 = vmatpush.msra.mxu0 0.0
      %4567 = vmatpush.msra.mxu0 0.0
      %4568 = vmatpush.msra.mxu0 %v4403
      %4569 = vmatmul.f32.gmra.mxu0 %v4387
      %v4570 = vpop.f32.mrf.mxu0
      %v4571 = vadd.f32 0.0, %v4570
      %4572 = vdwg.mxu0
      %4573 = vmatpush.msra.mxu0 0.0
      %4574 = vmatpush.msra.mxu0 0.0
      %4575 = vmatpush.msra.mxu0 0.0
      %4576 = vmatpush.msra.mxu0 0.0
      %4577 = vmatpush.msra.mxu0 0.0
      %4578 = vmatpush.msra.mxu0 0.0
      %4579 = vmatpush.msra.mxu0 0.0
      %4580 = vmatpush.msra.mxu0 0.0
      %4581 = vmatpush.msra.mxu0 0.0
      %4582 = vmatpush.msra.mxu0 0.0
      %4583 = vmatpush.msra.mxu0 0.0
      %4584 = vmatpush.msra.mxu0 0.0
      %4585 = vmatpush.msra.mxu0 0.0
      %4586 = vmatpush.msra.mxu0 0.0
      %4587 = vmatpush.msra.mxu0 0.0
      %4588 = vmatpush.msra.mxu0 %v4405
      %4589 = vmatmul.f32.gmra.mxu0 %v4387
      %v4590 = vpop.f32.mrf.mxu0
      %v4591 = vadd.f32 0.0, %v4590
      %4592 = vdwg.mxu0
      %4593 = vmatpush.msra.mxu0 0.0
      %4594 = vmatpush.msra.mxu0 0.0
      %4595 = vmatpush.msra.mxu0 0.0
      %4596 = vmatpush.msra.mxu0 0.0
      %4597 = vmatpush.msra.mxu0 0.0
      %4598 = vmatpush.msra.mxu0 0.0
      %4599 = vmatpush.msra.mxu0 0.0
      %4600 = vmatpush.msra.mxu0 0.0
      %4601 = vmatpush.msra.mxu0 0.0
      %4602 = vmatpush.msra.mxu0 0.0
      %4603 = vmatpush.msra.mxu0 0.0
      %4604 = vmatpush.msra.mxu0 0.0
      %4605 = vmatpush.msra.mxu0 0.0
      %4606 = vmatpush.msra.mxu0 0.0
      %4607 = vmatpush.msra.mxu0 0.0
      %4608 = vmatpush.msra.mxu0 %v4407
      %4609 = vmatmul.f32.gmra.mxu0 %v4387
      %v4610 = vpop.f32.mrf.mxu0
      %v4611 = vadd.f32 0.0, %v4610
      %4612 = vdwg.mxu0
      %4613 = vmatpush.msra.mxu0 0.0
      %4614 = vmatpush.msra.mxu0 0.0
      %4615 = vmatpush.msra.mxu0 0.0
      %4616 = vmatpush.msra.mxu0 0.0
      %4617 = vmatpush.msra.mxu0 0.0
      %4618 = vmatpush.msra.mxu0 0.0
      %4619 = vmatpush.msra.mxu0 0.0
      %4620 = vmatpush.msra.mxu0 0.0
      %4621 = vmatpush.msra.mxu0 0.0
      %4622 = vmatpush.msra.mxu0 0.0
      %4623 = vmatpush.msra.mxu0 0.0
      %4624 = vmatpush.msra.mxu0 0.0
      %4625 = vmatpush.msra.mxu0 0.0
      %4626 = vmatpush.msra.mxu0 0.0
      %4627 = vmatpush.msra.mxu0 0.0
      %4628 = vmatpush.msra.mxu0 %v4409
      %4629 = vmatmul.f32.gmra.mxu0 %v4387
      %v4630 = vpop.f32.mrf.mxu0
      %v4631 = vadd.f32 0.0, %v4630
      %4632 = vdwg.mxu0
      %4633 = vmatpush.msra.mxu0 0.0
      %4634 = vmatpush.msra.mxu0 0.0
      %4635 = vmatpush.msra.mxu0 0.0
      %4636 = vmatpush.msra.mxu0 0.0
      %4637 = vmatpush.msra.mxu0 0.0
      %4638 = vmatpush.msra.mxu0 0.0
      %4639 = vmatpush.msra.mxu0 0.0
      %4640 = vmatpush.msra.mxu0 0.0
      %4641 = vmatpush.msra.mxu0 0.0
      %4642 = vmatpush.msra.mxu0 0.0
      %4643 = vmatpush.msra.mxu0 0.0
      %4644 = vmatpush.msra.mxu0 0.0
      %4645 = vmatpush.msra.mxu0 0.0
      %4646 = vmatpush.msra.mxu0 0.0
      %4647 = vmatpush.msra.mxu0 0.0
      %4648 = vmatpush.msra.mxu0 %v4411
      %4649 = vmatmul.f32.gmra.mxu0 %v4387
      %v4650 = vpop.f32.mrf.mxu0
      %v4651 = vadd.f32 0.0, %v4650
      %4652 = vdwg.mxu0
      %v4653 = vadd.f32 %v4288, %v4431
      %v4654 = vadd.f32 %v4289, %v4451
      %v4655 = vadd.f32 %v4290, %v4471
      %v4656 = vadd.f32 %v4291, %v4491
      %v4657 = vadd.f32 %v4292, %v4511
      %v4658 = vadd.f32 %v4293, %v4531
      %v4659 = vadd.f32 %v4294, %v4551
      %v4660 = vadd.f32 %v4295, %v4571
      %v4661 = vadd.f32 %v4296, %v4591
      %v4662 = vadd.f32 %v4297, %v4611
      %v4663 = vadd.f32 %v4298, %v4631
      %v4664 = vadd.f32 %v4299, %v4651
      %v4665 = vld [vmem:[#allocation2] sm:$0xff]
      %v4666 = vld [vmem:[#allocation2 + $0x8] sm:$0xff]
      %v4667 = vld [vmem:[#allocation2 + $0x10] sm:$0xff]
      %v4668 = vld [vmem:[#allocation2 + $0x18] sm:$0xff]
      %v4669 = vld [vmem:[#allocation2 + $0x20] sm:$0xff]
      %v4670 = vld [vmem:[#allocation2 + $0x28] sm:$0xff]
      %v4671 = vld [vmem:[#allocation2 + $0x30] sm:$0xff]
      %v4672 = vld [vmem:[#allocation2 + $0x38] sm:$0xf]
      %4673 = vrot.lane.b32.xlu0 %v689, 84
      %v4674 = vpop.permute.xlu0 %4673
      %4683 = vst [vmem:[#allocation1] ss:$2 sm:$0xff] %v4665
      %s4684 = scalar_lea.vmem [#allocation1], 16
      %4685 = vst [vmem:[%s4684] ss:$2 sm:$0xff] %v4666
      %s4686 = scalar_lea.vmem [#allocation1], 32
      %4687 = vst [vmem:[%s4686] ss:$2 sm:$0xff] %v4667
      %s4688 = scalar_lea.vmem [#allocation1], 48
      %4689 = vst [vmem:[%s4688] ss:$2 sm:$0xff] %v4668
      %v4690 = vld.sshfl [vmem:[#allocation1] sm:$0xff pattern:$0x75316420]
      %v4691 = vld.sshfl [vmem:[#allocation1 + $0x8] sm:$0xff pattern:$0x75316420]
      %v4692 = vld.sshfl [vmem:[#allocation1 + $0x10] sm:$0xff pattern:$0x75316420]
      %v4693 = vld.sshfl [vmem:[#allocation1 + $0x18] sm:$0xff pattern:$0x75316420]
      %v4694 = vld.sshfl [vmem:[#allocation1 + $0x20] sm:$0xff pattern:$0x75316420]
      %v4695 = vld.sshfl [vmem:[#allocation1 + $0x28] sm:$0xff pattern:$0x75316420]
      %v4696 = vld.sshfl [vmem:[#allocation1 + $0x30] sm:$0xff pattern:$0x75316420]
      %v4697 = vld.sshfl [vmem:[#allocation1 + $0x38] sm:$0xff pattern:$0x75316420]
      %4698 = vst [vmem:[#allocation1] ss:$2 sm:$0xff] %v4669
      %4699 = vst [vmem:[%s4684] ss:$2 sm:$0xff] %v4670
      %4700 = vst [vmem:[%s4686] ss:$2 sm:$0xff] %v4671
      %4701 = vst [vmem:[%s4688] ss:$2 sm:$0xff] %v4672
      %v4702 = vld.sshfl [vmem:[#allocation1] sm:$0xff pattern:$0x75316420]
      %v4703 = vld.sshfl [vmem:[#allocation1 + $0x8] sm:$0xff pattern:$0x75316420]
      %v4704 = vld.sshfl [vmem:[#allocation1 + $0x10] sm:$0xff pattern:$0x75316420]
      %v4705 = vld.sshfl [vmem:[#allocation1 + $0x18] sm:$0xff pattern:$0x75316420]
      %v4706 = vld.sshfl [vmem:[#allocation1 + $0x20] sm:$0xff pattern:$0x75316420]
      %v4707 = vld.sshfl [vmem:[#allocation1 + $0x28] sm:$0xff pattern:$0x75316420]
      %v4708 = vld.sshfl [vmem:[#allocation1 + $0x30] sm:$0xff pattern:$0x75316420]
      %4709 = vrot.lane.b32.xlu0 %v4690, 9
      %v4710 = vpop.permute.xlu0 %4709
      %4711 = vrot.lane.b32.xlu0 %v4691, 9
      %v4712 = vpop.permute.xlu0 %4711
      %4713 = vrot.lane.b32.xlu0 %v4692, 9
      %v4714 = vpop.permute.xlu0 %4713
      %4715 = vrot.lane.b32.xlu0 %v4693, 9
      %v4716 = vpop.permute.xlu0 %4715
      %4717 = vrot.lane.b32.xlu0 %v4694, 9
      %v4718 = vpop.permute.xlu0 %4717
      %4719 = vrot.lane.b32.xlu0 %v4695, 9
      %v4720 = vpop.permute.xlu0 %4719
      %4721 = vrot.lane.b32.xlu0 %v4696, 9
      %v4722 = vpop.permute.xlu0 %4721
      %4723 = vrot.lane.b32.xlu0 %v4697, 9
      %v4724 = vpop.permute.xlu0 %4723
      %4725 = vrot.lane.b32.xlu0 %v4702, 9
      %v4726 = vpop.permute.xlu0 %4725
      %4727 = vrot.lane.b32.xlu0 %v4703, 9
      %v4728 = vpop.permute.xlu0 %4727
      %4729 = vrot.lane.b32.xlu0 %v4704, 9
      %v4730 = vpop.permute.xlu0 %4729
      %4731 = vrot.lane.b32.xlu0 %v4705, 9
      %v4732 = vpop.permute.xlu0 %4731
      %4733 = vrot.lane.b32.xlu0 %v4706, 9
      %v4734 = vpop.permute.xlu0 %4733
      %4735 = vrot.lane.b32.xlu0 %v4707, 9
      %v4736 = vpop.permute.xlu0 %4735
      %4737 = vrot.lane.b32.xlu0 %v4708, 9
      %v4738 = vpop.permute.xlu0 %4737
      %vm4739 = vcmask 72704
      %v4740 = vsel %vm4739, %v4710, %v4712
      %v4741 = vsel %vm4739, %v4712, %v4714
      %v4742 = vsel %vm4739, %v4714, %v4716
      %v4743 = vsel %vm4739, %v4716, %v4718
      %v4744 = vsel %vm4739, %v4720, %v4722
      %v4745 = vsel %vm4739, %v4722, %v4724
      %v4746 = vsel %vm4739, %v4724, %v4726
      %v4747 = vsel %vm4739, %v4726, %v4728
      %v4748 = vsel %vm4739, %v4730, %v4732
      %v4749 = vsel %vm4739, %v4732, %v4734
      %v4750 = vsel %vm4739, %v4734, %v4736
      %v4751 = vsel %vm4739, %v4736, %v4738
      %v4752 = vsel %vm778, %v4674, 0
      %v4754 = vsel %vm640, %v4740, 0
      %v4756 = vsel %vm640, %v4741, 0
      %v4758 = vsel %vm640, %v4742, 0
      %v4760 = vsel %vm640, %v4743, 0
      %v4762 = vsel %vm640, %v4744, 0
      %v4764 = vsel %vm640, %v4745, 0
      %v4766 = vsel %vm640, %v4746, 0
      %v4768 = vsel %vm640, %v4747, 0
      %v4770 = vsel %vm640, %v4748, 0
      %v4772 = vsel %vm640, %v4749, 0
      %v4774 = vsel %vm640, %v4750, 0
      %v4776 = vsel %vm640, %v4751, 0
      %4778 = vmatpush.msra.mxu0 0.0
      %4779 = vmatpush.msra.mxu0 0.0
      %4780 = vmatpush.msra.mxu0 0.0
      %4781 = vmatpush.msra.mxu0 0.0
      %4782 = vmatpush.msra.mxu0 0.0
      %4783 = vmatpush.msra.mxu0 0.0
      %4784 = vmatpush.msra.mxu0 0.0
      %4785 = vmatpush.msra.mxu0 0.0
      %4786 = vmatpush.msra.mxu0 0.0
      %4787 = vmatpush.msra.mxu0 0.0
      %4788 = vmatpush.msra.mxu0 0.0
      %4789 = vmatpush.msra.mxu0 0.0
      %4790 = vmatpush.msra.mxu0 0.0
      %4791 = vmatpush.msra.mxu0 0.0
      %4792 = vmatpush.msra.mxu0 0.0
      %4793 = vmatpush.msra.mxu0 %v4754
      %4794 = vmatmul.f32.gmra.mxu0 %v4752
      %v4795 = vpop.f32.mrf.mxu0
      %v4796 = vadd.f32 0.0, %v4795
      %4797 = vdwg.mxu0
      %4798 = vmatpush.msra.mxu0 0.0
      %4799 = vmatpush.msra.mxu0 0.0
      %4800 = vmatpush.msra.mxu0 0.0
      %4801 = vmatpush.msra.mxu0 0.0
      %4802 = vmatpush.msra.mxu0 0.0
      %4803 = vmatpush.msra.mxu0 0.0
      %4804 = vmatpush.msra.mxu0 0.0
      %4805 = vmatpush.msra.mxu0 0.0
      %4806 = vmatpush.msra.mxu0 0.0
      %4807 = vmatpush.msra.mxu0 0.0
      %4808 = vmatpush.msra.mxu0 0.0
      %4809 = vmatpush.msra.mxu0 0.0
      %4810 = vmatpush.msra.mxu0 0.0
      %4811 = vmatpush.msra.mxu0 0.0
      %4812 = vmatpush.msra.mxu0 0.0
      %4813 = vmatpush.msra.mxu0 %v4756
      %4814 = vmatmul.f32.gmra.mxu0 %v4752
      %v4815 = vpop.f32.mrf.mxu0
      %v4816 = vadd.f32 0.0, %v4815
      %4817 = vdwg.mxu0
      %4818 = vmatpush.msra.mxu0 0.0
      %4819 = vmatpush.msra.mxu0 0.0
      %4820 = vmatpush.msra.mxu0 0.0
      %4821 = vmatpush.msra.mxu0 0.0
      %4822 = vmatpush.msra.mxu0 0.0
      %4823 = vmatpush.msra.mxu0 0.0
      %4824 = vmatpush.msra.mxu0 0.0
      %4825 = vmatpush.msra.mxu0 0.0
      %4826 = vmatpush.msra.mxu0 0.0
      %4827 = vmatpush.msra.mxu0 0.0
      %4828 = vmatpush.msra.mxu0 0.0
      %4829 = vmatpush.msra.mxu0 0.0
      %4830 = vmatpush.msra.mxu0 0.0
      %4831 = vmatpush.msra.mxu0 0.0
      %4832 = vmatpush.msra.mxu0 0.0
      %4833 = vmatpush.msra.mxu0 %v4758
      %4834 = vmatmul.f32.gmra.mxu0 %v4752
      %v4835 = vpop.f32.mrf.mxu0
      %v4836 = vadd.f32 0.0, %v4835
      %4837 = vdwg.mxu0
      %4838 = vmatpush.msra.mxu0 0.0
      %4839 = vmatpush.msra.mxu0 0.0
      %4840 = vmatpush.msra.mxu0 0.0
      %4841 = vmatpush.msra.mxu0 0.0
      %4842 = vmatpush.msra.mxu0 0.0
      %4843 = vmatpush.msra.mxu0 0.0
      %4844 = vmatpush.msra.mxu0 0.0
      %4845 = vmatpush.msra.mxu0 0.0
      %4846 = vmatpush.msra.mxu0 0.0
      %4847 = vmatpush.msra.mxu0 0.0
      %4848 = vmatpush.msra.mxu0 0.0
      %4849 = vmatpush.msra.mxu0 0.0
      %4850 = vmatpush.msra.mxu0 0.0
      %4851 = vmatpush.msra.mxu0 0.0
      %4852 = vmatpush.msra.mxu0 0.0
      %4853 = vmatpush.msra.mxu0 %v4760
      %4854 = vmatmul.f32.gmra.mxu0 %v4752
      %v4855 = vpop.f32.mrf.mxu0
      %v4856 = vadd.f32 0.0, %v4855
      %4857 = vdwg.mxu0
      %4858 = vmatpush.msra.mxu0 0.0
      %4859 = vmatpush.msra.mxu0 0.0
      %4860 = vmatpush.msra.mxu0 0.0
      %4861 = vmatpush.msra.mxu0 0.0
      %4862 = vmatpush.msra.mxu0 0.0
      %4863 = vmatpush.msra.mxu0 0.0
      %4864 = vmatpush.msra.mxu0 0.0
      %4865 = vmatpush.msra.mxu0 0.0
      %4866 = vmatpush.msra.mxu0 0.0
      %4867 = vmatpush.msra.mxu0 0.0
      %4868 = vmatpush.msra.mxu0 0.0
      %4869 = vmatpush.msra.mxu0 0.0
      %4870 = vmatpush.msra.mxu0 0.0
      %4871 = vmatpush.msra.mxu0 0.0
      %4872 = vmatpush.msra.mxu0 0.0
      %4873 = vmatpush.msra.mxu0 %v4762
      %4874 = vmatmul.f32.gmra.mxu0 %v4752
      %v4875 = vpop.f32.mrf.mxu0
      %v4876 = vadd.f32 0.0, %v4875
      %4877 = vdwg.mxu0
      %4878 = vmatpush.msra.mxu0 0.0
      %4879 = vmatpush.msra.mxu0 0.0
      %4880 = vmatpush.msra.mxu0 0.0
      %4881 = vmatpush.msra.mxu0 0.0
      %4882 = vmatpush.msra.mxu0 0.0
      %4883 = vmatpush.msra.mxu0 0.0
      %4884 = vmatpush.msra.mxu0 0.0
      %4885 = vmatpush.msra.mxu0 0.0
      %4886 = vmatpush.msra.mxu0 0.0
      %4887 = vmatpush.msra.mxu0 0.0
      %4888 = vmatpush.msra.mxu0 0.0
      %4889 = vmatpush.msra.mxu0 0.0
      %4890 = vmatpush.msra.mxu0 0.0
      %4891 = vmatpush.msra.mxu0 0.0
      %4892 = vmatpush.msra.mxu0 0.0
      %4893 = vmatpush.msra.mxu0 %v4764
      %4894 = vmatmul.f32.gmra.mxu0 %v4752
      %v4895 = vpop.f32.mrf.mxu0
      %v4896 = vadd.f32 0.0, %v4895
      %4897 = vdwg.mxu0
      %4898 = vmatpush.msra.mxu0 0.0
      %4899 = vmatpush.msra.mxu0 0.0
      %4900 = vmatpush.msra.mxu0 0.0
      %4901 = vmatpush.msra.mxu0 0.0
      %4902 = vmatpush.msra.mxu0 0.0
      %4903 = vmatpush.msra.mxu0 0.0
      %4904 = vmatpush.msra.mxu0 0.0
      %4905 = vmatpush.msra.mxu0 0.0
      %4906 = vmatpush.msra.mxu0 0.0
      %4907 = vmatpush.msra.mxu0 0.0
      %4908 = vmatpush.msra.mxu0 0.0
      %4909 = vmatpush.msra.mxu0 0.0
      %4910 = vmatpush.msra.mxu0 0.0
      %4911 = vmatpush.msra.mxu0 0.0
      %4912 = vmatpush.msra.mxu0 0.0
      %4913 = vmatpush.msra.mxu0 %v4766
      %4914 = vmatmul.f32.gmra.mxu0 %v4752
      %v4915 = vpop.f32.mrf.mxu0
      %v4916 = vadd.f32 0.0, %v4915
      %4917 = vdwg.mxu0
      %4918 = vmatpush.msra.mxu0 0.0
      %4919 = vmatpush.msra.mxu0 0.0
      %4920 = vmatpush.msra.mxu0 0.0
      %4921 = vmatpush.msra.mxu0 0.0
      %4922 = vmatpush.msra.mxu0 0.0
      %4923 = vmatpush.msra.mxu0 0.0
      %4924 = vmatpush.msra.mxu0 0.0
      %4925 = vmatpush.msra.mxu0 0.0
      %4926 = vmatpush.msra.mxu0 0.0
      %4927 = vmatpush.msra.mxu0 0.0
      %4928 = vmatpush.msra.mxu0 0.0
      %4929 = vmatpush.msra.mxu0 0.0
      %4930 = vmatpush.msra.mxu0 0.0
      %4931 = vmatpush.msra.mxu0 0.0
      %4932 = vmatpush.msra.mxu0 0.0
      %4933 = vmatpush.msra.mxu0 %v4768
      %4934 = vmatmul.f32.gmra.mxu0 %v4752
      %v4935 = vpop.f32.mrf.mxu0
      %v4936 = vadd.f32 0.0, %v4935
      %4937 = vdwg.mxu0
      %4938 = vmatpush.msra.mxu0 0.0
      %4939 = vmatpush.msra.mxu0 0.0
      %4940 = vmatpush.msra.mxu0 0.0
      %4941 = vmatpush.msra.mxu0 0.0
      %4942 = vmatpush.msra.mxu0 0.0
      %4943 = vmatpush.msra.mxu0 0.0
      %4944 = vmatpush.msra.mxu0 0.0
      %4945 = vmatpush.msra.mxu0 0.0
      %4946 = vmatpush.msra.mxu0 0.0
      %4947 = vmatpush.msra.mxu0 0.0
      %4948 = vmatpush.msra.mxu0 0.0
      %4949 = vmatpush.msra.mxu0 0.0
      %4950 = vmatpush.msra.mxu0 0.0
      %4951 = vmatpush.msra.mxu0 0.0
      %4952 = vmatpush.msra.mxu0 0.0
      %4953 = vmatpush.msra.mxu0 %v4770
      %4954 = vmatmul.f32.gmra.mxu0 %v4752
      %v4955 = vpop.f32.mrf.mxu0
      %v4956 = vadd.f32 0.0, %v4955
      %4957 = vdwg.mxu0
      %4958 = vmatpush.msra.mxu0 0.0
      %4959 = vmatpush.msra.mxu0 0.0
      %4960 = vmatpush.msra.mxu0 0.0
      %4961 = vmatpush.msra.mxu0 0.0
      %4962 = vmatpush.msra.mxu0 0.0
      %4963 = vmatpush.msra.mxu0 0.0
      %4964 = vmatpush.msra.mxu0 0.0
      %4965 = vmatpush.msra.mxu0 0.0
      %4966 = vmatpush.msra.mxu0 0.0
      %4967 = vmatpush.msra.mxu0 0.0
      %4968 = vmatpush.msra.mxu0 0.0
      %4969 = vmatpush.msra.mxu0 0.0
      %4970 = vmatpush.msra.mxu0 0.0
      %4971 = vmatpush.msra.mxu0 0.0
      %4972 = vmatpush.msra.mxu0 0.0
      %4973 = vmatpush.msra.mxu0 %v4772
      %4974 = vmatmul.f32.gmra.mxu0 %v4752
      %v4975 = vpop.f32.mrf.mxu0
      %v4976 = vadd.f32 0.0, %v4975
      %4977 = vdwg.mxu0
      %4978 = vmatpush.msra.mxu0 0.0
      %4979 = vmatpush.msra.mxu0 0.0
      %4980 = vmatpush.msra.mxu0 0.0
      %4981 = vmatpush.msra.mxu0 0.0
      %4982 = vmatpush.msra.mxu0 0.0
      %4983 = vmatpush.msra.mxu0 0.0
      %4984 = vmatpush.msra.mxu0 0.0
      %4985 = vmatpush.msra.mxu0 0.0
      %4986 = vmatpush.msra.mxu0 0.0
      %4987 = vmatpush.msra.mxu0 0.0
      %4988 = vmatpush.msra.mxu0 0.0
      %4989 = vmatpush.msra.mxu0 0.0
      %4990 = vmatpush.msra.mxu0 0.0
      %4991 = vmatpush.msra.mxu0 0.0
      %4992 = vmatpush.msra.mxu0 0.0
      %4993 = vmatpush.msra.mxu0 %v4774
      %4994 = vmatmul.f32.gmra.mxu0 %v4752
      %v4995 = vpop.f32.mrf.mxu0
      %v4996 = vadd.f32 0.0, %v4995
      %4997 = vdwg.mxu0
      %4998 = vmatpush.msra.mxu0 0.0
      %4999 = vmatpush.msra.mxu0 0.0
      %5000 = vmatpush.msra.mxu0 0.0
      %5001 = vmatpush.msra.mxu0 0.0
      %5002 = vmatpush.msra.mxu0 0.0
      %5003 = vmatpush.msra.mxu0 0.0
      %5004 = vmatpush.msra.mxu0 0.0
      %5005 = vmatpush.msra.mxu0 0.0
      %5006 = vmatpush.msra.mxu0 0.0
      %5007 = vmatpush.msra.mxu0 0.0
      %5008 = vmatpush.msra.mxu0 0.0
      %5009 = vmatpush.msra.mxu0 0.0
      %5010 = vmatpush.msra.mxu0 0.0
      %5011 = vmatpush.msra.mxu0 0.0
      %5012 = vmatpush.msra.mxu0 0.0
      %5013 = vmatpush.msra.mxu0 %v4776
      %5014 = vmatmul.f32.gmra.mxu0 %v4752
      %v5015 = vpop.f32.mrf.mxu0
      %v5016 = vadd.f32 0.0, %v5015
      %5017 = vdwg.mxu0
      %v5018 = vadd.f32 %v4653, %v4796
      %v5019 = vadd.f32 %v4654, %v4816
      %v5020 = vadd.f32 %v4655, %v4836
      %v5021 = vadd.f32 %v4656, %v4856
      %v5022 = vadd.f32 %v4657, %v4876
      %v5023 = vadd.f32 %v4658, %v4896
      %v5024 = vadd.f32 %v4659, %v4916
      %v5025 = vadd.f32 %v4660, %v4936
      %v5026 = vadd.f32 %v4661, %v4956
      %v5027 = vadd.f32 %v4662, %v4976
      %v5028 = vadd.f32 %v4663, %v4996
      %v5029 = vadd.f32 %v4664, %v5016
      %v5030 = vld [vmem:[#allocation2] sm:$0xff]
      %v5031 = vld [vmem:[#allocation2 + $0x8] sm:$0xff]
      %v5032 = vld [vmem:[#allocation2 + $0x10] sm:$0xff]
      %v5033 = vld [vmem:[#allocation2 + $0x18] sm:$0xff]
      %v5034 = vld [vmem:[#allocation2 + $0x20] sm:$0xff]
      %v5035 = vld [vmem:[#allocation2 + $0x28] sm:$0xff]
      %v5036 = vld [vmem:[#allocation2 + $0x30] sm:$0xff]
      %v5037 = vld [vmem:[#allocation2 + $0x38] sm:$0xff]
      %5038 = vrot.lane.b32.xlu0 %v689, 80
      %v5039 = vpop.permute.xlu0 %5038
      %5048 = vst [vmem:[#allocation1] ss:$2 sm:$0xff] %v5030
      %s5049 = scalar_lea.vmem [#allocation1], 16
      %5050 = vst [vmem:[%s5049] ss:$2 sm:$0xff] %v5031
      %s5051 = scalar_lea.vmem [#allocation1], 32
      %5052 = vst [vmem:[%s5051] ss:$2 sm:$0xff] %v5032
      %s5053 = scalar_lea.vmem [#allocation1], 48
      %5054 = vst [vmem:[%s5053] ss:$2 sm:$0xff] %v5033
      %v5055 = vld.sshfl [vmem:[#allocation1] sm:$0xff pattern:$0x75316420]
      %v5056 = vld.sshfl [vmem:[#allocation1 + $0x8] sm:$0xff pattern:$0x75316420]
      %v5057 = vld.sshfl [vmem:[#allocation1 + $0x10] sm:$0xff pattern:$0x75316420]
      %v5058 = vld.sshfl [vmem:[#allocation1 + $0x18] sm:$0xff pattern:$0x75316420]
      %v5059 = vld.sshfl [vmem:[#allocation1 + $0x20] sm:$0xff pattern:$0x75316420]
      %v5060 = vld.sshfl [vmem:[#allocation1 + $0x28] sm:$0xff pattern:$0x75316420]
      %v5061 = vld.sshfl [vmem:[#allocation1 + $0x30] sm:$0xff pattern:$0x75316420]
      %v5062 = vld.sshfl [vmem:[#allocation1 + $0x38] sm:$0xff pattern:$0x75316420]
      %5063 = vst [vmem:[#allocation1] ss:$2 sm:$0xff] %v5034
      %5064 = vst [vmem:[%s5049] ss:$2 sm:$0xff] %v5035
      %5065 = vst [vmem:[%s5051] ss:$2 sm:$0xff] %v5036
      %5066 = vst [vmem:[%s5053] ss:$2 sm:$0xff] %v5037
      %v5067 = vld.sshfl [vmem:[#allocation1] sm:$0xff pattern:$0x75316420]
      %v5068 = vld.sshfl [vmem:[#allocation1 + $0x8] sm:$0xff pattern:$0x75316420]
      %v5069 = vld.sshfl [vmem:[#allocation1 + $0x10] sm:$0xff pattern:$0x75316420]
      %v5070 = vld.sshfl [vmem:[#allocation1 + $0x18] sm:$0xff pattern:$0x75316420]
      %v5071 = vld.sshfl [vmem:[#allocation1 + $0x20] sm:$0xff pattern:$0x75316420]
      %v5072 = vld.sshfl [vmem:[#allocation1 + $0x28] sm:$0xff pattern:$0x75316420]
      %v5073 = vld.sshfl [vmem:[#allocation1 + $0x30] sm:$0xff pattern:$0x75316420]
      %5074 = vrot.lane.b32.xlu0 %v5055, 1
      %v5075 = vpop.permute.xlu0 %5074
      %5076 = vrot.lane.b32.xlu0 %v5056, 1
      %v5077 = vpop.permute.xlu0 %5076
      %5078 = vrot.lane.b32.xlu0 %v5057, 1
      %v5079 = vpop.permute.xlu0 %5078
      %5080 = vrot.lane.b32.xlu0 %v5058, 1
      %v5081 = vpop.permute.xlu0 %5080
      %5082 = vrot.lane.b32.xlu0 %v5059, 1
      %v5083 = vpop.permute.xlu0 %5082
      %5084 = vrot.lane.b32.xlu0 %v5060, 1
      %v5085 = vpop.permute.xlu0 %5084
      %5086 = vrot.lane.b32.xlu0 %v5061, 1
      %v5087 = vpop.permute.xlu0 %5086
      %5088 = vrot.lane.b32.xlu0 %v5062, 1
      %v5089 = vpop.permute.xlu0 %5088
      %5090 = vrot.lane.b32.xlu0 %v5067, 1
      %v5091 = vpop.permute.xlu0 %5090
      %5092 = vrot.lane.b32.xlu0 %v5068, 1
      %v5093 = vpop.permute.xlu0 %5092
      %5094 = vrot.lane.b32.xlu0 %v5069, 1
      %v5095 = vpop.permute.xlu0 %5094
      %5096 = vrot.lane.b32.xlu0 %v5070, 1
      %v5097 = vpop.permute.xlu0 %5096
      %5098 = vrot.lane.b32.xlu0 %v5071, 1
      %v5099 = vpop.permute.xlu0 %5098
      %5100 = vrot.lane.b32.xlu0 %v5072, 1
      %v5101 = vpop.permute.xlu0 %5100
      %5102 = vrot.lane.b32.xlu0 %v5073, 1
      %v5103 = vpop.permute.xlu0 %5102
      %vm5104 = vcmask 7168
      %v5105 = vsel %vm5104, %v5075, %v5077
      %v5106 = vsel %vm5104, %v5077, %v5079
      %v5107 = vsel %vm5104, %v5079, %v5081
      %v5108 = vsel %vm5104, %v5081, %v5083
      %v5109 = vsel %vm5104, %v5085, %v5087
      %v5110 = vsel %vm5104, %v5087, %v5089
      %v5111 = vsel %vm5104, %v5089, %v5091
      %v5112 = vsel %vm5104, %v5091, %v5093
      %v5113 = vsel %vm5104, %v5095, %v5097
      %v5114 = vsel %vm5104, %v5097, %v5099
      %v5115 = vsel %vm5104, %v5099, %v5101
      %v5116 = vsel %vm5104, %v5101, %v5103
      %v5117 = vsel %vm778, %v5039, 0
      %v5119 = vsel %vm640, %v5105, 0
      %v5121 = vsel %vm640, %v5106, 0
      %v5123 = vsel %vm640, %v5107, 0
      %v5125 = vsel %vm640, %v5108, 0
      %v5127 = vsel %vm640, %v5109, 0
      %v5129 = vsel %vm640, %v5110, 0
      %v5131 = vsel %vm640, %v5111, 0
      %v5133 = vsel %vm640, %v5112, 0
      %v5135 = vsel %vm640, %v5113, 0
      %v5137 = vsel %vm640, %v5114, 0
      %v5139 = vsel %vm640, %v5115, 0
      %v5141 = vsel %vm640, %v5116, 0
      %5143 = vmatpush.msra.mxu0 0.0
      %5144 = vmatpush.msra.mxu0 0.0
      %5145 = vmatpush.msra.mxu0 0.0
      %5146 = vmatpush.msra.mxu0 0.0
      %5147 = vmatpush.msra.mxu0 0.0
      %5148 = vmatpush.msra.mxu0 0.0
      %5149 = vmatpush.msra.mxu0 0.0
      %5150 = vmatpush.msra.mxu0 0.0
      %5151 = vmatpush.msra.mxu0 0.0
      %5152 = vmatpush.msra.mxu0 0.0
      %5153 = vmatpush.msra.mxu0 0.0
      %5154 = vmatpush.msra.mxu0 0.0
      %5155 = vmatpush.msra.mxu0 0.0
      %5156 = vmatpush.msra.mxu0 0.0
      %5157 = vmatpush.msra.mxu0 0.0
      %5158 = vmatpush.msra.mxu0 %v5119
      %5159 = vmatmul.f32.gmra.mxu0 %v5117
      %v5160 = vpop.f32.mrf.mxu0
      %v5161 = vadd.f32 0.0, %v5160
      %5162 = vdwg.mxu0
      %5163 = vmatpush.msra.mxu0 0.0
      %5164 = vmatpush.msra.mxu0 0.0
      %5165 = vmatpush.msra.mxu0 0.0
      %5166 = vmatpush.msra.mxu0 0.0
      %5167 = vmatpush.msra.mxu0 0.0
      %5168 = vmatpush.msra.mxu0 0.0
      %5169 = vmatpush.msra.mxu0 0.0
      %5170 = vmatpush.msra.mxu0 0.0
      %5171 = vmatpush.msra.mxu0 0.0
      %5172 = vmatpush.msra.mxu0 0.0
      %5173 = vmatpush.msra.mxu0 0.0
      %5174 = vmatpush.msra.mxu0 0.0
      %5175 = vmatpush.msra.mxu0 0.0
      %5176 = vmatpush.msra.mxu0 0.0
      %5177 = vmatpush.msra.mxu0 0.0
      %5178 = vmatpush.msra.mxu0 %v5121
      %5179 = vmatmul.f32.gmra.mxu0 %v5117
      %v5180 = vpop.f32.mrf.mxu0
      %v5181 = vadd.f32 0.0, %v5180
      %5182 = vdwg.mxu0
      %5183 = vmatpush.msra.mxu0 0.0
      %5184 = vmatpush.msra.mxu0 0.0
      %5185 = vmatpush.msra.mxu0 0.0
      %5186 = vmatpush.msra.mxu0 0.0
      %5187 = vmatpush.msra.mxu0 0.0
      %5188 = vmatpush.msra.mxu0 0.0
      %5189 = vmatpush.msra.mxu0 0.0
      %5190 = vmatpush.msra.mxu0 0.0
      %5191 = vmatpush.msra.mxu0 0.0
      %5192 = vmatpush.msra.mxu0 0.0
      %5193 = vmatpush.msra.mxu0 0.0
      %5194 = vmatpush.msra.mxu0 0.0
      %5195 = vmatpush.msra.mxu0 0.0
      %5196 = vmatpush.msra.mxu0 0.0
      %5197 = vmatpush.msra.mxu0 0.0
      %5198 = vmatpush.msra.mxu0 %v5123
      %5199 = vmatmul.f32.gmra.mxu0 %v5117
      %v5200 = vpop.f32.mrf.mxu0
      %v5201 = vadd.f32 0.0, %v5200
      %5202 = vdwg.mxu0
      %5203 = vmatpush.msra.mxu0 0.0
      %5204 = vmatpush.msra.mxu0 0.0
      %5205 = vmatpush.msra.mxu0 0.0
      %5206 = vmatpush.msra.mxu0 0.0
      %5207 = vmatpush.msra.mxu0 0.0
      %5208 = vmatpush.msra.mxu0 0.0
      %5209 = vmatpush.msra.mxu0 0.0
      %5210 = vmatpush.msra.mxu0 0.0
      %5211 = vmatpush.msra.mxu0 0.0
      %5212 = vmatpush.msra.mxu0 0.0
      %5213 = vmatpush.msra.mxu0 0.0
      %5214 = vmatpush.msra.mxu0 0.0
      %5215 = vmatpush.msra.mxu0 0.0
      %5216 = vmatpush.msra.mxu0 0.0
      %5217 = vmatpush.msra.mxu0 0.0
      %5218 = vmatpush.msra.mxu0 %v5125
      %5219 = vmatmul.f32.gmra.mxu0 %v5117
      %v5220 = vpop.f32.mrf.mxu0
      %v5221 = vadd.f32 0.0, %v5220
      %5222 = vdwg.mxu0
      %5223 = vmatpush.msra.mxu0 0.0
      %5224 = vmatpush.msra.mxu0 0.0
      %5225 = vmatpush.msra.mxu0 0.0
      %5226 = vmatpush.msra.mxu0 0.0
      %5227 = vmatpush.msra.mxu0 0.0
      %5228 = vmatpush.msra.mxu0 0.0
      %5229 = vmatpush.msra.mxu0 0.0
      %5230 = vmatpush.msra.mxu0 0.0
      %5231 = vmatpush.msra.mxu0 0.0
      %5232 = vmatpush.msra.mxu0 0.0
      %5233 = vmatpush.msra.mxu0 0.0
      %5234 = vmatpush.msra.mxu0 0.0
      %5235 = vmatpush.msra.mxu0 0.0
      %5236 = vmatpush.msra.mxu0 0.0
      %5237 = vmatpush.msra.mxu0 0.0
      %5238 = vmatpush.msra.mxu0 %v5127
      %5239 = vmatmul.f32.gmra.mxu0 %v5117
      %v5240 = vpop.f32.mrf.mxu0
      %v5241 = vadd.f32 0.0, %v5240
      %5242 = vdwg.mxu0
      %5243 = vmatpush.msra.mxu0 0.0
      %5244 = vmatpush.msra.mxu0 0.0
      %5245 = vmatpush.msra.mxu0 0.0
      %5246 = vmatpush.msra.mxu0 0.0
      %5247 = vmatpush.msra.mxu0 0.0
      %5248 = vmatpush.msra.mxu0 0.0
      %5249 = vmatpush.msra.mxu0 0.0
      %5250 = vmatpush.msra.mxu0 0.0
      %5251 = vmatpush.msra.mxu0 0.0
      %5252 = vmatpush.msra.mxu0 0.0
      %5253 = vmatpush.msra.mxu0 0.0
      %5254 = vmatpush.msra.mxu0 0.0
      %5255 = vmatpush.msra.mxu0 0.0
      %5256 = vmatpush.msra.mxu0 0.0
      %5257 = vmatpush.msra.mxu0 0.0
      %5258 = vmatpush.msra.mxu0 %v5129
      %5259 = vmatmul.f32.gmra.mxu0 %v5117
      %v5260 = vpop.f32.mrf.mxu0
      %v5261 = vadd.f32 0.0, %v5260
      %5262 = vdwg.mxu0
      %5263 = vmatpush.msra.mxu0 0.0
      %5264 = vmatpush.msra.mxu0 0.0
      %5265 = vmatpush.msra.mxu0 0.0
      %5266 = vmatpush.msra.mxu0 0.0
      %5267 = vmatpush.msra.mxu0 0.0
      %5268 = vmatpush.msra.mxu0 0.0
      %5269 = vmatpush.msra.mxu0 0.0
      %5270 = vmatpush.msra.mxu0 0.0
      %5271 = vmatpush.msra.mxu0 0.0
      %5272 = vmatpush.msra.mxu0 0.0
      %5273 = vmatpush.msra.mxu0 0.0
      %5274 = vmatpush.msra.mxu0 0.0
      %5275 = vmatpush.msra.mxu0 0.0
      %5276 = vmatpush.msra.mxu0 0.0
      %5277 = vmatpush.msra.mxu0 0.0
      %5278 = vmatpush.msra.mxu0 %v5131
      %5279 = vmatmul.f32.gmra.mxu0 %v5117
      %v5280 = vpop.f32.mrf.mxu0
      %v5281 = vadd.f32 0.0, %v5280
      %5282 = vdwg.mxu0
      %5283 = vmatpush.msra.mxu0 0.0
      %5284 = vmatpush.msra.mxu0 0.0
      %5285 = vmatpush.msra.mxu0 0.0
      %5286 = vmatpush.msra.mxu0 0.0
      %5287 = vmatpush.msra.mxu0 0.0
      %5288 = vmatpush.msra.mxu0 0.0
      %5289 = vmatpush.msra.mxu0 0.0
      %5290 = vmatpush.msra.mxu0 0.0
      %5291 = vmatpush.msra.mxu0 0.0
      %5292 = vmatpush.msra.mxu0 0.0
      %5293 = vmatpush.msra.mxu0 0.0
      %5294 = vmatpush.msra.mxu0 0.0
      %5295 = vmatpush.msra.mxu0 0.0
      %5296 = vmatpush.msra.mxu0 0.0
      %5297 = vmatpush.msra.mxu0 0.0
      %5298 = vmatpush.msra.mxu0 %v5133
      %5299 = vmatmul.f32.gmra.mxu0 %v5117
      %v5300 = vpop.f32.mrf.mxu0
      %v5301 = vadd.f32 0.0, %v5300
      %5302 = vdwg.mxu0
      %5303 = vmatpush.msra.mxu0 0.0
      %5304 = vmatpush.msra.mxu0 0.0
      %5305 = vmatpush.msra.mxu0 0.0
      %5306 = vmatpush.msra.mxu0 0.0
      %5307 = vmatpush.msra.mxu0 0.0
      %5308 = vmatpush.msra.mxu0 0.0
      %5309 = vmatpush.msra.mxu0 0.0
      %5310 = vmatpush.msra.mxu0 0.0
      %5311 = vmatpush.msra.mxu0 0.0
      %5312 = vmatpush.msra.mxu0 0.0
      %5313 = vmatpush.msra.mxu0 0.0
      %5314 = vmatpush.msra.mxu0 0.0
      %5315 = vmatpush.msra.mxu0 0.0
      %5316 = vmatpush.msra.mxu0 0.0
      %5317 = vmatpush.msra.mxu0 0.0
      %5318 = vmatpush.msra.mxu0 %v5135
      %5319 = vmatmul.f32.gmra.mxu0 %v5117
      %v5320 = vpop.f32.mrf.mxu0
      %v5321 = vadd.f32 0.0, %v5320
      %5322 = vdwg.mxu0
      %5323 = vmatpush.msra.mxu0 0.0
      %5324 = vmatpush.msra.mxu0 0.0
      %5325 = vmatpush.msra.mxu0 0.0
      %5326 = vmatpush.msra.mxu0 0.0
      %5327 = vmatpush.msra.mxu0 0.0
      %5328 = vmatpush.msra.mxu0 0.0
      %5329 = vmatpush.msra.mxu0 0.0
      %5330 = vmatpush.msra.mxu0 0.0
      %5331 = vmatpush.msra.mxu0 0.0
      %5332 = vmatpush.msra.mxu0 0.0
      %5333 = vmatpush.msra.mxu0 0.0
      %5334 = vmatpush.msra.mxu0 0.0
      %5335 = vmatpush.msra.mxu0 0.0
      %5336 = vmatpush.msra.mxu0 0.0
      %5337 = vmatpush.msra.mxu0 0.0
      %5338 = vmatpush.msra.mxu0 %v5137
      %5339 = vmatmul.f32.gmra.mxu0 %v5117
      %v5340 = vpop.f32.mrf.mxu0
      %v5341 = vadd.f32 0.0, %v5340
      %5342 = vdwg.mxu0
      %5343 = vmatpush.msra.mxu0 0.0
      %5344 = vmatpush.msra.mxu0 0.0
      %5345 = vmatpush.msra.mxu0 0.0
      %5346 = vmatpush.msra.mxu0 0.0
      %5347 = vmatpush.msra.mxu0 0.0
      %5348 = vmatpush.msra.mxu0 0.0
      %5349 = vmatpush.msra.mxu0 0.0
      %5350 = vmatpush.msra.mxu0 0.0
      %5351 = vmatpush.msra.mxu0 0.0
      %5352 = vmatpush.msra.mxu0 0.0
      %5353 = vmatpush.msra.mxu0 0.0
      %5354 = vmatpush.msra.mxu0 0.0
      %5355 = vmatpush.msra.mxu0 0.0
      %5356 = vmatpush.msra.mxu0 0.0
      %5357 = vmatpush.msra.mxu0 0.0
      %5358 = vmatpush.msra.mxu0 %v5139
      %5359 = vmatmul.f32.gmra.mxu0 %v5117
      %v5360 = vpop.f32.mrf.mxu0
      %v5361 = vadd.f32 0.0, %v5360
      %5362 = vdwg.mxu0
      %5363 = vmatpush.msra.mxu0 0.0
      %5364 = vmatpush.msra.mxu0 0.0
      %5365 = vmatpush.msra.mxu0 0.0
      %5366 = vmatpush.msra.mxu0 0.0
      %5367 = vmatpush.msra.mxu0 0.0
      %5368 = vmatpush.msra.mxu0 0.0
      %5369 = vmatpush.msra.mxu0 0.0
      %5370 = vmatpush.msra.mxu0 0.0
      %5371 = vmatpush.msra.mxu0 0.0
      %5372 = vmatpush.msra.mxu0 0.0
      %5373 = vmatpush.msra.mxu0 0.0
      %5374 = vmatpush.msra.mxu0 0.0
      %5375 = vmatpush.msra.mxu0 0.0
      %5376 = vmatpush.msra.mxu0 0.0
      %5377 = vmatpush.msra.mxu0 0.0
      %5378 = vmatpush.msra.mxu0 %v5141
      %5379 = vmatmul.f32.gmra.mxu0 %v5117
      %v5380 = vpop.f32.mrf.mxu0
      %v5381 = vadd.f32 0.0, %v5380
      %5382 = vdwg.mxu0
      %v5383 = vadd.f32 %v5018, %v5161
      %v5384 = vadd.f32 %v5019, %v5181
      %v5385 = vadd.f32 %v5020, %v5201
      %v5386 = vadd.f32 %v5021, %v5221
      %v5387 = vadd.f32 %v5022, %v5241
      %v5388 = vadd.f32 %v5023, %v5261
      %v5389 = vadd.f32 %v5024, %v5281
      %v5390 = vadd.f32 %v5025, %v5301
      %v5391 = vadd.f32 %v5026, %v5321
      %v5392 = vadd.f32 %v5027, %v5341
      %v5393 = vadd.f32 %v5028, %v5361
      %v5394 = vadd.f32 %v5029, %v5381
      %v5395 = vld [vmem:[#allocation2 + $0x4] sm:$0xff]
      %v5396 = vld [vmem:[#allocation2 + $0xc] sm:$0xff]
      %v5397 = vld [vmem:[#allocation2 + $0x14] sm:$0xff]
      %v5398 = vld [vmem:[#allocation2 + $0x1c] sm:$0xff]
      %v5399 = vld [vmem:[#allocation2 + $0x24] sm:$0xff]
      %v5400 = vld [vmem:[#allocation2 + $0x2c] sm:$0xff]
      %v5401 = vld [vmem:[#allocation2 + $0x34] sm:$0xff]
      %v5402 = vld [vmem:[#allocation2 + $0x3c] sm:$0xf]
      %5403 = vrot.lane.b32.xlu0 %v689, 76
      %v5404 = vpop.permute.xlu0 %5403
      %5413 = vst [vmem:[#allocation1] ss:$2 sm:$0xff] %v5395
      %s5414 = scalar_lea.vmem [#allocation1], 16
      %5415 = vst [vmem:[%s5414] ss:$2 sm:$0xff] %v5396
      %s5416 = scalar_lea.vmem [#allocation1], 32
      %5417 = vst [vmem:[%s5416] ss:$2 sm:$0xff] %v5397
      %s5418 = scalar_lea.vmem [#allocation1], 48
      %5419 = vst [vmem:[%s5418] ss:$2 sm:$0xff] %v5398
      %v5420 = vld.sshfl [vmem:[#allocation1] sm:$0xff pattern:$0x75316420]
      %v5421 = vld.sshfl [vmem:[#allocation1 + $0x8] sm:$0xff pattern:$0x75316420]
      %v5422 = vld.sshfl [vmem:[#allocation1 + $0x10] sm:$0xff pattern:$0x75316420]
      %v5423 = vld.sshfl [vmem:[#allocation1 + $0x18] sm:$0xff pattern:$0x75316420]
      %v5424 = vld.sshfl [vmem:[#allocation1 + $0x28] sm:$0xff pattern:$0x75316420]
      %v5425 = vld.sshfl [vmem:[#allocation1 + $0x30] sm:$0xff pattern:$0x75316420]
      %v5426 = vld.sshfl [vmem:[#allocation1 + $0x38] sm:$0xff pattern:$0x75316420]
      %5427 = vst [vmem:[#allocation1] ss:$2 sm:$0xff] %v5399
      %5428 = vst [vmem:[%s5414] ss:$2 sm:$0xff] %v5400
      %5429 = vst [vmem:[%s5416] ss:$2 sm:$0xff] %v5401
      %5430 = vst [vmem:[%s5418] ss:$2 sm:$0xff] %v5402
      %v5431 = vld.sshfl [vmem:[#allocation1] sm:$0xff pattern:$0x75316420]
      %v5432 = vld.sshfl [vmem:[#allocation1 + $0x10] sm:$0xff pattern:$0x75316420]
      %v5433 = vld.sshfl [vmem:[#allocation1 + $0x18] sm:$0xff pattern:$0x75316420]
      %v5434 = vld.sshfl [vmem:[#allocation1 + $0x20] sm:$0xff pattern:$0x75316420]
      %v5435 = vld.sshfl [vmem:[#allocation1 + $0x28] sm:$0xff pattern:$0x75316420]
      %v5436 = vsel %vm778, %v5404, 0
      %v5438 = vsel %vm640, %v5420, 0
      %v5440 = vsel %vm640, %v5421, 0
      %v5442 = vsel %vm640, %v5422, 0
      %v5444 = vsel %vm640, %v5423, 0
      %v5446 = vsel %vm640, %v5424, 0
      %v5448 = vsel %vm640, %v5425, 0
      %v5450 = vsel %vm640, %v5426, 0
      %v5452 = vsel %vm640, %v5431, 0
      %v5454 = vsel %vm640, %v5432, 0
      %v5456 = vsel %vm640, %v5433, 0
      %v5458 = vsel %vm640, %v5434, 0
      %v5460 = vsel %vm640, %v5435, 0
      %5462 = vmatpush.msra.mxu0 0.0
      %5463 = vmatpush.msra.mxu0 0.0
      %5464 = vmatpush.msra.mxu0 0.0
      %5465 = vmatpush.msra.mxu0 0.0
      %5466 = vmatpush.msra.mxu0 0.0
      %5467 = vmatpush.msra.mxu0 0.0
      %5468 = vmatpush.msra.mxu0 0.0
      %5469 = vmatpush.msra.mxu0 0.0
      %5470 = vmatpush.msra.mxu0 0.0
      %5471 = vmatpush.msra.mxu0 0.0
      %5472 = vmatpush.msra.mxu0 0.0
      %5473 = vmatpush.msra.mxu0 0.0
      %5474 = vmatpush.msra.mxu0 0.0
      %5475 = vmatpush.msra.mxu0 0.0
      %5476 = vmatpush.msra.mxu0 0.0
      %5477 = vmatpush.msra.mxu0 %v5438
      %5478 = vmatmul.f32.gmra.mxu0 %v5436
      %v5479 = vpop.f32.mrf.mxu0
      %v5480 = vadd.f32 0.0, %v5479
      %5481 = vdwg.mxu0
      %5482 = vmatpush.msra.mxu0 0.0
      %5483 = vmatpush.msra.mxu0 0.0
      %5484 = vmatpush.msra.mxu0 0.0
      %5485 = vmatpush.msra.mxu0 0.0
      %5486 = vmatpush.msra.mxu0 0.0
      %5487 = vmatpush.msra.mxu0 0.0
      %5488 = vmatpush.msra.mxu0 0.0
      %5489 = vmatpush.msra.mxu0 0.0
      %5490 = vmatpush.msra.mxu0 0.0
      %5491 = vmatpush.msra.mxu0 0.0
      %5492 = vmatpush.msra.mxu0 0.0
      %5493 = vmatpush.msra.mxu0 0.0
      %5494 = vmatpush.msra.mxu0 0.0
      %5495 = vmatpush.msra.mxu0 0.0
      %5496 = vmatpush.msra.mxu0 0.0
      %5497 = vmatpush.msra.mxu0 %v5440
      %5498 = vmatmul.f32.gmra.mxu0 %v5436
      %v5499 = vpop.f32.mrf.mxu0
      %v5500 = vadd.f32 0.0, %v5499
      %5501 = vdwg.mxu0
      %5502 = vmatpush.msra.mxu0 0.0
      %5503 = vmatpush.msra.mxu0 0.0
      %5504 = vmatpush.msra.mxu0 0.0
      %5505 = vmatpush.msra.mxu0 0.0
      %5506 = vmatpush.msra.mxu0 0.0
      %5507 = vmatpush.msra.mxu0 0.0
      %5508 = vmatpush.msra.mxu0 0.0
      %5509 = vmatpush.msra.mxu0 0.0
      %5510 = vmatpush.msra.mxu0 0.0
      %5511 = vmatpush.msra.mxu0 0.0
      %5512 = vmatpush.msra.mxu0 0.0
      %5513 = vmatpush.msra.mxu0 0.0
      %5514 = vmatpush.msra.mxu0 0.0
      %5515 = vmatpush.msra.mxu0 0.0
      %5516 = vmatpush.msra.mxu0 0.0
      %5517 = vmatpush.msra.mxu0 %v5442
      %5518 = vmatmul.f32.gmra.mxu0 %v5436
      %v5519 = vpop.f32.mrf.mxu0
      %v5520 = vadd.f32 0.0, %v5519
      %5521 = vdwg.mxu0
      %5522 = vmatpush.msra.mxu0 0.0
      %5523 = vmatpush.msra.mxu0 0.0
      %5524 = vmatpush.msra.mxu0 0.0
      %5525 = vmatpush.msra.mxu0 0.0
      %5526 = vmatpush.msra.mxu0 0.0
      %5527 = vmatpush.msra.mxu0 0.0
      %5528 = vmatpush.msra.mxu0 0.0
      %5529 = vmatpush.msra.mxu0 0.0
      %5530 = vmatpush.msra.mxu0 0.0
      %5531 = vmatpush.msra.mxu0 0.0
      %5532 = vmatpush.msra.mxu0 0.0
      %5533 = vmatpush.msra.mxu0 0.0
      %5534 = vmatpush.msra.mxu0 0.0
      %5535 = vmatpush.msra.mxu0 0.0
      %5536 = vmatpush.msra.mxu0 0.0
      %5537 = vmatpush.msra.mxu0 %v5444
      %5538 = vmatmul.f32.gmra.mxu0 %v5436
      %v5539 = vpop.f32.mrf.mxu0
      %v5540 = vadd.f32 0.0, %v5539
      %5541 = vdwg.mxu0
      %5542 = vmatpush.msra.mxu0 0.0
      %5543 = vmatpush.msra.mxu0 0.0
      %5544 = vmatpush.msra.mxu0 0.0
      %5545 = vmatpush.msra.mxu0 0.0
      %5546 = vmatpush.msra.mxu0 0.0
      %5547 = vmatpush.msra.mxu0 0.0
      %5548 = vmatpush.msra.mxu0 0.0
      %5549 = vmatpush.msra.mxu0 0.0
      %5550 = vmatpush.msra.mxu0 0.0
      %5551 = vmatpush.msra.mxu0 0.0
      %5552 = vmatpush.msra.mxu0 0.0
      %5553 = vmatpush.msra.mxu0 0.0
      %5554 = vmatpush.msra.mxu0 0.0
      %5555 = vmatpush.msra.mxu0 0.0
      %5556 = vmatpush.msra.mxu0 0.0
      %5557 = vmatpush.msra.mxu0 %v5446
      %5558 = vmatmul.f32.gmra.mxu0 %v5436
      %v5559 = vpop.f32.mrf.mxu0
      %v5560 = vadd.f32 0.0, %v5559
      %5561 = vdwg.mxu0
      %5562 = vmatpush.msra.mxu0 0.0
      %5563 = vmatpush.msra.mxu0 0.0
      %5564 = vmatpush.msra.mxu0 0.0
      %5565 = vmatpush.msra.mxu0 0.0
      %5566 = vmatpush.msra.mxu0 0.0
      %5567 = vmatpush.msra.mxu0 0.0
      %5568 = vmatpush.msra.mxu0 0.0
      %5569 = vmatpush.msra.mxu0 0.0
      %5570 = vmatpush.msra.mxu0 0.0
      %5571 = vmatpush.msra.mxu0 0.0
      %5572 = vmatpush.msra.mxu0 0.0
      %5573 = vmatpush.msra.mxu0 0.0
      %5574 = vmatpush.msra.mxu0 0.0
      %5575 = vmatpush.msra.mxu0 0.0
      %5576 = vmatpush.msra.mxu0 0.0
      %5577 = vmatpush.msra.mxu0 %v5448
      %5578 = vmatmul.f32.gmra.mxu0 %v5436
      %v5579 = vpop.f32.mrf.mxu0
      %v5580 = vadd.f32 0.0, %v5579
      %5581 = vdwg.mxu0
      %5582 = vmatpush.msra.mxu0 0.0
      %5583 = vmatpush.msra.mxu0 0.0
      %5584 = vmatpush.msra.mxu0 0.0
      %5585 = vmatpush.msra.mxu0 0.0
      %5586 = vmatpush.msra.mxu0 0.0
      %5587 = vmatpush.msra.mxu0 0.0
      %5588 = vmatpush.msra.mxu0 0.0
      %5589 = vmatpush.msra.mxu0 0.0
      %5590 = vmatpush.msra.mxu0 0.0
      %5591 = vmatpush.msra.mxu0 0.0
      %5592 = vmatpush.msra.mxu0 0.0
      %5593 = vmatpush.msra.mxu0 0.0
      %5594 = vmatpush.msra.mxu0 0.0
      %5595 = vmatpush.msra.mxu0 0.0
      %5596 = vmatpush.msra.mxu0 0.0
      %5597 = vmatpush.msra.mxu0 %v5450
      %5598 = vmatmul.f32.gmra.mxu0 %v5436
      %v5599 = vpop.f32.mrf.mxu0
      %v5600 = vadd.f32 0.0, %v5599
      %5601 = vdwg.mxu0
      %5602 = vmatpush.msra.mxu0 0.0
      %5603 = vmatpush.msra.mxu0 0.0
      %5604 = vmatpush.msra.mxu0 0.0
      %5605 = vmatpush.msra.mxu0 0.0
      %5606 = vmatpush.msra.mxu0 0.0
      %5607 = vmatpush.msra.mxu0 0.0
      %5608 = vmatpush.msra.mxu0 0.0
      %5609 = vmatpush.msra.mxu0 0.0
      %5610 = vmatpush.msra.mxu0 0.0
      %5611 = vmatpush.msra.mxu0 0.0
      %5612 = vmatpush.msra.mxu0 0.0
      %5613 = vmatpush.msra.mxu0 0.0
      %5614 = vmatpush.msra.mxu0 0.0
      %5615 = vmatpush.msra.mxu0 0.0
      %5616 = vmatpush.msra.mxu0 0.0
      %5617 = vmatpush.msra.mxu0 %v5452
      %5618 = vmatmul.f32.gmra.mxu0 %v5436
      %v5619 = vpop.f32.mrf.mxu0
      %v5620 = vadd.f32 0.0, %v5619
      %5621 = vdwg.mxu0
      %5622 = vmatpush.msra.mxu0 0.0
      %5623 = vmatpush.msra.mxu0 0.0
      %5624 = vmatpush.msra.mxu0 0.0
      %5625 = vmatpush.msra.mxu0 0.0
      %5626 = vmatpush.msra.mxu0 0.0
      %5627 = vmatpush.msra.mxu0 0.0
      %5628 = vmatpush.msra.mxu0 0.0
      %5629 = vmatpush.msra.mxu0 0.0
      %5630 = vmatpush.msra.mxu0 0.0
      %5631 = vmatpush.msra.mxu0 0.0
      %5632 = vmatpush.msra.mxu0 0.0
      %5633 = vmatpush.msra.mxu0 0.0
      %5634 = vmatpush.msra.mxu0 0.0
      %5635 = vmatpush.msra.mxu0 0.0
      %5636 = vmatpush.msra.mxu0 0.0
      %5637 = vmatpush.msra.mxu0 %v5454
      %5638 = vmatmul.f32.gmra.mxu0 %v5436
      %v5639 = vpop.f32.mrf.mxu0
      %v5640 = vadd.f32 0.0, %v5639
      %5641 = vdwg.mxu0
      %5642 = vmatpush.msra.mxu0 0.0
      %5643 = vmatpush.msra.mxu0 0.0
      %5644 = vmatpush.msra.mxu0 0.0
      %5645 = vmatpush.msra.mxu0 0.0
      %5646 = vmatpush.msra.mxu0 0.0
      %5647 = vmatpush.msra.mxu0 0.0
      %5648 = vmatpush.msra.mxu0 0.0
      %5649 = vmatpush.msra.mxu0 0.0
      %5650 = vmatpush.msra.mxu0 0.0
      %5651 = vmatpush.msra.mxu0 0.0
      %5652 = vmatpush.msra.mxu0 0.0
      %5653 = vmatpush.msra.mxu0 0.0
      %5654 = vmatpush.msra.mxu0 0.0
      %5655 = vmatpush.msra.mxu0 0.0
      %5656 = vmatpush.msra.mxu0 0.0
      %5657 = vmatpush.msra.mxu0 %v5456
      %5658 = vmatmul.f32.gmra.mxu0 %v5436
      %v5659 = vpop.f32.mrf.mxu0
      %v5660 = vadd.f32 0.0, %v5659
      %5661 = vdwg.mxu0
      %5662 = vmatpush.msra.mxu0 0.0
      %5663 = vmatpush.msra.mxu0 0.0
      %5664 = vmatpush.msra.mxu0 0.0
      %5665 = vmatpush.msra.mxu0 0.0
      %5666 = vmatpush.msra.mxu0 0.0
      %5667 = vmatpush.msra.mxu0 0.0
      %5668 = vmatpush.msra.mxu0 0.0
      %5669 = vmatpush.msra.mxu0 0.0
      %5670 = vmatpush.msra.mxu0 0.0
      %5671 = vmatpush.msra.mxu0 0.0
      %5672 = vmatpush.msra.mxu0 0.0
      %5673 = vmatpush.msra.mxu0 0.0
      %5674 = vmatpush.msra.mxu0 0.0
      %5675 = vmatpush.msra.mxu0 0.0
      %5676 = vmatpush.msra.mxu0 0.0
      %5677 = vmatpush.msra.mxu0 %v5458
      %5678 = vmatmul.f32.gmra.mxu0 %v5436
      %v5679 = vpop.f32.mrf.mxu0
      %v5680 = vadd.f32 0.0, %v5679
      %5681 = vdwg.mxu0
      %5682 = vmatpush.msra.mxu0 0.0
      %5683 = vmatpush.msra.mxu0 0.0
      %5684 = vmatpush.msra.mxu0 0.0
      %5685 = vmatpush.msra.mxu0 0.0
      %5686 = vmatpush.msra.mxu0 0.0
      %5687 = vmatpush.msra.mxu0 0.0
      %5688 = vmatpush.msra.mxu0 0.0
      %5689 = vmatpush.msra.mxu0 0.0
      %5690 = vmatpush.msra.mxu0 0.0
      %5691 = vmatpush.msra.mxu0 0.0
      %5692 = vmatpush.msra.mxu0 0.0
      %5693 = vmatpush.msra.mxu0 0.0
      %5694 = vmatpush.msra.mxu0 0.0
      %5695 = vmatpush.msra.mxu0 0.0
      %5696 = vmatpush.msra.mxu0 0.0
      %5697 = vmatpush.msra.mxu0 %v5460
      %5698 = vmatmul.f32.gmra.mxu0 %v5436
      %v5699 = vpop.f32.mrf.mxu0
      %v5700 = vadd.f32 0.0, %v5699
      %5701 = vdwg.mxu0
      %v5702 = vadd.f32 %v5383, %v5480
      %v5703 = vadd.f32 %v5384, %v5500
      %v5704 = vadd.f32 %v5385, %v5520
      %v5705 = vadd.f32 %v5386, %v5540
      %v5706 = vadd.f32 %v5387, %v5560
      %v5707 = vadd.f32 %v5388, %v5580
      %v5708 = vadd.f32 %v5389, %v5600
      %v5709 = vadd.f32 %v5390, %v5620
      %v5710 = vadd.f32 %v5391, %v5640
      %v5711 = vadd.f32 %v5392, %v5660
      %v5712 = vadd.f32 %v5393, %v5680
      %v5713 = vadd.f32 %v5394, %v5700
      %v5714 = vld [vmem:[#allocation2 + $0x4] sm:$0xff]
      %v5715 = vld [vmem:[#allocation2 + $0xc] sm:$0xff]
      %v5716 = vld [vmem:[#allocation2 + $0x14] sm:$0xff]
      %v5717 = vld [vmem:[#allocation2 + $0x1c] sm:$0xff]
      %v5718 = vld [vmem:[#allocation2 + $0x24] sm:$0xff]
      %v5719 = vld [vmem:[#allocation2 + $0x2c] sm:$0xff]
      %v5720 = vld [vmem:[#allocation2 + $0x34] sm:$0xff]
      %v5721 = vld [vmem:[#allocation2 + $0x3c] sm:$0xf]
      %5722 = vrot.lane.b32.xlu0 %v689, 72
      %v5723 = vpop.permute.xlu0 %5722
      %5732 = vst [vmem:[#allocation1] ss:$2 sm:$0xff] %v5714
      %s5733 = scalar_lea.vmem [#allocation1], 16
      %5734 = vst [vmem:[%s5733] ss:$2 sm:$0xff] %v5715
      %s5735 = scalar_lea.vmem [#allocation1], 32
      %5736 = vst [vmem:[%s5735] ss:$2 sm:$0xff] %v5716
      %s5737 = scalar_lea.vmem [#allocation1], 48
      %5738 = vst [vmem:[%s5737] ss:$2 sm:$0xff] %v5717
      %v5739 = vld.sshfl [vmem:[#allocation1] sm:$0xff pattern:$0x75316420]
      %v5740 = vld.sshfl [vmem:[#allocation1 + $0x8] sm:$0xff pattern:$0x75316420]
      %v5741 = vld.sshfl [vmem:[#allocation1 + $0x10] sm:$0xff pattern:$0x75316420]
      %v5742 = vld.sshfl [vmem:[#allocation1 + $0x18] sm:$0xff pattern:$0x75316420]
      %v5743 = vld.sshfl [vmem:[#allocation1 + $0x20] sm:$0xff pattern:$0x75316420]
      %v5744 = vld.sshfl [vmem:[#allocation1 + $0x28] sm:$0xff pattern:$0x75316420]
      %v5745 = vld.sshfl [vmem:[#allocation1 + $0x30] sm:$0xff pattern:$0x75316420]
      %v5746 = vld.sshfl [vmem:[#allocation1 + $0x38] sm:$0xff pattern:$0x75316420]
      %5747 = vst [vmem:[#allocation1] ss:$2 sm:$0xff] %v5718
      %5748 = vst [vmem:[%s5733] ss:$2 sm:$0xff] %v5719
      %5749 = vst [vmem:[%s5735] ss:$2 sm:$0xff] %v5720
      %5750 = vst [vmem:[%s5737] ss:$2 sm:$0xff] %v5721
      %v5751 = vld.sshfl [vmem:[#allocation1] sm:$0xff pattern:$0x75316420]
      %v5752 = vld.sshfl [vmem:[#allocation1 + $0x8] sm:$0xff pattern:$0x75316420]
      %v5753 = vld.sshfl [vmem:[#allocation1 + $0x10] sm:$0xff pattern:$0x75316420]
      %v5754 = vld.sshfl [vmem:[#allocation1 + $0x18] sm:$0xff pattern:$0x75316420]
      %v5755 = vld.sshfl [vmem:[#allocation1 + $0x20] sm:$0xff pattern:$0x75316420]
      %v5756 = vld.sshfl [vmem:[#allocation1 + $0x28] sm:$0xff pattern:$0x75316420]
      %v5757 = vld.sshfl [vmem:[#allocation1 + $0x30] sm:$0xff pattern:$0x75316420]
      %5758 = vrot.lane.b32.xlu0 %v5739, 127
      %v5759 = vpop.permute.xlu0 %5758
      %5760 = vrot.lane.b32.xlu0 %v5740, 127
      %v5761 = vpop.permute.xlu0 %5760
      %5762 = vrot.lane.b32.xlu0 %v5741, 127
      %v5763 = vpop.permute.xlu0 %5762
      %5764 = vrot.lane.b32.xlu0 %v5742, 127
      %v5765 = vpop.permute.xlu0 %5764
      %5766 = vrot.lane.b32.xlu0 %v5743, 127
      %v5767 = vpop.permute.xlu0 %5766
      %5768 = vrot.lane.b32.xlu0 %v5744, 127
      %v5769 = vpop.permute.xlu0 %5768
      %5770 = vrot.lane.b32.xlu0 %v5745, 127
      %v5771 = vpop.permute.xlu0 %5770
      %5772 = vrot.lane.b32.xlu0 %v5746, 127
      %v5773 = vpop.permute.xlu0 %5772
      %5774 = vrot.lane.b32.xlu0 %v5751, 127
      %v5775 = vpop.permute.xlu0 %5774
      %5776 = vrot.lane.b32.xlu0 %v5752, 127
      %v5777 = vpop.permute.xlu0 %5776
      %5778 = vrot.lane.b32.xlu0 %v5753, 127
      %v5779 = vpop.permute.xlu0 %5778
      %5780 = vrot.lane.b32.xlu0 %v5754, 127
      %v5781 = vpop.permute.xlu0 %5780
      %5782 = vrot.lane.b32.xlu0 %v5755, 127
      %v5783 = vpop.permute.xlu0 %5782
      %5784 = vrot.lane.b32.xlu0 %v5756, 127
      %v5785 = vpop.permute.xlu0 %5784
      %5786 = vrot.lane.b32.xlu0 %v5757, 127
      %v5787 = vpop.permute.xlu0 %5786
      %vm5788 = vcmask 1039360
      %v5789 = vsel %vm5788, %v5759, %v5761
      %v5790 = vsel %vm5788, %v5761, %v5763
      %v5791 = vsel %vm5788, %v5763, %v5765
      %v5792 = vsel %vm5788, %v5765, %v5767
      %v5793 = vsel %vm5788, %v5769, %v5771
      %v5794 = vsel %vm5788, %v5771, %v5773
      %v5795 = vsel %vm5788, %v5773, %v5775
      %v5796 = vsel %vm5788, %v5775, %v5777
      %v5797 = vsel %vm5788, %v5779, %v5781
      %v5798 = vsel %vm5788, %v5781, %v5783
      %v5799 = vsel %vm5788, %v5783, %v5785
      %v5800 = vsel %vm5788, %v5785, %v5787
      %v5801 = vsel %vm778, %v5723, 0
      %v5803 = vsel %vm640, %v5789, 0
      %v5805 = vsel %vm640, %v5790, 0
      %v5807 = vsel %vm640, %v5791, 0
      %v5809 = vsel %vm640, %v5792, 0
      %v5811 = vsel %vm640, %v5793, 0
      %v5813 = vsel %vm640, %v5794, 0
      %v5815 = vsel %vm640, %v5795, 0
      %v5817 = vsel %vm640, %v5796, 0
      %v5819 = vsel %vm640, %v5797, 0
      %v5821 = vsel %vm640, %v5798, 0
      %v5823 = vsel %vm640, %v5799, 0
      %v5825 = vsel %vm640, %v5800, 0
      %5827 = vmatpush.msra.mxu0 0.0
      %5828 = vmatpush.msra.mxu0 0.0
      %5829 = vmatpush.msra.mxu0 0.0
      %5830 = vmatpush.msra.mxu0 0.0
      %5831 = vmatpush.msra.mxu0 0.0
      %5832 = vmatpush.msra.mxu0 0.0
      %5833 = vmatpush.msra.mxu0 0.0
      %5834 = vmatpush.msra.mxu0 0.0
      %5835 = vmatpush.msra.mxu0 0.0
      %5836 = vmatpush.msra.mxu0 0.0
      %5837 = vmatpush.msra.mxu0 0.0
      %5838 = vmatpush.msra.mxu0 0.0
      %5839 = vmatpush.msra.mxu0 0.0
      %5840 = vmatpush.msra.mxu0 0.0
      %5841 = vmatpush.msra.mxu0 0.0
      %5842 = vmatpush.msra.mxu0 %v5803
      %5843 = vmatmul.f32.gmra.mxu0 %v5801
      %v5844 = vpop.f32.mrf.mxu0
      %v5845 = vadd.f32 0.0, %v5844
      %5846 = vdwg.mxu0
      %5847 = vmatpush.msra.mxu0 0.0
      %5848 = vmatpush.msra.mxu0 0.0
      %5849 = vmatpush.msra.mxu0 0.0
      %5850 = vmatpush.msra.mxu0 0.0
      %5851 = vmatpush.msra.mxu0 0.0
      %5852 = vmatpush.msra.mxu0 0.0
      %5853 = vmatpush.msra.mxu0 0.0
      %5854 = vmatpush.msra.mxu0 0.0
      %5855 = vmatpush.msra.mxu0 0.0
      %5856 = vmatpush.msra.mxu0 0.0
      %5857 = vmatpush.msra.mxu0 0.0
      %5858 = vmatpush.msra.mxu0 0.0
      %5859 = vmatpush.msra.mxu0 0.0
      %5860 = vmatpush.msra.mxu0 0.0
      %5861 = vmatpush.msra.mxu0 0.0
      %5862 = vmatpush.msra.mxu0 %v5805
      %5863 = vmatmul.f32.gmra.mxu0 %v5801
      %v5864 = vpop.f32.mrf.mxu0
      %v5865 = vadd.f32 0.0, %v5864
      %5866 = vdwg.mxu0
      %5867 = vmatpush.msra.mxu0 0.0
      %5868 = vmatpush.msra.mxu0 0.0
      %5869 = vmatpush.msra.mxu0 0.0
      %5870 = vmatpush.msra.mxu0 0.0
      %5871 = vmatpush.msra.mxu0 0.0
      %5872 = vmatpush.msra.mxu0 0.0
      %5873 = vmatpush.msra.mxu0 0.0
      %5874 = vmatpush.msra.mxu0 0.0
      %5875 = vmatpush.msra.mxu0 0.0
      %5876 = vmatpush.msra.mxu0 0.0
      %5877 = vmatpush.msra.mxu0 0.0
      %5878 = vmatpush.msra.mxu0 0.0
      %5879 = vmatpush.msra.mxu0 0.0
      %5880 = vmatpush.msra.mxu0 0.0
      %5881 = vmatpush.msra.mxu0 0.0
      %5882 = vmatpush.msra.mxu0 %v5807
      %5883 = vmatmul.f32.gmra.mxu0 %v5801
      %v5884 = vpop.f32.mrf.mxu0
      %v5885 = vadd.f32 0.0, %v5884
      %5886 = vdwg.mxu0
      %5887 = vmatpush.msra.mxu0 0.0
      %5888 = vmatpush.msra.mxu0 0.0
      %5889 = vmatpush.msra.mxu0 0.0
      %5890 = vmatpush.msra.mxu0 0.0
      %5891 = vmatpush.msra.mxu0 0.0
      %5892 = vmatpush.msra.mxu0 0.0
      %5893 = vmatpush.msra.mxu0 0.0
      %5894 = vmatpush.msra.mxu0 0.0
      %5895 = vmatpush.msra.mxu0 0.0
      %5896 = vmatpush.msra.mxu0 0.0
      %5897 = vmatpush.msra.mxu0 0.0
      %5898 = vmatpush.msra.mxu0 0.0
      %5899 = vmatpush.msra.mxu0 0.0
      %5900 = vmatpush.msra.mxu0 0.0
      %5901 = vmatpush.msra.mxu0 0.0
      %5902 = vmatpush.msra.mxu0 %v5809
      %5903 = vmatmul.f32.gmra.mxu0 %v5801
      %v5904 = vpop.f32.mrf.mxu0
      %v5905 = vadd.f32 0.0, %v5904
      %5906 = vdwg.mxu0
      %5907 = vmatpush.msra.mxu0 0.0
      %5908 = vmatpush.msra.mxu0 0.0
      %5909 = vmatpush.msra.mxu0 0.0
      %5910 = vmatpush.msra.mxu0 0.0
      %5911 = vmatpush.msra.mxu0 0.0
      %5912 = vmatpush.msra.mxu0 0.0
      %5913 = vmatpush.msra.mxu0 0.0
      %5914 = vmatpush.msra.mxu0 0.0
      %5915 = vmatpush.msra.mxu0 0.0
      %5916 = vmatpush.msra.mxu0 0.0
      %5917 = vmatpush.msra.mxu0 0.0
      %5918 = vmatpush.msra.mxu0 0.0
      %5919 = vmatpush.msra.mxu0 0.0
      %5920 = vmatpush.msra.mxu0 0.0
      %5921 = vmatpush.msra.mxu0 0.0
      %5922 = vmatpush.msra.mxu0 %v5811
      %5923 = vmatmul.f32.gmra.mxu0 %v5801
      %v5924 = vpop.f32.mrf.mxu0
      %v5925 = vadd.f32 0.0, %v5924
      %5926 = vdwg.mxu0
      %5927 = vmatpush.msra.mxu0 0.0
      %5928 = vmatpush.msra.mxu0 0.0
      %5929 = vmatpush.msra.mxu0 0.0
      %5930 = vmatpush.msra.mxu0 0.0
      %5931 = vmatpush.msra.mxu0 0.0
      %5932 = vmatpush.msra.mxu0 0.0
      %5933 = vmatpush.msra.mxu0 0.0
      %5934 = vmatpush.msra.mxu0 0.0
      %5935 = vmatpush.msra.mxu0 0.0
      %5936 = vmatpush.msra.mxu0 0.0
      %5937 = vmatpush.msra.mxu0 0.0
      %5938 = vmatpush.msra.mxu0 0.0
      %5939 = vmatpush.msra.mxu0 0.0
      %5940 = vmatpush.msra.mxu0 0.0
      %5941 = vmatpush.msra.mxu0 0.0
      %5942 = vmatpush.msra.mxu0 %v5813
      %5943 = vmatmul.f32.gmra.mxu0 %v5801
      %v5944 = vpop.f32.mrf.mxu0
      %v5945 = vadd.f32 0.0, %v5944
      %5946 = vdwg.mxu0
      %5947 = vmatpush.msra.mxu0 0.0
      %5948 = vmatpush.msra.mxu0 0.0
      %5949 = vmatpush.msra.mxu0 0.0
      %5950 = vmatpush.msra.mxu0 0.0
      %5951 = vmatpush.msra.mxu0 0.0
      %5952 = vmatpush.msra.mxu0 0.0
      %5953 = vmatpush.msra.mxu0 0.0
      %5954 = vmatpush.msra.mxu0 0.0
      %5955 = vmatpush.msra.mxu0 0.0
      %5956 = vmatpush.msra.mxu0 0.0
      %5957 = vmatpush.msra.mxu0 0.0
      %5958 = vmatpush.msra.mxu0 0.0
      %5959 = vmatpush.msra.mxu0 0.0
      %5960 = vmatpush.msra.mxu0 0.0
      %5961 = vmatpush.msra.mxu0 0.0
      %5962 = vmatpush.msra.mxu0 %v5815
      %5963 = vmatmul.f32.gmra.mxu0 %v5801
      %v5964 = vpop.f32.mrf.mxu0
      %v5965 = vadd.f32 0.0, %v5964
      %5966 = vdwg.mxu0
      %5967 = vmatpush.msra.mxu0 0.0
      %5968 = vmatpush.msra.mxu0 0.0
      %5969 = vmatpush.msra.mxu0 0.0
      %5970 = vmatpush.msra.mxu0 0.0
      %5971 = vmatpush.msra.mxu0 0.0
      %5972 = vmatpush.msra.mxu0 0.0
      %5973 = vmatpush.msra.mxu0 0.0
      %5974 = vmatpush.msra.mxu0 0.0
      %5975 = vmatpush.msra.mxu0 0.0
      %5976 = vmatpush.msra.mxu0 0.0
      %5977 = vmatpush.msra.mxu0 0.0
      %5978 = vmatpush.msra.mxu0 0.0
      %5979 = vmatpush.msra.mxu0 0.0
      %5980 = vmatpush.msra.mxu0 0.0
      %5981 = vmatpush.msra.mxu0 0.0
      %5982 = vmatpush.msra.mxu0 %v5817
      %5983 = vmatmul.f32.gmra.mxu0 %v5801
      %v5984 = vpop.f32.mrf.mxu0
      %v5985 = vadd.f32 0.0, %v5984
      %5986 = vdwg.mxu0
      %5987 = vmatpush.msra.mxu0 0.0
      %5988 = vmatpush.msra.mxu0 0.0
      %5989 = vmatpush.msra.mxu0 0.0
      %5990 = vmatpush.msra.mxu0 0.0
      %5991 = vmatpush.msra.mxu0 0.0
      %5992 = vmatpush.msra.mxu0 0.0
      %5993 = vmatpush.msra.mxu0 0.0
      %5994 = vmatpush.msra.mxu0 0.0
      %5995 = vmatpush.msra.mxu0 0.0
      %5996 = vmatpush.msra.mxu0 0.0
      %5997 = vmatpush.msra.mxu0 0.0
      %5998 = vmatpush.msra.mxu0 0.0
      %5999 = vmatpush.msra.mxu0 0.0
      %6000 = vmatpush.msra.mxu0 0.0
      %6001 = vmatpush.msra.mxu0 0.0
      %6002 = vmatpush.msra.mxu0 %v5819
      %6003 = vmatmul.f32.gmra.mxu0 %v5801
      %v6004 = vpop.f32.mrf.mxu0
      %v6005 = vadd.f32 0.0, %v6004
      %6006 = vdwg.mxu0
      %6007 = vmatpush.msra.mxu0 0.0
      %6008 = vmatpush.msra.mxu0 0.0
      %6009 = vmatpush.msra.mxu0 0.0
      %6010 = vmatpush.msra.mxu0 0.0
      %6011 = vmatpush.msra.mxu0 0.0
      %6012 = vmatpush.msra.mxu0 0.0
      %6013 = vmatpush.msra.mxu0 0.0
      %6014 = vmatpush.msra.mxu0 0.0
      %6015 = vmatpush.msra.mxu0 0.0
      %6016 = vmatpush.msra.mxu0 0.0
      %6017 = vmatpush.msra.mxu0 0.0
      %6018 = vmatpush.msra.mxu0 0.0
      %6019 = vmatpush.msra.mxu0 0.0
      %6020 = vmatpush.msra.mxu0 0.0
      %6021 = vmatpush.msra.mxu0 0.0
      %6022 = vmatpush.msra.mxu0 %v5821
      %6023 = vmatmul.f32.gmra.mxu0 %v5801
      %v6024 = vpop.f32.mrf.mxu0
      %v6025 = vadd.f32 0.0, %v6024
      %6026 = vdwg.mxu0
      %6027 = vmatpush.msra.mxu0 0.0
      %6028 = vmatpush.msra.mxu0 0.0
      %6029 = vmatpush.msra.mxu0 0.0
      %6030 = vmatpush.msra.mxu0 0.0
      %6031 = vmatpush.msra.mxu0 0.0
      %6032 = vmatpush.msra.mxu0 0.0
      %6033 = vmatpush.msra.mxu0 0.0
      %6034 = vmatpush.msra.mxu0 0.0
      %6035 = vmatpush.msra.mxu0 0.0
      %6036 = vmatpush.msra.mxu0 0.0
      %6037 = vmatpush.msra.mxu0 0.0
      %6038 = vmatpush.msra.mxu0 0.0
      %6039 = vmatpush.msra.mxu0 0.0
      %6040 = vmatpush.msra.mxu0 0.0
      %6041 = vmatpush.msra.mxu0 0.0
      %6042 = vmatpush.msra.mxu0 %v5823
      %6043 = vmatmul.f32.gmra.mxu0 %v5801
      %v6044 = vpop.f32.mrf.mxu0
      %v6045 = vadd.f32 0.0, %v6044
      %6046 = vdwg.mxu0
      %6047 = vmatpush.msra.mxu0 0.0
      %6048 = vmatpush.msra.mxu0 0.0
      %6049 = vmatpush.msra.mxu0 0.0
      %6050 = vmatpush.msra.mxu0 0.0
      %6051 = vmatpush.msra.mxu0 0.0
      %6052 = vmatpush.msra.mxu0 0.0
      %6053 = vmatpush.msra.mxu0 0.0
      %6054 = vmatpush.msra.mxu0 0.0
      %6055 = vmatpush.msra.mxu0 0.0
      %6056 = vmatpush.msra.mxu0 0.0
      %6057 = vmatpush.msra.mxu0 0.0
      %6058 = vmatpush.msra.mxu0 0.0
      %6059 = vmatpush.msra.mxu0 0.0
      %6060 = vmatpush.msra.mxu0 0.0
      %6061 = vmatpush.msra.mxu0 0.0
      %6062 = vmatpush.msra.mxu0 %v5825
      %6063 = vmatmul.f32.gmra.mxu0 %v5801
      %v6064 = vpop.f32.mrf.mxu0
      %v6065 = vadd.f32 0.0, %v6064
      %6066 = vdwg.mxu0
      %v6067 = vadd.f32 %v5702, %v5845
      %v6068 = vadd.f32 %v5703, %v5865
      %v6069 = vadd.f32 %v5704, %v5885
      %v6070 = vadd.f32 %v5705, %v5905
      %v6071 = vadd.f32 %v5706, %v5925
      %v6072 = vadd.f32 %v5707, %v5945
      %v6073 = vadd.f32 %v5708, %v5965
      %v6074 = vadd.f32 %v5709, %v5985
      %v6075 = vadd.f32 %v5710, %v6005
      %v6076 = vadd.f32 %v5711, %v6025
      %v6077 = vadd.f32 %v5712, %v6045
      %v6078 = vadd.f32 %v5713, %v6065
      %v6079 = vld [vmem:[#allocation2 + $0x4] sm:$0xff]
      %v6080 = vld [vmem:[#allocation2 + $0xc] sm:$0xff]
      %v6081 = vld [vmem:[#allocation2 + $0x14] sm:$0xff]
      %v6082 = vld [vmem:[#allocation2 + $0x1c] sm:$0xff]
      %v6083 = vld [vmem:[#allocation2 + $0x24] sm:$0xff]
      %v6084 = vld [vmem:[#allocation2 + $0x2c] sm:$0xff]
      %v6085 = vld [vmem:[#allocation2 + $0x34] sm:$0xff]
      %v6086 = vld [vmem:[#allocation2 + $0x3c] sm:$0xf]
      %6087 = vrot.lane.b32.xlu0 %v689, 68
      %v6088 = vpop.permute.xlu0 %6087
      %6097 = vst [vmem:[#allocation1] ss:$2 sm:$0xff] %v6079
      %s6098 = scalar_lea.vmem [#allocation1], 16
      %6099 = vst [vmem:[%s6098] ss:$2 sm:$0xff] %v6080
      %s6100 = scalar_lea.vmem [#allocation1], 32
      %6101 = vst [vmem:[%s6100] ss:$2 sm:$0xff] %v6081
      %s6102 = scalar_lea.vmem [#allocation1], 48
      %6103 = vst [vmem:[%s6102] ss:$2 sm:$0xff] %v6082
      %v6104 = vld.sshfl [vmem:[#allocation1] sm:$0xff pattern:$0x75316420]
      %v6105 = vld.sshfl [vmem:[#allocation1 + $0x8] sm:$0xff pattern:$0x75316420]
      %v6106 = vld.sshfl [vmem:[#allocation1 + $0x10] sm:$0xff pattern:$0x75316420]
      %v6107 = vld.sshfl [vmem:[#allocation1 + $0x18] sm:$0xff pattern:$0x75316420]
      %v6108 = vld.sshfl [vmem:[#allocation1 + $0x20] sm:$0xff pattern:$0x75316420]
      %v6109 = vld.sshfl [vmem:[#allocation1 + $0x28] sm:$0xff pattern:$0x75316420]
      %v6110 = vld.sshfl [vmem:[#allocation1 + $0x30] sm:$0xff pattern:$0x75316420]
      %v6111 = vld.sshfl [vmem:[#allocation1 + $0x38] sm:$0xff pattern:$0x75316420]
      %6112 = vst [vmem:[#allocation1] ss:$2 sm:$0xff] %v6083
      %6113 = vst [vmem:[%s6098] ss:$2 sm:$0xff] %v6084
      %6114 = vst [vmem:[%s6100] ss:$2 sm:$0xff] %v6085
      %6115 = vst [vmem:[%s6102] ss:$2 sm:$0xff] %v6086
      %v6116 = vld.sshfl [vmem:[#allocation1] sm:$0xff pattern:$0x75316420]
      %v6117 = vld.sshfl [vmem:[#allocation1 + $0x8] sm:$0xff pattern:$0x75316420]
      %v6118 = vld.sshfl [vmem:[#allocation1 + $0x10] sm:$0xff pattern:$0x75316420]
      %v6119 = vld.sshfl [vmem:[#allocation1 + $0x18] sm:$0xff pattern:$0x75316420]
      %v6120 = vld.sshfl [vmem:[#allocation1 + $0x20] sm:$0xff pattern:$0x75316420]
      %v6121 = vld.sshfl [vmem:[#allocation1 + $0x28] sm:$0xff pattern:$0x75316420]
      %v6122 = vld.sshfl [vmem:[#allocation1 + $0x30] sm:$0xff pattern:$0x75316420]
      %6123 = vrot.lane.b32.xlu0 %v6104, 119
      %v6124 = vpop.permute.xlu0 %6123
      %6125 = vrot.lane.b32.xlu0 %v6105, 119
      %v6126 = vpop.permute.xlu0 %6125
      %6127 = vrot.lane.b32.xlu0 %v6106, 119
      %v6128 = vpop.permute.xlu0 %6127
      %6129 = vrot.lane.b32.xlu0 %v6107, 119
      %v6130 = vpop.permute.xlu0 %6129
      %6131 = vrot.lane.b32.xlu0 %v6108, 119
      %v6132 = vpop.permute.xlu0 %6131
      %6133 = vrot.lane.b32.xlu0 %v6109, 119
      %v6134 = vpop.permute.xlu0 %6133
      %6135 = vrot.lane.b32.xlu0 %v6110, 119
      %v6136 = vpop.permute.xlu0 %6135
      %6137 = vrot.lane.b32.xlu0 %v6111, 119
      %v6138 = vpop.permute.xlu0 %6137
      %6139 = vrot.lane.b32.xlu0 %v6116, 119
      %v6140 = vpop.permute.xlu0 %6139
      %6141 = vrot.lane.b32.xlu0 %v6117, 119
      %v6142 = vpop.permute.xlu0 %6141
      %6143 = vrot.lane.b32.xlu0 %v6118, 119
      %v6144 = vpop.permute.xlu0 %6143
      %6145 = vrot.lane.b32.xlu0 %v6119, 119
      %v6146 = vpop.permute.xlu0 %6145
      %6147 = vrot.lane.b32.xlu0 %v6120, 119
      %v6148 = vpop.permute.xlu0 %6147
      %6149 = vrot.lane.b32.xlu0 %v6121, 119
      %v6150 = vpop.permute.xlu0 %6149
      %6151 = vrot.lane.b32.xlu0 %v6122, 119
      %v6152 = vpop.permute.xlu0 %6151
      %vm6153 = vcmask 973824
      %v6154 = vsel %vm6153, %v6124, %v6126
      %v6155 = vsel %vm6153, %v6126, %v6128
      %v6156 = vsel %vm6153, %v6128, %v6130
      %v6157 = vsel %vm6153, %v6130, %v6132
      %v6158 = vsel %vm6153, %v6134, %v6136
      %v6159 = vsel %vm6153, %v6136, %v6138
      %v6160 = vsel %vm6153, %v6138, %v6140
      %v6161 = vsel %vm6153, %v6140, %v6142
      %v6162 = vsel %vm6153, %v6144, %v6146
      %v6163 = vsel %vm6153, %v6146, %v6148
      %v6164 = vsel %vm6153, %v6148, %v6150
      %v6165 = vsel %vm6153, %v6150, %v6152
      %v6166 = vsel %vm778, %v6088, 0
      %v6168 = vsel %vm640, %v6154, 0
      %v6170 = vsel %vm640, %v6155, 0
      %v6172 = vsel %vm640, %v6156, 0
      %v6174 = vsel %vm640, %v6157, 0
      %v6176 = vsel %vm640, %v6158, 0
      %v6178 = vsel %vm640, %v6159, 0
      %v6180 = vsel %vm640, %v6160, 0
      %v6182 = vsel %vm640, %v6161, 0
      %v6184 = vsel %vm640, %v6162, 0
      %v6186 = vsel %vm640, %v6163, 0
      %v6188 = vsel %vm640, %v6164, 0
      %v6190 = vsel %vm640, %v6165, 0
      %6192 = vmatpush.msra.mxu0 0.0
      %6193 = vmatpush.msra.mxu0 0.0
      %6194 = vmatpush.msra.mxu0 0.0
      %6195 = vmatpush.msra.mxu0 0.0
      %6196 = vmatpush.msra.mxu0 0.0
      %6197 = vmatpush.msra.mxu0 0.0
      %6198 = vmatpush.msra.mxu0 0.0
      %6199 = vmatpush.msra.mxu0 0.0
      %6200 = vmatpush.msra.mxu0 0.0
      %6201 = vmatpush.msra.mxu0 0.0
      %6202 = vmatpush.msra.mxu0 0.0
      %6203 = vmatpush.msra.mxu0 0.0
      %6204 = vmatpush.msra.mxu0 0.0
      %6205 = vmatpush.msra.mxu0 0.0
      %6206 = vmatpush.msra.mxu0 0.0
      %6207 = vmatpush.msra.mxu0 %v6168
      %6208 = vmatmul.f32.gmra.mxu0 %v6166
      %v6209 = vpop.f32.mrf.mxu0
      %v6210 = vadd.f32 0.0, %v6209
      %6211 = vdwg.mxu0
      %6212 = vmatpush.msra.mxu0 0.0
      %6213 = vmatpush.msra.mxu0 0.0
      %6214 = vmatpush.msra.mxu0 0.0
      %6215 = vmatpush.msra.mxu0 0.0
      %6216 = vmatpush.msra.mxu0 0.0
      %6217 = vmatpush.msra.mxu0 0.0
      %6218 = vmatpush.msra.mxu0 0.0
      %6219 = vmatpush.msra.mxu0 0.0
      %6220 = vmatpush.msra.mxu0 0.0
      %6221 = vmatpush.msra.mxu0 0.0
      %6222 = vmatpush.msra.mxu0 0.0
      %6223 = vmatpush.msra.mxu0 0.0
      %6224 = vmatpush.msra.mxu0 0.0
      %6225 = vmatpush.msra.mxu0 0.0
      %6226 = vmatpush.msra.mxu0 0.0
      %6227 = vmatpush.msra.mxu0 %v6170
      %6228 = vmatmul.f32.gmra.mxu0 %v6166
      %v6229 = vpop.f32.mrf.mxu0
      %v6230 = vadd.f32 0.0, %v6229
      %6231 = vdwg.mxu0
      %6232 = vmatpush.msra.mxu0 0.0
      %6233 = vmatpush.msra.mxu0 0.0
      %6234 = vmatpush.msra.mxu0 0.0
      %6235 = vmatpush.msra.mxu0 0.0
      %6236 = vmatpush.msra.mxu0 0.0
      %6237 = vmatpush.msra.mxu0 0.0
      %6238 = vmatpush.msra.mxu0 0.0
      %6239 = vmatpush.msra.mxu0 0.0
      %6240 = vmatpush.msra.mxu0 0.0
      %6241 = vmatpush.msra.mxu0 0.0
      %6242 = vmatpush.msra.mxu0 0.0
      %6243 = vmatpush.msra.mxu0 0.0
      %6244 = vmatpush.msra.mxu0 0.0
      %6245 = vmatpush.msra.mxu0 0.0
      %6246 = vmatpush.msra.mxu0 0.0
      %6247 = vmatpush.msra.mxu0 %v6172
      %6248 = vmatmul.f32.gmra.mxu0 %v6166
      %v6249 = vpop.f32.mrf.mxu0
      %v6250 = vadd.f32 0.0, %v6249
      %6251 = vdwg.mxu0
      %6252 = vmatpush.msra.mxu0 0.0
      %6253 = vmatpush.msra.mxu0 0.0
      %6254 = vmatpush.msra.mxu0 0.0
      %6255 = vmatpush.msra.mxu0 0.0
      %6256 = vmatpush.msra.mxu0 0.0
      %6257 = vmatpush.msra.mxu0 0.0
      %6258 = vmatpush.msra.mxu0 0.0
      %6259 = vmatpush.msra.mxu0 0.0
      %6260 = vmatpush.msra.mxu0 0.0
      %6261 = vmatpush.msra.mxu0 0.0
      %6262 = vmatpush.msra.mxu0 0.0
      %6263 = vmatpush.msra.mxu0 0.0
      %6264 = vmatpush.msra.mxu0 0.0
      %6265 = vmatpush.msra.mxu0 0.0
      %6266 = vmatpush.msra.mxu0 0.0
      %6267 = vmatpush.msra.mxu0 %v6174
      %6268 = vmatmul.f32.gmra.mxu0 %v6166
      %v6269 = vpop.f32.mrf.mxu0
      %v6270 = vadd.f32 0.0, %v6269
      %6271 = vdwg.mxu0
      %6272 = vmatpush.msra.mxu0 0.0
      %6273 = vmatpush.msra.mxu0 0.0
      %6274 = vmatpush.msra.mxu0 0.0
      %6275 = vmatpush.msra.mxu0 0.0
      %6276 = vmatpush.msra.mxu0 0.0
      %6277 = vmatpush.msra.mxu0 0.0
      %6278 = vmatpush.msra.mxu0 0.0
      %6279 = vmatpush.msra.mxu0 0.0
      %6280 = vmatpush.msra.mxu0 0.0
      %6281 = vmatpush.msra.mxu0 0.0
      %6282 = vmatpush.msra.mxu0 0.0
      %6283 = vmatpush.msra.mxu0 0.0
      %6284 = vmatpush.msra.mxu0 0.0
      %6285 = vmatpush.msra.mxu0 0.0
      %6286 = vmatpush.msra.mxu0 0.0
      %6287 = vmatpush.msra.mxu0 %v6176
      %6288 = vmatmul.f32.gmra.mxu0 %v6166
      %v6289 = vpop.f32.mrf.mxu0
      %v6290 = vadd.f32 0.0, %v6289
      %6291 = vdwg.mxu0
      %6292 = vmatpush.msra.mxu0 0.0
      %6293 = vmatpush.msra.mxu0 0.0
      %6294 = vmatpush.msra.mxu0 0.0
      %6295 = vmatpush.msra.mxu0 0.0
      %6296 = vmatpush.msra.mxu0 0.0
      %6297 = vmatpush.msra.mxu0 0.0
      %6298 = vmatpush.msra.mxu0 0.0
      %6299 = vmatpush.msra.mxu0 0.0
      %6300 = vmatpush.msra.mxu0 0.0
      %6301 = vmatpush.msra.mxu0 0.0
      %6302 = vmatpush.msra.mxu0 0.0
      %6303 = vmatpush.msra.mxu0 0.0
      %6304 = vmatpush.msra.mxu0 0.0
      %6305 = vmatpush.msra.mxu0 0.0
      %6306 = vmatpush.msra.mxu0 0.0
      %6307 = vmatpush.msra.mxu0 %v6178
      %6308 = vmatmul.f32.gmra.mxu0 %v6166
      %v6309 = vpop.f32.mrf.mxu0
      %v6310 = vadd.f32 0.0, %v6309
      %6311 = vdwg.mxu0
      %6312 = vmatpush.msra.mxu0 0.0
      %6313 = vmatpush.msra.mxu0 0.0
      %6314 = vmatpush.msra.mxu0 0.0
      %6315 = vmatpush.msra.mxu0 0.0
      %6316 = vmatpush.msra.mxu0 0.0
      %6317 = vmatpush.msra.mxu0 0.0
      %6318 = vmatpush.msra.mxu0 0.0
      %6319 = vmatpush.msra.mxu0 0.0
      %6320 = vmatpush.msra.mxu0 0.0
      %6321 = vmatpush.msra.mxu0 0.0
      %6322 = vmatpush.msra.mxu0 0.0
      %6323 = vmatpush.msra.mxu0 0.0
      %6324 = vmatpush.msra.mxu0 0.0
      %6325 = vmatpush.msra.mxu0 0.0
      %6326 = vmatpush.msra.mxu0 0.0
      %6327 = vmatpush.msra.mxu0 %v6180
      %6328 = vmatmul.f32.gmra.mxu0 %v6166
      %v6329 = vpop.f32.mrf.mxu0
      %v6330 = vadd.f32 0.0, %v6329
      %6331 = vdwg.mxu0
      %6332 = vmatpush.msra.mxu0 0.0
      %6333 = vmatpush.msra.mxu0 0.0
      %6334 = vmatpush.msra.mxu0 0.0
      %6335 = vmatpush.msra.mxu0 0.0
      %6336 = vmatpush.msra.mxu0 0.0
      %6337 = vmatpush.msra.mxu0 0.0
      %6338 = vmatpush.msra.mxu0 0.0
      %6339 = vmatpush.msra.mxu0 0.0
      %6340 = vmatpush.msra.mxu0 0.0
      %6341 = vmatpush.msra.mxu0 0.0
      %6342 = vmatpush.msra.mxu0 0.0
      %6343 = vmatpush.msra.mxu0 0.0
      %6344 = vmatpush.msra.mxu0 0.0
      %6345 = vmatpush.msra.mxu0 0.0
      %6346 = vmatpush.msra.mxu0 0.0
      %6347 = vmatpush.msra.mxu0 %v6182
      %6348 = vmatmul.f32.gmra.mxu0 %v6166
      %v6349 = vpop.f32.mrf.mxu0
      %v6350 = vadd.f32 0.0, %v6349
      %6351 = vdwg.mxu0
      %6352 = vmatpush.msra.mxu0 0.0
      %6353 = vmatpush.msra.mxu0 0.0
      %6354 = vmatpush.msra.mxu0 0.0
      %6355 = vmatpush.msra.mxu0 0.0
      %6356 = vmatpush.msra.mxu0 0.0
      %6357 = vmatpush.msra.mxu0 0.0
      %6358 = vmatpush.msra.mxu0 0.0
      %6359 = vmatpush.msra.mxu0 0.0
      %6360 = vmatpush.msra.mxu0 0.0
      %6361 = vmatpush.msra.mxu0 0.0
      %6362 = vmatpush.msra.mxu0 0.0
      %6363 = vmatpush.msra.mxu0 0.0
      %6364 = vmatpush.msra.mxu0 0.0
      %6365 = vmatpush.msra.mxu0 0.0
      %6366 = vmatpush.msra.mxu0 0.0
      %6367 = vmatpush.msra.mxu0 %v6184
      %6368 = vmatmul.f32.gmra.mxu0 %v6166
      %v6369 = vpop.f32.mrf.mxu0
      %v6370 = vadd.f32 0.0, %v6369
      %6371 = vdwg.mxu0
      %6372 = vmatpush.msra.mxu0 0.0
      %6373 = vmatpush.msra.mxu0 0.0
      %6374 = vmatpush.msra.mxu0 0.0
      %6375 = vmatpush.msra.mxu0 0.0
      %6376 = vmatpush.msra.mxu0 0.0
      %6377 = vmatpush.msra.mxu0 0.0
      %6378 = vmatpush.msra.mxu0 0.0
      %6379 = vmatpush.msra.mxu0 0.0
      %6380 = vmatpush.msra.mxu0 0.0
      %6381 = vmatpush.msra.mxu0 0.0
      %6382 = vmatpush.msra.mxu0 0.0
      %6383 = vmatpush.msra.mxu0 0.0
      %6384 = vmatpush.msra.mxu0 0.0
      %6385 = vmatpush.msra.mxu0 0.0
      %6386 = vmatpush.msra.mxu0 0.0
      %6387 = vmatpush.msra.mxu0 %v6186
      %6388 = vmatmul.f32.gmra.mxu0 %v6166
      %v6389 = vpop.f32.mrf.mxu0
      %v6390 = vadd.f32 0.0, %v6389
      %6391 = vdwg.mxu0
      %6392 = vmatpush.msra.mxu0 0.0
      %6393 = vmatpush.msra.mxu0 0.0
      %6394 = vmatpush.msra.mxu0 0.0
      %6395 = vmatpush.msra.mxu0 0.0
      %6396 = vmatpush.msra.mxu0 0.0
      %6397 = vmatpush.msra.mxu0 0.0
      %6398 = vmatpush.msra.mxu0 0.0
      %6399 = vmatpush.msra.mxu0 0.0
      %6400 = vmatpush.msra.mxu0 0.0
      %6401 = vmatpush.msra.mxu0 0.0
      %6402 = vmatpush.msra.mxu0 0.0
      %6403 = vmatpush.msra.mxu0 0.0
      %6404 = vmatpush.msra.mxu0 0.0
      %6405 = vmatpush.msra.mxu0 0.0
      %6406 = vmatpush.msra.mxu0 0.0
      %6407 = vmatpush.msra.mxu0 %v6188
      %6408 = vmatmul.f32.gmra.mxu0 %v6166
      %v6409 = vpop.f32.mrf.mxu0
      %v6410 = vadd.f32 0.0, %v6409
      %6411 = vdwg.mxu0
      %6412 = vmatpush.msra.mxu0 0.0
      %6413 = vmatpush.msra.mxu0 0.0
      %6414 = vmatpush.msra.mxu0 0.0
      %6415 = vmatpush.msra.mxu0 0.0
      %6416 = vmatpush.msra.mxu0 0.0
      %6417 = vmatpush.msra.mxu0 0.0
      %6418 = vmatpush.msra.mxu0 0.0
      %6419 = vmatpush.msra.mxu0 0.0
      %6420 = vmatpush.msra.mxu0 0.0
      %6421 = vmatpush.msra.mxu0 0.0
      %6422 = vmatpush.msra.mxu0 0.0
      %6423 = vmatpush.msra.mxu0 0.0
      %6424 = vmatpush.msra.mxu0 0.0
      %6425 = vmatpush.msra.mxu0 0.0
      %6426 = vmatpush.msra.mxu0 0.0
      %6427 = vmatpush.msra.mxu0 %v6190
      %6428 = vmatmul.f32.gmra.mxu0 %v6166
      %v6429 = vpop.f32.mrf.mxu0
      %v6430 = vadd.f32 0.0, %v6429
      %6431 = vdwg.mxu0
      %v6432 = vadd.f32 %v6067, %v6210
      %v6433 = vadd.f32 %v6068, %v6230
      %v6434 = vadd.f32 %v6069, %v6250
      %v6435 = vadd.f32 %v6070, %v6270
      %v6436 = vadd.f32 %v6071, %v6290
      %v6437 = vadd.f32 %v6072, %v6310
      %v6438 = vadd.f32 %v6073, %v6330
      %v6439 = vadd.f32 %v6074, %v6350
      %v6440 = vadd.f32 %v6075, %v6370
      %v6441 = vadd.f32 %v6076, %v6390
      %v6442 = vadd.f32 %v6077, %v6410
      %v6443 = vadd.f32 %v6078, %v6430
      %v6444 = vld [vmem:[#allocation2 + $0x4] sm:$0xff]
      %v6445 = vld [vmem:[#allocation2 + $0xc] sm:$0xff]
      %v6446 = vld [vmem:[#allocation2 + $0x14] sm:$0xff]
      %v6447 = vld [vmem:[#allocation2 + $0x1c] sm:$0xff]
      %v6448 = vld [vmem:[#allocation2 + $0x24] sm:$0xff]
      %v6449 = vld [vmem:[#allocation2 + $0x2c] sm:$0xff]
      %v6450 = vld [vmem:[#allocation2 + $0x34] sm:$0xff]
      %v6451 = vld [vmem:[#allocation2 + $0x3c] sm:$0xf]
      %6452 = vrot.lane.b32.xlu0 %v689, 64
      %v6453 = vpop.permute.xlu0 %6452
      %6462 = vst [vmem:[#allocation1] ss:$2 sm:$0xff] %v6444
      %s6463 = scalar_lea.vmem [#allocation1], 16
      %6464 = vst [vmem:[%s6463] ss:$2 sm:$0xff] %v6445
      %s6465 = scalar_lea.vmem [#allocation1], 32
      %6466 = vst [vmem:[%s6465] ss:$2 sm:$0xff] %v6446
      %s6467 = scalar_lea.vmem [#allocation1], 48
      %6468 = vst [vmem:[%s6467] ss:$2 sm:$0xff] %v6447
      %v6469 = vld.sshfl [vmem:[#allocation1] sm:$0xff pattern:$0x75316420]
      %v6470 = vld.sshfl [vmem:[#allocation1 + $0x8] sm:$0xff pattern:$0x75316420]
      %v6471 = vld.sshfl [vmem:[#allocation1 + $0x10] sm:$0xff pattern:$0x75316420]
      %v6472 = vld.sshfl [vmem:[#allocation1 + $0x18] sm:$0xff pattern:$0x75316420]
      %v6473 = vld.sshfl [vmem:[#allocation1 + $0x20] sm:$0xff pattern:$0x75316420]
      %v6474 = vld.sshfl [vmem:[#allocation1 + $0x28] sm:$0xff pattern:$0x75316420]
      %v6475 = vld.sshfl [vmem:[#allocation1 + $0x30] sm:$0xff pattern:$0x75316420]
      %v6476 = vld.sshfl [vmem:[#allocation1 + $0x38] sm:$0xff pattern:$0x75316420]
      %6477 = vst [vmem:[#allocation1] ss:$2 sm:$0xff] %v6448
      %6478 = vst [vmem:[%s6463] ss:$2 sm:$0xff] %v6449
      %6479 = vst [vmem:[%s6465] ss:$2 sm:$0xff] %v6450
      %6480 = vst [vmem:[%s6467] ss:$2 sm:$0xff] %v6451
      %v6481 = vld.sshfl [vmem:[#allocation1] sm:$0xff pattern:$0x75316420]
      %v6482 = vld.sshfl [vmem:[#allocation1 + $0x8] sm:$0xff pattern:$0x75316420]
      %v6483 = vld.sshfl [vmem:[#allocation1 + $0x10] sm:$0xff pattern:$0x75316420]
      %v6484 = vld.sshfl [vmem:[#allocation1 + $0x18] sm:$0xff pattern:$0x75316420]
      %v6485 = vld.sshfl [vmem:[#allocation1 + $0x20] sm:$0xff pattern:$0x75316420]
      %v6486 = vld.sshfl [vmem:[#allocation1 + $0x28] sm:$0xff pattern:$0x75316420]
      %v6487 = vld.sshfl [vmem:[#allocation1 + $0x30] sm:$0xff pattern:$0x75316420]
      %6488 = vrot.lane.b32.xlu0 %v6469, 118
      %v6489 = vpop.permute.xlu0 %6488
      %6490 = vrot.lane.b32.xlu0 %v6470, 118
      %v6491 = vpop.permute.xlu0 %6490
      %6492 = vrot.lane.b32.xlu0 %v6471, 118
      %v6493 = vpop.permute.xlu0 %6492
      %6494 = vrot.lane.b32.xlu0 %v6472, 118
      %v6495 = vpop.permute.xlu0 %6494
      %6496 = vrot.lane.b32.xlu0 %v6473, 118
      %v6497 = vpop.permute.xlu0 %6496
      %6498 = vrot.lane.b32.xlu0 %v6474, 118
      %v6499 = vpop.permute.xlu0 %6498
      %6500 = vrot.lane.b32.xlu0 %v6475, 118
      %v6501 = vpop.permute.xlu0 %6500
      %6502 = vrot.lane.b32.xlu0 %v6476, 118
      %v6503 = vpop.permute.xlu0 %6502
      %6504 = vrot.lane.b32.xlu0 %v6481, 118
      %v6505 = vpop.permute.xlu0 %6504
      %6506 = vrot.lane.b32.xlu0 %v6482, 118
      %v6507 = vpop.permute.xlu0 %6506
      %6508 = vrot.lane.b32.xlu0 %v6483, 118
      %v6509 = vpop.permute.xlu0 %6508
      %6510 = vrot.lane.b32.xlu0 %v6484, 118
      %v6511 = vpop.permute.xlu0 %6510
      %6512 = vrot.lane.b32.xlu0 %v6485, 118
      %v6513 = vpop.permute.xlu0 %6512
      %6514 = vrot.lane.b32.xlu0 %v6486, 118
      %v6515 = vpop.permute.xlu0 %6514
      %6516 = vrot.lane.b32.xlu0 %v6487, 118
      %v6517 = vpop.permute.xlu0 %6516
      %vm6518 = vcmask 965632
      %v6519 = vsel %vm6518, %v6489, %v6491
      %v6520 = vsel %vm6518, %v6491, %v6493
      %v6521 = vsel %vm6518, %v6493, %v6495
      %v6522 = vsel %vm6518, %v6495, %v6497
      %v6523 = vsel %vm6518, %v6499, %v6501
      %v6524 = vsel %vm6518, %v6501, %v6503
      %v6525 = vsel %vm6518, %v6503, %v6505
      %v6526 = vsel %vm6518, %v6505, %v6507
      %v6527 = vsel %vm6518, %v6509, %v6511
      %v6528 = vsel %vm6518, %v6511, %v6513
      %v6529 = vsel %vm6518, %v6513, %v6515
      %v6530 = vsel %vm6518, %v6515, %v6517
      %v6531 = vsel %vm778, %v6453, 0
      %v6533 = vsel %vm640, %v6519, 0
      %v6535 = vsel %vm640, %v6520, 0
      %v6537 = vsel %vm640, %v6521, 0
      %v6539 = vsel %vm640, %v6522, 0
      %v6541 = vsel %vm640, %v6523, 0
      %v6543 = vsel %vm640, %v6524, 0
      %v6545 = vsel %vm640, %v6525, 0
      %v6547 = vsel %vm640, %v6526, 0
      %v6549 = vsel %vm640, %v6527, 0
      %v6551 = vsel %vm640, %v6528, 0
      %v6553 = vsel %vm640, %v6529, 0
      %v6555 = vsel %vm640, %v6530, 0
      %6557 = vmatpush.msra.mxu0 0.0
      %6558 = vmatpush.msra.mxu0 0.0
      %6559 = vmatpush.msra.mxu0 0.0
      %6560 = vmatpush.msra.mxu0 0.0
      %6561 = vmatpush.msra.mxu0 0.0
      %6562 = vmatpush.msra.mxu0 0.0
      %6563 = vmatpush.msra.mxu0 0.0
      %6564 = vmatpush.msra.mxu0 0.0
      %6565 = vmatpush.msra.mxu0 0.0
      %6566 = vmatpush.msra.mxu0 0.0
      %6567 = vmatpush.msra.mxu0 0.0
      %6568 = vmatpush.msra.mxu0 0.0
      %6569 = vmatpush.msra.mxu0 0.0
      %6570 = vmatpush.msra.mxu0 0.0
      %6571 = vmatpush.msra.mxu0 0.0
      %6572 = vmatpush.msra.mxu0 %v6533
      %6573 = vmatmul.f32.gmra.mxu0 %v6531
      %v6574 = vpop.f32.mrf.mxu0
      %v6575 = vadd.f32 0.0, %v6574
      %6576 = vdwg.mxu0
      %6577 = vmatpush.msra.mxu0 0.0
      %6578 = vmatpush.msra.mxu0 0.0
      %6579 = vmatpush.msra.mxu0 0.0
      %6580 = vmatpush.msra.mxu0 0.0
      %6581 = vmatpush.msra.mxu0 0.0
      %6582 = vmatpush.msra.mxu0 0.0
      %6583 = vmatpush.msra.mxu0 0.0
      %6584 = vmatpush.msra.mxu0 0.0
      %6585 = vmatpush.msra.mxu0 0.0
      %6586 = vmatpush.msra.mxu0 0.0
      %6587 = vmatpush.msra.mxu0 0.0
      %6588 = vmatpush.msra.mxu0 0.0
      %6589 = vmatpush.msra.mxu0 0.0
      %6590 = vmatpush.msra.mxu0 0.0
      %6591 = vmatpush.msra.mxu0 0.0
      %6592 = vmatpush.msra.mxu0 %v6535
      %6593 = vmatmul.f32.gmra.mxu0 %v6531
      %v6594 = vpop.f32.mrf.mxu0
      %v6595 = vadd.f32 0.0, %v6594
      %6596 = vdwg.mxu0
      %6597 = vmatpush.msra.mxu0 0.0
      %6598 = vmatpush.msra.mxu0 0.0
      %6599 = vmatpush.msra.mxu0 0.0
      %6600 = vmatpush.msra.mxu0 0.0
      %6601 = vmatpush.msra.mxu0 0.0
      %6602 = vmatpush.msra.mxu0 0.0
      %6603 = vmatpush.msra.mxu0 0.0
      %6604 = vmatpush.msra.mxu0 0.0
      %6605 = vmatpush.msra.mxu0 0.0
      %6606 = vmatpush.msra.mxu0 0.0
      %6607 = vmatpush.msra.mxu0 0.0
      %6608 = vmatpush.msra.mxu0 0.0
      %6609 = vmatpush.msra.mxu0 0.0
      %6610 = vmatpush.msra.mxu0 0.0
      %6611 = vmatpush.msra.mxu0 0.0
      %6612 = vmatpush.msra.mxu0 %v6537
      %6613 = vmatmul.f32.gmra.mxu0 %v6531
      %v6614 = vpop.f32.mrf.mxu0
      %v6615 = vadd.f32 0.0, %v6614
      %6616 = vdwg.mxu0
      %6617 = vmatpush.msra.mxu0 0.0
      %6618 = vmatpush.msra.mxu0 0.0
      %6619 = vmatpush.msra.mxu0 0.0
      %6620 = vmatpush.msra.mxu0 0.0
      %6621 = vmatpush.msra.mxu0 0.0
      %6622 = vmatpush.msra.mxu0 0.0
      %6623 = vmatpush.msra.mxu0 0.0
      %6624 = vmatpush.msra.mxu0 0.0
      %6625 = vmatpush.msra.mxu0 0.0
      %6626 = vmatpush.msra.mxu0 0.0
      %6627 = vmatpush.msra.mxu0 0.0
      %6628 = vmatpush.msra.mxu0 0.0
      %6629 = vmatpush.msra.mxu0 0.0
      %6630 = vmatpush.msra.mxu0 0.0
      %6631 = vmatpush.msra.mxu0 0.0
      %6632 = vmatpush.msra.mxu0 %v6539
      %6633 = vmatmul.f32.gmra.mxu0 %v6531
      %v6634 = vpop.f32.mrf.mxu0
      %v6635 = vadd.f32 0.0, %v6634
      %6636 = vdwg.mxu0
      %6637 = vmatpush.msra.mxu0 0.0
      %6638 = vmatpush.msra.mxu0 0.0
      %6639 = vmatpush.msra.mxu0 0.0
      %6640 = vmatpush.msra.mxu0 0.0
      %6641 = vmatpush.msra.mxu0 0.0
      %6642 = vmatpush.msra.mxu0 0.0
      %6643 = vmatpush.msra.mxu0 0.0
      %6644 = vmatpush.msra.mxu0 0.0
      %6645 = vmatpush.msra.mxu0 0.0
      %6646 = vmatpush.msra.mxu0 0.0
      %6647 = vmatpush.msra.mxu0 0.0
      %6648 = vmatpush.msra.mxu0 0.0
      %6649 = vmatpush.msra.mxu0 0.0
      %6650 = vmatpush.msra.mxu0 0.0
      %6651 = vmatpush.msra.mxu0 0.0
      %6652 = vmatpush.msra.mxu0 %v6541
      %6653 = vmatmul.f32.gmra.mxu0 %v6531
      %v6654 = vpop.f32.mrf.mxu0
      %v6655 = vadd.f32 0.0, %v6654
      %6656 = vdwg.mxu0
      %6657 = vmatpush.msra.mxu0 0.0
      %6658 = vmatpush.msra.mxu0 0.0
      %6659 = vmatpush.msra.mxu0 0.0
      %6660 = vmatpush.msra.mxu0 0.0
      %6661 = vmatpush.msra.mxu0 0.0
      %6662 = vmatpush.msra.mxu0 0.0
      %6663 = vmatpush.msra.mxu0 0.0
      %6664 = vmatpush.msra.mxu0 0.0
      %6665 = vmatpush.msra.mxu0 0.0
      %6666 = vmatpush.msra.mxu0 0.0
      %6667 = vmatpush.msra.mxu0 0.0
      %6668 = vmatpush.msra.mxu0 0.0
      %6669 = vmatpush.msra.mxu0 0.0
      %6670 = vmatpush.msra.mxu0 0.0
      %6671 = vmatpush.msra.mxu0 0.0
      %6672 = vmatpush.msra.mxu0 %v6543
      %6673 = vmatmul.f32.gmra.mxu0 %v6531
      %v6674 = vpop.f32.mrf.mxu0
      %v6675 = vadd.f32 0.0, %v6674
      %6676 = vdwg.mxu0
      %6677 = vmatpush.msra.mxu0 0.0
      %6678 = vmatpush.msra.mxu0 0.0
      %6679 = vmatpush.msra.mxu0 0.0
      %6680 = vmatpush.msra.mxu0 0.0
      %6681 = vmatpush.msra.mxu0 0.0
      %6682 = vmatpush.msra.mxu0 0.0
      %6683 = vmatpush.msra.mxu0 0.0
      %6684 = vmatpush.msra.mxu0 0.0
      %6685 = vmatpush.msra.mxu0 0.0
      %6686 = vmatpush.msra.mxu0 0.0
      %6687 = vmatpush.msra.mxu0 0.0
      %6688 = vmatpush.msra.mxu0 0.0
      %6689 = vmatpush.msra.mxu0 0.0
      %6690 = vmatpush.msra.mxu0 0.0
      %6691 = vmatpush.msra.mxu0 0.0
      %6692 = vmatpush.msra.mxu0 %v6545
      %6693 = vmatmul.f32.gmra.mxu0 %v6531
      %v6694 = vpop.f32.mrf.mxu0
      %v6695 = vadd.f32 0.0, %v6694
      %6696 = vdwg.mxu0
      %6697 = vmatpush.msra.mxu0 0.0
      %6698 = vmatpush.msra.mxu0 0.0
      %6699 = vmatpush.msra.mxu0 0.0
      %6700 = vmatpush.msra.mxu0 0.0
      %6701 = vmatpush.msra.mxu0 0.0
      %6702 = vmatpush.msra.mxu0 0.0
      %6703 = vmatpush.msra.mxu0 0.0
      %6704 = vmatpush.msra.mxu0 0.0
      %6705 = vmatpush.msra.mxu0 0.0
      %6706 = vmatpush.msra.mxu0 0.0
      %6707 = vmatpush.msra.mxu0 0.0
      %6708 = vmatpush.msra.mxu0 0.0
      %6709 = vmatpush.msra.mxu0 0.0
      %6710 = vmatpush.msra.mxu0 0.0
      %6711 = vmatpush.msra.mxu0 0.0
      %6712 = vmatpush.msra.mxu0 %v6547
      %6713 = vmatmul.f32.gmra.mxu0 %v6531
      %v6714 = vpop.f32.mrf.mxu0
      %v6715 = vadd.f32 0.0, %v6714
      %6716 = vdwg.mxu0
      %6717 = vmatpush.msra.mxu0 0.0
      %6718 = vmatpush.msra.mxu0 0.0
      %6719 = vmatpush.msra.mxu0 0.0
      %6720 = vmatpush.msra.mxu0 0.0
      %6721 = vmatpush.msra.mxu0 0.0
      %6722 = vmatpush.msra.mxu0 0.0
      %6723 = vmatpush.msra.mxu0 0.0
      %6724 = vmatpush.msra.mxu0 0.0
      %6725 = vmatpush.msra.mxu0 0.0
      %6726 = vmatpush.msra.mxu0 0.0
      %6727 = vmatpush.msra.mxu0 0.0
      %6728 = vmatpush.msra.mxu0 0.0
      %6729 = vmatpush.msra.mxu0 0.0
      %6730 = vmatpush.msra.mxu0 0.0
      %6731 = vmatpush.msra.mxu0 0.0
      %6732 = vmatpush.msra.mxu0 %v6549
      %6733 = vmatmul.f32.gmra.mxu0 %v6531
      %v6734 = vpop.f32.mrf.mxu0
      %v6735 = vadd.f32 0.0, %v6734
      %6736 = vdwg.mxu0
      %6737 = vmatpush.msra.mxu0 0.0
      %6738 = vmatpush.msra.mxu0 0.0
      %6739 = vmatpush.msra.mxu0 0.0
      %6740 = vmatpush.msra.mxu0 0.0
      %6741 = vmatpush.msra.mxu0 0.0
      %6742 = vmatpush.msra.mxu0 0.0
      %6743 = vmatpush.msra.mxu0 0.0
      %6744 = vmatpush.msra.mxu0 0.0
      %6745 = vmatpush.msra.mxu0 0.0
      %6746 = vmatpush.msra.mxu0 0.0
      %6747 = vmatpush.msra.mxu0 0.0
      %6748 = vmatpush.msra.mxu0 0.0
      %6749 = vmatpush.msra.mxu0 0.0
      %6750 = vmatpush.msra.mxu0 0.0
      %6751 = vmatpush.msra.mxu0 0.0
      %6752 = vmatpush.msra.mxu0 %v6551
      %6753 = vmatmul.f32.gmra.mxu0 %v6531
      %v6754 = vpop.f32.mrf.mxu0
      %v6755 = vadd.f32 0.0, %v6754
      %6756 = vdwg.mxu0
      %6757 = vmatpush.msra.mxu0 0.0
      %6758 = vmatpush.msra.mxu0 0.0
      %6759 = vmatpush.msra.mxu0 0.0
      %6760 = vmatpush.msra.mxu0 0.0
      %6761 = vmatpush.msra.mxu0 0.0
      %6762 = vmatpush.msra.mxu0 0.0
      %6763 = vmatpush.msra.mxu0 0.0
      %6764 = vmatpush.msra.mxu0 0.0
      %6765 = vmatpush.msra.mxu0 0.0
      %6766 = vmatpush.msra.mxu0 0.0
      %6767 = vmatpush.msra.mxu0 0.0
      %6768 = vmatpush.msra.mxu0 0.0
      %6769 = vmatpush.msra.mxu0 0.0
      %6770 = vmatpush.msra.mxu0 0.0
      %6771 = vmatpush.msra.mxu0 0.0
      %6772 = vmatpush.msra.mxu0 %v6553
      %6773 = vmatmul.f32.gmra.mxu0 %v6531
      %v6774 = vpop.f32.mrf.mxu0
      %v6775 = vadd.f32 0.0, %v6774
      %6776 = vdwg.mxu0
      %6777 = vmatpush.msra.mxu0 0.0
      %6778 = vmatpush.msra.mxu0 0.0
      %6779 = vmatpush.msra.mxu0 0.0
      %6780 = vmatpush.msra.mxu0 0.0
      %6781 = vmatpush.msra.mxu0 0.0
      %6782 = vmatpush.msra.mxu0 0.0
      %6783 = vmatpush.msra.mxu0 0.0
      %6784 = vmatpush.msra.mxu0 0.0
      %6785 = vmatpush.msra.mxu0 0.0
      %6786 = vmatpush.msra.mxu0 0.0
      %6787 = vmatpush.msra.mxu0 0.0
      %6788 = vmatpush.msra.mxu0 0.0
      %6789 = vmatpush.msra.mxu0 0.0
      %6790 = vmatpush.msra.mxu0 0.0
      %6791 = vmatpush.msra.mxu0 0.0
      %6792 = vmatpush.msra.mxu0 %v6555
      %6793 = vmatmul.f32.gmra.mxu0 %v6531
      %v6794 = vpop.f32.mrf.mxu0
      %v6795 = vadd.f32 0.0, %v6794
      %6796 = vdwg.mxu0
      %v6797 = vadd.f32 %v6432, %v6575
      %v6798 = vadd.f32 %v6433, %v6595
      %v6799 = vadd.f32 %v6434, %v6615
      %v6800 = vadd.f32 %v6435, %v6635
      %v6801 = vadd.f32 %v6436, %v6655
      %v6802 = vadd.f32 %v6437, %v6675
      %v6803 = vadd.f32 %v6438, %v6695
      %v6804 = vadd.f32 %v6439, %v6715
      %v6805 = vadd.f32 %v6440, %v6735
      %v6806 = vadd.f32 %v6441, %v6755
      %v6807 = vadd.f32 %v6442, %v6775
      %v6808 = vadd.f32 %v6443, %v6795
      %v6809 = vld [vmem:[#allocation2 + $0x4] sm:$0xff]
      %v6810 = vld [vmem:[#allocation2 + $0xc] sm:$0xff]
      %v6811 = vld [vmem:[#allocation2 + $0x14] sm:$0xff]
      %v6812 = vld [vmem:[#allocation2 + $0x1c] sm:$0xff]
      %v6813 = vld [vmem:[#allocation2 + $0x24] sm:$0xff]
      %v6814 = vld [vmem:[#allocation2 + $0x2c] sm:$0xff]
      %v6815 = vld [vmem:[#allocation2 + $0x34] sm:$0xff]
      %v6816 = vld [vmem:[#allocation2 + $0x3c] sm:$0xf]
      %6817 = vrot.lane.b32.xlu0 %v689, 60
      %v6818 = vpop.permute.xlu0 %6817
      %6827 = vst [vmem:[#allocation1] ss:$2 sm:$0xff] %v6809
      %s6828 = scalar_lea.vmem [#allocation1], 16
      %6829 = vst [vmem:[%s6828] ss:$2 sm:$0xff] %v6810
      %s6830 = scalar_lea.vmem [#allocation1], 32
      %6831 = vst [vmem:[%s6830] ss:$2 sm:$0xff] %v6811
      %s6832 = scalar_lea.vmem [#allocation1], 48
      %6833 = vst [vmem:[%s6832] ss:$2 sm:$0xff] %v6812
      %v6834 = vld.sshfl [vmem:[#allocation1] sm:$0xff pattern:$0x75316420]
      %v6835 = vld.sshfl [vmem:[#allocation1 + $0x8] sm:$0xff pattern:$0x75316420]
      %v6836 = vld.sshfl [vmem:[#allocation1 + $0x10] sm:$0xff pattern:$0x75316420]
      %v6837 = vld.sshfl [vmem:[#allocation1 + $0x18] sm:$0xff pattern:$0x75316420]
      %v6838 = vld.sshfl [vmem:[#allocation1 + $0x20] sm:$0xff pattern:$0x75316420]
      %v6839 = vld.sshfl [vmem:[#allocation1 + $0x28] sm:$0xff pattern:$0x75316420]
      %v6840 = vld.sshfl [vmem:[#allocation1 + $0x30] sm:$0xff pattern:$0x75316420]
      %v6841 = vld.sshfl [vmem:[#allocation1 + $0x38] sm:$0xff pattern:$0x75316420]
      %6842 = vst [vmem:[#allocation1] ss:$2 sm:$0xff] %v6813
      %6843 = vst [vmem:[%s6828] ss:$2 sm:$0xff] %v6814
      %6844 = vst [vmem:[%s6830] ss:$2 sm:$0xff] %v6815
      %6845 = vst [vmem:[%s6832] ss:$2 sm:$0xff] %v6816
      %v6846 = vld.sshfl [vmem:[#allocation1] sm:$0xff pattern:$0x75316420]
      %v6847 = vld.sshfl [vmem:[#allocation1 + $0x8] sm:$0xff pattern:$0x75316420]
      %v6848 = vld.sshfl [vmem:[#allocation1 + $0x10] sm:$0xff pattern:$0x75316420]
      %v6849 = vld.sshfl [vmem:[#allocation1 + $0x18] sm:$0xff pattern:$0x75316420]
      %v6850 = vld.sshfl [vmem:[#allocation1 + $0x20] sm:$0xff pattern:$0x75316420]
      %v6851 = vld.sshfl [vmem:[#allocation1 + $0x28] sm:$0xff pattern:$0x75316420]
      %v6852 = vld.sshfl [vmem:[#allocation1 + $0x30] sm:$0xff pattern:$0x75316420]
      %6853 = vrot.lane.b32.xlu0 %v6834, 117
      %v6854 = vpop.permute.xlu0 %6853
      %6855 = vrot.lane.b32.xlu0 %v6835, 117
      %v6856 = vpop.permute.xlu0 %6855
      %6857 = vrot.lane.b32.xlu0 %v6836, 117
      %v6858 = vpop.permute.xlu0 %6857
      %6859 = vrot.lane.b32.xlu0 %v6837, 117
      %v6860 = vpop.permute.xlu0 %6859
      %6861 = vrot.lane.b32.xlu0 %v6838, 117
      %v6862 = vpop.permute.xlu0 %6861
      %6863 = vrot.lane.b32.xlu0 %v6839, 117
      %v6864 = vpop.permute.xlu0 %6863
      %6865 = vrot.lane.b32.xlu0 %v6840, 117
      %v6866 = vpop.permute.xlu0 %6865
      %6867 = vrot.lane.b32.xlu0 %v6841, 117
      %v6868 = vpop.permute.xlu0 %6867
      %6869 = vrot.lane.b32.xlu0 %v6846, 117
      %v6870 = vpop.permute.xlu0 %6869
      %6871 = vrot.lane.b32.xlu0 %v6847, 117
      %v6872 = vpop.permute.xlu0 %6871
      %6873 = vrot.lane.b32.xlu0 %v6848, 117
      %v6874 = vpop.permute.xlu0 %6873
      %6875 = vrot.lane.b32.xlu0 %v6849, 117
      %v6876 = vpop.permute.xlu0 %6875
      %6877 = vrot.lane.b32.xlu0 %v6850, 117
      %v6878 = vpop.permute.xlu0 %6877
      %6879 = vrot.lane.b32.xlu0 %v6851, 117
      %v6880 = vpop.permute.xlu0 %6879
      %6881 = vrot.lane.b32.xlu0 %v6852, 117
      %v6882 = vpop.permute.xlu0 %6881
      %vm6883 = vcmask 957440
      %v6884 = vsel %vm6883, %v6854, %v6856
      %v6885 = vsel %vm6883, %v6856, %v6858
      %v6886 = vsel %vm6883, %v6858, %v6860
      %v6887 = vsel %vm6883, %v6860, %v6862
      %v6888 = vsel %vm6883, %v6864, %v6866
      %v6889 = vsel %vm6883, %v6866, %v6868
      %v6890 = vsel %vm6883, %v6868, %v6870
      %v6891 = vsel %vm6883, %v6870, %v6872
      %v6892 = vsel %vm6883, %v6874, %v6876
      %v6893 = vsel %vm6883, %v6876, %v6878
      %v6894 = vsel %vm6883, %v6878, %v6880
      %v6895 = vsel %vm6883, %v6880, %v6882
      %v6896 = vsel %vm778, %v6818, 0
      %v6898 = vsel %vm640, %v6884, 0
      %v6900 = vsel %vm640, %v6885, 0
      %v6902 = vsel %vm640, %v6886, 0
      %v6904 = vsel %vm640, %v6887, 0
      %v6906 = vsel %vm640, %v6888, 0
      %v6908 = vsel %vm640, %v6889, 0
      %v6910 = vsel %vm640, %v6890, 0
      %v6912 = vsel %vm640, %v6891, 0
      %v6914 = vsel %vm640, %v6892, 0
      %v6916 = vsel %vm640, %v6893, 0
      %v6918 = vsel %vm640, %v6894, 0
      %v6920 = vsel %vm640, %v6895, 0
      %6922 = vmatpush.msra.mxu0 0.0
      %6923 = vmatpush.msra.mxu0 0.0
      %6924 = vmatpush.msra.mxu0 0.0
      %6925 = vmatpush.msra.mxu0 0.0
      %6926 = vmatpush.msra.mxu0 0.0
      %6927 = vmatpush.msra.mxu0 0.0
      %6928 = vmatpush.msra.mxu0 0.0
      %6929 = vmatpush.msra.mxu0 0.0
      %6930 = vmatpush.msra.mxu0 0.0
      %6931 = vmatpush.msra.mxu0 0.0
      %6932 = vmatpush.msra.mxu0 0.0
      %6933 = vmatpush.msra.mxu0 0.0
      %6934 = vmatpush.msra.mxu0 0.0
      %6935 = vmatpush.msra.mxu0 0.0
      %6936 = vmatpush.msra.mxu0 0.0
      %6937 = vmatpush.msra.mxu0 %v6898
      %6938 = vmatmul.f32.gmra.mxu0 %v6896
      %v6939 = vpop.f32.mrf.mxu0
      %v6940 = vadd.f32 0.0, %v6939
      %6941 = vdwg.mxu0
      %6942 = vmatpush.msra.mxu0 0.0
      %6943 = vmatpush.msra.mxu0 0.0
      %6944 = vmatpush.msra.mxu0 0.0
      %6945 = vmatpush.msra.mxu0 0.0
      %6946 = vmatpush.msra.mxu0 0.0
      %6947 = vmatpush.msra.mxu0 0.0
      %6948 = vmatpush.msra.mxu0 0.0
      %6949 = vmatpush.msra.mxu0 0.0
      %6950 = vmatpush.msra.mxu0 0.0
      %6951 = vmatpush.msra.mxu0 0.0
      %6952 = vmatpush.msra.mxu0 0.0
      %6953 = vmatpush.msra.mxu0 0.0
      %6954 = vmatpush.msra.mxu0 0.0
      %6955 = vmatpush.msra.mxu0 0.0
      %6956 = vmatpush.msra.mxu0 0.0
      %6957 = vmatpush.msra.mxu0 %v6900
      %6958 = vmatmul.f32.gmra.mxu0 %v6896
      %v6959 = vpop.f32.mrf.mxu0
      %v6960 = vadd.f32 0.0, %v6959
      %6961 = vdwg.mxu0
      %6962 = vmatpush.msra.mxu0 0.0
      %6963 = vmatpush.msra.mxu0 0.0
      %6964 = vmatpush.msra.mxu0 0.0
      %6965 = vmatpush.msra.mxu0 0.0
      %6966 = vmatpush.msra.mxu0 0.0
      %6967 = vmatpush.msra.mxu0 0.0
      %6968 = vmatpush.msra.mxu0 0.0
      %6969 = vmatpush.msra.mxu0 0.0
      %6970 = vmatpush.msra.mxu0 0.0
      %6971 = vmatpush.msra.mxu0 0.0
      %6972 = vmatpush.msra.mxu0 0.0
      %6973 = vmatpush.msra.mxu0 0.0
      %6974 = vmatpush.msra.mxu0 0.0
      %6975 = vmatpush.msra.mxu0 0.0
      %6976 = vmatpush.msra.mxu0 0.0
      %6977 = vmatpush.msra.mxu0 %v6902
      %6978 = vmatmul.f32.gmra.mxu0 %v6896
      %v6979 = vpop.f32.mrf.mxu0
      %v6980 = vadd.f32 0.0, %v6979
      %6981 = vdwg.mxu0
      %6982 = vmatpush.msra.mxu0 0.0
      %6983 = vmatpush.msra.mxu0 0.0
      %6984 = vmatpush.msra.mxu0 0.0
      %6985 = vmatpush.msra.mxu0 0.0
      %6986 = vmatpush.msra.mxu0 0.0
      %6987 = vmatpush.msra.mxu0 0.0
      %6988 = vmatpush.msra.mxu0 0.0
      %6989 = vmatpush.msra.mxu0 0.0
      %6990 = vmatpush.msra.mxu0 0.0
      %6991 = vmatpush.msra.mxu0 0.0
      %6992 = vmatpush.msra.mxu0 0.0
      %6993 = vmatpush.msra.mxu0 0.0
      %6994 = vmatpush.msra.mxu0 0.0
      %6995 = vmatpush.msra.mxu0 0.0
      %6996 = vmatpush.msra.mxu0 0.0
      %6997 = vmatpush.msra.mxu0 %v6904
      %6998 = vmatmul.f32.gmra.mxu0 %v6896
      %v6999 = vpop.f32.mrf.mxu0
      %v7000 = vadd.f32 0.0, %v6999
      %7001 = vdwg.mxu0
      %7002 = vmatpush.msra.mxu0 0.0
      %7003 = vmatpush.msra.mxu0 0.0
      %7004 = vmatpush.msra.mxu0 0.0
      %7005 = vmatpush.msra.mxu0 0.0
      %7006 = vmatpush.msra.mxu0 0.0
      %7007 = vmatpush.msra.mxu0 0.0
      %7008 = vmatpush.msra.mxu0 0.0
      %7009 = vmatpush.msra.mxu0 0.0
      %7010 = vmatpush.msra.mxu0 0.0
      %7011 = vmatpush.msra.mxu0 0.0
      %7012 = vmatpush.msra.mxu0 0.0
      %7013 = vmatpush.msra.mxu0 0.0
      %7014 = vmatpush.msra.mxu0 0.0
      %7015 = vmatpush.msra.mxu0 0.0
      %7016 = vmatpush.msra.mxu0 0.0
      %7017 = vmatpush.msra.mxu0 %v6906
      %7018 = vmatmul.f32.gmra.mxu0 %v6896
      %v7019 = vpop.f32.mrf.mxu0
      %v7020 = vadd.f32 0.0, %v7019
      %7021 = vdwg.mxu0
      %7022 = vmatpush.msra.mxu0 0.0
      %7023 = vmatpush.msra.mxu0 0.0
      %7024 = vmatpush.msra.mxu0 0.0
      %7025 = vmatpush.msra.mxu0 0.0
      %7026 = vmatpush.msra.mxu0 0.0
      %7027 = vmatpush.msra.mxu0 0.0
      %7028 = vmatpush.msra.mxu0 0.0
      %7029 = vmatpush.msra.mxu0 0.0
      %7030 = vmatpush.msra.mxu0 0.0
      %7031 = vmatpush.msra.mxu0 0.0
      %7032 = vmatpush.msra.mxu0 0.0
      %7033 = vmatpush.msra.mxu0 0.0
      %7034 = vmatpush.msra.mxu0 0.0
      %7035 = vmatpush.msra.mxu0 0.0
      %7036 = vmatpush.msra.mxu0 0.0
      %7037 = vmatpush.msra.mxu0 %v6908
      %7038 = vmatmul.f32.gmra.mxu0 %v6896
      %v7039 = vpop.f32.mrf.mxu0
      %v7040 = vadd.f32 0.0, %v7039
      %7041 = vdwg.mxu0
      %7042 = vmatpush.msra.mxu0 0.0
      %7043 = vmatpush.msra.mxu0 0.0
      %7044 = vmatpush.msra.mxu0 0.0
      %7045 = vmatpush.msra.mxu0 0.0
      %7046 = vmatpush.msra.mxu0 0.0
      %7047 = vmatpush.msra.mxu0 0.0
      %7048 = vmatpush.msra.mxu0 0.0
      %7049 = vmatpush.msra.mxu0 0.0
      %7050 = vmatpush.msra.mxu0 0.0
      %7051 = vmatpush.msra.mxu0 0.0
      %7052 = vmatpush.msra.mxu0 0.0
      %7053 = vmatpush.msra.mxu0 0.0
      %7054 = vmatpush.msra.mxu0 0.0
      %7055 = vmatpush.msra.mxu0 0.0
      %7056 = vmatpush.msra.mxu0 0.0
      %7057 = vmatpush.msra.mxu0 %v6910
      %7058 = vmatmul.f32.gmra.mxu0 %v6896
      %v7059 = vpop.f32.mrf.mxu0
      %v7060 = vadd.f32 0.0, %v7059
      %7061 = vdwg.mxu0
      %7062 = vmatpush.msra.mxu0 0.0
      %7063 = vmatpush.msra.mxu0 0.0
      %7064 = vmatpush.msra.mxu0 0.0
      %7065 = vmatpush.msra.mxu0 0.0
      %7066 = vmatpush.msra.mxu0 0.0
      %7067 = vmatpush.msra.mxu0 0.0
      %7068 = vmatpush.msra.mxu0 0.0
      %7069 = vmatpush.msra.mxu0 0.0
      %7070 = vmatpush.msra.mxu0 0.0
      %7071 = vmatpush.msra.mxu0 0.0
      %7072 = vmatpush.msra.mxu0 0.0
      %7073 = vmatpush.msra.mxu0 0.0
      %7074 = vmatpush.msra.mxu0 0.0
      %7075 = vmatpush.msra.mxu0 0.0
      %7076 = vmatpush.msra.mxu0 0.0
      %7077 = vmatpush.msra.mxu0 %v6912
      %7078 = vmatmul.f32.gmra.mxu0 %v6896
      %v7079 = vpop.f32.mrf.mxu0
      %v7080 = vadd.f32 0.0, %v7079
      %7081 = vdwg.mxu0
      %7082 = vmatpush.msra.mxu0 0.0
      %7083 = vmatpush.msra.mxu0 0.0
      %7084 = vmatpush.msra.mxu0 0.0
      %7085 = vmatpush.msra.mxu0 0.0
      %7086 = vmatpush.msra.mxu0 0.0
      %7087 = vmatpush.msra.mxu0 0.0
      %7088 = vmatpush.msra.mxu0 0.0
      %7089 = vmatpush.msra.mxu0 0.0
      %7090 = vmatpush.msra.mxu0 0.0
      %7091 = vmatpush.msra.mxu0 0.0
      %7092 = vmatpush.msra.mxu0 0.0
      %7093 = vmatpush.msra.mxu0 0.0
      %7094 = vmatpush.msra.mxu0 0.0
      %7095 = vmatpush.msra.mxu0 0.0
      %7096 = vmatpush.msra.mxu0 0.0
      %7097 = vmatpush.msra.mxu0 %v6914
      %7098 = vmatmul.f32.gmra.mxu0 %v6896
      %v7099 = vpop.f32.mrf.mxu0
      %v7100 = vadd.f32 0.0, %v7099
      %7101 = vdwg.mxu0
      %7102 = vmatpush.msra.mxu0 0.0
      %7103 = vmatpush.msra.mxu0 0.0
      %7104 = vmatpush.msra.mxu0 0.0
      %7105 = vmatpush.msra.mxu0 0.0
      %7106 = vmatpush.msra.mxu0 0.0
      %7107 = vmatpush.msra.mxu0 0.0
      %7108 = vmatpush.msra.mxu0 0.0
      %7109 = vmatpush.msra.mxu0 0.0
      %7110 = vmatpush.msra.mxu0 0.0
      %7111 = vmatpush.msra.mxu0 0.0
      %7112 = vmatpush.msra.mxu0 0.0
      %7113 = vmatpush.msra.mxu0 0.0
      %7114 = vmatpush.msra.mxu0 0.0
      %7115 = vmatpush.msra.mxu0 0.0
      %7116 = vmatpush.msra.mxu0 0.0
      %7117 = vmatpush.msra.mxu0 %v6916
      %7118 = vmatmul.f32.gmra.mxu0 %v6896
      %v7119 = vpop.f32.mrf.mxu0
      %v7120 = vadd.f32 0.0, %v7119
      %7121 = vdwg.mxu0
      %7122 = vmatpush.msra.mxu0 0.0
      %7123 = vmatpush.msra.mxu0 0.0
      %7124 = vmatpush.msra.mxu0 0.0
      %7125 = vmatpush.msra.mxu0 0.0
      %7126 = vmatpush.msra.mxu0 0.0
      %7127 = vmatpush.msra.mxu0 0.0
      %7128 = vmatpush.msra.mxu0 0.0
      %7129 = vmatpush.msra.mxu0 0.0
      %7130 = vmatpush.msra.mxu0 0.0
      %7131 = vmatpush.msra.mxu0 0.0
      %7132 = vmatpush.msra.mxu0 0.0
      %7133 = vmatpush.msra.mxu0 0.0
      %7134 = vmatpush.msra.mxu0 0.0
      %7135 = vmatpush.msra.mxu0 0.0
      %7136 = vmatpush.msra.mxu0 0.0
      %7137 = vmatpush.msra.mxu0 %v6918
      %7138 = vmatmul.f32.gmra.mxu0 %v6896
      %v7139 = vpop.f32.mrf.mxu0
      %v7140 = vadd.f32 0.0, %v7139
      %7141 = vdwg.mxu0
      %7142 = vmatpush.msra.mxu0 0.0
      %7143 = vmatpush.msra.mxu0 0.0
      %7144 = vmatpush.msra.mxu0 0.0
      %7145 = vmatpush.msra.mxu0 0.0
      %7146 = vmatpush.msra.mxu0 0.0
      %7147 = vmatpush.msra.mxu0 0.0
      %7148 = vmatpush.msra.mxu0 0.0
      %7149 = vmatpush.msra.mxu0 0.0
      %7150 = vmatpush.msra.mxu0 0.0
      %7151 = vmatpush.msra.mxu0 0.0
      %7152 = vmatpush.msra.mxu0 0.0
      %7153 = vmatpush.msra.mxu0 0.0
      %7154 = vmatpush.msra.mxu0 0.0
      %7155 = vmatpush.msra.mxu0 0.0
      %7156 = vmatpush.msra.mxu0 0.0
      %7157 = vmatpush.msra.mxu0 %v6920
      %7158 = vmatmul.f32.gmra.mxu0 %v6896
      %v7159 = vpop.f32.mrf.mxu0
      %v7160 = vadd.f32 0.0, %v7159
      %7161 = vdwg.mxu0
      %v7162 = vadd.f32 %v6797, %v6940
      %v7163 = vadd.f32 %v6798, %v6960
      %v7164 = vadd.f32 %v6799, %v6980
      %v7165 = vadd.f32 %v6800, %v7000
      %v7166 = vadd.f32 %v6801, %v7020
      %v7167 = vadd.f32 %v6802, %v7040
      %v7168 = vadd.f32 %v6803, %v7060
      %v7169 = vadd.f32 %v6804, %v7080
      %v7170 = vadd.f32 %v6805, %v7100
      %v7171 = vadd.f32 %v6806, %v7120
      %v7172 = vadd.f32 %v6807, %v7140
      %v7173 = vadd.f32 %v6808, %v7160
      %v7174 = vld [vmem:[#allocation2 + $0x4] sm:$0xff]
      %v7175 = vld [vmem:[#allocation2 + $0xc] sm:$0xff]
      %v7176 = vld [vmem:[#allocation2 + $0x14] sm:$0xff]
      %v7177 = vld [vmem:[#allocation2 + $0x1c] sm:$0xff]
      %v7178 = vld [vmem:[#allocation2 + $0x24] sm:$0xff]
      %v7179 = vld [vmem:[#allocation2 + $0x2c] sm:$0xff]
      %v7180 = vld [vmem:[#allocation2 + $0x34] sm:$0xff]
      %v7181 = vld [vmem:[#allocation2 + $0x3c] sm:$0xf]
      %7182 = vrot.lane.b32.xlu0 %v689, 56
      %v7183 = vpop.permute.xlu0 %7182
      %7192 = vst [vmem:[#allocation1] ss:$2 sm:$0xff] %v7174
      %s7193 = scalar_lea.vmem [#allocation1], 16
      %7194 = vst [vmem:[%s7193] ss:$2 sm:$0xff] %v7175
      %s7195 = scalar_lea.vmem [#allocation1], 32
      %7196 = vst [vmem:[%s7195] ss:$2 sm:$0xff] %v7176
      %s7197 = scalar_lea.vmem [#allocation1], 48
      %7198 = vst [vmem:[%s7197] ss:$2 sm:$0xff] %v7177
      %v7199 = vld.sshfl [vmem:[#allocation1] sm:$0xff pattern:$0x75316420]
      %v7200 = vld.sshfl [vmem:[#allocation1 + $0x8] sm:$0xff pattern:$0x75316420]
      %v7201 = vld.sshfl [vmem:[#allocation1 + $0x10] sm:$0xff pattern:$0x75316420]
      %v7202 = vld.sshfl [vmem:[#allocation1 + $0x18] sm:$0xff pattern:$0x75316420]
      %v7203 = vld.sshfl [vmem:[#allocation1 + $0x20] sm:$0xff pattern:$0x75316420]
      %v7204 = vld.sshfl [vmem:[#allocation1 + $0x28] sm:$0xff pattern:$0x75316420]
      %v7205 = vld.sshfl [vmem:[#allocation1 + $0x30] sm:$0xff pattern:$0x75316420]
      %v7206 = vld.sshfl [vmem:[#allocation1 + $0x38] sm:$0xff pattern:$0x75316420]
      %7207 = vst [vmem:[#allocation1] ss:$2 sm:$0xff] %v7178
      %7208 = vst [vmem:[%s7193] ss:$2 sm:$0xff] %v7179
      %7209 = vst [vmem:[%s7195] ss:$2 sm:$0xff] %v7180
      %7210 = vst [vmem:[%s7197] ss:$2 sm:$0xff] %v7181
      %v7211 = vld.sshfl [vmem:[#allocation1] sm:$0xff pattern:$0x75316420]
      %v7212 = vld.sshfl [vmem:[#allocation1 + $0x8] sm:$0xff pattern:$0x75316420]
      %v7213 = vld.sshfl [vmem:[#allocation1 + $0x10] sm:$0xff pattern:$0x75316420]
      %v7214 = vld.sshfl [vmem:[#allocation1 + $0x18] sm:$0xff pattern:$0x75316420]
      %v7215 = vld.sshfl [vmem:[#allocation1 + $0x20] sm:$0xff pattern:$0x75316420]
      %v7216 = vld.sshfl [vmem:[#allocation1 + $0x28] sm:$0xff pattern:$0x75316420]
      %v7217 = vld.sshfl [vmem:[#allocation1 + $0x30] sm:$0xff pattern:$0x75316420]
      %7218 = vrot.lane.b32.xlu0 %v7199, 39
      %v7219 = vpop.permute.xlu0 %7218
      %7220 = vrot.lane.b32.xlu0 %v7200, 39
      %v7221 = vpop.permute.xlu0 %7220
      %7222 = vrot.lane.b32.xlu0 %v7201, 39
      %v7223 = vpop.permute.xlu0 %7222
      %7224 = vrot.lane.b32.xlu0 %v7202, 39
      %v7225 = vpop.permute.xlu0 %7224
      %7226 = vrot.lane.b32.xlu0 %v7203, 39
      %v7227 = vpop.permute.xlu0 %7226
      %7228 = vrot.lane.b32.xlu0 %v7204, 39
      %v7229 = vpop.permute.xlu0 %7228
      %7230 = vrot.lane.b32.xlu0 %v7205, 39
      %v7231 = vpop.permute.xlu0 %7230
      %7232 = vrot.lane.b32.xlu0 %v7206, 39
      %v7233 = vpop.permute.xlu0 %7232
      %7234 = vrot.lane.b32.xlu0 %v7211, 39
      %v7235 = vpop.permute.xlu0 %7234
      %7236 = vrot.lane.b32.xlu0 %v7212, 39
      %v7237 = vpop.permute.xlu0 %7236
      %7238 = vrot.lane.b32.xlu0 %v7213, 39
      %v7239 = vpop.permute.xlu0 %7238
      %7240 = vrot.lane.b32.xlu0 %v7214, 39
      %v7241 = vpop.permute.xlu0 %7240
      %7242 = vrot.lane.b32.xlu0 %v7215, 39
      %v7243 = vpop.permute.xlu0 %7242
      %7244 = vrot.lane.b32.xlu0 %v7216, 39
      %v7245 = vpop.permute.xlu0 %7244
      %7246 = vrot.lane.b32.xlu0 %v7217, 39
      %v7247 = vpop.permute.xlu0 %7246
      %vm7248 = vcmask 318464
      %v7249 = vsel %vm7248, %v7219, %v7221
      %v7250 = vsel %vm7248, %v7221, %v7223
      %v7251 = vsel %vm7248, %v7223, %v7225
      %v7252 = vsel %vm7248, %v7225, %v7227
      %v7253 = vsel %vm7248, %v7229, %v7231
      %v7254 = vsel %vm7248, %v7231, %v7233
      %v7255 = vsel %vm7248, %v7233, %v7235
      %v7256 = vsel %vm7248, %v7235, %v7237
      %v7257 = vsel %vm7248, %v7239, %v7241
      %v7258 = vsel %vm7248, %v7241, %v7243
      %v7259 = vsel %vm7248, %v7243, %v7245
      %v7260 = vsel %vm7248, %v7245, %v7247
      %v7261 = vsel %vm778, %v7183, 0
      %v7263 = vsel %vm640, %v7249, 0
      %v7265 = vsel %vm640, %v7250, 0
      %v7267 = vsel %vm640, %v7251, 0
      %v7269 = vsel %vm640, %v7252, 0
      %v7271 = vsel %vm640, %v7253, 0
      %v7273 = vsel %vm640, %v7254, 0
      %v7275 = vsel %vm640, %v7255, 0
      %v7277 = vsel %vm640, %v7256, 0
      %v7279 = vsel %vm640, %v7257, 0
      %v7281 = vsel %vm640, %v7258, 0
      %v7283 = vsel %vm640, %v7259, 0
      %v7285 = vsel %vm640, %v7260, 0
      %7287 = vmatpush.msra.mxu0 0.0
      %7288 = vmatpush.msra.mxu0 0.0
      %7289 = vmatpush.msra.mxu0 0.0
      %7290 = vmatpush.msra.mxu0 0.0
      %7291 = vmatpush.msra.mxu0 0.0
      %7292 = vmatpush.msra.mxu0 0.0
      %7293 = vmatpush.msra.mxu0 0.0
      %7294 = vmatpush.msra.mxu0 0.0
      %7295 = vmatpush.msra.mxu0 0.0
      %7296 = vmatpush.msra.mxu0 0.0
      %7297 = vmatpush.msra.mxu0 0.0
      %7298 = vmatpush.msra.mxu0 0.0
      %7299 = vmatpush.msra.mxu0 0.0
      %7300 = vmatpush.msra.mxu0 0.0
      %7301 = vmatpush.msra.mxu0 0.0
      %7302 = vmatpush.msra.mxu0 %v7263
      %7303 = vmatmul.f32.gmra.mxu0 %v7261
      %v7304 = vpop.f32.mrf.mxu0
      %v7305 = vadd.f32 0.0, %v7304
      %7306 = vdwg.mxu0
      %7307 = vmatpush.msra.mxu0 0.0
      %7308 = vmatpush.msra.mxu0 0.0
      %7309 = vmatpush.msra.mxu0 0.0
      %7310 = vmatpush.msra.mxu0 0.0
      %7311 = vmatpush.msra.mxu0 0.0
      %7312 = vmatpush.msra.mxu0 0.0
      %7313 = vmatpush.msra.mxu0 0.0
      %7314 = vmatpush.msra.mxu0 0.0
      %7315 = vmatpush.msra.mxu0 0.0
      %7316 = vmatpush.msra.mxu0 0.0
      %7317 = vmatpush.msra.mxu0 0.0
      %7318 = vmatpush.msra.mxu0 0.0
      %7319 = vmatpush.msra.mxu0 0.0
      %7320 = vmatpush.msra.mxu0 0.0
      %7321 = vmatpush.msra.mxu0 0.0
      %7322 = vmatpush.msra.mxu0 %v7265
      %7323 = vmatmul.f32.gmra.mxu0 %v7261
      %v7324 = vpop.f32.mrf.mxu0
      %v7325 = vadd.f32 0.0, %v7324
      %7326 = vdwg.mxu0
      %7327 = vmatpush.msra.mxu0 0.0
      %7328 = vmatpush.msra.mxu0 0.0
      %7329 = vmatpush.msra.mxu0 0.0
      %7330 = vmatpush.msra.mxu0 0.0
      %7331 = vmatpush.msra.mxu0 0.0
      %7332 = vmatpush.msra.mxu0 0.0
      %7333 = vmatpush.msra.mxu0 0.0
      %7334 = vmatpush.msra.mxu0 0.0
      %7335 = vmatpush.msra.mxu0 0.0
      %7336 = vmatpush.msra.mxu0 0.0
      %7337 = vmatpush.msra.mxu0 0.0
      %7338 = vmatpush.msra.mxu0 0.0
      %7339 = vmatpush.msra.mxu0 0.0
      %7340 = vmatpush.msra.mxu0 0.0
      %7341 = vmatpush.msra.mxu0 0.0
      %7342 = vmatpush.msra.mxu0 %v7267
      %7343 = vmatmul.f32.gmra.mxu0 %v7261
      %v7344 = vpop.f32.mrf.mxu0
      %v7345 = vadd.f32 0.0, %v7344
      %7346 = vdwg.mxu0
      %7347 = vmatpush.msra.mxu0 0.0
      %7348 = vmatpush.msra.mxu0 0.0
      %7349 = vmatpush.msra.mxu0 0.0
      %7350 = vmatpush.msra.mxu0 0.0
      %7351 = vmatpush.msra.mxu0 0.0
      %7352 = vmatpush.msra.mxu0 0.0
      %7353 = vmatpush.msra.mxu0 0.0
      %7354 = vmatpush.msra.mxu0 0.0
      %7355 = vmatpush.msra.mxu0 0.0
      %7356 = vmatpush.msra.mxu0 0.0
      %7357 = vmatpush.msra.mxu0 0.0
      %7358 = vmatpush.msra.mxu0 0.0
      %7359 = vmatpush.msra.mxu0 0.0
      %7360 = vmatpush.msra.mxu0 0.0
      %7361 = vmatpush.msra.mxu0 0.0
      %7362 = vmatpush.msra.mxu0 %v7269
      %7363 = vmatmul.f32.gmra.mxu0 %v7261
      %v7364 = vpop.f32.mrf.mxu0
      %v7365 = vadd.f32 0.0, %v7364
      %7366 = vdwg.mxu0
      %7367 = vmatpush.msra.mxu0 0.0
      %7368 = vmatpush.msra.mxu0 0.0
      %7369 = vmatpush.msra.mxu0 0.0
      %7370 = vmatpush.msra.mxu0 0.0
      %7371 = vmatpush.msra.mxu0 0.0
      %7372 = vmatpush.msra.mxu0 0.0
      %7373 = vmatpush.msra.mxu0 0.0
      %7374 = vmatpush.msra.mxu0 0.0
      %7375 = vmatpush.msra.mxu0 0.0
      %7376 = vmatpush.msra.mxu0 0.0
      %7377 = vmatpush.msra.mxu0 0.0
      %7378 = vmatpush.msra.mxu0 0.0
      %7379 = vmatpush.msra.mxu0 0.0
      %7380 = vmatpush.msra.mxu0 0.0
      %7381 = vmatpush.msra.mxu0 0.0
      %7382 = vmatpush.msra.mxu0 %v7271
      %7383 = vmatmul.f32.gmra.mxu0 %v7261
      %v7384 = vpop.f32.mrf.mxu0
      %v7385 = vadd.f32 0.0, %v7384
      %7386 = vdwg.mxu0
      %7387 = vmatpush.msra.mxu0 0.0
      %7388 = vmatpush.msra.mxu0 0.0
      %7389 = vmatpush.msra.mxu0 0.0
      %7390 = vmatpush.msra.mxu0 0.0
      %7391 = vmatpush.msra.mxu0 0.0
      %7392 = vmatpush.msra.mxu0 0.0
      %7393 = vmatpush.msra.mxu0 0.0
      %7394 = vmatpush.msra.mxu0 0.0
      %7395 = vmatpush.msra.mxu0 0.0
      %7396 = vmatpush.msra.mxu0 0.0
      %7397 = vmatpush.msra.mxu0 0.0
      %7398 = vmatpush.msra.mxu0 0.0
      %7399 = vmatpush.msra.mxu0 0.0
      %7400 = vmatpush.msra.mxu0 0.0
      %7401 = vmatpush.msra.mxu0 0.0
      %7402 = vmatpush.msra.mxu0 %v7273
      %7403 = vmatmul.f32.gmra.mxu0 %v7261
      %v7404 = vpop.f32.mrf.mxu0
      %v7405 = vadd.f32 0.0, %v7404
      %7406 = vdwg.mxu0
      %7407 = vmatpush.msra.mxu0 0.0
      %7408 = vmatpush.msra.mxu0 0.0
      %7409 = vmatpush.msra.mxu0 0.0
      %7410 = vmatpush.msra.mxu0 0.0
      %7411 = vmatpush.msra.mxu0 0.0
      %7412 = vmatpush.msra.mxu0 0.0
      %7413 = vmatpush.msra.mxu0 0.0
      %7414 = vmatpush.msra.mxu0 0.0
      %7415 = vmatpush.msra.mxu0 0.0
      %7416 = vmatpush.msra.mxu0 0.0
      %7417 = vmatpush.msra.mxu0 0.0
      %7418 = vmatpush.msra.mxu0 0.0
      %7419 = vmatpush.msra.mxu0 0.0
      %7420 = vmatpush.msra.mxu0 0.0
      %7421 = vmatpush.msra.mxu0 0.0
      %7422 = vmatpush.msra.mxu0 %v7275
      %7423 = vmatmul.f32.gmra.mxu0 %v7261
      %v7424 = vpop.f32.mrf.mxu0
      %v7425 = vadd.f32 0.0, %v7424
      %7426 = vdwg.mxu0
      %7427 = vmatpush.msra.mxu0 0.0
      %7428 = vmatpush.msra.mxu0 0.0
      %7429 = vmatpush.msra.mxu0 0.0
      %7430 = vmatpush.msra.mxu0 0.0
      %7431 = vmatpush.msra.mxu0 0.0
      %7432 = vmatpush.msra.mxu0 0.0
      %7433 = vmatpush.msra.mxu0 0.0
      %7434 = vmatpush.msra.mxu0 0.0
      %7435 = vmatpush.msra.mxu0 0.0
      %7436 = vmatpush.msra.mxu0 0.0
      %7437 = vmatpush.msra.mxu0 0.0
      %7438 = vmatpush.msra.mxu0 0.0
      %7439 = vmatpush.msra.mxu0 0.0
      %7440 = vmatpush.msra.mxu0 0.0
      %7441 = vmatpush.msra.mxu0 0.0
      %7442 = vmatpush.msra.mxu0 %v7277
      %7443 = vmatmul.f32.gmra.mxu0 %v7261
      %v7444 = vpop.f32.mrf.mxu0
      %v7445 = vadd.f32 0.0, %v7444
      %7446 = vdwg.mxu0
      %7447 = vmatpush.msra.mxu0 0.0
      %7448 = vmatpush.msra.mxu0 0.0
      %7449 = vmatpush.msra.mxu0 0.0
      %7450 = vmatpush.msra.mxu0 0.0
      %7451 = vmatpush.msra.mxu0 0.0
      %7452 = vmatpush.msra.mxu0 0.0
      %7453 = vmatpush.msra.mxu0 0.0
      %7454 = vmatpush.msra.mxu0 0.0
      %7455 = vmatpush.msra.mxu0 0.0
      %7456 = vmatpush.msra.mxu0 0.0
      %7457 = vmatpush.msra.mxu0 0.0
      %7458 = vmatpush.msra.mxu0 0.0
      %7459 = vmatpush.msra.mxu0 0.0
      %7460 = vmatpush.msra.mxu0 0.0
      %7461 = vmatpush.msra.mxu0 0.0
      %7462 = vmatpush.msra.mxu0 %v7279
      %7463 = vmatmul.f32.gmra.mxu0 %v7261
      %v7464 = vpop.f32.mrf.mxu0
      %v7465 = vadd.f32 0.0, %v7464
      %7466 = vdwg.mxu0
      %7467 = vmatpush.msra.mxu0 0.0
      %7468 = vmatpush.msra.mxu0 0.0
      %7469 = vmatpush.msra.mxu0 0.0
      %7470 = vmatpush.msra.mxu0 0.0
      %7471 = vmatpush.msra.mxu0 0.0
      %7472 = vmatpush.msra.mxu0 0.0
      %7473 = vmatpush.msra.mxu0 0.0
      %7474 = vmatpush.msra.mxu0 0.0
      %7475 = vmatpush.msra.mxu0 0.0
      %7476 = vmatpush.msra.mxu0 0.0
      %7477 = vmatpush.msra.mxu0 0.0
      %7478 = vmatpush.msra.mxu0 0.0
      %7479 = vmatpush.msra.mxu0 0.0
      %7480 = vmatpush.msra.mxu0 0.0
      %7481 = vmatpush.msra.mxu0 0.0
      %7482 = vmatpush.msra.mxu0 %v7281
      %7483 = vmatmul.f32.gmra.mxu0 %v7261
      %v7484 = vpop.f32.mrf.mxu0
      %v7485 = vadd.f32 0.0, %v7484
      %7486 = vdwg.mxu0
      %7487 = vmatpush.msra.mxu0 0.0
      %7488 = vmatpush.msra.mxu0 0.0
      %7489 = vmatpush.msra.mxu0 0.0
      %7490 = vmatpush.msra.mxu0 0.0
      %7491 = vmatpush.msra.mxu0 0.0
      %7492 = vmatpush.msra.mxu0 0.0
      %7493 = vmatpush.msra.mxu0 0.0
      %7494 = vmatpush.msra.mxu0 0.0
      %7495 = vmatpush.msra.mxu0 0.0
      %7496 = vmatpush.msra.mxu0 0.0
      %7497 = vmatpush.msra.mxu0 0.0
      %7498 = vmatpush.msra.mxu0 0.0
      %7499 = vmatpush.msra.mxu0 0.0
      %7500 = vmatpush.msra.mxu0 0.0
      %7501 = vmatpush.msra.mxu0 0.0
      %7502 = vmatpush.msra.mxu0 %v7283
      %7503 = vmatmul.f32.gmra.mxu0 %v7261
      %v7504 = vpop.f32.mrf.mxu0
      %v7505 = vadd.f32 0.0, %v7504
      %7506 = vdwg.mxu0
      %7507 = vmatpush.msra.mxu0 0.0
      %7508 = vmatpush.msra.mxu0 0.0
      %7509 = vmatpush.msra.mxu0 0.0
      %7510 = vmatpush.msra.mxu0 0.0
      %7511 = vmatpush.msra.mxu0 0.0
      %7512 = vmatpush.msra.mxu0 0.0
      %7513 = vmatpush.msra.mxu0 0.0
      %7514 = vmatpush.msra.mxu0 0.0
      %7515 = vmatpush.msra.mxu0 0.0
      %7516 = vmatpush.msra.mxu0 0.0
      %7517 = vmatpush.msra.mxu0 0.0
      %7518 = vmatpush.msra.mxu0 0.0
      %7519 = vmatpush.msra.mxu0 0.0
      %7520 = vmatpush.msra.mxu0 0.0
      %7521 = vmatpush.msra.mxu0 0.0
      %7522 = vmatpush.msra.mxu0 %v7285
      %7523 = vmatmul.f32.gmra.mxu0 %v7261
      %v7524 = vpop.f32.mrf.mxu0
      %v7525 = vadd.f32 0.0, %v7524
      %7526 = vdwg.mxu0
      %v7527 = vadd.f32 %v7162, %v7305
      %v7528 = vadd.f32 %v7163, %v7325
      %v7529 = vadd.f32 %v7164, %v7345
      %v7530 = vadd.f32 %v7165, %v7365
      %v7531 = vadd.f32 %v7166, %v7385
      %v7532 = vadd.f32 %v7167, %v7405
      %v7533 = vadd.f32 %v7168, %v7425
      %v7534 = vadd.f32 %v7169, %v7445
      %v7535 = vadd.f32 %v7170, %v7465
      %v7536 = vadd.f32 %v7171, %v7485
      %v7537 = vadd.f32 %v7172, %v7505
      %v7538 = vadd.f32 %v7173, %v7525
      %v7539 = vld [vmem:[#allocation2 + $0x4] sm:$0xff]
      %v7540 = vld [vmem:[#allocation2 + $0xc] sm:$0xff]
      %v7541 = vld [vmem:[#allocation2 + $0x14] sm:$0xff]
      %v7542 = vld [vmem:[#allocation2 + $0x1c] sm:$0xff]
      %v7543 = vld [vmem:[#allocation2 + $0x24] sm:$0xff]
      %v7544 = vld [vmem:[#allocation2 + $0x2c] sm:$0xff]
      %v7545 = vld [vmem:[#allocation2 + $0x34] sm:$0xff]
      %v7546 = vld [vmem:[#allocation2 + $0x3c] sm:$0xf]
      %7547 = vrot.lane.b32.xlu0 %v689, 52
      %v7548 = vpop.permute.xlu0 %7547
      %7557 = vst [vmem:[#allocation1] ss:$2 sm:$0xff] %v7539
      %s7558 = scalar_lea.vmem [#allocation1], 16
      %7559 = vst [vmem:[%s7558] ss:$2 sm:$0xff] %v7540
      %s7560 = scalar_lea.vmem [#allocation1], 32
      %7561 = vst [vmem:[%s7560] ss:$2 sm:$0xff] %v7541
      %s7562 = scalar_lea.vmem [#allocation1], 48
      %7563 = vst [vmem:[%s7562] ss:$2 sm:$0xff] %v7542
      %v7564 = vld.sshfl [vmem:[#allocation1] sm:$0xff pattern:$0x75316420]
      %v7565 = vld.sshfl [vmem:[#allocation1 + $0x8] sm:$0xff pattern:$0x75316420]
      %v7566 = vld.sshfl [vmem:[#allocation1 + $0x10] sm:$0xff pattern:$0x75316420]
      %v7567 = vld.sshfl [vmem:[#allocation1 + $0x18] sm:$0xff pattern:$0x75316420]
      %v7568 = vld.sshfl [vmem:[#allocation1 + $0x20] sm:$0xff pattern:$0x75316420]
      %v7569 = vld.sshfl [vmem:[#allocation1 + $0x28] sm:$0xff pattern:$0x75316420]
      %v7570 = vld.sshfl [vmem:[#allocation1 + $0x30] sm:$0xff pattern:$0x75316420]
      %v7571 = vld.sshfl [vmem:[#allocation1 + $0x38] sm:$0xff pattern:$0x75316420]
      %7572 = vst [vmem:[#allocation1] ss:$2 sm:$0xff] %v7543
      %7573 = vst [vmem:[%s7558] ss:$2 sm:$0xff] %v7544
      %7574 = vst [vmem:[%s7560] ss:$2 sm:$0xff] %v7545
      %7575 = vst [vmem:[%s7562] ss:$2 sm:$0xff] %v7546
      %v7576 = vld.sshfl [vmem:[#allocation1] sm:$0xff pattern:$0x75316420]
      %v7577 = vld.sshfl [vmem:[#allocation1 + $0x8] sm:$0xff pattern:$0x75316420]
      %v7578 = vld.sshfl [vmem:[#allocation1 + $0x10] sm:$0xff pattern:$0x75316420]
      %v7579 = vld.sshfl [vmem:[#allocation1 + $0x18] sm:$0xff pattern:$0x75316420]
      %v7580 = vld.sshfl [vmem:[#allocation1 + $0x20] sm:$0xff pattern:$0x75316420]
      %v7581 = vld.sshfl [vmem:[#allocation1 + $0x28] sm:$0xff pattern:$0x75316420]
      %v7582 = vld.sshfl [vmem:[#allocation1 + $0x30] sm:$0xff pattern:$0x75316420]
      %7583 = vrot.lane.b32.xlu0 %v7564, 38
      %v7584 = vpop.permute.xlu0 %7583
      %7585 = vrot.lane.b32.xlu0 %v7565, 38
      %v7586 = vpop.permute.xlu0 %7585
      %7587 = vrot.lane.b32.xlu0 %v7566, 38
      %v7588 = vpop.permute.xlu0 %7587
      %7589 = vrot.lane.b32.xlu0 %v7567, 38
      %v7590 = vpop.permute.xlu0 %7589
      %7591 = vrot.lane.b32.xlu0 %v7568, 38
      %v7592 = vpop.permute.xlu0 %7591
      %7593 = vrot.lane.b32.xlu0 %v7569, 38
      %v7594 = vpop.permute.xlu0 %7593
      %7595 = vrot.lane.b32.xlu0 %v7570, 38
      %v7596 = vpop.permute.xlu0 %7595
      %7597 = vrot.lane.b32.xlu0 %v7571, 38
      %v7598 = vpop.permute.xlu0 %7597
      %7599 = vrot.lane.b32.xlu0 %v7576, 38
      %v7600 = vpop.permute.xlu0 %7599
      %7601 = vrot.lane.b32.xlu0 %v7577, 38
      %v7602 = vpop.permute.xlu0 %7601
      %7603 = vrot.lane.b32.xlu0 %v7578, 38
      %v7604 = vpop.permute.xlu0 %7603
      %7605 = vrot.lane.b32.xlu0 %v7579, 38
      %v7606 = vpop.permute.xlu0 %7605
      %7607 = vrot.lane.b32.xlu0 %v7580, 38
      %v7608 = vpop.permute.xlu0 %7607
      %7609 = vrot.lane.b32.xlu0 %v7581, 38
      %v7610 = vpop.permute.xlu0 %7609
      %7611 = vrot.lane.b32.xlu0 %v7582, 38
      %v7612 = vpop.permute.xlu0 %7611
      %vm7613 = vcmask 310272
      %v7614 = vsel %vm7613, %v7584, %v7586
      %v7615 = vsel %vm7613, %v7586, %v7588
      %v7616 = vsel %vm7613, %v7588, %v7590
      %v7617 = vsel %vm7613, %v7590, %v7592
      %v7618 = vsel %vm7613, %v7594, %v7596
      %v7619 = vsel %vm7613, %v7596, %v7598
      %v7620 = vsel %vm7613, %v7598, %v7600
      %v7621 = vsel %vm7613, %v7600, %v7602
      %v7622 = vsel %vm7613, %v7604, %v7606
      %v7623 = vsel %vm7613, %v7606, %v7608
      %v7624 = vsel %vm7613, %v7608, %v7610
      %v7625 = vsel %vm7613, %v7610, %v7612
      %v7626 = vsel %vm778, %v7548, 0
      %v7628 = vsel %vm640, %v7614, 0
      %v7630 = vsel %vm640, %v7615, 0
      %v7632 = vsel %vm640, %v7616, 0
      %v7634 = vsel %vm640, %v7617, 0
      %v7636 = vsel %vm640, %v7618, 0
      %v7638 = vsel %vm640, %v7619, 0
      %v7640 = vsel %vm640, %v7620, 0
      %v7642 = vsel %vm640, %v7621, 0
      %v7644 = vsel %vm640, %v7622, 0
      %v7646 = vsel %vm640, %v7623, 0
      %v7648 = vsel %vm640, %v7624, 0
      %v7650 = vsel %vm640, %v7625, 0
      %7652 = vmatpush.msra.mxu0 0.0
      %7653 = vmatpush.msra.mxu0 0.0
      %7654 = vmatpush.msra.mxu0 0.0
      %7655 = vmatpush.msra.mxu0 0.0
      %7656 = vmatpush.msra.mxu0 0.0
      %7657 = vmatpush.msra.mxu0 0.0
      %7658 = vmatpush.msra.mxu0 0.0
      %7659 = vmatpush.msra.mxu0 0.0
      %7660 = vmatpush.msra.mxu0 0.0
      %7661 = vmatpush.msra.mxu0 0.0
      %7662 = vmatpush.msra.mxu0 0.0
      %7663 = vmatpush.msra.mxu0 0.0
      %7664 = vmatpush.msra.mxu0 0.0
      %7665 = vmatpush.msra.mxu0 0.0
      %7666 = vmatpush.msra.mxu0 0.0
      %7667 = vmatpush.msra.mxu0 %v7628
      %7668 = vmatmul.f32.gmra.mxu0 %v7626
      %v7669 = vpop.f32.mrf.mxu0
      %v7670 = vadd.f32 0.0, %v7669
      %7671 = vdwg.mxu0
      %7672 = vmatpush.msra.mxu0 0.0
      %7673 = vmatpush.msra.mxu0 0.0
      %7674 = vmatpush.msra.mxu0 0.0
      %7675 = vmatpush.msra.mxu0 0.0
      %7676 = vmatpush.msra.mxu0 0.0
      %7677 = vmatpush.msra.mxu0 0.0
      %7678 = vmatpush.msra.mxu0 0.0
      %7679 = vmatpush.msra.mxu0 0.0
      %7680 = vmatpush.msra.mxu0 0.0
      %7681 = vmatpush.msra.mxu0 0.0
      %7682 = vmatpush.msra.mxu0 0.0
      %7683 = vmatpush.msra.mxu0 0.0
      %7684 = vmatpush.msra.mxu0 0.0
      %7685 = vmatpush.msra.mxu0 0.0
      %7686 = vmatpush.msra.mxu0 0.0
      %7687 = vmatpush.msra.mxu0 %v7630
      %7688 = vmatmul.f32.gmra.mxu0 %v7626
      %v7689 = vpop.f32.mrf.mxu0
      %v7690 = vadd.f32 0.0, %v7689
      %7691 = vdwg.mxu0
      %7692 = vmatpush.msra.mxu0 0.0
      %7693 = vmatpush.msra.mxu0 0.0
      %7694 = vmatpush.msra.mxu0 0.0
      %7695 = vmatpush.msra.mxu0 0.0
      %7696 = vmatpush.msra.mxu0 0.0
      %7697 = vmatpush.msra.mxu0 0.0
      %7698 = vmatpush.msra.mxu0 0.0
      %7699 = vmatpush.msra.mxu0 0.0
      %7700 = vmatpush.msra.mxu0 0.0
      %7701 = vmatpush.msra.mxu0 0.0
      %7702 = vmatpush.msra.mxu0 0.0
      %7703 = vmatpush.msra.mxu0 0.0
      %7704 = vmatpush.msra.mxu0 0.0
      %7705 = vmatpush.msra.mxu0 0.0
      %7706 = vmatpush.msra.mxu0 0.0
      %7707 = vmatpush.msra.mxu0 %v7632
      %7708 = vmatmul.f32.gmra.mxu0 %v7626
      %v7709 = vpop.f32.mrf.mxu0
      %v7710 = vadd.f32 0.0, %v7709
      %7711 = vdwg.mxu0
      %7712 = vmatpush.msra.mxu0 0.0
      %7713 = vmatpush.msra.mxu0 0.0
      %7714 = vmatpush.msra.mxu0 0.0
      %7715 = vmatpush.msra.mxu0 0.0
      %7716 = vmatpush.msra.mxu0 0.0
      %7717 = vmatpush.msra.mxu0 0.0
      %7718 = vmatpush.msra.mxu0 0.0
      %7719 = vmatpush.msra.mxu0 0.0
      %7720 = vmatpush.msra.mxu0 0.0
      %7721 = vmatpush.msra.mxu0 0.0
      %7722 = vmatpush.msra.mxu0 0.0
      %7723 = vmatpush.msra.mxu0 0.0
      %7724 = vmatpush.msra.mxu0 0.0
      %7725 = vmatpush.msra.mxu0 0.0
      %7726 = vmatpush.msra.mxu0 0.0
      %7727 = vmatpush.msra.mxu0 %v7634
      %7728 = vmatmul.f32.gmra.mxu0 %v7626
      %v7729 = vpop.f32.mrf.mxu0
      %v7730 = vadd.f32 0.0, %v7729
      %7731 = vdwg.mxu0
      %7732 = vmatpush.msra.mxu0 0.0
      %7733 = vmatpush.msra.mxu0 0.0
      %7734 = vmatpush.msra.mxu0 0.0
      %7735 = vmatpush.msra.mxu0 0.0
      %7736 = vmatpush.msra.mxu0 0.0
      %7737 = vmatpush.msra.mxu0 0.0
      %7738 = vmatpush.msra.mxu0 0.0
      %7739 = vmatpush.msra.mxu0 0.0
      %7740 = vmatpush.msra.mxu0 0.0
      %7741 = vmatpush.msra.mxu0 0.0
      %7742 = vmatpush.msra.mxu0 0.0
      %7743 = vmatpush.msra.mxu0 0.0
      %7744 = vmatpush.msra.mxu0 0.0
      %7745 = vmatpush.msra.mxu0 0.0
      %7746 = vmatpush.msra.mxu0 0.0
      %7747 = vmatpush.msra.mxu0 %v7636
      %7748 = vmatmul.f32.gmra.mxu0 %v7626
      %v7749 = vpop.f32.mrf.mxu0
      %v7750 = vadd.f32 0.0, %v7749
      %7751 = vdwg.mxu0
      %7752 = vmatpush.msra.mxu0 0.0
      %7753 = vmatpush.msra.mxu0 0.0
      %7754 = vmatpush.msra.mxu0 0.0
      %7755 = vmatpush.msra.mxu0 0.0
      %7756 = vmatpush.msra.mxu0 0.0
      %7757 = vmatpush.msra.mxu0 0.0
      %7758 = vmatpush.msra.mxu0 0.0
      %7759 = vmatpush.msra.mxu0 0.0
      %7760 = vmatpush.msra.mxu0 0.0
      %7761 = vmatpush.msra.mxu0 0.0
      %7762 = vmatpush.msra.mxu0 0.0
      %7763 = vmatpush.msra.mxu0 0.0
      %7764 = vmatpush.msra.mxu0 0.0
      %7765 = vmatpush.msra.mxu0 0.0
      %7766 = vmatpush.msra.mxu0 0.0
      %7767 = vmatpush.msra.mxu0 %v7638
      %7768 = vmatmul.f32.gmra.mxu0 %v7626
      %v7769 = vpop.f32.mrf.mxu0
      %v7770 = vadd.f32 0.0, %v7769
      %7771 = vdwg.mxu0
      %7772 = vmatpush.msra.mxu0 0.0
      %7773 = vmatpush.msra.mxu0 0.0
      %7774 = vmatpush.msra.mxu0 0.0
      %7775 = vmatpush.msra.mxu0 0.0
      %7776 = vmatpush.msra.mxu0 0.0
      %7777 = vmatpush.msra.mxu0 0.0
      %7778 = vmatpush.msra.mxu0 0.0
      %7779 = vmatpush.msra.mxu0 0.0
      %7780 = vmatpush.msra.mxu0 0.0
      %7781 = vmatpush.msra.mxu0 0.0
      %7782 = vmatpush.msra.mxu0 0.0
      %7783 = vmatpush.msra.mxu0 0.0
      %7784 = vmatpush.msra.mxu0 0.0
      %7785 = vmatpush.msra.mxu0 0.0
      %7786 = vmatpush.msra.mxu0 0.0
      %7787 = vmatpush.msra.mxu0 %v7640
      %7788 = vmatmul.f32.gmra.mxu0 %v7626
      %v7789 = vpop.f32.mrf.mxu0
      %v7790 = vadd.f32 0.0, %v7789
      %7791 = vdwg.mxu0
      %7792 = vmatpush.msra.mxu0 0.0
      %7793 = vmatpush.msra.mxu0 0.0
      %7794 = vmatpush.msra.mxu0 0.0
      %7795 = vmatpush.msra.mxu0 0.0
      %7796 = vmatpush.msra.mxu0 0.0
      %7797 = vmatpush.msra.mxu0 0.0
      %7798 = vmatpush.msra.mxu0 0.0
      %7799 = vmatpush.msra.mxu0 0.0
      %7800 = vmatpush.msra.mxu0 0.0
      %7801 = vmatpush.msra.mxu0 0.0
      %7802 = vmatpush.msra.mxu0 0.0
      %7803 = vmatpush.msra.mxu0 0.0
      %7804 = vmatpush.msra.mxu0 0.0
      %7805 = vmatpush.msra.mxu0 0.0
      %7806 = vmatpush.msra.mxu0 0.0
      %7807 = vmatpush.msra.mxu0 %v7642
      %7808 = vmatmul.f32.gmra.mxu0 %v7626
      %v7809 = vpop.f32.mrf.mxu0
      %v7810 = vadd.f32 0.0, %v7809
      %7811 = vdwg.mxu0
      %7812 = vmatpush.msra.mxu0 0.0
      %7813 = vmatpush.msra.mxu0 0.0
      %7814 = vmatpush.msra.mxu0 0.0
      %7815 = vmatpush.msra.mxu0 0.0
      %7816 = vmatpush.msra.mxu0 0.0
      %7817 = vmatpush.msra.mxu0 0.0
      %7818 = vmatpush.msra.mxu0 0.0
      %7819 = vmatpush.msra.mxu0 0.0
      %7820 = vmatpush.msra.mxu0 0.0
      %7821 = vmatpush.msra.mxu0 0.0
      %7822 = vmatpush.msra.mxu0 0.0
      %7823 = vmatpush.msra.mxu0 0.0
      %7824 = vmatpush.msra.mxu0 0.0
      %7825 = vmatpush.msra.mxu0 0.0
      %7826 = vmatpush.msra.mxu0 0.0
      %7827 = vmatpush.msra.mxu0 %v7644
      %7828 = vmatmul.f32.gmra.mxu0 %v7626
      %v7829 = vpop.f32.mrf.mxu0
      %v7830 = vadd.f32 0.0, %v7829
      %7831 = vdwg.mxu0
      %7832 = vmatpush.msra.mxu0 0.0
      %7833 = vmatpush.msra.mxu0 0.0
      %7834 = vmatpush.msra.mxu0 0.0
      %7835 = vmatpush.msra.mxu0 0.0
      %7836 = vmatpush.msra.mxu0 0.0
      %7837 = vmatpush.msra.mxu0 0.0
      %7838 = vmatpush.msra.mxu0 0.0
      %7839 = vmatpush.msra.mxu0 0.0
      %7840 = vmatpush.msra.mxu0 0.0
      %7841 = vmatpush.msra.mxu0 0.0
      %7842 = vmatpush.msra.mxu0 0.0
      %7843 = vmatpush.msra.mxu0 0.0
      %7844 = vmatpush.msra.mxu0 0.0
      %7845 = vmatpush.msra.mxu0 0.0
      %7846 = vmatpush.msra.mxu0 0.0
      %7847 = vmatpush.msra.mxu0 %v7646
      %7848 = vmatmul.f32.gmra.mxu0 %v7626
      %v7849 = vpop.f32.mrf.mxu0
      %v7850 = vadd.f32 0.0, %v7849
      %7851 = vdwg.mxu0
      %7852 = vmatpush.msra.mxu0 0.0
      %7853 = vmatpush.msra.mxu0 0.0
      %7854 = vmatpush.msra.mxu0 0.0
      %7855 = vmatpush.msra.mxu0 0.0
      %7856 = vmatpush.msra.mxu0 0.0
      %7857 = vmatpush.msra.mxu0 0.0
      %7858 = vmatpush.msra.mxu0 0.0
      %7859 = vmatpush.msra.mxu0 0.0
      %7860 = vmatpush.msra.mxu0 0.0
      %7861 = vmatpush.msra.mxu0 0.0
      %7862 = vmatpush.msra.mxu0 0.0
      %7863 = vmatpush.msra.mxu0 0.0
      %7864 = vmatpush.msra.mxu0 0.0
      %7865 = vmatpush.msra.mxu0 0.0
      %7866 = vmatpush.msra.mxu0 0.0
      %7867 = vmatpush.msra.mxu0 %v7648
      %7868 = vmatmul.f32.gmra.mxu0 %v7626
      %v7869 = vpop.f32.mrf.mxu0
      %v7870 = vadd.f32 0.0, %v7869
      %7871 = vdwg.mxu0
      %7872 = vmatpush.msra.mxu0 0.0
      %7873 = vmatpush.msra.mxu0 0.0
      %7874 = vmatpush.msra.mxu0 0.0
      %7875 = vmatpush.msra.mxu0 0.0
      %7876 = vmatpush.msra.mxu0 0.0
      %7877 = vmatpush.msra.mxu0 0.0
      %7878 = vmatpush.msra.mxu0 0.0
      %7879 = vmatpush.msra.mxu0 0.0
      %7880 = vmatpush.msra.mxu0 0.0
      %7881 = vmatpush.msra.mxu0 0.0
      %7882 = vmatpush.msra.mxu0 0.0
      %7883 = vmatpush.msra.mxu0 0.0
      %7884 = vmatpush.msra.mxu0 0.0
      %7885 = vmatpush.msra.mxu0 0.0
      %7886 = vmatpush.msra.mxu0 0.0
      %7887 = vmatpush.msra.mxu0 %v7650
      %7888 = vmatmul.f32.gmra.mxu0 %v7626
      %v7889 = vpop.f32.mrf.mxu0
      %v7890 = vadd.f32 0.0, %v7889
      %7891 = vdwg.mxu0
      %v7892 = vadd.f32 %v7527, %v7670
      %v7893 = vadd.f32 %v7528, %v7690
      %v7894 = vadd.f32 %v7529, %v7710
      %v7895 = vadd.f32 %v7530, %v7730
      %v7896 = vadd.f32 %v7531, %v7750
      %v7897 = vadd.f32 %v7532, %v7770
      %v7898 = vadd.f32 %v7533, %v7790
      %v7899 = vadd.f32 %v7534, %v7810
      %v7900 = vadd.f32 %v7535, %v7830
      %v7901 = vadd.f32 %v7536, %v7850
      %v7902 = vadd.f32 %v7537, %v7870
      %v7903 = vadd.f32 %v7538, %v7890
      %v7904 = vld [vmem:[#allocation2 + $0x4] sm:$0xff]
      %v7905 = vld [vmem:[#allocation2 + $0xc] sm:$0xff]
      %v7906 = vld [vmem:[#allocation2 + $0x14] sm:$0xff]
      %v7907 = vld [vmem:[#allocation2 + $0x1c] sm:$0xff]
      %v7908 = vld [vmem:[#allocation2 + $0x24] sm:$0xff]
      %v7909 = vld [vmem:[#allocation2 + $0x2c] sm:$0xff]
      %v7910 = vld [vmem:[#allocation2 + $0x34] sm:$0xff]
      %v7911 = vld [vmem:[#allocation2 + $0x3c] sm:$0xf]
      %7912 = vrot.lane.b32.xlu0 %v689, 48
      %v7913 = vpop.permute.xlu0 %7912
      %7922 = vst [vmem:[#allocation1] ss:$2 sm:$0xff] %v7904
      %s7923 = scalar_lea.vmem [#allocation1], 16
      %7924 = vst [vmem:[%s7923] ss:$2 sm:$0xff] %v7905
      %s7925 = scalar_lea.vmem [#allocation1], 32
      %7926 = vst [vmem:[%s7925] ss:$2 sm:$0xff] %v7906
      %s7927 = scalar_lea.vmem [#allocation1], 48
      %7928 = vst [vmem:[%s7927] ss:$2 sm:$0xff] %v7907
      %v7929 = vld.sshfl [vmem:[#allocation1] sm:$0xff pattern:$0x75316420]
      %v7930 = vld.sshfl [vmem:[#allocation1 + $0x8] sm:$0xff pattern:$0x75316420]
      %v7931 = vld.sshfl [vmem:[#allocation1 + $0x10] sm:$0xff pattern:$0x75316420]
      %v7932 = vld.sshfl [vmem:[#allocation1 + $0x18] sm:$0xff pattern:$0x75316420]
      %v7933 = vld.sshfl [vmem:[#allocation1 + $0x20] sm:$0xff pattern:$0x75316420]
      %v7934 = vld.sshfl [vmem:[#allocation1 + $0x28] sm:$0xff pattern:$0x75316420]
      %v7935 = vld.sshfl [vmem:[#allocation1 + $0x30] sm:$0xff pattern:$0x75316420]
      %v7936 = vld.sshfl [vmem:[#allocation1 + $0x38] sm:$0xff pattern:$0x75316420]
      %7937 = vst [vmem:[#allocation1] ss:$2 sm:$0xff] %v7908
      %7938 = vst [vmem:[%s7923] ss:$2 sm:$0xff] %v7909
      %7939 = vst [vmem:[%s7925] ss:$2 sm:$0xff] %v7910
      %7940 = vst [vmem:[%s7927] ss:$2 sm:$0xff] %v7911
      %v7941 = vld.sshfl [vmem:[#allocation1] sm:$0xff pattern:$0x75316420]
      %v7942 = vld.sshfl [vmem:[#allocation1 + $0x8] sm:$0xff pattern:$0x75316420]
      %v7943 = vld.sshfl [vmem:[#allocation1 + $0x10] sm:$0xff pattern:$0x75316420]
      %v7944 = vld.sshfl [vmem:[#allocation1 + $0x18] sm:$0xff pattern:$0x75316420]
      %v7945 = vld.sshfl [vmem:[#allocation1 + $0x20] sm:$0xff pattern:$0x75316420]
      %v7946 = vld.sshfl [vmem:[#allocation1 + $0x28] sm:$0xff pattern:$0x75316420]
      %v7947 = vld.sshfl [vmem:[#allocation1 + $0x30] sm:$0xff pattern:$0x75316420]
      %7948 = vrot.lane.b32.xlu0 %v7929, 37
      %v7949 = vpop.permute.xlu0 %7948
      %7950 = vrot.lane.b32.xlu0 %v7930, 37
      %v7951 = vpop.permute.xlu0 %7950
      %7952 = vrot.lane.b32.xlu0 %v7931, 37
      %v7953 = vpop.permute.xlu0 %7952
      %7954 = vrot.lane.b32.xlu0 %v7932, 37
      %v7955 = vpop.permute.xlu0 %7954
      %7956 = vrot.lane.b32.xlu0 %v7933, 37
      %v7957 = vpop.permute.xlu0 %7956
      %7958 = vrot.lane.b32.xlu0 %v7934, 37
      %v7959 = vpop.permute.xlu0 %7958
      %7960 = vrot.lane.b32.xlu0 %v7935, 37
      %v7961 = vpop.permute.xlu0 %7960
      %7962 = vrot.lane.b32.xlu0 %v7936, 37
      %v7963 = vpop.permute.xlu0 %7962
      %7964 = vrot.lane.b32.xlu0 %v7941, 37
      %v7965 = vpop.permute.xlu0 %7964
      %7966 = vrot.lane.b32.xlu0 %v7942, 37
      %v7967 = vpop.permute.xlu0 %7966
      %7968 = vrot.lane.b32.xlu0 %v7943, 37
      %v7969 = vpop.permute.xlu0 %7968
      %7970 = vrot.lane.b32.xlu0 %v7944, 37
      %v7971 = vpop.permute.xlu0 %7970
      %7972 = vrot.lane.b32.xlu0 %v7945, 37
      %v7973 = vpop.permute.xlu0 %7972
      %7974 = vrot.lane.b32.xlu0 %v7946, 37
      %v7975 = vpop.permute.xlu0 %7974
      %7976 = vrot.lane.b32.xlu0 %v7947, 37
      %v7977 = vpop.permute.xlu0 %7976
      %vm7978 = vcmask 302080
      %v7979 = vsel %vm7978, %v7949, %v7951
      %v7980 = vsel %vm7978, %v7951, %v7953
      %v7981 = vsel %vm7978, %v7953, %v7955
      %v7982 = vsel %vm7978, %v7955, %v7957
      %v7983 = vsel %vm7978, %v7959, %v7961
      %v7984 = vsel %vm7978, %v7961, %v7963
      %v7985 = vsel %vm7978, %v7963, %v7965
      %v7986 = vsel %vm7978, %v7965, %v7967
      %v7987 = vsel %vm7978, %v7969, %v7971
      %v7988 = vsel %vm7978, %v7971, %v7973
      %v7989 = vsel %vm7978, %v7973, %v7975
      %v7990 = vsel %vm7978, %v7975, %v7977
      %v7991 = vsel %vm778, %v7913, 0
      %v7993 = vsel %vm640, %v7979, 0
      %v7995 = vsel %vm640, %v7980, 0
      %v7997 = vsel %vm640, %v7981, 0
      %v7999 = vsel %vm640, %v7982, 0
      %v8001 = vsel %vm640, %v7983, 0
      %v8003 = vsel %vm640, %v7984, 0
      %v8005 = vsel %vm640, %v7985, 0
      %v8007 = vsel %vm640, %v7986, 0
      %v8009 = vsel %vm640, %v7987, 0
      %v8011 = vsel %vm640, %v7988, 0
      %v8013 = vsel %vm640, %v7989, 0
      %v8015 = vsel %vm640, %v7990, 0
      %8017 = vmatpush.msra.mxu0 0.0
      %8018 = vmatpush.msra.mxu0 0.0
      %8019 = vmatpush.msra.mxu0 0.0
      %8020 = vmatpush.msra.mxu0 0.0
      %8021 = vmatpush.msra.mxu0 0.0
      %8022 = vmatpush.msra.mxu0 0.0
      %8023 = vmatpush.msra.mxu0 0.0
      %8024 = vmatpush.msra.mxu0 0.0
      %8025 = vmatpush.msra.mxu0 0.0
      %8026 = vmatpush.msra.mxu0 0.0
      %8027 = vmatpush.msra.mxu0 0.0
      %8028 = vmatpush.msra.mxu0 0.0
      %8029 = vmatpush.msra.mxu0 0.0
      %8030 = vmatpush.msra.mxu0 0.0
      %8031 = vmatpush.msra.mxu0 0.0
      %8032 = vmatpush.msra.mxu0 %v7993
      %8033 = vmatmul.f32.gmra.mxu0 %v7991
      %v8034 = vpop.f32.mrf.mxu0
      %v8035 = vadd.f32 0.0, %v8034
      %8036 = vdwg.mxu0
      %8037 = vmatpush.msra.mxu0 0.0
      %8038 = vmatpush.msra.mxu0 0.0
      %8039 = vmatpush.msra.mxu0 0.0
      %8040 = vmatpush.msra.mxu0 0.0
      %8041 = vmatpush.msra.mxu0 0.0
      %8042 = vmatpush.msra.mxu0 0.0
      %8043 = vmatpush.msra.mxu0 0.0
      %8044 = vmatpush.msra.mxu0 0.0
      %8045 = vmatpush.msra.mxu0 0.0
      %8046 = vmatpush.msra.mxu0 0.0
      %8047 = vmatpush.msra.mxu0 0.0
      %8048 = vmatpush.msra.mxu0 0.0
      %8049 = vmatpush.msra.mxu0 0.0
      %8050 = vmatpush.msra.mxu0 0.0
      %8051 = vmatpush.msra.mxu0 0.0
      %8052 = vmatpush.msra.mxu0 %v7995
      %8053 = vmatmul.f32.gmra.mxu0 %v7991
      %v8054 = vpop.f32.mrf.mxu0
      %v8055 = vadd.f32 0.0, %v8054
      %8056 = vdwg.mxu0
      %8057 = vmatpush.msra.mxu0 0.0
      %8058 = vmatpush.msra.mxu0 0.0
      %8059 = vmatpush.msra.mxu0 0.0
      %8060 = vmatpush.msra.mxu0 0.0
      %8061 = vmatpush.msra.mxu0 0.0
      %8062 = vmatpush.msra.mxu0 0.0
      %8063 = vmatpush.msra.mxu0 0.0
      %8064 = vmatpush.msra.mxu0 0.0
      %8065 = vmatpush.msra.mxu0 0.0
      %8066 = vmatpush.msra.mxu0 0.0
      %8067 = vmatpush.msra.mxu0 0.0
      %8068 = vmatpush.msra.mxu0 0.0
      %8069 = vmatpush.msra.mxu0 0.0
      %8070 = vmatpush.msra.mxu0 0.0
      %8071 = vmatpush.msra.mxu0 0.0
      %8072 = vmatpush.msra.mxu0 %v7997
      %8073 = vmatmul.f32.gmra.mxu0 %v7991
      %v8074 = vpop.f32.mrf.mxu0
      %v8075 = vadd.f32 0.0, %v8074
      %8076 = vdwg.mxu0
      %8077 = vmatpush.msra.mxu0 0.0
      %8078 = vmatpush.msra.mxu0 0.0
      %8079 = vmatpush.msra.mxu0 0.0
      %8080 = vmatpush.msra.mxu0 0.0
      %8081 = vmatpush.msra.mxu0 0.0
      %8082 = vmatpush.msra.mxu0 0.0
      %8083 = vmatpush.msra.mxu0 0.0
      %8084 = vmatpush.msra.mxu0 0.0
      %8085 = vmatpush.msra.mxu0 0.0
      %8086 = vmatpush.msra.mxu0 0.0
      %8087 = vmatpush.msra.mxu0 0.0
      %8088 = vmatpush.msra.mxu0 0.0
      %8089 = vmatpush.msra.mxu0 0.0
      %8090 = vmatpush.msra.mxu0 0.0
      %8091 = vmatpush.msra.mxu0 0.0
      %8092 = vmatpush.msra.mxu0 %v7999
      %8093 = vmatmul.f32.gmra.mxu0 %v7991
      %v8094 = vpop.f32.mrf.mxu0
      %v8095 = vadd.f32 0.0, %v8094
      %8096 = vdwg.mxu0
      %8097 = vmatpush.msra.mxu0 0.0
      %8098 = vmatpush.msra.mxu0 0.0
      %8099 = vmatpush.msra.mxu0 0.0
      %8100 = vmatpush.msra.mxu0 0.0
      %8101 = vmatpush.msra.mxu0 0.0
      %8102 = vmatpush.msra.mxu0 0.0
      %8103 = vmatpush.msra.mxu0 0.0
      %8104 = vmatpush.msra.mxu0 0.0
      %8105 = vmatpush.msra.mxu0 0.0
      %8106 = vmatpush.msra.mxu0 0.0
      %8107 = vmatpush.msra.mxu0 0.0
      %8108 = vmatpush.msra.mxu0 0.0
      %8109 = vmatpush.msra.mxu0 0.0
      %8110 = vmatpush.msra.mxu0 0.0
      %8111 = vmatpush.msra.mxu0 0.0
      %8112 = vmatpush.msra.mxu0 %v8001
      %8113 = vmatmul.f32.gmra.mxu0 %v7991
      %v8114 = vpop.f32.mrf.mxu0
      %v8115 = vadd.f32 0.0, %v8114
      %8116 = vdwg.mxu0
      %8117 = vmatpush.msra.mxu0 0.0
      %8118 = vmatpush.msra.mxu0 0.0
      %8119 = vmatpush.msra.mxu0 0.0
      %8120 = vmatpush.msra.mxu0 0.0
      %8121 = vmatpush.msra.mxu0 0.0
      %8122 = vmatpush.msra.mxu0 0.0
      %8123 = vmatpush.msra.mxu0 0.0
      %8124 = vmatpush.msra.mxu0 0.0
      %8125 = vmatpush.msra.mxu0 0.0
      %8126 = vmatpush.msra.mxu0 0.0
      %8127 = vmatpush.msra.mxu0 0.0
      %8128 = vmatpush.msra.mxu0 0.0
      %8129 = vmatpush.msra.mxu0 0.0
      %8130 = vmatpush.msra.mxu0 0.0
      %8131 = vmatpush.msra.mxu0 0.0
      %8132 = vmatpush.msra.mxu0 %v8003
      %8133 = vmatmul.f32.gmra.mxu0 %v7991
      %v8134 = vpop.f32.mrf.mxu0
      %v8135 = vadd.f32 0.0, %v8134
      %8136 = vdwg.mxu0
      %8137 = vmatpush.msra.mxu0 0.0
      %8138 = vmatpush.msra.mxu0 0.0
      %8139 = vmatpush.msra.mxu0 0.0
      %8140 = vmatpush.msra.mxu0 0.0
      %8141 = vmatpush.msra.mxu0 0.0
      %8142 = vmatpush.msra.mxu0 0.0
      %8143 = vmatpush.msra.mxu0 0.0
      %8144 = vmatpush.msra.mxu0 0.0
      %8145 = vmatpush.msra.mxu0 0.0
      %8146 = vmatpush.msra.mxu0 0.0
      %8147 = vmatpush.msra.mxu0 0.0
      %8148 = vmatpush.msra.mxu0 0.0
      %8149 = vmatpush.msra.mxu0 0.0
      %8150 = vmatpush.msra.mxu0 0.0
      %8151 = vmatpush.msra.mxu0 0.0
      %8152 = vmatpush.msra.mxu0 %v8005
      %8153 = vmatmul.f32.gmra.mxu0 %v7991
      %v8154 = vpop.f32.mrf.mxu0
      %v8155 = vadd.f32 0.0, %v8154
      %8156 = vdwg.mxu0
      %8157 = vmatpush.msra.mxu0 0.0
      %8158 = vmatpush.msra.mxu0 0.0
      %8159 = vmatpush.msra.mxu0 0.0
      %8160 = vmatpush.msra.mxu0 0.0
      %8161 = vmatpush.msra.mxu0 0.0
      %8162 = vmatpush.msra.mxu0 0.0
      %8163 = vmatpush.msra.mxu0 0.0
      %8164 = vmatpush.msra.mxu0 0.0
      %8165 = vmatpush.msra.mxu0 0.0
      %8166 = vmatpush.msra.mxu0 0.0
      %8167 = vmatpush.msra.mxu0 0.0
      %8168 = vmatpush.msra.mxu0 0.0
      %8169 = vmatpush.msra.mxu0 0.0
      %8170 = vmatpush.msra.mxu0 0.0
      %8171 = vmatpush.msra.mxu0 0.0
      %8172 = vmatpush.msra.mxu0 %v8007
      %8173 = vmatmul.f32.gmra.mxu0 %v7991
      %v8174 = vpop.f32.mrf.mxu0
      %v8175 = vadd.f32 0.0, %v8174
      %8176 = vdwg.mxu0
      %8177 = vmatpush.msra.mxu0 0.0
      %8178 = vmatpush.msra.mxu0 0.0
      %8179 = vmatpush.msra.mxu0 0.0
      %8180 = vmatpush.msra.mxu0 0.0
      %8181 = vmatpush.msra.mxu0 0.0
      %8182 = vmatpush.msra.mxu0 0.0
      %8183 = vmatpush.msra.mxu0 0.0
      %8184 = vmatpush.msra.mxu0 0.0
      %8185 = vmatpush.msra.mxu0 0.0
      %8186 = vmatpush.msra.mxu0 0.0
      %8187 = vmatpush.msra.mxu0 0.0
      %8188 = vmatpush.msra.mxu0 0.0
      %8189 = vmatpush.msra.mxu0 0.0
      %8190 = vmatpush.msra.mxu0 0.0
      %8191 = vmatpush.msra.mxu0 0.0
      %8192 = vmatpush.msra.mxu0 %v8009
      %8193 = vmatmul.f32.gmra.mxu0 %v7991
      %v8194 = vpop.f32.mrf.mxu0
      %v8195 = vadd.f32 0.0, %v8194
      %8196 = vdwg.mxu0
      %8197 = vmatpush.msra.mxu0 0.0
      %8198 = vmatpush.msra.mxu0 0.0
      %8199 = vmatpush.msra.mxu0 0.0
      %8200 = vmatpush.msra.mxu0 0.0
      %8201 = vmatpush.msra.mxu0 0.0
      %8202 = vmatpush.msra.mxu0 0.0
      %8203 = vmatpush.msra.mxu0 0.0
      %8204 = vmatpush.msra.mxu0 0.0
      %8205 = vmatpush.msra.mxu0 0.0
      %8206 = vmatpush.msra.mxu0 0.0
      %8207 = vmatpush.msra.mxu0 0.0
      %8208 = vmatpush.msra.mxu0 0.0
      %8209 = vmatpush.msra.mxu0 0.0
      %8210 = vmatpush.msra.mxu0 0.0
      %8211 = vmatpush.msra.mxu0 0.0
      %8212 = vmatpush.msra.mxu0 %v8011
      %8213 = vmatmul.f32.gmra.mxu0 %v7991
      %v8214 = vpop.f32.mrf.mxu0
      %v8215 = vadd.f32 0.0, %v8214
      %8216 = vdwg.mxu0
      %8217 = vmatpush.msra.mxu0 0.0
      %8218 = vmatpush.msra.mxu0 0.0
      %8219 = vmatpush.msra.mxu0 0.0
      %8220 = vmatpush.msra.mxu0 0.0
      %8221 = vmatpush.msra.mxu0 0.0
      %8222 = vmatpush.msra.mxu0 0.0
      %8223 = vmatpush.msra.mxu0 0.0
      %8224 = vmatpush.msra.mxu0 0.0
      %8225 = vmatpush.msra.mxu0 0.0
      %8226 = vmatpush.msra.mxu0 0.0
      %8227 = vmatpush.msra.mxu0 0.0
      %8228 = vmatpush.msra.mxu0 0.0
      %8229 = vmatpush.msra.mxu0 0.0
      %8230 = vmatpush.msra.mxu0 0.0
      %8231 = vmatpush.msra.mxu0 0.0
      %8232 = vmatpush.msra.mxu0 %v8013
      %8233 = vmatmul.f32.gmra.mxu0 %v7991
      %v8234 = vpop.f32.mrf.mxu0
      %v8235 = vadd.f32 0.0, %v8234
      %8236 = vdwg.mxu0
      %8237 = vmatpush.msra.mxu0 0.0
      %8238 = vmatpush.msra.mxu0 0.0
      %8239 = vmatpush.msra.mxu0 0.0
      %8240 = vmatpush.msra.mxu0 0.0
      %8241 = vmatpush.msra.mxu0 0.0
      %8242 = vmatpush.msra.mxu0 0.0
      %8243 = vmatpush.msra.mxu0 0.0
      %8244 = vmatpush.msra.mxu0 0.0
      %8245 = vmatpush.msra.mxu0 0.0
      %8246 = vmatpush.msra.mxu0 0.0
      %8247 = vmatpush.msra.mxu0 0.0
      %8248 = vmatpush.msra.mxu0 0.0
      %8249 = vmatpush.msra.mxu0 0.0
      %8250 = vmatpush.msra.mxu0 0.0
      %8251 = vmatpush.msra.mxu0 0.0
      %8252 = vmatpush.msra.mxu0 %v8015
      %8253 = vmatmul.f32.gmra.mxu0 %v7991
      %v8254 = vpop.f32.mrf.mxu0
      %v8255 = vadd.f32 0.0, %v8254
      %8256 = vdwg.mxu0
      %v8257 = vadd.f32 %v7892, %v8035
      %v8258 = vadd.f32 %v7893, %v8055
      %v8259 = vadd.f32 %v7894, %v8075
      %v8260 = vadd.f32 %v7895, %v8095
      %v8261 = vadd.f32 %v7896, %v8115
      %v8262 = vadd.f32 %v7897, %v8135
      %v8263 = vadd.f32 %v7898, %v8155
      %v8264 = vadd.f32 %v7899, %v8175
      %v8265 = vadd.f32 %v7900, %v8195
      %v8266 = vadd.f32 %v7901, %v8215
      %v8267 = vadd.f32 %v7902, %v8235
      %v8268 = vadd.f32 %v7903, %v8255
      %v8269 = vld [vmem:[#allocation2 + $0x4] sm:$0xff]
      %v8270 = vld [vmem:[#allocation2 + $0xc] sm:$0xff]
      %v8271 = vld [vmem:[#allocation2 + $0x14] sm:$0xff]
      %v8272 = vld [vmem:[#allocation2 + $0x1c] sm:$0xff]
      %v8273 = vld [vmem:[#allocation2 + $0x24] sm:$0xff]
      %v8274 = vld [vmem:[#allocation2 + $0x2c] sm:$0xff]
      %v8275 = vld [vmem:[#allocation2 + $0x34] sm:$0xff]
      %v8276 = vld [vmem:[#allocation2 + $0x3c] sm:$0xf]
      %8277 = vrot.lane.b32.xlu0 %v689, 44
      %v8278 = vpop.permute.xlu0 %8277
      %8287 = vst [vmem:[#allocation1] ss:$2 sm:$0xff] %v8269
      %s8288 = scalar_lea.vmem [#allocation1], 16
      %8289 = vst [vmem:[%s8288] ss:$2 sm:$0xff] %v8270
      %s8290 = scalar_lea.vmem [#allocation1], 32
      %8291 = vst [vmem:[%s8290] ss:$2 sm:$0xff] %v8271
      %s8292 = scalar_lea.vmem [#allocation1], 48
      %8293 = vst [vmem:[%s8292] ss:$2 sm:$0xff] %v8272
      %v8294 = vld.sshfl [vmem:[#allocation1] sm:$0xff pattern:$0x75316420]
      %v8295 = vld.sshfl [vmem:[#allocation1 + $0x8] sm:$0xff pattern:$0x75316420]
      %v8296 = vld.sshfl [vmem:[#allocation1 + $0x10] sm:$0xff pattern:$0x75316420]
      %v8297 = vld.sshfl [vmem:[#allocation1 + $0x18] sm:$0xff pattern:$0x75316420]
      %v8298 = vld.sshfl [vmem:[#allocation1 + $0x20] sm:$0xff pattern:$0x75316420]
      %v8299 = vld.sshfl [vmem:[#allocation1 + $0x28] sm:$0xff pattern:$0x75316420]
      %v8300 = vld.sshfl [vmem:[#allocation1 + $0x30] sm:$0xff pattern:$0x75316420]
      %v8301 = vld.sshfl [vmem:[#allocation1 + $0x38] sm:$0xff pattern:$0x75316420]
      %8302 = vst [vmem:[#allocation1] ss:$2 sm:$0xff] %v8273
      %8303 = vst [vmem:[%s8288] ss:$2 sm:$0xff] %v8274
      %8304 = vst [vmem:[%s8290] ss:$2 sm:$0xff] %v8275
      %8305 = vst [vmem:[%s8292] ss:$2 sm:$0xff] %v8276
      %v8306 = vld.sshfl [vmem:[#allocation1] sm:$0xff pattern:$0x75316420]
      %v8307 = vld.sshfl [vmem:[#allocation1 + $0x8] sm:$0xff pattern:$0x75316420]
      %v8308 = vld.sshfl [vmem:[#allocation1 + $0x10] sm:$0xff pattern:$0x75316420]
      %v8309 = vld.sshfl [vmem:[#allocation1 + $0x18] sm:$0xff pattern:$0x75316420]
      %v8310 = vld.sshfl [vmem:[#allocation1 + $0x20] sm:$0xff pattern:$0x75316420]
      %v8311 = vld.sshfl [vmem:[#allocation1 + $0x28] sm:$0xff pattern:$0x75316420]
      %v8312 = vld.sshfl [vmem:[#allocation1 + $0x30] sm:$0xff pattern:$0x75316420]
      %8313 = vrot.lane.b32.xlu0 %v8294, 29
      %v8314 = vpop.permute.xlu0 %8313
      %8315 = vrot.lane.b32.xlu0 %v8295, 29
      %v8316 = vpop.permute.xlu0 %8315
      %8317 = vrot.lane.b32.xlu0 %v8296, 29
      %v8318 = vpop.permute.xlu0 %8317
      %8319 = vrot.lane.b32.xlu0 %v8297, 29
      %v8320 = vpop.permute.xlu0 %8319
      %8321 = vrot.lane.b32.xlu0 %v8298, 29
      %v8322 = vpop.permute.xlu0 %8321
      %8323 = vrot.lane.b32.xlu0 %v8299, 29
      %v8324 = vpop.permute.xlu0 %8323
      %8325 = vrot.lane.b32.xlu0 %v8300, 29
      %v8326 = vpop.permute.xlu0 %8325
      %8327 = vrot.lane.b32.xlu0 %v8301, 29
      %v8328 = vpop.permute.xlu0 %8327
      %8329 = vrot.lane.b32.xlu0 %v8306, 29
      %v8330 = vpop.permute.xlu0 %8329
      %8331 = vrot.lane.b32.xlu0 %v8307, 29
      %v8332 = vpop.permute.xlu0 %8331
      %8333 = vrot.lane.b32.xlu0 %v8308, 29
      %v8334 = vpop.permute.xlu0 %8333
      %8335 = vrot.lane.b32.xlu0 %v8309, 29
      %v8336 = vpop.permute.xlu0 %8335
      %8337 = vrot.lane.b32.xlu0 %v8310, 29
      %v8338 = vpop.permute.xlu0 %8337
      %8339 = vrot.lane.b32.xlu0 %v8311, 29
      %v8340 = vpop.permute.xlu0 %8339
      %8341 = vrot.lane.b32.xlu0 %v8312, 29
      %v8342 = vpop.permute.xlu0 %8341
      %vm8343 = vcmask 236544
      %v8344 = vsel %vm8343, %v8314, %v8316
      %v8345 = vsel %vm8343, %v8316, %v8318
      %v8346 = vsel %vm8343, %v8318, %v8320
      %v8347 = vsel %vm8343, %v8320, %v8322
      %v8348 = vsel %vm8343, %v8324, %v8326
      %v8349 = vsel %vm8343, %v8326, %v8328
      %v8350 = vsel %vm8343, %v8328, %v8330
      %v8351 = vsel %vm8343, %v8330, %v8332
      %v8352 = vsel %vm8343, %v8334, %v8336
      %v8353 = vsel %vm8343, %v8336, %v8338
      %v8354 = vsel %vm8343, %v8338, %v8340
      %v8355 = vsel %vm8343, %v8340, %v8342
      %v8356 = vsel %vm778, %v8278, 0
      %v8358 = vsel %vm640, %v8344, 0
      %v8360 = vsel %vm640, %v8345, 0
      %v8362 = vsel %vm640, %v8346, 0
      %v8364 = vsel %vm640, %v8347, 0
      %v8366 = vsel %vm640, %v8348, 0
      %v8368 = vsel %vm640, %v8349, 0
      %v8370 = vsel %vm640, %v8350, 0
      %v8372 = vsel %vm640, %v8351, 0
      %v8374 = vsel %vm640, %v8352, 0
      %v8376 = vsel %vm640, %v8353, 0
      %v8378 = vsel %vm640, %v8354, 0
      %v8380 = vsel %vm640, %v8355, 0
      %8382 = vmatpush.msra.mxu0 0.0
      %8383 = vmatpush.msra.mxu0 0.0
      %8384 = vmatpush.msra.mxu0 0.0
      %8385 = vmatpush.msra.mxu0 0.0
      %8386 = vmatpush.msra.mxu0 0.0
      %8387 = vmatpush.msra.mxu0 0.0
      %8388 = vmatpush.msra.mxu0 0.0
      %8389 = vmatpush.msra.mxu0 0.0
      %8390 = vmatpush.msra.mxu0 0.0
      %8391 = vmatpush.msra.mxu0 0.0
      %8392 = vmatpush.msra.mxu0 0.0
      %8393 = vmatpush.msra.mxu0 0.0
      %8394 = vmatpush.msra.mxu0 0.0
      %8395 = vmatpush.msra.mxu0 0.0
      %8396 = vmatpush.msra.mxu0 0.0
      %8397 = vmatpush.msra.mxu0 %v8358
      %8398 = vmatmul.f32.gmra.mxu0 %v8356
      %v8399 = vpop.f32.mrf.mxu0
      %v8400 = vadd.f32 0.0, %v8399
      %8401 = vdwg.mxu0
      %8402 = vmatpush.msra.mxu0 0.0
      %8403 = vmatpush.msra.mxu0 0.0
      %8404 = vmatpush.msra.mxu0 0.0
      %8405 = vmatpush.msra.mxu0 0.0
      %8406 = vmatpush.msra.mxu0 0.0
      %8407 = vmatpush.msra.mxu0 0.0
      %8408 = vmatpush.msra.mxu0 0.0
      %8409 = vmatpush.msra.mxu0 0.0
      %8410 = vmatpush.msra.mxu0 0.0
      %8411 = vmatpush.msra.mxu0 0.0
      %8412 = vmatpush.msra.mxu0 0.0
      %8413 = vmatpush.msra.mxu0 0.0
      %8414 = vmatpush.msra.mxu0 0.0
      %8415 = vmatpush.msra.mxu0 0.0
      %8416 = vmatpush.msra.mxu0 0.0
      %8417 = vmatpush.msra.mxu0 %v8360
      %8418 = vmatmul.f32.gmra.mxu0 %v8356
      %v8419 = vpop.f32.mrf.mxu0
      %v8420 = vadd.f32 0.0, %v8419
      %8421 = vdwg.mxu0
      %8422 = vmatpush.msra.mxu0 0.0
      %8423 = vmatpush.msra.mxu0 0.0
      %8424 = vmatpush.msra.mxu0 0.0
      %8425 = vmatpush.msra.mxu0 0.0
      %8426 = vmatpush.msra.mxu0 0.0
      %8427 = vmatpush.msra.mxu0 0.0
      %8428 = vmatpush.msra.mxu0 0.0
      %8429 = vmatpush.msra.mxu0 0.0
      %8430 = vmatpush.msra.mxu0 0.0
      %8431 = vmatpush.msra.mxu0 0.0
      %8432 = vmatpush.msra.mxu0 0.0
      %8433 = vmatpush.msra.mxu0 0.0
      %8434 = vmatpush.msra.mxu0 0.0
      %8435 = vmatpush.msra.mxu0 0.0
      %8436 = vmatpush.msra.mxu0 0.0
      %8437 = vmatpush.msra.mxu0 %v8362
      %8438 = vmatmul.f32.gmra.mxu0 %v8356
      %v8439 = vpop.f32.mrf.mxu0
      %v8440 = vadd.f32 0.0, %v8439
      %8441 = vdwg.mxu0
      %8442 = vmatpush.msra.mxu0 0.0
      %8443 = vmatpush.msra.mxu0 0.0
      %8444 = vmatpush.msra.mxu0 0.0
      %8445 = vmatpush.msra.mxu0 0.0
      %8446 = vmatpush.msra.mxu0 0.0
      %8447 = vmatpush.msra.mxu0 0.0
      %8448 = vmatpush.msra.mxu0 0.0
      %8449 = vmatpush.msra.mxu0 0.0
      %8450 = vmatpush.msra.mxu0 0.0
      %8451 = vmatpush.msra.mxu0 0.0
      %8452 = vmatpush.msra.mxu0 0.0
      %8453 = vmatpush.msra.mxu0 0.0
      %8454 = vmatpush.msra.mxu0 0.0
      %8455 = vmatpush.msra.mxu0 0.0
      %8456 = vmatpush.msra.mxu0 0.0
      %8457 = vmatpush.msra.mxu0 %v8364
      %8458 = vmatmul.f32.gmra.mxu0 %v8356
      %v8459 = vpop.f32.mrf.mxu0
      %v8460 = vadd.f32 0.0, %v8459
      %8461 = vdwg.mxu0
      %8462 = vmatpush.msra.mxu0 0.0
      %8463 = vmatpush.msra.mxu0 0.0
      %8464 = vmatpush.msra.mxu0 0.0
      %8465 = vmatpush.msra.mxu0 0.0
      %8466 = vmatpush.msra.mxu0 0.0
      %8467 = vmatpush.msra.mxu0 0.0
      %8468 = vmatpush.msra.mxu0 0.0
      %8469 = vmatpush.msra.mxu0 0.0
      %8470 = vmatpush.msra.mxu0 0.0
      %8471 = vmatpush.msra.mxu0 0.0
      %8472 = vmatpush.msra.mxu0 0.0
      %8473 = vmatpush.msra.mxu0 0.0
      %8474 = vmatpush.msra.mxu0 0.0
      %8475 = vmatpush.msra.mxu0 0.0
      %8476 = vmatpush.msra.mxu0 0.0
      %8477 = vmatpush.msra.mxu0 %v8366
      %8478 = vmatmul.f32.gmra.mxu0 %v8356
      %v8479 = vpop.f32.mrf.mxu0
      %v8480 = vadd.f32 0.0, %v8479
      %8481 = vdwg.mxu0
      %8482 = vmatpush.msra.mxu0 0.0
      %8483 = vmatpush.msra.mxu0 0.0
      %8484 = vmatpush.msra.mxu0 0.0
      %8485 = vmatpush.msra.mxu0 0.0
      %8486 = vmatpush.msra.mxu0 0.0
      %8487 = vmatpush.msra.mxu0 0.0
      %8488 = vmatpush.msra.mxu0 0.0
      %8489 = vmatpush.msra.mxu0 0.0
      %8490 = vmatpush.msra.mxu0 0.0
      %8491 = vmatpush.msra.mxu0 0.0
      %8492 = vmatpush.msra.mxu0 0.0
      %8493 = vmatpush.msra.mxu0 0.0
      %8494 = vmatpush.msra.mxu0 0.0
      %8495 = vmatpush.msra.mxu0 0.0
      %8496 = vmatpush.msra.mxu0 0.0
      %8497 = vmatpush.msra.mxu0 %v8368
      %8498 = vmatmul.f32.gmra.mxu0 %v8356
      %v8499 = vpop.f32.mrf.mxu0
      %v8500 = vadd.f32 0.0, %v8499
      %8501 = vdwg.mxu0
      %8502 = vmatpush.msra.mxu0 0.0
      %8503 = vmatpush.msra.mxu0 0.0
      %8504 = vmatpush.msra.mxu0 0.0
      %8505 = vmatpush.msra.mxu0 0.0
      %8506 = vmatpush.msra.mxu0 0.0
      %8507 = vmatpush.msra.mxu0 0.0
      %8508 = vmatpush.msra.mxu0 0.0
      %8509 = vmatpush.msra.mxu0 0.0
      %8510 = vmatpush.msra.mxu0 0.0
      %8511 = vmatpush.msra.mxu0 0.0
      %8512 = vmatpush.msra.mxu0 0.0
      %8513 = vmatpush.msra.mxu0 0.0
      %8514 = vmatpush.msra.mxu0 0.0
      %8515 = vmatpush.msra.mxu0 0.0
      %8516 = vmatpush.msra.mxu0 0.0
      %8517 = vmatpush.msra.mxu0 %v8370
      %8518 = vmatmul.f32.gmra.mxu0 %v8356
      %v8519 = vpop.f32.mrf.mxu0
      %v8520 = vadd.f32 0.0, %v8519
      %8521 = vdwg.mxu0
      %8522 = vmatpush.msra.mxu0 0.0
      %8523 = vmatpush.msra.mxu0 0.0
      %8524 = vmatpush.msra.mxu0 0.0
      %8525 = vmatpush.msra.mxu0 0.0
      %8526 = vmatpush.msra.mxu0 0.0
      %8527 = vmatpush.msra.mxu0 0.0
      %8528 = vmatpush.msra.mxu0 0.0
      %8529 = vmatpush.msra.mxu0 0.0
      %8530 = vmatpush.msra.mxu0 0.0
      %8531 = vmatpush.msra.mxu0 0.0
      %8532 = vmatpush.msra.mxu0 0.0
      %8533 = vmatpush.msra.mxu0 0.0
      %8534 = vmatpush.msra.mxu0 0.0
      %8535 = vmatpush.msra.mxu0 0.0
      %8536 = vmatpush.msra.mxu0 0.0
      %8537 = vmatpush.msra.mxu0 %v8372
      %8538 = vmatmul.f32.gmra.mxu0 %v8356
      %v8539 = vpop.f32.mrf.mxu0
      %v8540 = vadd.f32 0.0, %v8539
      %8541 = vdwg.mxu0
      %8542 = vmatpush.msra.mxu0 0.0
      %8543 = vmatpush.msra.mxu0 0.0
      %8544 = vmatpush.msra.mxu0 0.0
      %8545 = vmatpush.msra.mxu0 0.0
      %8546 = vmatpush.msra.mxu0 0.0
      %8547 = vmatpush.msra.mxu0 0.0
      %8548 = vmatpush.msra.mxu0 0.0
      %8549 = vmatpush.msra.mxu0 0.0
      %8550 = vmatpush.msra.mxu0 0.0
      %8551 = vmatpush.msra.mxu0 0.0
      %8552 = vmatpush.msra.mxu0 0.0
      %8553 = vmatpush.msra.mxu0 0.0
      %8554 = vmatpush.msra.mxu0 0.0
      %8555 = vmatpush.msra.mxu0 0.0
      %8556 = vmatpush.msra.mxu0 0.0
      %8557 = vmatpush.msra.mxu0 %v8374
      %8558 = vmatmul.f32.gmra.mxu0 %v8356
      %v8559 = vpop.f32.mrf.mxu0
      %v8560 = vadd.f32 0.0, %v8559
      %8561 = vdwg.mxu0
      %8562 = vmatpush.msra.mxu0 0.0
      %8563 = vmatpush.msra.mxu0 0.0
      %8564 = vmatpush.msra.mxu0 0.0
      %8565 = vmatpush.msra.mxu0 0.0
      %8566 = vmatpush.msra.mxu0 0.0
      %8567 = vmatpush.msra.mxu0 0.0
      %8568 = vmatpush.msra.mxu0 0.0
      %8569 = vmatpush.msra.mxu0 0.0
      %8570 = vmatpush.msra.mxu0 0.0
      %8571 = vmatpush.msra.mxu0 0.0
      %8572 = vmatpush.msra.mxu0 0.0
      %8573 = vmatpush.msra.mxu0 0.0
      %8574 = vmatpush.msra.mxu0 0.0
      %8575 = vmatpush.msra.mxu0 0.0
      %8576 = vmatpush.msra.mxu0 0.0
      %8577 = vmatpush.msra.mxu0 %v8376
      %8578 = vmatmul.f32.gmra.mxu0 %v8356
      %v8579 = vpop.f32.mrf.mxu0
      %v8580 = vadd.f32 0.0, %v8579
      %8581 = vdwg.mxu0
      %8582 = vmatpush.msra.mxu0 0.0
      %8583 = vmatpush.msra.mxu0 0.0
      %8584 = vmatpush.msra.mxu0 0.0
      %8585 = vmatpush.msra.mxu0 0.0
      %8586 = vmatpush.msra.mxu0 0.0
      %8587 = vmatpush.msra.mxu0 0.0
      %8588 = vmatpush.msra.mxu0 0.0
      %8589 = vmatpush.msra.mxu0 0.0
      %8590 = vmatpush.msra.mxu0 0.0
      %8591 = vmatpush.msra.mxu0 0.0
      %8592 = vmatpush.msra.mxu0 0.0
      %8593 = vmatpush.msra.mxu0 0.0
      %8594 = vmatpush.msra.mxu0 0.0
      %8595 = vmatpush.msra.mxu0 0.0
      %8596 = vmatpush.msra.mxu0 0.0
      %8597 = vmatpush.msra.mxu0 %v8378
      %8598 = vmatmul.f32.gmra.mxu0 %v8356
      %v8599 = vpop.f32.mrf.mxu0
      %v8600 = vadd.f32 0.0, %v8599
      %8601 = vdwg.mxu0
      %8602 = vmatpush.msra.mxu0 0.0
      %8603 = vmatpush.msra.mxu0 0.0
      %8604 = vmatpush.msra.mxu0 0.0
      %8605 = vmatpush.msra.mxu0 0.0
      %8606 = vmatpush.msra.mxu0 0.0
      %8607 = vmatpush.msra.mxu0 0.0
      %8608 = vmatpush.msra.mxu0 0.0
      %8609 = vmatpush.msra.mxu0 0.0
      %8610 = vmatpush.msra.mxu0 0.0
      %8611 = vmatpush.msra.mxu0 0.0
      %8612 = vmatpush.msra.mxu0 0.0
      %8613 = vmatpush.msra.mxu0 0.0
      %8614 = vmatpush.msra.mxu0 0.0
      %8615 = vmatpush.msra.mxu0 0.0
      %8616 = vmatpush.msra.mxu0 0.0
      %8617 = vmatpush.msra.mxu0 %v8380
      %8618 = vmatmul.f32.gmra.mxu0 %v8356
      %v8619 = vpop.f32.mrf.mxu0
      %v8620 = vadd.f32 0.0, %v8619
      %8621 = vdwg.mxu0
      %v8622 = vadd.f32 %v8257, %v8400
      %v8623 = vadd.f32 %v8258, %v8420
      %v8624 = vadd.f32 %v8259, %v8440
      %v8625 = vadd.f32 %v8260, %v8460
      %v8626 = vadd.f32 %v8261, %v8480
      %v8627 = vadd.f32 %v8262, %v8500
      %v8628 = vadd.f32 %v8263, %v8520
      %v8629 = vadd.f32 %v8264, %v8540
      %v8630 = vadd.f32 %v8265, %v8560
      %v8631 = vadd.f32 %v8266, %v8580
      %v8632 = vadd.f32 %v8267, %v8600
      %v8633 = vadd.f32 %v8268, %v8620
      %v8634 = vld [vmem:[#allocation2 + $0x4] sm:$0xff]
      %v8635 = vld [vmem:[#allocation2 + $0xc] sm:$0xff]
      %v8636 = vld [vmem:[#allocation2 + $0x14] sm:$0xff]
      %v8637 = vld [vmem:[#allocation2 + $0x1c] sm:$0xff]
      %v8638 = vld [vmem:[#allocation2 + $0x24] sm:$0xff]
      %v8639 = vld [vmem:[#allocation2 + $0x2c] sm:$0xff]
      %v8640 = vld [vmem:[#allocation2 + $0x34] sm:$0xff]
      %v8641 = vld [vmem:[#allocation2 + $0x3c] sm:$0xf]
      %8642 = vrot.lane.b32.xlu0 %v689, 40
      %v8643 = vpop.permute.xlu0 %8642
      %8652 = vst [vmem:[#allocation1] ss:$2 sm:$0xff] %v8634
      %s8653 = scalar_lea.vmem [#allocation1], 16
      %8654 = vst [vmem:[%s8653] ss:$2 sm:$0xff] %v8635
      %s8655 = scalar_lea.vmem [#allocation1], 32
      %8656 = vst [vmem:[%s8655] ss:$2 sm:$0xff] %v8636
      %s8657 = scalar_lea.vmem [#allocation1], 48
      %8658 = vst [vmem:[%s8657] ss:$2 sm:$0xff] %v8637
      %v8659 = vld.sshfl [vmem:[#allocation1] sm:$0xff pattern:$0x75316420]
      %v8660 = vld.sshfl [vmem:[#allocation1 + $0x8] sm:$0xff pattern:$0x75316420]
      %v8661 = vld.sshfl [vmem:[#allocation1 + $0x10] sm:$0xff pattern:$0x75316420]
      %v8662 = vld.sshfl [vmem:[#allocation1 + $0x18] sm:$0xff pattern:$0x75316420]
      %v8663 = vld.sshfl [vmem:[#allocation1 + $0x20] sm:$0xff pattern:$0x75316420]
      %v8664 = vld.sshfl [vmem:[#allocation1 + $0x28] sm:$0xff pattern:$0x75316420]
      %v8665 = vld.sshfl [vmem:[#allocation1 + $0x30] sm:$0xff pattern:$0x75316420]
      %v8666 = vld.sshfl [vmem:[#allocation1 + $0x38] sm:$0xff pattern:$0x75316420]
      %8667 = vst [vmem:[#allocation1] ss:$2 sm:$0xff] %v8638
      %8668 = vst [vmem:[%s8653] ss:$2 sm:$0xff] %v8639
      %8669 = vst [vmem:[%s8655] ss:$2 sm:$0xff] %v8640
      %8670 = vst [vmem:[%s8657] ss:$2 sm:$0xff] %v8641
      %v8671 = vld.sshfl [vmem:[#allocation1] sm:$0xff pattern:$0x75316420]
      %v8672 = vld.sshfl [vmem:[#allocation1 + $0x8] sm:$0xff pattern:$0x75316420]
      %v8673 = vld.sshfl [vmem:[#allocation1 + $0x10] sm:$0xff pattern:$0x75316420]
      %v8674 = vld.sshfl [vmem:[#allocation1 + $0x18] sm:$0xff pattern:$0x75316420]
      %v8675 = vld.sshfl [vmem:[#allocation1 + $0x20] sm:$0xff pattern:$0x75316420]
      %v8676 = vld.sshfl [vmem:[#allocation1 + $0x28] sm:$0xff pattern:$0x75316420]
      %v8677 = vld.sshfl [vmem:[#allocation1 + $0x30] sm:$0xff pattern:$0x75316420]
      %8678 = vrot.lane.b32.xlu0 %v8659, 28
      %v8679 = vpop.permute.xlu0 %8678
      %8680 = vrot.lane.b32.xlu0 %v8660, 28
      %v8681 = vpop.permute.xlu0 %8680
      %8682 = vrot.lane.b32.xlu0 %v8661, 28
      %v8683 = vpop.permute.xlu0 %8682
      %8684 = vrot.lane.b32.xlu0 %v8662, 28
      %v8685 = vpop.permute.xlu0 %8684
      %8686 = vrot.lane.b32.xlu0 %v8663, 28
      %v8687 = vpop.permute.xlu0 %8686
      %8688 = vrot.lane.b32.xlu0 %v8664, 28
      %v8689 = vpop.permute.xlu0 %8688
      %8690 = vrot.lane.b32.xlu0 %v8665, 28
      %v8691 = vpop.permute.xlu0 %8690
      %8692 = vrot.lane.b32.xlu0 %v8666, 28
      %v8693 = vpop.permute.xlu0 %8692
      %8694 = vrot.lane.b32.xlu0 %v8671, 28
      %v8695 = vpop.permute.xlu0 %8694
      %8696 = vrot.lane.b32.xlu0 %v8672, 28
      %v8697 = vpop.permute.xlu0 %8696
      %8698 = vrot.lane.b32.xlu0 %v8673, 28
      %v8699 = vpop.permute.xlu0 %8698
      %8700 = vrot.lane.b32.xlu0 %v8674, 28
      %v8701 = vpop.permute.xlu0 %8700
      %8702 = vrot.lane.b32.xlu0 %v8675, 28
      %v8703 = vpop.permute.xlu0 %8702
      %8704 = vrot.lane.b32.xlu0 %v8676, 28
      %v8705 = vpop.permute.xlu0 %8704
      %8706 = vrot.lane.b32.xlu0 %v8677, 28
      %v8707 = vpop.permute.xlu0 %8706
      %vm8708 = vcmask 228352
      %v8709 = vsel %vm8708, %v8679, %v8681
      %v8710 = vsel %vm8708, %v8681, %v8683
      %v8711 = vsel %vm8708, %v8683, %v8685
      %v8712 = vsel %vm8708, %v8685, %v8687
      %v8713 = vsel %vm8708, %v8689, %v8691
      %v8714 = vsel %vm8708, %v8691, %v8693
      %v8715 = vsel %vm8708, %v8693, %v8695
      %v8716 = vsel %vm8708, %v8695, %v8697
      %v8717 = vsel %vm8708, %v8699, %v8701
      %v8718 = vsel %vm8708, %v8701, %v8703
      %v8719 = vsel %vm8708, %v8703, %v8705
      %v8720 = vsel %vm8708, %v8705, %v8707
      %v8721 = vsel %vm778, %v8643, 0
      %v8723 = vsel %vm640, %v8709, 0
      %v8725 = vsel %vm640, %v8710, 0
      %v8727 = vsel %vm640, %v8711, 0
      %v8729 = vsel %vm640, %v8712, 0
      %v8731 = vsel %vm640, %v8713, 0
      %v8733 = vsel %vm640, %v8714, 0
      %v8735 = vsel %vm640, %v8715, 0
      %v8737 = vsel %vm640, %v8716, 0
      %v8739 = vsel %vm640, %v8717, 0
      %v8741 = vsel %vm640, %v8718, 0
      %v8743 = vsel %vm640, %v8719, 0
      %v8745 = vsel %vm640, %v8720, 0
      %8747 = vmatpush.msra.mxu0 0.0
      %8748 = vmatpush.msra.mxu0 0.0
      %8749 = vmatpush.msra.mxu0 0.0
      %8750 = vmatpush.msra.mxu0 0.0
      %8751 = vmatpush.msra.mxu0 0.0
      %8752 = vmatpush.msra.mxu0 0.0
      %8753 = vmatpush.msra.mxu0 0.0
      %8754 = vmatpush.msra.mxu0 0.0
      %8755 = vmatpush.msra.mxu0 0.0
      %8756 = vmatpush.msra.mxu0 0.0
      %8757 = vmatpush.msra.mxu0 0.0
      %8758 = vmatpush.msra.mxu0 0.0
      %8759 = vmatpush.msra.mxu0 0.0
      %8760 = vmatpush.msra.mxu0 0.0
      %8761 = vmatpush.msra.mxu0 0.0
      %8762 = vmatpush.msra.mxu0 %v8723
      %8763 = vmatmul.f32.gmra.mxu0 %v8721
      %v8764 = vpop.f32.mrf.mxu0
      %v8765 = vadd.f32 0.0, %v8764
      %8766 = vdwg.mxu0
      %8767 = vmatpush.msra.mxu0 0.0
      %8768 = vmatpush.msra.mxu0 0.0
      %8769 = vmatpush.msra.mxu0 0.0
      %8770 = vmatpush.msra.mxu0 0.0
      %8771 = vmatpush.msra.mxu0 0.0
      %8772 = vmatpush.msra.mxu0 0.0
      %8773 = vmatpush.msra.mxu0 0.0
      %8774 = vmatpush.msra.mxu0 0.0
      %8775 = vmatpush.msra.mxu0 0.0
      %8776 = vmatpush.msra.mxu0 0.0
      %8777 = vmatpush.msra.mxu0 0.0
      %8778 = vmatpush.msra.mxu0 0.0
      %8779 = vmatpush.msra.mxu0 0.0
      %8780 = vmatpush.msra.mxu0 0.0
      %8781 = vmatpush.msra.mxu0 0.0
      %8782 = vmatpush.msra.mxu0 %v8725
      %8783 = vmatmul.f32.gmra.mxu0 %v8721
      %v8784 = vpop.f32.mrf.mxu0
      %v8785 = vadd.f32 0.0, %v8784
      %8786 = vdwg.mxu0
      %8787 = vmatpush.msra.mxu0 0.0
      %8788 = vmatpush.msra.mxu0 0.0
      %8789 = vmatpush.msra.mxu0 0.0
      %8790 = vmatpush.msra.mxu0 0.0
      %8791 = vmatpush.msra.mxu0 0.0
      %8792 = vmatpush.msra.mxu0 0.0
      %8793 = vmatpush.msra.mxu0 0.0
      %8794 = vmatpush.msra.mxu0 0.0
      %8795 = vmatpush.msra.mxu0 0.0
      %8796 = vmatpush.msra.mxu0 0.0
      %8797 = vmatpush.msra.mxu0 0.0
      %8798 = vmatpush.msra.mxu0 0.0
      %8799 = vmatpush.msra.mxu0 0.0
      %8800 = vmatpush.msra.mxu0 0.0
      %8801 = vmatpush.msra.mxu0 0.0
      %8802 = vmatpush.msra.mxu0 %v8727
      %8803 = vmatmul.f32.gmra.mxu0 %v8721
      %v8804 = vpop.f32.mrf.mxu0
      %v8805 = vadd.f32 0.0, %v8804
      %8806 = vdwg.mxu0
      %8807 = vmatpush.msra.mxu0 0.0
      %8808 = vmatpush.msra.mxu0 0.0
      %8809 = vmatpush.msra.mxu0 0.0
      %8810 = vmatpush.msra.mxu0 0.0
      %8811 = vmatpush.msra.mxu0 0.0
      %8812 = vmatpush.msra.mxu0 0.0
      %8813 = vmatpush.msra.mxu0 0.0
      %8814 = vmatpush.msra.mxu0 0.0
      %8815 = vmatpush.msra.mxu0 0.0
      %8816 = vmatpush.msra.mxu0 0.0
      %8817 = vmatpush.msra.mxu0 0.0
      %8818 = vmatpush.msra.mxu0 0.0
      %8819 = vmatpush.msra.mxu0 0.0
      %8820 = vmatpush.msra.mxu0 0.0
      %8821 = vmatpush.msra.mxu0 0.0
      %8822 = vmatpush.msra.mxu0 %v8729
      %8823 = vmatmul.f32.gmra.mxu0 %v8721
      %v8824 = vpop.f32.mrf.mxu0
      %v8825 = vadd.f32 0.0, %v8824
      %8826 = vdwg.mxu0
      %8827 = vmatpush.msra.mxu0 0.0
      %8828 = vmatpush.msra.mxu0 0.0
      %8829 = vmatpush.msra.mxu0 0.0
      %8830 = vmatpush.msra.mxu0 0.0
      %8831 = vmatpush.msra.mxu0 0.0
      %8832 = vmatpush.msra.mxu0 0.0
      %8833 = vmatpush.msra.mxu0 0.0
      %8834 = vmatpush.msra.mxu0 0.0
      %8835 = vmatpush.msra.mxu0 0.0
      %8836 = vmatpush.msra.mxu0 0.0
      %8837 = vmatpush.msra.mxu0 0.0
      %8838 = vmatpush.msra.mxu0 0.0
      %8839 = vmatpush.msra.mxu0 0.0
      %8840 = vmatpush.msra.mxu0 0.0
      %8841 = vmatpush.msra.mxu0 0.0
      %8842 = vmatpush.msra.mxu0 %v8731
      %8843 = vmatmul.f32.gmra.mxu0 %v8721
      %v8844 = vpop.f32.mrf.mxu0
      %v8845 = vadd.f32 0.0, %v8844
      %8846 = vdwg.mxu0
      %8847 = vmatpush.msra.mxu0 0.0
      %8848 = vmatpush.msra.mxu0 0.0
      %8849 = vmatpush.msra.mxu0 0.0
      %8850 = vmatpush.msra.mxu0 0.0
      %8851 = vmatpush.msra.mxu0 0.0
      %8852 = vmatpush.msra.mxu0 0.0
      %8853 = vmatpush.msra.mxu0 0.0
      %8854 = vmatpush.msra.mxu0 0.0
      %8855 = vmatpush.msra.mxu0 0.0
      %8856 = vmatpush.msra.mxu0 0.0
      %8857 = vmatpush.msra.mxu0 0.0
      %8858 = vmatpush.msra.mxu0 0.0
      %8859 = vmatpush.msra.mxu0 0.0
      %8860 = vmatpush.msra.mxu0 0.0
      %8861 = vmatpush.msra.mxu0 0.0
      %8862 = vmatpush.msra.mxu0 %v8733
      %8863 = vmatmul.f32.gmra.mxu0 %v8721
      %v8864 = vpop.f32.mrf.mxu0
      %v8865 = vadd.f32 0.0, %v8864
      %8866 = vdwg.mxu0
      %8867 = vmatpush.msra.mxu0 0.0
      %8868 = vmatpush.msra.mxu0 0.0
      %8869 = vmatpush.msra.mxu0 0.0
      %8870 = vmatpush.msra.mxu0 0.0
      %8871 = vmatpush.msra.mxu0 0.0
      %8872 = vmatpush.msra.mxu0 0.0
      %8873 = vmatpush.msra.mxu0 0.0
      %8874 = vmatpush.msra.mxu0 0.0
      %8875 = vmatpush.msra.mxu0 0.0
      %8876 = vmatpush.msra.mxu0 0.0
      %8877 = vmatpush.msra.mxu0 0.0
      %8878 = vmatpush.msra.mxu0 0.0
      %8879 = vmatpush.msra.mxu0 0.0
      %8880 = vmatpush.msra.mxu0 0.0
      %8881 = vmatpush.msra.mxu0 0.0
      %8882 = vmatpush.msra.mxu0 %v8735
      %8883 = vmatmul.f32.gmra.mxu0 %v8721
      %v8884 = vpop.f32.mrf.mxu0
      %v8885 = vadd.f32 0.0, %v8884
      %8886 = vdwg.mxu0
      %8887 = vmatpush.msra.mxu0 0.0
      %8888 = vmatpush.msra.mxu0 0.0
      %8889 = vmatpush.msra.mxu0 0.0
      %8890 = vmatpush.msra.mxu0 0.0
      %8891 = vmatpush.msra.mxu0 0.0
      %8892 = vmatpush.msra.mxu0 0.0
      %8893 = vmatpush.msra.mxu0 0.0
      %8894 = vmatpush.msra.mxu0 0.0
      %8895 = vmatpush.msra.mxu0 0.0
      %8896 = vmatpush.msra.mxu0 0.0
      %8897 = vmatpush.msra.mxu0 0.0
      %8898 = vmatpush.msra.mxu0 0.0
      %8899 = vmatpush.msra.mxu0 0.0
      %8900 = vmatpush.msra.mxu0 0.0
      %8901 = vmatpush.msra.mxu0 0.0
      %8902 = vmatpush.msra.mxu0 %v8737
      %8903 = vmatmul.f32.gmra.mxu0 %v8721
      %v8904 = vpop.f32.mrf.mxu0
      %v8905 = vadd.f32 0.0, %v8904
      %8906 = vdwg.mxu0
      %8907 = vmatpush.msra.mxu0 0.0
      %8908 = vmatpush.msra.mxu0 0.0
      %8909 = vmatpush.msra.mxu0 0.0
      %8910 = vmatpush.msra.mxu0 0.0
      %8911 = vmatpush.msra.mxu0 0.0
      %8912 = vmatpush.msra.mxu0 0.0
      %8913 = vmatpush.msra.mxu0 0.0
      %8914 = vmatpush.msra.mxu0 0.0
      %8915 = vmatpush.msra.mxu0 0.0
      %8916 = vmatpush.msra.mxu0 0.0
      %8917 = vmatpush.msra.mxu0 0.0
      %8918 = vmatpush.msra.mxu0 0.0
      %8919 = vmatpush.msra.mxu0 0.0
      %8920 = vmatpush.msra.mxu0 0.0
      %8921 = vmatpush.msra.mxu0 0.0
      %8922 = vmatpush.msra.mxu0 %v8739
      %8923 = vmatmul.f32.gmra.mxu0 %v8721
      %v8924 = vpop.f32.mrf.mxu0
      %v8925 = vadd.f32 0.0, %v8924
      %8926 = vdwg.mxu0
      %8927 = vmatpush.msra.mxu0 0.0
      %8928 = vmatpush.msra.mxu0 0.0
      %8929 = vmatpush.msra.mxu0 0.0
      %8930 = vmatpush.msra.mxu0 0.0
      %8931 = vmatpush.msra.mxu0 0.0
      %8932 = vmatpush.msra.mxu0 0.0
      %8933 = vmatpush.msra.mxu0 0.0
      %8934 = vmatpush.msra.mxu0 0.0
      %8935 = vmatpush.msra.mxu0 0.0
      %8936 = vmatpush.msra.mxu0 0.0
      %8937 = vmatpush.msra.mxu0 0.0
      %8938 = vmatpush.msra.mxu0 0.0
      %8939 = vmatpush.msra.mxu0 0.0
      %8940 = vmatpush.msra.mxu0 0.0
      %8941 = vmatpush.msra.mxu0 0.0
      %8942 = vmatpush.msra.mxu0 %v8741
      %8943 = vmatmul.f32.gmra.mxu0 %v8721
      %v8944 = vpop.f32.mrf.mxu0
      %v8945 = vadd.f32 0.0, %v8944
      %8946 = vdwg.mxu0
      %8947 = vmatpush.msra.mxu0 0.0
      %8948 = vmatpush.msra.mxu0 0.0
      %8949 = vmatpush.msra.mxu0 0.0
      %8950 = vmatpush.msra.mxu0 0.0
      %8951 = vmatpush.msra.mxu0 0.0
      %8952 = vmatpush.msra.mxu0 0.0
      %8953 = vmatpush.msra.mxu0 0.0
      %8954 = vmatpush.msra.mxu0 0.0
      %8955 = vmatpush.msra.mxu0 0.0
      %8956 = vmatpush.msra.mxu0 0.0
      %8957 = vmatpush.msra.mxu0 0.0
      %8958 = vmatpush.msra.mxu0 0.0
      %8959 = vmatpush.msra.mxu0 0.0
      %8960 = vmatpush.msra.mxu0 0.0
      %8961 = vmatpush.msra.mxu0 0.0
      %8962 = vmatpush.msra.mxu0 %v8743
      %8963 = vmatmul.f32.gmra.mxu0 %v8721
      %v8964 = vpop.f32.mrf.mxu0
      %v8965 = vadd.f32 0.0, %v8964
      %8966 = vdwg.mxu0
      %8967 = vmatpush.msra.mxu0 0.0
      %8968 = vmatpush.msra.mxu0 0.0
      %8969 = vmatpush.msra.mxu0 0.0
      %8970 = vmatpush.msra.mxu0 0.0
      %8971 = vmatpush.msra.mxu0 0.0
      %8972 = vmatpush.msra.mxu0 0.0
      %8973 = vmatpush.msra.mxu0 0.0
      %8974 = vmatpush.msra.mxu0 0.0
      %8975 = vmatpush.msra.mxu0 0.0
      %8976 = vmatpush.msra.mxu0 0.0
      %8977 = vmatpush.msra.mxu0 0.0
      %8978 = vmatpush.msra.mxu0 0.0
      %8979 = vmatpush.msra.mxu0 0.0
      %8980 = vmatpush.msra.mxu0 0.0
      %8981 = vmatpush.msra.mxu0 0.0
      %8982 = vmatpush.msra.mxu0 %v8745
      %8983 = vmatmul.f32.gmra.mxu0 %v8721
      %v8984 = vpop.f32.mrf.mxu0
      %v8985 = vadd.f32 0.0, %v8984
      %8986 = vdwg.mxu0
      %v8987 = vadd.f32 %v8622, %v8765
      %v8988 = vadd.f32 %v8623, %v8785
      %v8989 = vadd.f32 %v8624, %v8805
      %v8990 = vadd.f32 %v8625, %v8825
      %v8991 = vadd.f32 %v8626, %v8845
      %v8992 = vadd.f32 %v8627, %v8865
      %v8993 = vadd.f32 %v8628, %v8885
      %v8994 = vadd.f32 %v8629, %v8905
      %v8995 = vadd.f32 %v8630, %v8925
      %v8996 = vadd.f32 %v8631, %v8945
      %v8997 = vadd.f32 %v8632, %v8965
      %v8998 = vadd.f32 %v8633, %v8985
      %v8999 = vld [vmem:[#allocation2 + $0x4] sm:$0xff]
      %v9000 = vld [vmem:[#allocation2 + $0xc] sm:$0xff]
      %v9001 = vld [vmem:[#allocation2 + $0x14] sm:$0xff]
      %v9002 = vld [vmem:[#allocation2 + $0x1c] sm:$0xff]
      %v9003 = vld [vmem:[#allocation2 + $0x24] sm:$0xff]
      %v9004 = vld [vmem:[#allocation2 + $0x2c] sm:$0xff]
      %v9005 = vld [vmem:[#allocation2 + $0x34] sm:$0xff]
      %v9006 = vld [vmem:[#allocation2 + $0x3c] sm:$0xf]
      %9007 = vrot.lane.b32.xlu0 %v689, 36
      %v9008 = vpop.permute.xlu0 %9007
      %9017 = vst [vmem:[#allocation1] ss:$2 sm:$0xff] %v8999
      %s9018 = scalar_lea.vmem [#allocation1], 16
      %9019 = vst [vmem:[%s9018] ss:$2 sm:$0xff] %v9000
      %s9020 = scalar_lea.vmem [#allocation1], 32
      %9021 = vst [vmem:[%s9020] ss:$2 sm:$0xff] %v9001
      %s9022 = scalar_lea.vmem [#allocation1], 48
      %9023 = vst [vmem:[%s9022] ss:$2 sm:$0xff] %v9002
      %v9024 = vld.sshfl [vmem:[#allocation1] sm:$0xff pattern:$0x75316420]
      %v9025 = vld.sshfl [vmem:[#allocation1 + $0x8] sm:$0xff pattern:$0x75316420]
      %v9026 = vld.sshfl [vmem:[#allocation1 + $0x10] sm:$0xff pattern:$0x75316420]
      %v9027 = vld.sshfl [vmem:[#allocation1 + $0x18] sm:$0xff pattern:$0x75316420]
      %v9028 = vld.sshfl [vmem:[#allocation1 + $0x20] sm:$0xff pattern:$0x75316420]
      %v9029 = vld.sshfl [vmem:[#allocation1 + $0x28] sm:$0xff pattern:$0x75316420]
      %v9030 = vld.sshfl [vmem:[#allocation1 + $0x30] sm:$0xff pattern:$0x75316420]
      %v9031 = vld.sshfl [vmem:[#allocation1 + $0x38] sm:$0xff pattern:$0x75316420]
      %9032 = vst [vmem:[#allocation1] ss:$2 sm:$0xff] %v9003
      %9033 = vst [vmem:[%s9018] ss:$2 sm:$0xff] %v9004
      %9034 = vst [vmem:[%s9020] ss:$2 sm:$0xff] %v9005
      %9035 = vst [vmem:[%s9022] ss:$2 sm:$0xff] %v9006
      %v9036 = vld.sshfl [vmem:[#allocation1] sm:$0xff pattern:$0x75316420]
      %v9037 = vld.sshfl [vmem:[#allocation1 + $0x8] sm:$0xff pattern:$0x75316420]
      %v9038 = vld.sshfl [vmem:[#allocation1 + $0x10] sm:$0xff pattern:$0x75316420]
      %v9039 = vld.sshfl [vmem:[#allocation1 + $0x18] sm:$0xff pattern:$0x75316420]
      %v9040 = vld.sshfl [vmem:[#allocation1 + $0x20] sm:$0xff pattern:$0x75316420]
      %v9041 = vld.sshfl [vmem:[#allocation1 + $0x28] sm:$0xff pattern:$0x75316420]
      %v9042 = vld.sshfl [vmem:[#allocation1 + $0x30] sm:$0xff pattern:$0x75316420]
      %9043 = vrot.lane.b32.xlu0 %v9024, 27
      %v9044 = vpop.permute.xlu0 %9043
      %9045 = vrot.lane.b32.xlu0 %v9025, 27
      %v9046 = vpop.permute.xlu0 %9045
      %9047 = vrot.lane.b32.xlu0 %v9026, 27
      %v9048 = vpop.permute.xlu0 %9047
      %9049 = vrot.lane.b32.xlu0 %v9027, 27
      %v9050 = vpop.permute.xlu0 %9049
      %9051 = vrot.lane.b32.xlu0 %v9028, 27
      %v9052 = vpop.permute.xlu0 %9051
      %9053 = vrot.lane.b32.xlu0 %v9029, 27
      %v9054 = vpop.permute.xlu0 %9053
      %9055 = vrot.lane.b32.xlu0 %v9030, 27
      %v9056 = vpop.permute.xlu0 %9055
      %9057 = vrot.lane.b32.xlu0 %v9031, 27
      %v9058 = vpop.permute.xlu0 %9057
      %9059 = vrot.lane.b32.xlu0 %v9036, 27
      %v9060 = vpop.permute.xlu0 %9059
      %9061 = vrot.lane.b32.xlu0 %v9037, 27
      %v9062 = vpop.permute.xlu0 %9061
      %9063 = vrot.lane.b32.xlu0 %v9038, 27
      %v9064 = vpop.permute.xlu0 %9063
      %9065 = vrot.lane.b32.xlu0 %v9039, 27
      %v9066 = vpop.permute.xlu0 %9065
      %9067 = vrot.lane.b32.xlu0 %v9040, 27
      %v9068 = vpop.permute.xlu0 %9067
      %9069 = vrot.lane.b32.xlu0 %v9041, 27
      %v9070 = vpop.permute.xlu0 %9069
      %9071 = vrot.lane.b32.xlu0 %v9042, 27
      %v9072 = vpop.permute.xlu0 %9071
      %vm9073 = vcmask 220160
      %v9074 = vsel %vm9073, %v9044, %v9046
      %v9075 = vsel %vm9073, %v9046, %v9048
      %v9076 = vsel %vm9073, %v9048, %v9050
      %v9077 = vsel %vm9073, %v9050, %v9052
      %v9078 = vsel %vm9073, %v9054, %v9056
      %v9079 = vsel %vm9073, %v9056, %v9058
      %v9080 = vsel %vm9073, %v9058, %v9060
      %v9081 = vsel %vm9073, %v9060, %v9062
      %v9082 = vsel %vm9073, %v9064, %v9066
      %v9083 = vsel %vm9073, %v9066, %v9068
      %v9084 = vsel %vm9073, %v9068, %v9070
      %v9085 = vsel %vm9073, %v9070, %v9072
      %v9086 = vsel %vm778, %v9008, 0
      %v9088 = vsel %vm640, %v9074, 0
      %v9090 = vsel %vm640, %v9075, 0
      %v9092 = vsel %vm640, %v9076, 0
      %v9094 = vsel %vm640, %v9077, 0
      %v9096 = vsel %vm640, %v9078, 0
      %v9098 = vsel %vm640, %v9079, 0
      %v9100 = vsel %vm640, %v9080, 0
      %v9102 = vsel %vm640, %v9081, 0
      %v9104 = vsel %vm640, %v9082, 0
      %v9106 = vsel %vm640, %v9083, 0
      %v9108 = vsel %vm640, %v9084, 0
      %v9110 = vsel %vm640, %v9085, 0
      %9112 = vmatpush.msra.mxu0 0.0
      %9113 = vmatpush.msra.mxu0 0.0
      %9114 = vmatpush.msra.mxu0 0.0
      %9115 = vmatpush.msra.mxu0 0.0
      %9116 = vmatpush.msra.mxu0 0.0
      %9117 = vmatpush.msra.mxu0 0.0
      %9118 = vmatpush.msra.mxu0 0.0
      %9119 = vmatpush.msra.mxu0 0.0
      %9120 = vmatpush.msra.mxu0 0.0
      %9121 = vmatpush.msra.mxu0 0.0
      %9122 = vmatpush.msra.mxu0 0.0
      %9123 = vmatpush.msra.mxu0 0.0
      %9124 = vmatpush.msra.mxu0 0.0
      %9125 = vmatpush.msra.mxu0 0.0
      %9126 = vmatpush.msra.mxu0 0.0
      %9127 = vmatpush.msra.mxu0 %v9088
      %9128 = vmatmul.f32.gmra.mxu0 %v9086
      %v9129 = vpop.f32.mrf.mxu0
      %v9130 = vadd.f32 0.0, %v9129
      %9131 = vdwg.mxu0
      %9132 = vmatpush.msra.mxu0 0.0
      %9133 = vmatpush.msra.mxu0 0.0
      %9134 = vmatpush.msra.mxu0 0.0
      %9135 = vmatpush.msra.mxu0 0.0
      %9136 = vmatpush.msra.mxu0 0.0
      %9137 = vmatpush.msra.mxu0 0.0
      %9138 = vmatpush.msra.mxu0 0.0
      %9139 = vmatpush.msra.mxu0 0.0
      %9140 = vmatpush.msra.mxu0 0.0
      %9141 = vmatpush.msra.mxu0 0.0
      %9142 = vmatpush.msra.mxu0 0.0
      %9143 = vmatpush.msra.mxu0 0.0
      %9144 = vmatpush.msra.mxu0 0.0
      %9145 = vmatpush.msra.mxu0 0.0
      %9146 = vmatpush.msra.mxu0 0.0
      %9147 = vmatpush.msra.mxu0 %v9090
      %9148 = vmatmul.f32.gmra.mxu0 %v9086
      %v9149 = vpop.f32.mrf.mxu0
      %v9150 = vadd.f32 0.0, %v9149
      %9151 = vdwg.mxu0
      %9152 = vmatpush.msra.mxu0 0.0
      %9153 = vmatpush.msra.mxu0 0.0
      %9154 = vmatpush.msra.mxu0 0.0
      %9155 = vmatpush.msra.mxu0 0.0
      %9156 = vmatpush.msra.mxu0 0.0
      %9157 = vmatpush.msra.mxu0 0.0
      %9158 = vmatpush.msra.mxu0 0.0
      %9159 = vmatpush.msra.mxu0 0.0
      %9160 = vmatpush.msra.mxu0 0.0
      %9161 = vmatpush.msra.mxu0 0.0
      %9162 = vmatpush.msra.mxu0 0.0
      %9163 = vmatpush.msra.mxu0 0.0
      %9164 = vmatpush.msra.mxu0 0.0
      %9165 = vmatpush.msra.mxu0 0.0
      %9166 = vmatpush.msra.mxu0 0.0
      %9167 = vmatpush.msra.mxu0 %v9092
      %9168 = vmatmul.f32.gmra.mxu0 %v9086
      %v9169 = vpop.f32.mrf.mxu0
      %v9170 = vadd.f32 0.0, %v9169
      %9171 = vdwg.mxu0
      %9172 = vmatpush.msra.mxu0 0.0
      %9173 = vmatpush.msra.mxu0 0.0
      %9174 = vmatpush.msra.mxu0 0.0
      %9175 = vmatpush.msra.mxu0 0.0
      %9176 = vmatpush.msra.mxu0 0.0
      %9177 = vmatpush.msra.mxu0 0.0
      %9178 = vmatpush.msra.mxu0 0.0
      %9179 = vmatpush.msra.mxu0 0.0
      %9180 = vmatpush.msra.mxu0 0.0
      %9181 = vmatpush.msra.mxu0 0.0
      %9182 = vmatpush.msra.mxu0 0.0
      %9183 = vmatpush.msra.mxu0 0.0
      %9184 = vmatpush.msra.mxu0 0.0
      %9185 = vmatpush.msra.mxu0 0.0
      %9186 = vmatpush.msra.mxu0 0.0
      %9187 = vmatpush.msra.mxu0 %v9094
      %9188 = vmatmul.f32.gmra.mxu0 %v9086
      %v9189 = vpop.f32.mrf.mxu0
      %v9190 = vadd.f32 0.0, %v9189
      %9191 = vdwg.mxu0
      %9192 = vmatpush.msra.mxu0 0.0
      %9193 = vmatpush.msra.mxu0 0.0
      %9194 = vmatpush.msra.mxu0 0.0
      %9195 = vmatpush.msra.mxu0 0.0
      %9196 = vmatpush.msra.mxu0 0.0
      %9197 = vmatpush.msra.mxu0 0.0
      %9198 = vmatpush.msra.mxu0 0.0
      %9199 = vmatpush.msra.mxu0 0.0
      %9200 = vmatpush.msra.mxu0 0.0
      %9201 = vmatpush.msra.mxu0 0.0
      %9202 = vmatpush.msra.mxu0 0.0
      %9203 = vmatpush.msra.mxu0 0.0
      %9204 = vmatpush.msra.mxu0 0.0
      %9205 = vmatpush.msra.mxu0 0.0
      %9206 = vmatpush.msra.mxu0 0.0
      %9207 = vmatpush.msra.mxu0 %v9096
      %9208 = vmatmul.f32.gmra.mxu0 %v9086
      %v9209 = vpop.f32.mrf.mxu0
      %v9210 = vadd.f32 0.0, %v9209
      %9211 = vdwg.mxu0
      %9212 = vmatpush.msra.mxu0 0.0
      %9213 = vmatpush.msra.mxu0 0.0
      %9214 = vmatpush.msra.mxu0 0.0
      %9215 = vmatpush.msra.mxu0 0.0
      %9216 = vmatpush.msra.mxu0 0.0
      %9217 = vmatpush.msra.mxu0 0.0
      %9218 = vmatpush.msra.mxu0 0.0
      %9219 = vmatpush.msra.mxu0 0.0
      %9220 = vmatpush.msra.mxu0 0.0
      %9221 = vmatpush.msra.mxu0 0.0
      %9222 = vmatpush.msra.mxu0 0.0
      %9223 = vmatpush.msra.mxu0 0.0
      %9224 = vmatpush.msra.mxu0 0.0
      %9225 = vmatpush.msra.mxu0 0.0
      %9226 = vmatpush.msra.mxu0 0.0
      %9227 = vmatpush.msra.mxu0 %v9098
      %9228 = vmatmul.f32.gmra.mxu0 %v9086
      %v9229 = vpop.f32.mrf.mxu0
      %v9230 = vadd.f32 0.0, %v9229
      %9231 = vdwg.mxu0
      %9232 = vmatpush.msra.mxu0 0.0
      %9233 = vmatpush.msra.mxu0 0.0
      %9234 = vmatpush.msra.mxu0 0.0
      %9235 = vmatpush.msra.mxu0 0.0
      %9236 = vmatpush.msra.mxu0 0.0
      %9237 = vmatpush.msra.mxu0 0.0
      %9238 = vmatpush.msra.mxu0 0.0
      %9239 = vmatpush.msra.mxu0 0.0
      %9240 = vmatpush.msra.mxu0 0.0
      %9241 = vmatpush.msra.mxu0 0.0
      %9242 = vmatpush.msra.mxu0 0.0
      %9243 = vmatpush.msra.mxu0 0.0
      %9244 = vmatpush.msra.mxu0 0.0
      %9245 = vmatpush.msra.mxu0 0.0
      %9246 = vmatpush.msra.mxu0 0.0
      %9247 = vmatpush.msra.mxu0 %v9100
      %9248 = vmatmul.f32.gmra.mxu0 %v9086
      %v9249 = vpop.f32.mrf.mxu0
      %v9250 = vadd.f32 0.0, %v9249
      %9251 = vdwg.mxu0
      %9252 = vmatpush.msra.mxu0 0.0
      %9253 = vmatpush.msra.mxu0 0.0
      %9254 = vmatpush.msra.mxu0 0.0
      %9255 = vmatpush.msra.mxu0 0.0
      %9256 = vmatpush.msra.mxu0 0.0
      %9257 = vmatpush.msra.mxu0 0.0
      %9258 = vmatpush.msra.mxu0 0.0
      %9259 = vmatpush.msra.mxu0 0.0
      %9260 = vmatpush.msra.mxu0 0.0
      %9261 = vmatpush.msra.mxu0 0.0
      %9262 = vmatpush.msra.mxu0 0.0
      %9263 = vmatpush.msra.mxu0 0.0
      %9264 = vmatpush.msra.mxu0 0.0
      %9265 = vmatpush.msra.mxu0 0.0
      %9266 = vmatpush.msra.mxu0 0.0
      %9267 = vmatpush.msra.mxu0 %v9102
      %9268 = vmatmul.f32.gmra.mxu0 %v9086
      %v9269 = vpop.f32.mrf.mxu0
      %v9270 = vadd.f32 0.0, %v9269
      %9271 = vdwg.mxu0
      %9272 = vmatpush.msra.mxu0 0.0
      %9273 = vmatpush.msra.mxu0 0.0
      %9274 = vmatpush.msra.mxu0 0.0
      %9275 = vmatpush.msra.mxu0 0.0
      %9276 = vmatpush.msra.mxu0 0.0
      %9277 = vmatpush.msra.mxu0 0.0
      %9278 = vmatpush.msra.mxu0 0.0
      %9279 = vmatpush.msra.mxu0 0.0
      %9280 = vmatpush.msra.mxu0 0.0
      %9281 = vmatpush.msra.mxu0 0.0
      %9282 = vmatpush.msra.mxu0 0.0
      %9283 = vmatpush.msra.mxu0 0.0
      %9284 = vmatpush.msra.mxu0 0.0
      %9285 = vmatpush.msra.mxu0 0.0
      %9286 = vmatpush.msra.mxu0 0.0
      %9287 = vmatpush.msra.mxu0 %v9104
      %9288 = vmatmul.f32.gmra.mxu0 %v9086
      %v9289 = vpop.f32.mrf.mxu0
      %v9290 = vadd.f32 0.0, %v9289
      %9291 = vdwg.mxu0
      %9292 = vmatpush.msra.mxu0 0.0
      %9293 = vmatpush.msra.mxu0 0.0
      %9294 = vmatpush.msra.mxu0 0.0
      %9295 = vmatpush.msra.mxu0 0.0
      %9296 = vmatpush.msra.mxu0 0.0
      %9297 = vmatpush.msra.mxu0 0.0
      %9298 = vmatpush.msra.mxu0 0.0
      %9299 = vmatpush.msra.mxu0 0.0
      %9300 = vmatpush.msra.mxu0 0.0
      %9301 = vmatpush.msra.mxu0 0.0
      %9302 = vmatpush.msra.mxu0 0.0
      %9303 = vmatpush.msra.mxu0 0.0
      %9304 = vmatpush.msra.mxu0 0.0
      %9305 = vmatpush.msra.mxu0 0.0
      %9306 = vmatpush.msra.mxu0 0.0
      %9307 = vmatpush.msra.mxu0 %v9106
      %9308 = vmatmul.f32.gmra.mxu0 %v9086
      %v9309 = vpop.f32.mrf.mxu0
      %v9310 = vadd.f32 0.0, %v9309
      %9311 = vdwg.mxu0
      %9312 = vmatpush.msra.mxu0 0.0
      %9313 = vmatpush.msra.mxu0 0.0
      %9314 = vmatpush.msra.mxu0 0.0
      %9315 = vmatpush.msra.mxu0 0.0
      %9316 = vmatpush.msra.mxu0 0.0
      %9317 = vmatpush.msra.mxu0 0.0
      %9318 = vmatpush.msra.mxu0 0.0
      %9319 = vmatpush.msra.mxu0 0.0
      %9320 = vmatpush.msra.mxu0 0.0
      %9321 = vmatpush.msra.mxu0 0.0
      %9322 = vmatpush.msra.mxu0 0.0
      %9323 = vmatpush.msra.mxu0 0.0
      %9324 = vmatpush.msra.mxu0 0.0
      %9325 = vmatpush.msra.mxu0 0.0
      %9326 = vmatpush.msra.mxu0 0.0
      %9327 = vmatpush.msra.mxu0 %v9108
      %9328 = vmatmul.f32.gmra.mxu0 %v9086
      %v9329 = vpop.f32.mrf.mxu0
      %v9330 = vadd.f32 0.0, %v9329
      %9331 = vdwg.mxu0
      %9332 = vmatpush.msra.mxu0 0.0
      %9333 = vmatpush.msra.mxu0 0.0
      %9334 = vmatpush.msra.mxu0 0.0
      %9335 = vmatpush.msra.mxu0 0.0
      %9336 = vmatpush.msra.mxu0 0.0
      %9337 = vmatpush.msra.mxu0 0.0
      %9338 = vmatpush.msra.mxu0 0.0
      %9339 = vmatpush.msra.mxu0 0.0
      %9340 = vmatpush.msra.mxu0 0.0
      %9341 = vmatpush.msra.mxu0 0.0
      %9342 = vmatpush.msra.mxu0 0.0
      %9343 = vmatpush.msra.mxu0 0.0
      %9344 = vmatpush.msra.mxu0 0.0
      %9345 = vmatpush.msra.mxu0 0.0
      %9346 = vmatpush.msra.mxu0 0.0
      %9347 = vmatpush.msra.mxu0 %v9110
      %9348 = vmatmul.f32.gmra.mxu0 %v9086
      %v9349 = vpop.f32.mrf.mxu0
      %v9350 = vadd.f32 0.0, %v9349
      %9351 = vdwg.mxu0
      %v9352 = vadd.f32 %v8987, %v9130
      %v9353 = vadd.f32 %v8988, %v9150
      %v9354 = vadd.f32 %v8989, %v9170
      %v9355 = vadd.f32 %v8990, %v9190
      %v9356 = vadd.f32 %v8991, %v9210
      %v9357 = vadd.f32 %v8992, %v9230
      %v9358 = vadd.f32 %v8993, %v9250
      %v9359 = vadd.f32 %v8994, %v9270
      %v9360 = vadd.f32 %v8995, %v9290
      %v9361 = vadd.f32 %v8996, %v9310
      %v9362 = vadd.f32 %v8997, %v9330
      %v9363 = vadd.f32 %v8998, %v9350
      %v9364 = vld [vmem:[#allocation2 + $0x4] sm:$0xff]
      %v9365 = vld [vmem:[#allocation2 + $0xc] sm:$0xff]
      %v9366 = vld [vmem:[#allocation2 + $0x14] sm:$0xff]
      %v9367 = vld [vmem:[#allocation2 + $0x1c] sm:$0xff]
      %v9368 = vld [vmem:[#allocation2 + $0x24] sm:$0xff]
      %v9369 = vld [vmem:[#allocation2 + $0x2c] sm:$0xff]
      %v9370 = vld [vmem:[#allocation2 + $0x34] sm:$0xff]
      %v9371 = vld [vmem:[#allocation2 + $0x3c] sm:$0xf]
      %9372 = vrot.lane.b32.xlu0 %v689, 32
      %v9373 = vpop.permute.xlu0 %9372
      %9382 = vst [vmem:[#allocation1] ss:$2 sm:$0xff] %v9364
      %s9383 = scalar_lea.vmem [#allocation1], 16
      %9384 = vst [vmem:[%s9383] ss:$2 sm:$0xff] %v9365
      %s9385 = scalar_lea.vmem [#allocation1], 32
      %9386 = vst [vmem:[%s9385] ss:$2 sm:$0xff] %v9366
      %s9387 = scalar_lea.vmem [#allocation1], 48
      %9388 = vst [vmem:[%s9387] ss:$2 sm:$0xff] %v9367
      %v9389 = vld.sshfl [vmem:[#allocation1] sm:$0xff pattern:$0x75316420]
      %v9390 = vld.sshfl [vmem:[#allocation1 + $0x8] sm:$0xff pattern:$0x75316420]
      %v9391 = vld.sshfl [vmem:[#allocation1 + $0x10] sm:$0xff pattern:$0x75316420]
      %v9392 = vld.sshfl [vmem:[#allocation1 + $0x18] sm:$0xff pattern:$0x75316420]
      %v9393 = vld.sshfl [vmem:[#allocation1 + $0x20] sm:$0xff pattern:$0x75316420]
      %v9394 = vld.sshfl [vmem:[#allocation1 + $0x28] sm:$0xff pattern:$0x75316420]
      %v9395 = vld.sshfl [vmem:[#allocation1 + $0x30] sm:$0xff pattern:$0x75316420]
      %v9396 = vld.sshfl [vmem:[#allocation1 + $0x38] sm:$0xff pattern:$0x75316420]
      %9397 = vst [vmem:[#allocation1] ss:$2 sm:$0xff] %v9368
      %9398 = vst [vmem:[%s9383] ss:$2 sm:$0xff] %v9369
      %9399 = vst [vmem:[%s9385] ss:$2 sm:$0xff] %v9370
      %9400 = vst [vmem:[%s9387] ss:$2 sm:$0xff] %v9371
      %v9401 = vld.sshfl [vmem:[#allocation1] sm:$0xff pattern:$0x75316420]
      %v9402 = vld.sshfl [vmem:[#allocation1 + $0x8] sm:$0xff pattern:$0x75316420]
      %v9403 = vld.sshfl [vmem:[#allocation1 + $0x10] sm:$0xff pattern:$0x75316420]
      %v9404 = vld.sshfl [vmem:[#allocation1 + $0x18] sm:$0xff pattern:$0x75316420]
      %v9405 = vld.sshfl [vmem:[#allocation1 + $0x20] sm:$0xff pattern:$0x75316420]
      %v9406 = vld.sshfl [vmem:[#allocation1 + $0x28] sm:$0xff pattern:$0x75316420]
      %v9407 = vld.sshfl [vmem:[#allocation1 + $0x30] sm:$0xff pattern:$0x75316420]
      %9408 = vrot.lane.b32.xlu0 %v9389, 19
      %v9409 = vpop.permute.xlu0 %9408
      %9410 = vrot.lane.b32.xlu0 %v9390, 19
      %v9411 = vpop.permute.xlu0 %9410
      %9412 = vrot.lane.b32.xlu0 %v9391, 19
      %v9413 = vpop.permute.xlu0 %9412
      %9414 = vrot.lane.b32.xlu0 %v9392, 19
      %v9415 = vpop.permute.xlu0 %9414
      %9416 = vrot.lane.b32.xlu0 %v9393, 19
      %v9417 = vpop.permute.xlu0 %9416
      %9418 = vrot.lane.b32.xlu0 %v9394, 19
      %v9419 = vpop.permute.xlu0 %9418
      %9420 = vrot.lane.b32.xlu0 %v9395, 19
      %v9421 = vpop.permute.xlu0 %9420
      %9422 = vrot.lane.b32.xlu0 %v9396, 19
      %v9423 = vpop.permute.xlu0 %9422
      %9424 = vrot.lane.b32.xlu0 %v9401, 19
      %v9425 = vpop.permute.xlu0 %9424
      %9426 = vrot.lane.b32.xlu0 %v9402, 19
      %v9427 = vpop.permute.xlu0 %9426
      %9428 = vrot.lane.b32.xlu0 %v9403, 19
      %v9429 = vpop.permute.xlu0 %9428
      %9430 = vrot.lane.b32.xlu0 %v9404, 19
      %v9431 = vpop.permute.xlu0 %9430
      %9432 = vrot.lane.b32.xlu0 %v9405, 19
      %v9433 = vpop.permute.xlu0 %9432
      %9434 = vrot.lane.b32.xlu0 %v9406, 19
      %v9435 = vpop.permute.xlu0 %9434
      %9436 = vrot.lane.b32.xlu0 %v9407, 19
      %v9437 = vpop.permute.xlu0 %9436
      %vm9438 = vcmask 154624
      %v9439 = vsel %vm9438, %v9409, %v9411
      %v9440 = vsel %vm9438, %v9411, %v9413
      %v9441 = vsel %vm9438, %v9413, %v9415
      %v9442 = vsel %vm9438, %v9415, %v9417
      %v9443 = vsel %vm9438, %v9419, %v9421
      %v9444 = vsel %vm9438, %v9421, %v9423
      %v9445 = vsel %vm9438, %v9423, %v9425
      %v9446 = vsel %vm9438, %v9425, %v9427
      %v9447 = vsel %vm9438, %v9429, %v9431
      %v9448 = vsel %vm9438, %v9431, %v9433
      %v9449 = vsel %vm9438, %v9433, %v9435
      %v9450 = vsel %vm9438, %v9435, %v9437
      %v9451 = vsel %vm778, %v9373, 0
      %v9453 = vsel %vm640, %v9439, 0
      %v9455 = vsel %vm640, %v9440, 0
      %v9457 = vsel %vm640, %v9441, 0
      %v9459 = vsel %vm640, %v9442, 0
      %v9461 = vsel %vm640, %v9443, 0
      %v9463 = vsel %vm640, %v9444, 0
      %v9465 = vsel %vm640, %v9445, 0
      %v9467 = vsel %vm640, %v9446, 0
      %v9469 = vsel %vm640, %v9447, 0
      %v9471 = vsel %vm640, %v9448, 0
      %v9473 = vsel %vm640, %v9449, 0
      %v9475 = vsel %vm640, %v9450, 0
      %9477 = vmatpush.msra.mxu0 0.0
      %9478 = vmatpush.msra.mxu0 0.0
      %9479 = vmatpush.msra.mxu0 0.0
      %9480 = vmatpush.msra.mxu0 0.0
      %9481 = vmatpush.msra.mxu0 0.0
      %9482 = vmatpush.msra.mxu0 0.0
      %9483 = vmatpush.msra.mxu0 0.0
      %9484 = vmatpush.msra.mxu0 0.0
      %9485 = vmatpush.msra.mxu0 0.0
      %9486 = vmatpush.msra.mxu0 0.0
      %9487 = vmatpush.msra.mxu0 0.0
      %9488 = vmatpush.msra.mxu0 0.0
      %9489 = vmatpush.msra.mxu0 0.0
      %9490 = vmatpush.msra.mxu0 0.0
      %9491 = vmatpush.msra.mxu0 0.0
      %9492 = vmatpush.msra.mxu0 %v9453
      %9493 = vmatmul.f32.gmra.mxu0 %v9451
      %v9494 = vpop.f32.mrf.mxu0
      %v9495 = vadd.f32 0.0, %v9494
      %9496 = vdwg.mxu0
      %9497 = vmatpush.msra.mxu0 0.0
      %9498 = vmatpush.msra.mxu0 0.0
      %9499 = vmatpush.msra.mxu0 0.0
      %9500 = vmatpush.msra.mxu0 0.0
      %9501 = vmatpush.msra.mxu0 0.0
      %9502 = vmatpush.msra.mxu0 0.0
      %9503 = vmatpush.msra.mxu0 0.0
      %9504 = vmatpush.msra.mxu0 0.0
      %9505 = vmatpush.msra.mxu0 0.0
      %9506 = vmatpush.msra.mxu0 0.0
      %9507 = vmatpush.msra.mxu0 0.0
      %9508 = vmatpush.msra.mxu0 0.0
      %9509 = vmatpush.msra.mxu0 0.0
      %9510 = vmatpush.msra.mxu0 0.0
      %9511 = vmatpush.msra.mxu0 0.0
      %9512 = vmatpush.msra.mxu0 %v9455
      %9513 = vmatmul.f32.gmra.mxu0 %v9451
      %v9514 = vpop.f32.mrf.mxu0
      %v9515 = vadd.f32 0.0, %v9514
      %9516 = vdwg.mxu0
      %9517 = vmatpush.msra.mxu0 0.0
      %9518 = vmatpush.msra.mxu0 0.0
      %9519 = vmatpush.msra.mxu0 0.0
      %9520 = vmatpush.msra.mxu0 0.0
      %9521 = vmatpush.msra.mxu0 0.0
      %9522 = vmatpush.msra.mxu0 0.0
      %9523 = vmatpush.msra.mxu0 0.0
      %9524 = vmatpush.msra.mxu0 0.0
      %9525 = vmatpush.msra.mxu0 0.0
      %9526 = vmatpush.msra.mxu0 0.0
      %9527 = vmatpush.msra.mxu0 0.0
      %9528 = vmatpush.msra.mxu0 0.0
      %9529 = vmatpush.msra.mxu0 0.0
      %9530 = vmatpush.msra.mxu0 0.0
      %9531 = vmatpush.msra.mxu0 0.0
      %9532 = vmatpush.msra.mxu0 %v9457
      %9533 = vmatmul.f32.gmra.mxu0 %v9451
      %v9534 = vpop.f32.mrf.mxu0
      %v9535 = vadd.f32 0.0, %v9534
      %9536 = vdwg.mxu0
      %9537 = vmatpush.msra.mxu0 0.0
      %9538 = vmatpush.msra.mxu0 0.0
      %9539 = vmatpush.msra.mxu0 0.0
      %9540 = vmatpush.msra.mxu0 0.0
      %9541 = vmatpush.msra.mxu0 0.0
      %9542 = vmatpush.msra.mxu0 0.0
      %9543 = vmatpush.msra.mxu0 0.0
      %9544 = vmatpush.msra.mxu0 0.0
      %9545 = vmatpush.msra.mxu0 0.0
      %9546 = vmatpush.msra.mxu0 0.0
      %9547 = vmatpush.msra.mxu0 0.0
      %9548 = vmatpush.msra.mxu0 0.0
      %9549 = vmatpush.msra.mxu0 0.0
      %9550 = vmatpush.msra.mxu0 0.0
      %9551 = vmatpush.msra.mxu0 0.0
      %9552 = vmatpush.msra.mxu0 %v9459
      %9553 = vmatmul.f32.gmra.mxu0 %v9451
      %v9554 = vpop.f32.mrf.mxu0
      %v9555 = vadd.f32 0.0, %v9554
      %9556 = vdwg.mxu0
      %9557 = vmatpush.msra.mxu0 0.0
      %9558 = vmatpush.msra.mxu0 0.0
      %9559 = vmatpush.msra.mxu0 0.0
      %9560 = vmatpush.msra.mxu0 0.0
      %9561 = vmatpush.msra.mxu0 0.0
      %9562 = vmatpush.msra.mxu0 0.0
      %9563 = vmatpush.msra.mxu0 0.0
      %9564 = vmatpush.msra.mxu0 0.0
      %9565 = vmatpush.msra.mxu0 0.0
      %9566 = vmatpush.msra.mxu0 0.0
      %9567 = vmatpush.msra.mxu0 0.0
      %9568 = vmatpush.msra.mxu0 0.0
      %9569 = vmatpush.msra.mxu0 0.0
      %9570 = vmatpush.msra.mxu0 0.0
      %9571 = vmatpush.msra.mxu0 0.0
      %9572 = vmatpush.msra.mxu0 %v9461
      %9573 = vmatmul.f32.gmra.mxu0 %v9451
      %v9574 = vpop.f32.mrf.mxu0
      %v9575 = vadd.f32 0.0, %v9574
      %9576 = vdwg.mxu0
      %9577 = vmatpush.msra.mxu0 0.0
      %9578 = vmatpush.msra.mxu0 0.0
      %9579 = vmatpush.msra.mxu0 0.0
      %9580 = vmatpush.msra.mxu0 0.0
      %9581 = vmatpush.msra.mxu0 0.0
      %9582 = vmatpush.msra.mxu0 0.0
      %9583 = vmatpush.msra.mxu0 0.0
      %9584 = vmatpush.msra.mxu0 0.0
      %9585 = vmatpush.msra.mxu0 0.0
      %9586 = vmatpush.msra.mxu0 0.0
      %9587 = vmatpush.msra.mxu0 0.0
      %9588 = vmatpush.msra.mxu0 0.0
      %9589 = vmatpush.msra.mxu0 0.0
      %9590 = vmatpush.msra.mxu0 0.0
      %9591 = vmatpush.msra.mxu0 0.0
      %9592 = vmatpush.msra.mxu0 %v9463
      %9593 = vmatmul.f32.gmra.mxu0 %v9451
      %v9594 = vpop.f32.mrf.mxu0
      %v9595 = vadd.f32 0.0, %v9594
      %9596 = vdwg.mxu0
      %9597 = vmatpush.msra.mxu0 0.0
      %9598 = vmatpush.msra.mxu0 0.0
      %9599 = vmatpush.msra.mxu0 0.0
      %9600 = vmatpush.msra.mxu0 0.0
      %9601 = vmatpush.msra.mxu0 0.0
      %9602 = vmatpush.msra.mxu0 0.0
      %9603 = vmatpush.msra.mxu0 0.0
      %9604 = vmatpush.msra.mxu0 0.0
      %9605 = vmatpush.msra.mxu0 0.0
      %9606 = vmatpush.msra.mxu0 0.0
      %9607 = vmatpush.msra.mxu0 0.0
      %9608 = vmatpush.msra.mxu0 0.0
      %9609 = vmatpush.msra.mxu0 0.0
      %9610 = vmatpush.msra.mxu0 0.0
      %9611 = vmatpush.msra.mxu0 0.0
      %9612 = vmatpush.msra.mxu0 %v9465
      %9613 = vmatmul.f32.gmra.mxu0 %v9451
      %v9614 = vpop.f32.mrf.mxu0
      %v9615 = vadd.f32 0.0, %v9614
      %9616 = vdwg.mxu0
      %9617 = vmatpush.msra.mxu0 0.0
      %9618 = vmatpush.msra.mxu0 0.0
      %9619 = vmatpush.msra.mxu0 0.0
      %9620 = vmatpush.msra.mxu0 0.0
      %9621 = vmatpush.msra.mxu0 0.0
      %9622 = vmatpush.msra.mxu0 0.0
      %9623 = vmatpush.msra.mxu0 0.0
      %9624 = vmatpush.msra.mxu0 0.0
      %9625 = vmatpush.msra.mxu0 0.0
      %9626 = vmatpush.msra.mxu0 0.0
      %9627 = vmatpush.msra.mxu0 0.0
      %9628 = vmatpush.msra.mxu0 0.0
      %9629 = vmatpush.msra.mxu0 0.0
      %9630 = vmatpush.msra.mxu0 0.0
      %9631 = vmatpush.msra.mxu0 0.0
      %9632 = vmatpush.msra.mxu0 %v9467
      %9633 = vmatmul.f32.gmra.mxu0 %v9451
      %v9634 = vpop.f32.mrf.mxu0
      %v9635 = vadd.f32 0.0, %v9634
      %9636 = vdwg.mxu0
      %9637 = vmatpush.msra.mxu0 0.0
      %9638 = vmatpush.msra.mxu0 0.0
      %9639 = vmatpush.msra.mxu0 0.0
      %9640 = vmatpush.msra.mxu0 0.0
      %9641 = vmatpush.msra.mxu0 0.0
      %9642 = vmatpush.msra.mxu0 0.0
      %9643 = vmatpush.msra.mxu0 0.0
      %9644 = vmatpush.msra.mxu0 0.0
      %9645 = vmatpush.msra.mxu0 0.0
      %9646 = vmatpush.msra.mxu0 0.0
      %9647 = vmatpush.msra.mxu0 0.0
      %9648 = vmatpush.msra.mxu0 0.0
      %9649 = vmatpush.msra.mxu0 0.0
      %9650 = vmatpush.msra.mxu0 0.0
      %9651 = vmatpush.msra.mxu0 0.0
      %9652 = vmatpush.msra.mxu0 %v9469
      %9653 = vmatmul.f32.gmra.mxu0 %v9451
      %v9654 = vpop.f32.mrf.mxu0
      %v9655 = vadd.f32 0.0, %v9654
      %9656 = vdwg.mxu0
      %9657 = vmatpush.msra.mxu0 0.0
      %9658 = vmatpush.msra.mxu0 0.0
      %9659 = vmatpush.msra.mxu0 0.0
      %9660 = vmatpush.msra.mxu0 0.0
      %9661 = vmatpush.msra.mxu0 0.0
      %9662 = vmatpush.msra.mxu0 0.0
      %9663 = vmatpush.msra.mxu0 0.0
      %9664 = vmatpush.msra.mxu0 0.0
      %9665 = vmatpush.msra.mxu0 0.0
      %9666 = vmatpush.msra.mxu0 0.0
      %9667 = vmatpush.msra.mxu0 0.0
      %9668 = vmatpush.msra.mxu0 0.0
      %9669 = vmatpush.msra.mxu0 0.0
      %9670 = vmatpush.msra.mxu0 0.0
      %9671 = vmatpush.msra.mxu0 0.0
      %9672 = vmatpush.msra.mxu0 %v9471
      %9673 = vmatmul.f32.gmra.mxu0 %v9451
      %v9674 = vpop.f32.mrf.mxu0
      %v9675 = vadd.f32 0.0, %v9674
      %9676 = vdwg.mxu0
      %9677 = vmatpush.msra.mxu0 0.0
      %9678 = vmatpush.msra.mxu0 0.0
      %9679 = vmatpush.msra.mxu0 0.0
      %9680 = vmatpush.msra.mxu0 0.0
      %9681 = vmatpush.msra.mxu0 0.0
      %9682 = vmatpush.msra.mxu0 0.0
      %9683 = vmatpush.msra.mxu0 0.0
      %9684 = vmatpush.msra.mxu0 0.0
      %9685 = vmatpush.msra.mxu0 0.0
      %9686 = vmatpush.msra.mxu0 0.0
      %9687 = vmatpush.msra.mxu0 0.0
      %9688 = vmatpush.msra.mxu0 0.0
      %9689 = vmatpush.msra.mxu0 0.0
      %9690 = vmatpush.msra.mxu0 0.0
      %9691 = vmatpush.msra.mxu0 0.0
      %9692 = vmatpush.msra.mxu0 %v9473
      %9693 = vmatmul.f32.gmra.mxu0 %v9451
      %v9694 = vpop.f32.mrf.mxu0
      %v9695 = vadd.f32 0.0, %v9694
      %9696 = vdwg.mxu0
      %9697 = vmatpush.msra.mxu0 0.0
      %9698 = vmatpush.msra.mxu0 0.0
      %9699 = vmatpush.msra.mxu0 0.0
      %9700 = vmatpush.msra.mxu0 0.0
      %9701 = vmatpush.msra.mxu0 0.0
      %9702 = vmatpush.msra.mxu0 0.0
      %9703 = vmatpush.msra.mxu0 0.0
      %9704 = vmatpush.msra.mxu0 0.0
      %9705 = vmatpush.msra.mxu0 0.0
      %9706 = vmatpush.msra.mxu0 0.0
      %9707 = vmatpush.msra.mxu0 0.0
      %9708 = vmatpush.msra.mxu0 0.0
      %9709 = vmatpush.msra.mxu0 0.0
      %9710 = vmatpush.msra.mxu0 0.0
      %9711 = vmatpush.msra.mxu0 0.0
      %9712 = vmatpush.msra.mxu0 %v9475
      %9713 = vmatmul.f32.gmra.mxu0 %v9451
      %v9714 = vpop.f32.mrf.mxu0
      %v9715 = vadd.f32 0.0, %v9714
      %9716 = vdwg.mxu0
      %v9717 = vadd.f32 %v9352, %v9495
      %v9718 = vadd.f32 %v9353, %v9515
      %v9719 = vadd.f32 %v9354, %v9535
      %v9720 = vadd.f32 %v9355, %v9555
      %v9721 = vadd.f32 %v9356, %v9575
      %v9722 = vadd.f32 %v9357, %v9595
      %v9723 = vadd.f32 %v9358, %v9615
      %v9724 = vadd.f32 %v9359, %v9635
      %v9725 = vadd.f32 %v9360, %v9655
      %v9726 = vadd.f32 %v9361, %v9675
      %v9727 = vadd.f32 %v9362, %v9695
      %v9728 = vadd.f32 %v9363, %v9715
      %v9729 = vld [vmem:[#allocation2 + $0x4] sm:$0xff]
      %v9730 = vld [vmem:[#allocation2 + $0xc] sm:$0xff]
      %v9731 = vld [vmem:[#allocation2 + $0x14] sm:$0xff]
      %v9732 = vld [vmem:[#allocation2 + $0x1c] sm:$0xff]
      %v9733 = vld [vmem:[#allocation2 + $0x24] sm:$0xff]
      %v9734 = vld [vmem:[#allocation2 + $0x2c] sm:$0xff]
      %v9735 = vld [vmem:[#allocation2 + $0x34] sm:$0xff]
      %v9736 = vld [vmem:[#allocation2 + $0x3c] sm:$0xf]
      %9737 = vrot.lane.b32.xlu0 %v689, 28
      %v9738 = vpop.permute.xlu0 %9737
      %9747 = vst [vmem:[#allocation1] ss:$2 sm:$0xff] %v9729
      %s9748 = scalar_lea.vmem [#allocation1], 16
      %9749 = vst [vmem:[%s9748] ss:$2 sm:$0xff] %v9730
      %s9750 = scalar_lea.vmem [#allocation1], 32
      %9751 = vst [vmem:[%s9750] ss:$2 sm:$0xff] %v9731
      %s9752 = scalar_lea.vmem [#allocation1], 48
      %9753 = vst [vmem:[%s9752] ss:$2 sm:$0xff] %v9732
      %v9754 = vld.sshfl [vmem:[#allocation1] sm:$0xff pattern:$0x75316420]
      %v9755 = vld.sshfl [vmem:[#allocation1 + $0x8] sm:$0xff pattern:$0x75316420]
      %v9756 = vld.sshfl [vmem:[#allocation1 + $0x10] sm:$0xff pattern:$0x75316420]
      %v9757 = vld.sshfl [vmem:[#allocation1 + $0x18] sm:$0xff pattern:$0x75316420]
      %v9758 = vld.sshfl [vmem:[#allocation1 + $0x20] sm:$0xff pattern:$0x75316420]
      %v9759 = vld.sshfl [vmem:[#allocation1 + $0x28] sm:$0xff pattern:$0x75316420]
      %v9760 = vld.sshfl [vmem:[#allocation1 + $0x30] sm:$0xff pattern:$0x75316420]
      %v9761 = vld.sshfl [vmem:[#allocation1 + $0x38] sm:$0xff pattern:$0x75316420]
      %9762 = vst [vmem:[#allocation1] ss:$2 sm:$0xff] %v9733
      %9763 = vst [vmem:[%s9748] ss:$2 sm:$0xff] %v9734
      %9764 = vst [vmem:[%s9750] ss:$2 sm:$0xff] %v9735
      %9765 = vst [vmem:[%s9752] ss:$2 sm:$0xff] %v9736
      %v9766 = vld.sshfl [vmem:[#allocation1] sm:$0xff pattern:$0x75316420]
      %v9767 = vld.sshfl [vmem:[#allocation1 + $0x8] sm:$0xff pattern:$0x75316420]
      %v9768 = vld.sshfl [vmem:[#allocation1 + $0x10] sm:$0xff pattern:$0x75316420]
      %v9769 = vld.sshfl [vmem:[#allocation1 + $0x18] sm:$0xff pattern:$0x75316420]
      %v9770 = vld.sshfl [vmem:[#allocation1 + $0x20] sm:$0xff pattern:$0x75316420]
      %v9771 = vld.sshfl [vmem:[#allocation1 + $0x28] sm:$0xff pattern:$0x75316420]
      %v9772 = vld.sshfl [vmem:[#allocation1 + $0x30] sm:$0xff pattern:$0x75316420]
      %9773 = vrot.lane.b32.xlu0 %v9754, 18
      %v9774 = vpop.permute.xlu0 %9773
      %9775 = vrot.lane.b32.xlu0 %v9755, 18
      %v9776 = vpop.permute.xlu0 %9775
      %9777 = vrot.lane.b32.xlu0 %v9756, 18
      %v9778 = vpop.permute.xlu0 %9777
      %9779 = vrot.lane.b32.xlu0 %v9757, 18
      %v9780 = vpop.permute.xlu0 %9779
      %9781 = vrot.lane.b32.xlu0 %v9758, 18
      %v9782 = vpop.permute.xlu0 %9781
      %9783 = vrot.lane.b32.xlu0 %v9759, 18
      %v9784 = vpop.permute.xlu0 %9783
      %9785 = vrot.lane.b32.xlu0 %v9760, 18
      %v9786 = vpop.permute.xlu0 %9785
      %9787 = vrot.lane.b32.xlu0 %v9761, 18
      %v9788 = vpop.permute.xlu0 %9787
      %9789 = vrot.lane.b32.xlu0 %v9766, 18
      %v9790 = vpop.permute.xlu0 %9789
      %9791 = vrot.lane.b32.xlu0 %v9767, 18
      %v9792 = vpop.permute.xlu0 %9791
      %9793 = vrot.lane.b32.xlu0 %v9768, 18
      %v9794 = vpop.permute.xlu0 %9793
      %9795 = vrot.lane.b32.xlu0 %v9769, 18
      %v9796 = vpop.permute.xlu0 %9795
      %9797 = vrot.lane.b32.xlu0 %v9770, 18
      %v9798 = vpop.permute.xlu0 %9797
      %9799 = vrot.lane.b32.xlu0 %v9771, 18
      %v9800 = vpop.permute.xlu0 %9799
      %9801 = vrot.lane.b32.xlu0 %v9772, 18
      %v9802 = vpop.permute.xlu0 %9801
      %vm9803 = vcmask 146432
      %v9804 = vsel %vm9803, %v9774, %v9776
      %v9805 = vsel %vm9803, %v9776, %v9778
      %v9806 = vsel %vm9803, %v9778, %v9780
      %v9807 = vsel %vm9803, %v9780, %v9782
      %v9808 = vsel %vm9803, %v9784, %v9786
      %v9809 = vsel %vm9803, %v9786, %v9788
      %v9810 = vsel %vm9803, %v9788, %v9790
      %v9811 = vsel %vm9803, %v9790, %v9792
      %v9812 = vsel %vm9803, %v9794, %v9796
      %v9813 = vsel %vm9803, %v9796, %v9798
      %v9814 = vsel %vm9803, %v9798, %v9800
      %v9815 = vsel %vm9803, %v9800, %v9802
      %v9816 = vsel %vm778, %v9738, 0
      %v9818 = vsel %vm640, %v9804, 0
      %v9820 = vsel %vm640, %v9805, 0
      %v9822 = vsel %vm640, %v9806, 0
      %v9824 = vsel %vm640, %v9807, 0
      %v9826 = vsel %vm640, %v9808, 0
      %v9828 = vsel %vm640, %v9809, 0
      %v9830 = vsel %vm640, %v9810, 0
      %v9832 = vsel %vm640, %v9811, 0
      %v9834 = vsel %vm640, %v9812, 0
      %v9836 = vsel %vm640, %v9813, 0
      %v9838 = vsel %vm640, %v9814, 0
      %v9840 = vsel %vm640, %v9815, 0
      %9842 = vmatpush.msra.mxu0 0.0
      %9843 = vmatpush.msra.mxu0 0.0
      %9844 = vmatpush.msra.mxu0 0.0
      %9845 = vmatpush.msra.mxu0 0.0
      %9846 = vmatpush.msra.mxu0 0.0
      %9847 = vmatpush.msra.mxu0 0.0
      %9848 = vmatpush.msra.mxu0 0.0
      %9849 = vmatpush.msra.mxu0 0.0
      %9850 = vmatpush.msra.mxu0 0.0
      %9851 = vmatpush.msra.mxu0 0.0
      %9852 = vmatpush.msra.mxu0 0.0
      %9853 = vmatpush.msra.mxu0 0.0
      %9854 = vmatpush.msra.mxu0 0.0
      %9855 = vmatpush.msra.mxu0 0.0
      %9856 = vmatpush.msra.mxu0 0.0
      %9857 = vmatpush.msra.mxu0 %v9818
      %9858 = vmatmul.f32.gmra.mxu0 %v9816
      %v9859 = vpop.f32.mrf.mxu0
      %v9860 = vadd.f32 0.0, %v9859
      %9861 = vdwg.mxu0
      %9862 = vmatpush.msra.mxu0 0.0
      %9863 = vmatpush.msra.mxu0 0.0
      %9864 = vmatpush.msra.mxu0 0.0
      %9865 = vmatpush.msra.mxu0 0.0
      %9866 = vmatpush.msra.mxu0 0.0
      %9867 = vmatpush.msra.mxu0 0.0
      %9868 = vmatpush.msra.mxu0 0.0
      %9869 = vmatpush.msra.mxu0 0.0
      %9870 = vmatpush.msra.mxu0 0.0
      %9871 = vmatpush.msra.mxu0 0.0
      %9872 = vmatpush.msra.mxu0 0.0
      %9873 = vmatpush.msra.mxu0 0.0
      %9874 = vmatpush.msra.mxu0 0.0
      %9875 = vmatpush.msra.mxu0 0.0
      %9876 = vmatpush.msra.mxu0 0.0
      %9877 = vmatpush.msra.mxu0 %v9820
      %9878 = vmatmul.f32.gmra.mxu0 %v9816
      %v9879 = vpop.f32.mrf.mxu0
      %v9880 = vadd.f32 0.0, %v9879
      %9881 = vdwg.mxu0
      %9882 = vmatpush.msra.mxu0 0.0
      %9883 = vmatpush.msra.mxu0 0.0
      %9884 = vmatpush.msra.mxu0 0.0
      %9885 = vmatpush.msra.mxu0 0.0
      %9886 = vmatpush.msra.mxu0 0.0
      %9887 = vmatpush.msra.mxu0 0.0
      %9888 = vmatpush.msra.mxu0 0.0
      %9889 = vmatpush.msra.mxu0 0.0
      %9890 = vmatpush.msra.mxu0 0.0
      %9891 = vmatpush.msra.mxu0 0.0
      %9892 = vmatpush.msra.mxu0 0.0
      %9893 = vmatpush.msra.mxu0 0.0
      %9894 = vmatpush.msra.mxu0 0.0
      %9895 = vmatpush.msra.mxu0 0.0
      %9896 = vmatpush.msra.mxu0 0.0
      %9897 = vmatpush.msra.mxu0 %v9822
      %9898 = vmatmul.f32.gmra.mxu0 %v9816
      %v9899 = vpop.f32.mrf.mxu0
      %v9900 = vadd.f32 0.0, %v9899
      %9901 = vdwg.mxu0
      %9902 = vmatpush.msra.mxu0 0.0
      %9903 = vmatpush.msra.mxu0 0.0
      %9904 = vmatpush.msra.mxu0 0.0
      %9905 = vmatpush.msra.mxu0 0.0
      %9906 = vmatpush.msra.mxu0 0.0
      %9907 = vmatpush.msra.mxu0 0.0
      %9908 = vmatpush.msra.mxu0 0.0
      %9909 = vmatpush.msra.mxu0 0.0
      %9910 = vmatpush.msra.mxu0 0.0
      %9911 = vmatpush.msra.mxu0 0.0
      %9912 = vmatpush.msra.mxu0 0.0
      %9913 = vmatpush.msra.mxu0 0.0
      %9914 = vmatpush.msra.mxu0 0.0
      %9915 = vmatpush.msra.mxu0 0.0
      %9916 = vmatpush.msra.mxu0 0.0
      %9917 = vmatpush.msra.mxu0 %v9824
      %9918 = vmatmul.f32.gmra.mxu0 %v9816
      %v9919 = vpop.f32.mrf.mxu0
      %v9920 = vadd.f32 0.0, %v9919
      %9921 = vdwg.mxu0
      %9922 = vmatpush.msra.mxu0 0.0
      %9923 = vmatpush.msra.mxu0 0.0
      %9924 = vmatpush.msra.mxu0 0.0
      %9925 = vmatpush.msra.mxu0 0.0
      %9926 = vmatpush.msra.mxu0 0.0
      %9927 = vmatpush.msra.mxu0 0.0
      %9928 = vmatpush.msra.mxu0 0.0
      %9929 = vmatpush.msra.mxu0 0.0
      %9930 = vmatpush.msra.mxu0 0.0
      %9931 = vmatpush.msra.mxu0 0.0
      %9932 = vmatpush.msra.mxu0 0.0
      %9933 = vmatpush.msra.mxu0 0.0
      %9934 = vmatpush.msra.mxu0 0.0
      %9935 = vmatpush.msra.mxu0 0.0
      %9936 = vmatpush.msra.mxu0 0.0
      %9937 = vmatpush.msra.mxu0 %v9826
      %9938 = vmatmul.f32.gmra.mxu0 %v9816
      %v9939 = vpop.f32.mrf.mxu0
      %v9940 = vadd.f32 0.0, %v9939
      %9941 = vdwg.mxu0
      %9942 = vmatpush.msra.mxu0 0.0
      %9943 = vmatpush.msra.mxu0 0.0
      %9944 = vmatpush.msra.mxu0 0.0
      %9945 = vmatpush.msra.mxu0 0.0
      %9946 = vmatpush.msra.mxu0 0.0
      %9947 = vmatpush.msra.mxu0 0.0
      %9948 = vmatpush.msra.mxu0 0.0
      %9949 = vmatpush.msra.mxu0 0.0
      %9950 = vmatpush.msra.mxu0 0.0
      %9951 = vmatpush.msra.mxu0 0.0
      %9952 = vmatpush.msra.mxu0 0.0
      %9953 = vmatpush.msra.mxu0 0.0
      %9954 = vmatpush.msra.mxu0 0.0
      %9955 = vmatpush.msra.mxu0 0.0
      %9956 = vmatpush.msra.mxu0 0.0
      %9957 = vmatpush.msra.mxu0 %v9828
      %9958 = vmatmul.f32.gmra.mxu0 %v9816
      %v9959 = vpop.f32.mrf.mxu0
      %v9960 = vadd.f32 0.0, %v9959
      %9961 = vdwg.mxu0
      %9962 = vmatpush.msra.mxu0 0.0
      %9963 = vmatpush.msra.mxu0 0.0
      %9964 = vmatpush.msra.mxu0 0.0
      %9965 = vmatpush.msra.mxu0 0.0
      %9966 = vmatpush.msra.mxu0 0.0
      %9967 = vmatpush.msra.mxu0 0.0
      %9968 = vmatpush.msra.mxu0 0.0
      %9969 = vmatpush.msra.mxu0 0.0
      %9970 = vmatpush.msra.mxu0 0.0
      %9971 = vmatpush.msra.mxu0 0.0
      %9972 = vmatpush.msra.mxu0 0.0
      %9973 = vmatpush.msra.mxu0 0.0
      %9974 = vmatpush.msra.mxu0 0.0
      %9975 = vmatpush.msra.mxu0 0.0
      %9976 = vmatpush.msra.mxu0 0.0
      %9977 = vmatpush.msra.mxu0 %v9830
      %9978 = vmatmul.f32.gmra.mxu0 %v9816
      %v9979 = vpop.f32.mrf.mxu0
      %v9980 = vadd.f32 0.0, %v9979
      %9981 = vdwg.mxu0
      %9982 = vmatpush.msra.mxu0 0.0
      %9983 = vmatpush.msra.mxu0 0.0
      %9984 = vmatpush.msra.mxu0 0.0
      %9985 = vmatpush.msra.mxu0 0.0
      %9986 = vmatpush.msra.mxu0 0.0
      %9987 = vmatpush.msra.mxu0 0.0
      %9988 = vmatpush.msra.mxu0 0.0
      %9989 = vmatpush.msra.mxu0 0.0
      %9990 = vmatpush.msra.mxu0 0.0
      %9991 = vmatpush.msra.mxu0 0.0
      %9992 = vmatpush.msra.mxu0 0.0
      %9993 = vmatpush.msra.mxu0 0.0
      %9994 = vmatpush.msra.mxu0 0.0
      %9995 = vmatpush.msra.mxu0 0.0
      %9996 = vmatpush.msra.mxu0 0.0
      %9997 = vmatpush.msra.mxu0 %v9832
      %9998 = vmatmul.f32.gmra.mxu0 %v9816
      %v9999 = vpop.f32.mrf.mxu0
      %v10000 = vadd.f32 0.0, %v9999
      %10001 = vdwg.mxu0
      %10002 = vmatpush.msra.mxu0 0.0
      %10003 = vmatpush.msra.mxu0 0.0
      %10004 = vmatpush.msra.mxu0 0.0
      %10005 = vmatpush.msra.mxu0 0.0
      %10006 = vmatpush.msra.mxu0 0.0
      %10007 = vmatpush.msra.mxu0 0.0
      %10008 = vmatpush.msra.mxu0 0.0
      %10009 = vmatpush.msra.mxu0 0.0
      %10010 = vmatpush.msra.mxu0 0.0
      %10011 = vmatpush.msra.mxu0 0.0
      %10012 = vmatpush.msra.mxu0 0.0
      %10013 = vmatpush.msra.mxu0 0.0
      %10014 = vmatpush.msra.mxu0 0.0
      %10015 = vmatpush.msra.mxu0 0.0
      %10016 = vmatpush.msra.mxu0 0.0
      %10017 = vmatpush.msra.mxu0 %v9834
      %10018 = vmatmul.f32.gmra.mxu0 %v9816
      %v10019 = vpop.f32.mrf.mxu0
      %v10020 = vadd.f32 0.0, %v10019
      %10021 = vdwg.mxu0
      %10022 = vmatpush.msra.mxu0 0.0
      %10023 = vmatpush.msra.mxu0 0.0
      %10024 = vmatpush.msra.mxu0 0.0
      %10025 = vmatpush.msra.mxu0 0.0
      %10026 = vmatpush.msra.mxu0 0.0
      %10027 = vmatpush.msra.mxu0 0.0
      %10028 = vmatpush.msra.mxu0 0.0
      %10029 = vmatpush.msra.mxu0 0.0
      %10030 = vmatpush.msra.mxu0 0.0
      %10031 = vmatpush.msra.mxu0 0.0
      %10032 = vmatpush.msra.mxu0 0.0
      %10033 = vmatpush.msra.mxu0 0.0
      %10034 = vmatpush.msra.mxu0 0.0
      %10035 = vmatpush.msra.mxu0 0.0
      %10036 = vmatpush.msra.mxu0 0.0
      %10037 = vmatpush.msra.mxu0 %v9836
      %10038 = vmatmul.f32.gmra.mxu0 %v9816
      %v10039 = vpop.f32.mrf.mxu0
      %v10040 = vadd.f32 0.0, %v10039
      %10041 = vdwg.mxu0
      %10042 = vmatpush.msra.mxu0 0.0
      %10043 = vmatpush.msra.mxu0 0.0
      %10044 = vmatpush.msra.mxu0 0.0
      %10045 = vmatpush.msra.mxu0 0.0
      %10046 = vmatpush.msra.mxu0 0.0
      %10047 = vmatpush.msra.mxu0 0.0
      %10048 = vmatpush.msra.mxu0 0.0
      %10049 = vmatpush.msra.mxu0 0.0
      %10050 = vmatpush.msra.mxu0 0.0
      %10051 = vmatpush.msra.mxu0 0.0
      %10052 = vmatpush.msra.mxu0 0.0
      %10053 = vmatpush.msra.mxu0 0.0
      %10054 = vmatpush.msra.mxu0 0.0
      %10055 = vmatpush.msra.mxu0 0.0
      %10056 = vmatpush.msra.mxu0 0.0
      %10057 = vmatpush.msra.mxu0 %v9838
      %10058 = vmatmul.f32.gmra.mxu0 %v9816
      %v10059 = vpop.f32.mrf.mxu0
      %v10060 = vadd.f32 0.0, %v10059
      %10061 = vdwg.mxu0
      %10062 = vmatpush.msra.mxu0 0.0
      %10063 = vmatpush.msra.mxu0 0.0
      %10064 = vmatpush.msra.mxu0 0.0
      %10065 = vmatpush.msra.mxu0 0.0
      %10066 = vmatpush.msra.mxu0 0.0
      %10067 = vmatpush.msra.mxu0 0.0
      %10068 = vmatpush.msra.mxu0 0.0
      %10069 = vmatpush.msra.mxu0 0.0
      %10070 = vmatpush.msra.mxu0 0.0
      %10071 = vmatpush.msra.mxu0 0.0
      %10072 = vmatpush.msra.mxu0 0.0
      %10073 = vmatpush.msra.mxu0 0.0
      %10074 = vmatpush.msra.mxu0 0.0
      %10075 = vmatpush.msra.mxu0 0.0
      %10076 = vmatpush.msra.mxu0 0.0
      %10077 = vmatpush.msra.mxu0 %v9840
      %10078 = vmatmul.f32.gmra.mxu0 %v9816
      %v10079 = vpop.f32.mrf.mxu0
      %v10080 = vadd.f32 0.0, %v10079
      %10081 = vdwg.mxu0
      %v10082 = vadd.f32 %v9717, %v9860
      %v10083 = vadd.f32 %v9718, %v9880
      %v10084 = vadd.f32 %v9719, %v9900
      %v10085 = vadd.f32 %v9720, %v9920
      %v10086 = vadd.f32 %v9721, %v9940
      %v10087 = vadd.f32 %v9722, %v9960
      %v10088 = vadd.f32 %v9723, %v9980
      %v10089 = vadd.f32 %v9724, %v10000
      %v10090 = vadd.f32 %v9725, %v10020
      %v10091 = vadd.f32 %v9726, %v10040
      %v10092 = vadd.f32 %v9727, %v10060
      %v10093 = vadd.f32 %v9728, %v10080
      %v10094 = vld [vmem:[#allocation2 + $0x4] sm:$0xff]
      %v10095 = vld [vmem:[#allocation2 + $0xc] sm:$0xff]
      %v10096 = vld [vmem:[#allocation2 + $0x14] sm:$0xff]
      %v10097 = vld [vmem:[#allocation2 + $0x1c] sm:$0xff]
      %v10098 = vld [vmem:[#allocation2 + $0x24] sm:$0xff]
      %v10099 = vld [vmem:[#allocation2 + $0x2c] sm:$0xff]
      %v10100 = vld [vmem:[#allocation2 + $0x34] sm:$0xff]
      %v10101 = vld [vmem:[#allocation2 + $0x3c] sm:$0xf]
      %10102 = vrot.lane.b32.xlu0 %v689, 24
      %v10103 = vpop.permute.xlu0 %10102
      %10112 = vst [vmem:[#allocation1] ss:$2 sm:$0xff] %v10094
      %s10113 = scalar_lea.vmem [#allocation1], 16
      %10114 = vst [vmem:[%s10113] ss:$2 sm:$0xff] %v10095
      %s10115 = scalar_lea.vmem [#allocation1], 32
      %10116 = vst [vmem:[%s10115] ss:$2 sm:$0xff] %v10096
      %s10117 = scalar_lea.vmem [#allocation1], 48
      %10118 = vst [vmem:[%s10117] ss:$2 sm:$0xff] %v10097
      %v10119 = vld.sshfl [vmem:[#allocation1] sm:$0xff pattern:$0x75316420]
      %v10120 = vld.sshfl [vmem:[#allocation1 + $0x8] sm:$0xff pattern:$0x75316420]
      %v10121 = vld.sshfl [vmem:[#allocation1 + $0x10] sm:$0xff pattern:$0x75316420]
      %v10122 = vld.sshfl [vmem:[#allocation1 + $0x18] sm:$0xff pattern:$0x75316420]
      %v10123 = vld.sshfl [vmem:[#allocation1 + $0x20] sm:$0xff pattern:$0x75316420]
      %v10124 = vld.sshfl [vmem:[#allocation1 + $0x28] sm:$0xff pattern:$0x75316420]
      %v10125 = vld.sshfl [vmem:[#allocation1 + $0x30] sm:$0xff pattern:$0x75316420]
      %v10126 = vld.sshfl [vmem:[#allocation1 + $0x38] sm:$0xff pattern:$0x75316420]
      %10127 = vst [vmem:[#allocation1] ss:$2 sm:$0xff] %v10098
      %10128 = vst [vmem:[%s10113] ss:$2 sm:$0xff] %v10099
      %10129 = vst [vmem:[%s10115] ss:$2 sm:$0xff] %v10100
      %10130 = vst [vmem:[%s10117] ss:$2 sm:$0xff] %v10101
      %v10131 = vld.sshfl [vmem:[#allocation1] sm:$0xff pattern:$0x75316420]
      %v10132 = vld.sshfl [vmem:[#allocation1 + $0x8] sm:$0xff pattern:$0x75316420]
      %v10133 = vld.sshfl [vmem:[#allocation1 + $0x10] sm:$0xff pattern:$0x75316420]
      %v10134 = vld.sshfl [vmem:[#allocation1 + $0x18] sm:$0xff pattern:$0x75316420]
      %v10135 = vld.sshfl [vmem:[#allocation1 + $0x20] sm:$0xff pattern:$0x75316420]
      %v10136 = vld.sshfl [vmem:[#allocation1 + $0x28] sm:$0xff pattern:$0x75316420]
      %v10137 = vld.sshfl [vmem:[#allocation1 + $0x30] sm:$0xff pattern:$0x75316420]
      %10138 = vrot.lane.b32.xlu0 %v10119, 17
      %v10139 = vpop.permute.xlu0 %10138
      %10140 = vrot.lane.b32.xlu0 %v10120, 17
      %v10141 = vpop.permute.xlu0 %10140
      %10142 = vrot.lane.b32.xlu0 %v10121, 17
      %v10143 = vpop.permute.xlu0 %10142
      %10144 = vrot.lane.b32.xlu0 %v10122, 17
      %v10145 = vpop.permute.xlu0 %10144
      %10146 = vrot.lane.b32.xlu0 %v10123, 17
      %v10147 = vpop.permute.xlu0 %10146
      %10148 = vrot.lane.b32.xlu0 %v10124, 17
      %v10149 = vpop.permute.xlu0 %10148
      %10150 = vrot.lane.b32.xlu0 %v10125, 17
      %v10151 = vpop.permute.xlu0 %10150
      %10152 = vrot.lane.b32.xlu0 %v10126, 17
      %v10153 = vpop.permute.xlu0 %10152
      %10154 = vrot.lane.b32.xlu0 %v10131, 17
      %v10155 = vpop.permute.xlu0 %10154
      %10156 = vrot.lane.b32.xlu0 %v10132, 17
      %v10157 = vpop.permute.xlu0 %10156
      %10158 = vrot.lane.b32.xlu0 %v10133, 17
      %v10159 = vpop.permute.xlu0 %10158
      %10160 = vrot.lane.b32.xlu0 %v10134, 17
      %v10161 = vpop.permute.xlu0 %10160
      %10162 = vrot.lane.b32.xlu0 %v10135, 17
      %v10163 = vpop.permute.xlu0 %10162
      %10164 = vrot.lane.b32.xlu0 %v10136, 17
      %v10165 = vpop.permute.xlu0 %10164
      %10166 = vrot.lane.b32.xlu0 %v10137, 17
      %v10167 = vpop.permute.xlu0 %10166
      %vm10168 = vcmask 138240
      %v10169 = vsel %vm10168, %v10139, %v10141
      %v10170 = vsel %vm10168, %v10141, %v10143
      %v10171 = vsel %vm10168, %v10143, %v10145
      %v10172 = vsel %vm10168, %v10145, %v10147
      %v10173 = vsel %vm10168, %v10149, %v10151
      %v10174 = vsel %vm10168, %v10151, %v10153
      %v10175 = vsel %vm10168, %v10153, %v10155
      %v10176 = vsel %vm10168, %v10155, %v10157
      %v10177 = vsel %vm10168, %v10159, %v10161
      %v10178 = vsel %vm10168, %v10161, %v10163
      %v10179 = vsel %vm10168, %v10163, %v10165
      %v10180 = vsel %vm10168, %v10165, %v10167
      %v10181 = vsel %vm778, %v10103, 0
      %v10183 = vsel %vm640, %v10169, 0
      %v10185 = vsel %vm640, %v10170, 0
      %v10187 = vsel %vm640, %v10171, 0
      %v10189 = vsel %vm640, %v10172, 0
      %v10191 = vsel %vm640, %v10173, 0
      %v10193 = vsel %vm640, %v10174, 0
      %v10195 = vsel %vm640, %v10175, 0
      %v10197 = vsel %vm640, %v10176, 0
      %v10199 = vsel %vm640, %v10177, 0
      %v10201 = vsel %vm640, %v10178, 0
      %v10203 = vsel %vm640, %v10179, 0
      %v10205 = vsel %vm640, %v10180, 0
      %10207 = vmatpush.msra.mxu0 0.0
      %10208 = vmatpush.msra.mxu0 0.0
      %10209 = vmatpush.msra.mxu0 0.0
      %10210 = vmatpush.msra.mxu0 0.0
      %10211 = vmatpush.msra.mxu0 0.0
      %10212 = vmatpush.msra.mxu0 0.0
      %10213 = vmatpush.msra.mxu0 0.0
      %10214 = vmatpush.msra.mxu0 0.0
      %10215 = vmatpush.msra.mxu0 0.0
      %10216 = vmatpush.msra.mxu0 0.0
      %10217 = vmatpush.msra.mxu0 0.0
      %10218 = vmatpush.msra.mxu0 0.0
      %10219 = vmatpush.msra.mxu0 0.0
      %10220 = vmatpush.msra.mxu0 0.0
      %10221 = vmatpush.msra.mxu0 0.0
      %10222 = vmatpush.msra.mxu0 %v10183
      %10223 = vmatmul.f32.gmra.mxu0 %v10181
      %v10224 = vpop.f32.mrf.mxu0
      %v10225 = vadd.f32 0.0, %v10224
      %10226 = vdwg.mxu0
      %10227 = vmatpush.msra.mxu0 0.0
      %10228 = vmatpush.msra.mxu0 0.0
      %10229 = vmatpush.msra.mxu0 0.0
      %10230 = vmatpush.msra.mxu0 0.0
      %10231 = vmatpush.msra.mxu0 0.0
      %10232 = vmatpush.msra.mxu0 0.0
      %10233 = vmatpush.msra.mxu0 0.0
      %10234 = vmatpush.msra.mxu0 0.0
      %10235 = vmatpush.msra.mxu0 0.0
      %10236 = vmatpush.msra.mxu0 0.0
      %10237 = vmatpush.msra.mxu0 0.0
      %10238 = vmatpush.msra.mxu0 0.0
      %10239 = vmatpush.msra.mxu0 0.0
      %10240 = vmatpush.msra.mxu0 0.0
      %10241 = vmatpush.msra.mxu0 0.0
      %10242 = vmatpush.msra.mxu0 %v10185
      %10243 = vmatmul.f32.gmra.mxu0 %v10181
      %v10244 = vpop.f32.mrf.mxu0
      %v10245 = vadd.f32 0.0, %v10244
      %10246 = vdwg.mxu0
      %10247 = vmatpush.msra.mxu0 0.0
      %10248 = vmatpush.msra.mxu0 0.0
      %10249 = vmatpush.msra.mxu0 0.0
      %10250 = vmatpush.msra.mxu0 0.0
      %10251 = vmatpush.msra.mxu0 0.0
      %10252 = vmatpush.msra.mxu0 0.0
      %10253 = vmatpush.msra.mxu0 0.0
      %10254 = vmatpush.msra.mxu0 0.0
      %10255 = vmatpush.msra.mxu0 0.0
      %10256 = vmatpush.msra.mxu0 0.0
      %10257 = vmatpush.msra.mxu0 0.0
      %10258 = vmatpush.msra.mxu0 0.0
      %10259 = vmatpush.msra.mxu0 0.0
      %10260 = vmatpush.msra.mxu0 0.0
      %10261 = vmatpush.msra.mxu0 0.0
      %10262 = vmatpush.msra.mxu0 %v10187
      %10263 = vmatmul.f32.gmra.mxu0 %v10181
      %v10264 = vpop.f32.mrf.mxu0
      %v10265 = vadd.f32 0.0, %v10264
      %10266 = vdwg.mxu0
      %10267 = vmatpush.msra.mxu0 0.0
      %10268 = vmatpush.msra.mxu0 0.0
      %10269 = vmatpush.msra.mxu0 0.0
      %10270 = vmatpush.msra.mxu0 0.0
      %10271 = vmatpush.msra.mxu0 0.0
      %10272 = vmatpush.msra.mxu0 0.0
      %10273 = vmatpush.msra.mxu0 0.0
      %10274 = vmatpush.msra.mxu0 0.0
      %10275 = vmatpush.msra.mxu0 0.0
      %10276 = vmatpush.msra.mxu0 0.0
      %10277 = vmatpush.msra.mxu0 0.0
      %10278 = vmatpush.msra.mxu0 0.0
      %10279 = vmatpush.msra.mxu0 0.0
      %10280 = vmatpush.msra.mxu0 0.0
      %10281 = vmatpush.msra.mxu0 0.0
      %10282 = vmatpush.msra.mxu0 %v10189
      %10283 = vmatmul.f32.gmra.mxu0 %v10181
      %v10284 = vpop.f32.mrf.mxu0
      %v10285 = vadd.f32 0.0, %v10284
      %10286 = vdwg.mxu0
      %10287 = vmatpush.msra.mxu0 0.0
      %10288 = vmatpush.msra.mxu0 0.0
      %10289 = vmatpush.msra.mxu0 0.0
      %10290 = vmatpush.msra.mxu0 0.0
      %10291 = vmatpush.msra.mxu0 0.0
      %10292 = vmatpush.msra.mxu0 0.0
      %10293 = vmatpush.msra.mxu0 0.0
      %10294 = vmatpush.msra.mxu0 0.0
      %10295 = vmatpush.msra.mxu0 0.0
      %10296 = vmatpush.msra.mxu0 0.0
      %10297 = vmatpush.msra.mxu0 0.0
      %10298 = vmatpush.msra.mxu0 0.0
      %10299 = vmatpush.msra.mxu0 0.0
      %10300 = vmatpush.msra.mxu0 0.0
      %10301 = vmatpush.msra.mxu0 0.0
      %10302 = vmatpush.msra.mxu0 %v10191
      %10303 = vmatmul.f32.gmra.mxu0 %v10181
      %v10304 = vpop.f32.mrf.mxu0
      %v10305 = vadd.f32 0.0, %v10304
      %10306 = vdwg.mxu0
      %10307 = vmatpush.msra.mxu0 0.0
      %10308 = vmatpush.msra.mxu0 0.0
      %10309 = vmatpush.msra.mxu0 0.0
      %10310 = vmatpush.msra.mxu0 0.0
      %10311 = vmatpush.msra.mxu0 0.0
      %10312 = vmatpush.msra.mxu0 0.0
      %10313 = vmatpush.msra.mxu0 0.0
      %10314 = vmatpush.msra.mxu0 0.0
      %10315 = vmatpush.msra.mxu0 0.0
      %10316 = vmatpush.msra.mxu0 0.0
      %10317 = vmatpush.msra.mxu0 0.0
      %10318 = vmatpush.msra.mxu0 0.0
      %10319 = vmatpush.msra.mxu0 0.0
      %10320 = vmatpush.msra.mxu0 0.0
      %10321 = vmatpush.msra.mxu0 0.0
      %10322 = vmatpush.msra.mxu0 %v10193
      %10323 = vmatmul.f32.gmra.mxu0 %v10181
      %v10324 = vpop.f32.mrf.mxu0
      %v10325 = vadd.f32 0.0, %v10324
      %10326 = vdwg.mxu0
      %10327 = vmatpush.msra.mxu0 0.0
      %10328 = vmatpush.msra.mxu0 0.0
      %10329 = vmatpush.msra.mxu0 0.0
      %10330 = vmatpush.msra.mxu0 0.0
      %10331 = vmatpush.msra.mxu0 0.0
      %10332 = vmatpush.msra.mxu0 0.0
      %10333 = vmatpush.msra.mxu0 0.0
      %10334 = vmatpush.msra.mxu0 0.0
      %10335 = vmatpush.msra.mxu0 0.0
      %10336 = vmatpush.msra.mxu0 0.0
      %10337 = vmatpush.msra.mxu0 0.0
      %10338 = vmatpush.msra.mxu0 0.0
      %10339 = vmatpush.msra.mxu0 0.0
      %10340 = vmatpush.msra.mxu0 0.0
      %10341 = vmatpush.msra.mxu0 0.0
      %10342 = vmatpush.msra.mxu0 %v10195
      %10343 = vmatmul.f32.gmra.mxu0 %v10181
      %v10344 = vpop.f32.mrf.mxu0
      %v10345 = vadd.f32 0.0, %v10344
      %10346 = vdwg.mxu0
      %10347 = vmatpush.msra.mxu0 0.0
      %10348 = vmatpush.msra.mxu0 0.0
      %10349 = vmatpush.msra.mxu0 0.0
      %10350 = vmatpush.msra.mxu0 0.0
      %10351 = vmatpush.msra.mxu0 0.0
      %10352 = vmatpush.msra.mxu0 0.0
      %10353 = vmatpush.msra.mxu0 0.0
      %10354 = vmatpush.msra.mxu0 0.0
      %10355 = vmatpush.msra.mxu0 0.0
      %10356 = vmatpush.msra.mxu0 0.0
      %10357 = vmatpush.msra.mxu0 0.0
      %10358 = vmatpush.msra.mxu0 0.0
      %10359 = vmatpush.msra.mxu0 0.0
      %10360 = vmatpush.msra.mxu0 0.0
      %10361 = vmatpush.msra.mxu0 0.0
      %10362 = vmatpush.msra.mxu0 %v10197
      %10363 = vmatmul.f32.gmra.mxu0 %v10181
      %v10364 = vpop.f32.mrf.mxu0
      %v10365 = vadd.f32 0.0, %v10364
      %10366 = vdwg.mxu0
      %10367 = vmatpush.msra.mxu0 0.0
      %10368 = vmatpush.msra.mxu0 0.0
      %10369 = vmatpush.msra.mxu0 0.0
      %10370 = vmatpush.msra.mxu0 0.0
      %10371 = vmatpush.msra.mxu0 0.0
      %10372 = vmatpush.msra.mxu0 0.0
      %10373 = vmatpush.msra.mxu0 0.0
      %10374 = vmatpush.msra.mxu0 0.0
      %10375 = vmatpush.msra.mxu0 0.0
      %10376 = vmatpush.msra.mxu0 0.0
      %10377 = vmatpush.msra.mxu0 0.0
      %10378 = vmatpush.msra.mxu0 0.0
      %10379 = vmatpush.msra.mxu0 0.0
      %10380 = vmatpush.msra.mxu0 0.0
      %10381 = vmatpush.msra.mxu0 0.0
      %10382 = vmatpush.msra.mxu0 %v10199
      %10383 = vmatmul.f32.gmra.mxu0 %v10181
      %v10384 = vpop.f32.mrf.mxu0
      %v10385 = vadd.f32 0.0, %v10384
      %10386 = vdwg.mxu0
      %10387 = vmatpush.msra.mxu0 0.0
      %10388 = vmatpush.msra.mxu0 0.0
      %10389 = vmatpush.msra.mxu0 0.0
      %10390 = vmatpush.msra.mxu0 0.0
      %10391 = vmatpush.msra.mxu0 0.0
      %10392 = vmatpush.msra.mxu0 0.0
      %10393 = vmatpush.msra.mxu0 0.0
      %10394 = vmatpush.msra.mxu0 0.0
      %10395 = vmatpush.msra.mxu0 0.0
      %10396 = vmatpush.msra.mxu0 0.0
      %10397 = vmatpush.msra.mxu0 0.0
      %10398 = vmatpush.msra.mxu0 0.0
      %10399 = vmatpush.msra.mxu0 0.0
      %10400 = vmatpush.msra.mxu0 0.0
      %10401 = vmatpush.msra.mxu0 0.0
      %10402 = vmatpush.msra.mxu0 %v10201
      %10403 = vmatmul.f32.gmra.mxu0 %v10181
      %v10404 = vpop.f32.mrf.mxu0
      %v10405 = vadd.f32 0.0, %v10404
      %10406 = vdwg.mxu0
      %10407 = vmatpush.msra.mxu0 0.0
      %10408 = vmatpush.msra.mxu0 0.0
      %10409 = vmatpush.msra.mxu0 0.0
      %10410 = vmatpush.msra.mxu0 0.0
      %10411 = vmatpush.msra.mxu0 0.0
      %10412 = vmatpush.msra.mxu0 0.0
      %10413 = vmatpush.msra.mxu0 0.0
      %10414 = vmatpush.msra.mxu0 0.0
      %10415 = vmatpush.msra.mxu0 0.0
      %10416 = vmatpush.msra.mxu0 0.0
      %10417 = vmatpush.msra.mxu0 0.0
      %10418 = vmatpush.msra.mxu0 0.0
      %10419 = vmatpush.msra.mxu0 0.0
      %10420 = vmatpush.msra.mxu0 0.0
      %10421 = vmatpush.msra.mxu0 0.0
      %10422 = vmatpush.msra.mxu0 %v10203
      %10423 = vmatmul.f32.gmra.mxu0 %v10181
      %v10424 = vpop.f32.mrf.mxu0
      %v10425 = vadd.f32 0.0, %v10424
      %10426 = vdwg.mxu0
      %10427 = vmatpush.msra.mxu0 0.0
      %10428 = vmatpush.msra.mxu0 0.0
      %10429 = vmatpush.msra.mxu0 0.0
      %10430 = vmatpush.msra.mxu0 0.0
      %10431 = vmatpush.msra.mxu0 0.0
      %10432 = vmatpush.msra.mxu0 0.0
      %10433 = vmatpush.msra.mxu0 0.0
      %10434 = vmatpush.msra.mxu0 0.0
      %10435 = vmatpush.msra.mxu0 0.0
      %10436 = vmatpush.msra.mxu0 0.0
      %10437 = vmatpush.msra.mxu0 0.0
      %10438 = vmatpush.msra.mxu0 0.0
      %10439 = vmatpush.msra.mxu0 0.0
      %10440 = vmatpush.msra.mxu0 0.0
      %10441 = vmatpush.msra.mxu0 0.0
      %10442 = vmatpush.msra.mxu0 %v10205
      %10443 = vmatmul.f32.gmra.mxu0 %v10181
      %v10444 = vpop.f32.mrf.mxu0
      %v10445 = vadd.f32 0.0, %v10444
      %10446 = vdwg.mxu0
      %v10447 = vadd.f32 %v10082, %v10225
      %v10448 = vadd.f32 %v10083, %v10245
      %v10449 = vadd.f32 %v10084, %v10265
      %v10450 = vadd.f32 %v10085, %v10285
      %v10451 = vadd.f32 %v10086, %v10305
      %v10452 = vadd.f32 %v10087, %v10325
      %v10453 = vadd.f32 %v10088, %v10345
      %v10454 = vadd.f32 %v10089, %v10365
      %v10455 = vadd.f32 %v10090, %v10385
      %v10456 = vadd.f32 %v10091, %v10405
      %v10457 = vadd.f32 %v10092, %v10425
      %v10458 = vadd.f32 %v10093, %v10445
      %v10459 = vld [vmem:[%s8] sm:$0xf]
      %10461 = vset.pattern.permute.xlu0 0
      %10462 = vperm.xlu0 %10461, %v10459
      %v10463 = vpop.permute.xlu0 %10462
      %v10465 = vadd.f32 %v10447, %v10463
      %v10466 = vadd.f32 %v10448, %v10463
      %v10467 = vadd.f32 %v10449, %v10463
      %v10468 = vadd.f32 %v10450, %v10463
      %v10469 = vadd.f32 %v10451, %v10463
      %v10470 = vadd.f32 %v10452, %v10463
      %v10471 = vadd.f32 %v10453, %v10463
      %v10472 = vadd.f32 %v10454, %v10463
      %v10473 = vadd.f32 %v10455, %v10463
      %v10474 = vadd.f32 %v10456, %v10463
      %v10475 = vadd.f32 %v10457, %v10463
      %v10476 = vadd.f32 %v10458, %v10463
      %vm10477 = vcmp.ge.f32.partialorder %v10465, 0.0
      %vm10478 = vcmp.ge.f32.partialorder %v10466, 0.0
      %vm10479 = vcmp.ge.f32.partialorder %v10467, 0.0
      %vm10480 = vcmp.ge.f32.partialorder %v10468, 0.0
      %vm10481 = vcmp.ge.f32.partialorder %v10469, 0.0
      %vm10482 = vcmp.ge.f32.partialorder %v10470, 0.0
      %vm10483 = vcmp.ge.f32.partialorder %v10471, 0.0
      %vm10484 = vcmp.ge.f32.partialorder %v10472, 0.0
      %vm10485 = vcmp.ge.f32.partialorder %v10473, 0.0
      %vm10486 = vcmp.ge.f32.partialorder %v10474, 0.0
      %vm10487 = vcmp.ge.f32.partialorder %v10475, 0.0
      %vm10488 = vcmp.ge.f32.partialorder %v10476, 0.0
      %v10489 = vmul.f32 %v512, %v10465
      %v10490 = vmul.f32 %v512, %v10466
      %v10491 = vmul.f32 %v512, %v10467
      %v10492 = vmul.f32 %v512, %v10468
      %v10493 = vmul.f32 %v512, %v10469
      %v10494 = vmul.f32 %v512, %v10470
      %v10495 = vmul.f32 %v512, %v10471
      %v10496 = vmul.f32 %v512, %v10472
      %v10497 = vmul.f32 %v512, %v10473
      %v10498 = vmul.f32 %v512, %v10474
      %v10499 = vmul.f32 %v512, %v10475
      %v10500 = vmul.f32 %v512, %v10476
      %v10501 = vsel %vm10477, %v10465, %v10489
      %v10502 = vsel %vm10478, %v10466, %v10490
      %v10503 = vsel %vm10479, %v10467, %v10491
      %v10504 = vsel %vm10480, %v10468, %v10492
      %v10505 = vsel %vm10481, %v10469, %v10493
      %v10506 = vsel %vm10482, %v10470, %v10494
      %v10507 = vsel %vm10483, %v10471, %v10495
      %v10508 = vsel %vm10484, %v10472, %v10496
      %v10509 = vsel %vm10485, %v10473, %v10497
      %v10510 = vsel %vm10486, %v10474, %v10498
      %v10511 = vsel %vm10487, %v10475, %v10499
      %v10512 = vsel %vm10488, %v10476, %v10500
      %v10513 = vld [vmem:[%s9] sm:$0xff]
      %v10514 = vld [vmem:[%s9 + $0x8] sm:$0xff]
      %10517 = vrot.lane.b32.xlu0 %v10513, 124
      %v10518 = vpop.permute.xlu0 %10517
      %10519 = vrot.lane.b32.xlu0 %v10514, 124
      %v10520 = vpop.permute.xlu0 %10519
      %10525 = vrot.lane.b32.xlu0 %v10501, 28
      %v10526 = vpop.permute.xlu0 %10525
      %10527 = vrot.lane.b32.xlu0 %v10502, 28
      %v10528 = vpop.permute.xlu0 %10527
      %10529 = vrot.lane.b32.xlu0 %v10503, 28
      %v10530 = vpop.permute.xlu0 %10529
      %10531 = vrot.lane.b32.xlu0 %v10504, 28
      %v10532 = vpop.permute.xlu0 %10531
      %v10533 = vsel %vm8708, %v10526, %v10528
      %v10534 = vsel %vm8708, %v10528, %v10530
      %v10535 = vsel %vm8708, %v10530, %v10532
      %v10536 = vsel %vm778, %v10518, 0
      %v10538 = vsel %vm778, %v10520, 0
      %v10540 = vsel %vm640, %v10533, 0
      %v10542 = vsel %vm640, %v10534, 0
      %v10544 = vsel %vm640, %v10535, 0
      %v10546 = vsel %vm640, %v10532, 0
      %10548 = vmatpush.msra.mxu0 0.0
      %10549 = vmatpush.msra.mxu0 0.0
      %10550 = vmatpush.msra.mxu0 0.0
      %10551 = vmatpush.msra.mxu0 0.0
      %10552 = vmatpush.msra.mxu0 0.0
      %10553 = vmatpush.msra.mxu0 0.0
      %10554 = vmatpush.msra.mxu0 0.0
      %10555 = vmatpush.msra.mxu0 0.0
      %10556 = vmatpush.msra.mxu0 0.0
      %10557 = vmatpush.msra.mxu0 0.0
      %10558 = vmatpush.msra.mxu0 0.0
      %10559 = vmatpush.msra.mxu0 0.0
      %10560 = vmatpush.msra.mxu0 0.0
      %10561 = vmatpush.msra.mxu0 0.0
      %10562 = vmatpush.msra.mxu0 0.0
      %10563 = vmatpush.msra.mxu0 %v10540
      %10564 = vmatmul.f32.gmra.mxu0 %v10536
      %v10565 = vpop.f32.mrf.mxu0
      %v10566 = vadd.f32 0.0, %v10565
      %10567 = vmatmul.f32.gmra.mxu0 %v10538
      %v10568 = vpop.f32.mrf.mxu0
      %v10569 = vadd.f32 0.0, %v10568
      %10570 = vdwg.mxu0
      %10571 = vmatpush.msra.mxu0 0.0
      %10572 = vmatpush.msra.mxu0 0.0
      %10573 = vmatpush.msra.mxu0 0.0
      %10574 = vmatpush.msra.mxu0 0.0
      %10575 = vmatpush.msra.mxu0 0.0
      %10576 = vmatpush.msra.mxu0 0.0
      %10577 = vmatpush.msra.mxu0 0.0
      %10578 = vmatpush.msra.mxu0 0.0
      %10579 = vmatpush.msra.mxu0 0.0
      %10580 = vmatpush.msra.mxu0 0.0
      %10581 = vmatpush.msra.mxu0 0.0
      %10582 = vmatpush.msra.mxu0 0.0
      %10583 = vmatpush.msra.mxu0 0.0
      %10584 = vmatpush.msra.mxu0 0.0
      %10585 = vmatpush.msra.mxu0 0.0
      %10586 = vmatpush.msra.mxu0 %v10542
      %10587 = vmatmul.f32.gmra.mxu0 %v10536
      %v10588 = vpop.f32.mrf.mxu0
      %v10589 = vadd.f32 0.0, %v10588
      %10590 = vmatmul.f32.gmra.mxu0 %v10538
      %v10591 = vpop.f32.mrf.mxu0
      %v10592 = vadd.f32 0.0, %v10591
      %10593 = vdwg.mxu0
      %10594 = vmatpush.msra.mxu0 0.0
      %10595 = vmatpush.msra.mxu0 0.0
      %10596 = vmatpush.msra.mxu0 0.0
      %10597 = vmatpush.msra.mxu0 0.0
      %10598 = vmatpush.msra.mxu0 0.0
      %10599 = vmatpush.msra.mxu0 0.0
      %10600 = vmatpush.msra.mxu0 0.0
      %10601 = vmatpush.msra.mxu0 0.0
      %10602 = vmatpush.msra.mxu0 0.0
      %10603 = vmatpush.msra.mxu0 0.0
      %10604 = vmatpush.msra.mxu0 0.0
      %10605 = vmatpush.msra.mxu0 0.0
      %10606 = vmatpush.msra.mxu0 0.0
      %10607 = vmatpush.msra.mxu0 0.0
      %10608 = vmatpush.msra.mxu0 0.0
      %10609 = vmatpush.msra.mxu0 %v10544
      %10610 = vmatmul.f32.gmra.mxu0 %v10536
      %v10611 = vpop.f32.mrf.mxu0
      %v10612 = vadd.f32 0.0, %v10611
      %10613 = vmatmul.f32.gmra.mxu0 %v10538
      %v10614 = vpop.f32.mrf.mxu0
      %v10615 = vadd.f32 0.0, %v10614
      %10616 = vdwg.mxu0
      %10617 = vmatpush.msra.mxu0 0.0
      %10618 = vmatpush.msra.mxu0 0.0
      %10619 = vmatpush.msra.mxu0 0.0
      %10620 = vmatpush.msra.mxu0 0.0
      %10621 = vmatpush.msra.mxu0 0.0
      %10622 = vmatpush.msra.mxu0 0.0
      %10623 = vmatpush.msra.mxu0 0.0
      %10624 = vmatpush.msra.mxu0 0.0
      %10625 = vmatpush.msra.mxu0 0.0
      %10626 = vmatpush.msra.mxu0 0.0
      %10627 = vmatpush.msra.mxu0 0.0
      %10628 = vmatpush.msra.mxu0 0.0
      %10629 = vmatpush.msra.mxu0 0.0
      %10630 = vmatpush.msra.mxu0 0.0
      %10631 = vmatpush.msra.mxu0 0.0
      %10632 = vmatpush.msra.mxu0 %v10546
      %10633 = vmatmul.f32.gmra.mxu0 %v10536
      %v10634 = vpop.f32.mrf.mxu0
      %v10635 = vadd.f32 0.0, %v10634
      %10636 = vmatmul.f32.gmra.mxu0 %v10538
      %v10637 = vpop.f32.mrf.mxu0
      %v10638 = vadd.f32 0.0, %v10637
      %10639 = vdwg.mxu0
      %10644 = vrot.lane.b32.xlu0 %v524, 28
      %v10645 = vpop.permute.xlu0 %10644
      %10646 = vrot.lane.b32.xlu0 %v525, 28
      %v10647 = vpop.permute.xlu0 %10646
      %10648 = vrot.lane.b32.xlu0 %v526, 28
      %v10649 = vpop.permute.xlu0 %10648
      %10650 = vrot.lane.b32.xlu0 %v527, 28
      %v10651 = vpop.permute.xlu0 %10650
      %v10652 = vsel %vm8708, %v10645, %v10647
      %v10653 = vsel %vm8708, %v10647, %v10649
      %v10654 = vsel %vm8708, %v10649, %v10651
      %v10655 = vsel %vm778, %v10513, 0
      %v10657 = vsel %vm778, %v10514, 0
      %v10659 = vsel %vm640, %v10652, 0
      %v10661 = vsel %vm640, %v10653, 0
      %v10663 = vsel %vm640, %v10654, 0
      %v10665 = vsel %vm640, %v10651, 0
      %10667 = vmatpush.msra.mxu0 0.0
      %10668 = vmatpush.msra.mxu0 0.0
      %10669 = vmatpush.msra.mxu0 0.0
      %10670 = vmatpush.msra.mxu0 0.0
      %10671 = vmatpush.msra.mxu0 0.0
      %10672 = vmatpush.msra.mxu0 0.0
      %10673 = vmatpush.msra.mxu0 0.0
      %10674 = vmatpush.msra.mxu0 0.0
      %10675 = vmatpush.msra.mxu0 0.0
      %10676 = vmatpush.msra.mxu0 0.0
      %10677 = vmatpush.msra.mxu0 0.0
      %10678 = vmatpush.msra.mxu0 0.0
      %10679 = vmatpush.msra.mxu0 0.0
      %10680 = vmatpush.msra.mxu0 0.0
      %10681 = vmatpush.msra.mxu0 0.0
      %10682 = vmatpush.msra.mxu0 %v10659
      %10683 = vmatmul.f32.gmra.mxu0 %v10655
      %v10684 = vpop.f32.mrf.mxu0
      %v10685 = vadd.f32 %v10566, %v10684
      %10686 = vmatmul.f32.gmra.mxu0 %v10657
      %v10687 = vpop.f32.mrf.mxu0
      %v10688 = vadd.f32 %v10569, %v10687
      %10689 = vdwg.mxu0
      %10690 = vmatpush.msra.mxu0 0.0
      %10691 = vmatpush.msra.mxu0 0.0
      %10692 = vmatpush.msra.mxu0 0.0
      %10693 = vmatpush.msra.mxu0 0.0
      %10694 = vmatpush.msra.mxu0 0.0
      %10695 = vmatpush.msra.mxu0 0.0
      %10696 = vmatpush.msra.mxu0 0.0
      %10697 = vmatpush.msra.mxu0 0.0
      %10698 = vmatpush.msra.mxu0 0.0
      %10699 = vmatpush.msra.mxu0 0.0
      %10700 = vmatpush.msra.mxu0 0.0
      %10701 = vmatpush.msra.mxu0 0.0
      %10702 = vmatpush.msra.mxu0 0.0
      %10703 = vmatpush.msra.mxu0 0.0
      %10704 = vmatpush.msra.mxu0 0.0
      %10705 = vmatpush.msra.mxu0 %v10661
      %10706 = vmatmul.f32.gmra.mxu0 %v10655
      %v10707 = vpop.f32.mrf.mxu0
      %v10708 = vadd.f32 %v10589, %v10707
      %10709 = vmatmul.f32.gmra.mxu0 %v10657
      %v10710 = vpop.f32.mrf.mxu0
      %v10711 = vadd.f32 %v10592, %v10710
      %10712 = vdwg.mxu0
      %10713 = vmatpush.msra.mxu0 0.0
      %10714 = vmatpush.msra.mxu0 0.0
      %10715 = vmatpush.msra.mxu0 0.0
      %10716 = vmatpush.msra.mxu0 0.0
      %10717 = vmatpush.msra.mxu0 0.0
      %10718 = vmatpush.msra.mxu0 0.0
      %10719 = vmatpush.msra.mxu0 0.0
      %10720 = vmatpush.msra.mxu0 0.0
      %10721 = vmatpush.msra.mxu0 0.0
      %10722 = vmatpush.msra.mxu0 0.0
      %10723 = vmatpush.msra.mxu0 0.0
      %10724 = vmatpush.msra.mxu0 0.0
      %10725 = vmatpush.msra.mxu0 0.0
      %10726 = vmatpush.msra.mxu0 0.0
      %10727 = vmatpush.msra.mxu0 0.0
      %10728 = vmatpush.msra.mxu0 %v10663
      %10729 = vmatmul.f32.gmra.mxu0 %v10655
      %v10730 = vpop.f32.mrf.mxu0
      %v10731 = vadd.f32 %v10612, %v10730
      %10732 = vmatmul.f32.gmra.mxu0 %v10657
      %v10733 = vpop.f32.mrf.mxu0
      %v10734 = vadd.f32 %v10615, %v10733
      %10735 = vdwg.mxu0
      %10736 = vmatpush.msra.mxu0 0.0
      %10737 = vmatpush.msra.mxu0 0.0
      %10738 = vmatpush.msra.mxu0 0.0
      %10739 = vmatpush.msra.mxu0 0.0
      %10740 = vmatpush.msra.mxu0 0.0
      %10741 = vmatpush.msra.mxu0 0.0
      %10742 = vmatpush.msra.mxu0 0.0
      %10743 = vmatpush.msra.mxu0 0.0
      %10744 = vmatpush.msra.mxu0 0.0
      %10745 = vmatpush.msra.mxu0 0.0
      %10746 = vmatpush.msra.mxu0 0.0
      %10747 = vmatpush.msra.mxu0 0.0
      %10748 = vmatpush.msra.mxu0 0.0
      %10749 = vmatpush.msra.mxu0 0.0
      %10750 = vmatpush.msra.mxu0 0.0
      %10751 = vmatpush.msra.mxu0 %v10665
      %10752 = vmatmul.f32.gmra.mxu0 %v10655
      %v10753 = vpop.f32.mrf.mxu0
      %v10754 = vadd.f32 %v10635, %v10753
      %10755 = vmatmul.f32.gmra.mxu0 %v10657
      %v10756 = vpop.f32.mrf.mxu0
      %v10757 = vadd.f32 %v10638, %v10756
      %10758 = vdwg.mxu0
      %10759 = vrot.lane.b32.xlu0 %v10513, 120
      %v10760 = vpop.permute.xlu0 %10759
      %10761 = vrot.lane.b32.xlu0 %v10514, 120
      %v10762 = vpop.permute.xlu0 %10761
      %10767 = vrot.lane.b32.xlu0 %v10505, 68
      %v10768 = vpop.permute.xlu0 %10767
      %10769 = vrot.lane.b32.xlu0 %v10506, 68
      %v10770 = vpop.permute.xlu0 %10769
      %10771 = vrot.lane.b32.xlu0 %v10507, 68
      %v10772 = vpop.permute.xlu0 %10771
      %10773 = vrot.lane.b32.xlu0 %v10508, 68
      %v10774 = vpop.permute.xlu0 %10773
      %vm10775 = vcmask 556032
      %v10776 = vsel %vm10775, %v10768, %v10770
      %v10777 = vsel %vm10775, %v10770, %v10772
      %v10778 = vsel %vm10775, %v10772, %v10774
      %v10779 = vsel %vm778, %v10760, 0
      %v10781 = vsel %vm778, %v10762, 0
      %v10783 = vsel %vm640, %v10776, 0
      %v10785 = vsel %vm640, %v10777, 0
      %v10787 = vsel %vm640, %v10778, 0
      %v10789 = vsel %vm640, %v10774, 0
      %10791 = vmatpush.msra.mxu0 0.0
      %10792 = vmatpush.msra.mxu0 0.0
      %10793 = vmatpush.msra.mxu0 0.0
      %10794 = vmatpush.msra.mxu0 0.0
      %10795 = vmatpush.msra.mxu0 0.0
      %10796 = vmatpush.msra.mxu0 0.0
      %10797 = vmatpush.msra.mxu0 0.0
      %10798 = vmatpush.msra.mxu0 0.0
      %10799 = vmatpush.msra.mxu0 0.0
      %10800 = vmatpush.msra.mxu0 0.0
      %10801 = vmatpush.msra.mxu0 0.0
      %10802 = vmatpush.msra.mxu0 0.0
      %10803 = vmatpush.msra.mxu0 0.0
      %10804 = vmatpush.msra.mxu0 0.0
      %10805 = vmatpush.msra.mxu0 0.0
      %10806 = vmatpush.msra.mxu0 %v10783
      %10807 = vmatmul.f32.gmra.mxu0 %v10779
      %v10808 = vpop.f32.mrf.mxu0
      %v10809 = vadd.f32 0.0, %v10808
      %10810 = vmatmul.f32.gmra.mxu0 %v10781
      %v10811 = vpop.f32.mrf.mxu0
      %v10812 = vadd.f32 0.0, %v10811
      %10813 = vdwg.mxu0
      %10814 = vmatpush.msra.mxu0 0.0
      %10815 = vmatpush.msra.mxu0 0.0
      %10816 = vmatpush.msra.mxu0 0.0
      %10817 = vmatpush.msra.mxu0 0.0
      %10818 = vmatpush.msra.mxu0 0.0
      %10819 = vmatpush.msra.mxu0 0.0
      %10820 = vmatpush.msra.mxu0 0.0
      %10821 = vmatpush.msra.mxu0 0.0
      %10822 = vmatpush.msra.mxu0 0.0
      %10823 = vmatpush.msra.mxu0 0.0
      %10824 = vmatpush.msra.mxu0 0.0
      %10825 = vmatpush.msra.mxu0 0.0
      %10826 = vmatpush.msra.mxu0 0.0
      %10827 = vmatpush.msra.mxu0 0.0
      %10828 = vmatpush.msra.mxu0 0.0
      %10829 = vmatpush.msra.mxu0 %v10785
      %10830 = vmatmul.f32.gmra.mxu0 %v10779
      %v10831 = vpop.f32.mrf.mxu0
      %v10832 = vadd.f32 0.0, %v10831
      %10833 = vmatmul.f32.gmra.mxu0 %v10781
      %v10834 = vpop.f32.mrf.mxu0
      %v10835 = vadd.f32 0.0, %v10834
      %10836 = vdwg.mxu0
      %10837 = vmatpush.msra.mxu0 0.0
      %10838 = vmatpush.msra.mxu0 0.0
      %10839 = vmatpush.msra.mxu0 0.0
      %10840 = vmatpush.msra.mxu0 0.0
      %10841 = vmatpush.msra.mxu0 0.0
      %10842 = vmatpush.msra.mxu0 0.0
      %10843 = vmatpush.msra.mxu0 0.0
      %10844 = vmatpush.msra.mxu0 0.0
      %10845 = vmatpush.msra.mxu0 0.0
      %10846 = vmatpush.msra.mxu0 0.0
      %10847 = vmatpush.msra.mxu0 0.0
      %10848 = vmatpush.msra.mxu0 0.0
      %10849 = vmatpush.msra.mxu0 0.0
      %10850 = vmatpush.msra.mxu0 0.0
      %10851 = vmatpush.msra.mxu0 0.0
      %10852 = vmatpush.msra.mxu0 %v10787
      %10853 = vmatmul.f32.gmra.mxu0 %v10779
      %v10854 = vpop.f32.mrf.mxu0
      %v10855 = vadd.f32 0.0, %v10854
      %10856 = vmatmul.f32.gmra.mxu0 %v10781
      %v10857 = vpop.f32.mrf.mxu0
      %v10858 = vadd.f32 0.0, %v10857
      %10859 = vdwg.mxu0
      %10860 = vmatpush.msra.mxu0 0.0
      %10861 = vmatpush.msra.mxu0 0.0
      %10862 = vmatpush.msra.mxu0 0.0
      %10863 = vmatpush.msra.mxu0 0.0
      %10864 = vmatpush.msra.mxu0 0.0
      %10865 = vmatpush.msra.mxu0 0.0
      %10866 = vmatpush.msra.mxu0 0.0
      %10867 = vmatpush.msra.mxu0 0.0
      %10868 = vmatpush.msra.mxu0 0.0
      %10869 = vmatpush.msra.mxu0 0.0
      %10870 = vmatpush.msra.mxu0 0.0
      %10871 = vmatpush.msra.mxu0 0.0
      %10872 = vmatpush.msra.mxu0 0.0
      %10873 = vmatpush.msra.mxu0 0.0
      %10874 = vmatpush.msra.mxu0 0.0
      %10875 = vmatpush.msra.mxu0 %v10789
      %10876 = vmatmul.f32.gmra.mxu0 %v10779
      %v10877 = vpop.f32.mrf.mxu0
      %v10878 = vadd.f32 0.0, %v10877
      %10879 = vmatmul.f32.gmra.mxu0 %v10781
      %v10880 = vpop.f32.mrf.mxu0
      %v10881 = vadd.f32 0.0, %v10880
      %10882 = vdwg.mxu0
      %v10883 = vadd.f32 %v10685, %v10809
      %v10884 = vadd.f32 %v10708, %v10832
      %v10885 = vadd.f32 %v10731, %v10855
      %v10886 = vadd.f32 %v10754, %v10878
      %v10887 = vadd.f32 %v10688, %v10812
      %v10888 = vadd.f32 %v10711, %v10835
      %v10889 = vadd.f32 %v10734, %v10858
      %v10890 = vadd.f32 %v10757, %v10881
      %10891 = vrot.lane.b32.xlu0 %v10513, 116
      %v10892 = vpop.permute.xlu0 %10891
      %10893 = vrot.lane.b32.xlu0 %v10514, 116
      %v10894 = vpop.permute.xlu0 %10893
      %10899 = vrot.lane.b32.xlu0 %v10509, 108
      %v10900 = vpop.permute.xlu0 %10899
      %10901 = vrot.lane.b32.xlu0 %v10510, 108
      %v10902 = vpop.permute.xlu0 %10901
      %10903 = vrot.lane.b32.xlu0 %v10511, 108
      %v10904 = vpop.permute.xlu0 %10903
      %10905 = vrot.lane.b32.xlu0 %v10512, 108
      %v10906 = vpop.permute.xlu0 %10905
      %vm10907 = vcmask 883712
      %v10908 = vsel %vm10907, %v10900, %v10902
      %v10909 = vsel %vm10907, %v10902, %v10904
      %v10910 = vsel %vm10907, %v10904, %v10906
      %v10911 = vsel %vm778, %v10892, 0
      %v10913 = vsel %vm778, %v10894, 0
      %v10915 = vsel %vm640, %v10908, 0
      %v10917 = vsel %vm640, %v10909, 0
      %v10919 = vsel %vm640, %v10910, 0
      %v10921 = vsel %vm640, %v10906, 0
      %10923 = vmatpush.msra.mxu0 0.0
      %10924 = vmatpush.msra.mxu0 0.0
      %10925 = vmatpush.msra.mxu0 0.0
      %10926 = vmatpush.msra.mxu0 0.0
      %10927 = vmatpush.msra.mxu0 0.0
      %10928 = vmatpush.msra.mxu0 0.0
      %10929 = vmatpush.msra.mxu0 0.0
      %10930 = vmatpush.msra.mxu0 0.0
      %10931 = vmatpush.msra.mxu0 0.0
      %10932 = vmatpush.msra.mxu0 0.0
      %10933 = vmatpush.msra.mxu0 0.0
      %10934 = vmatpush.msra.mxu0 0.0
      %10935 = vmatpush.msra.mxu0 0.0
      %10936 = vmatpush.msra.mxu0 0.0
      %10937 = vmatpush.msra.mxu0 0.0
      %10938 = vmatpush.msra.mxu0 %v10915
      %10939 = vmatmul.f32.gmra.mxu0 %v10911
      %v10940 = vpop.f32.mrf.mxu0
      %v10941 = vadd.f32 0.0, %v10940
      %10942 = vmatmul.f32.gmra.mxu0 %v10913
      %v10943 = vpop.f32.mrf.mxu0
      %v10944 = vadd.f32 0.0, %v10943
      %10945 = vdwg.mxu0
      %10946 = vmatpush.msra.mxu0 0.0
      %10947 = vmatpush.msra.mxu0 0.0
      %10948 = vmatpush.msra.mxu0 0.0
      %10949 = vmatpush.msra.mxu0 0.0
      %10950 = vmatpush.msra.mxu0 0.0
      %10951 = vmatpush.msra.mxu0 0.0
      %10952 = vmatpush.msra.mxu0 0.0
      %10953 = vmatpush.msra.mxu0 0.0
      %10954 = vmatpush.msra.mxu0 0.0
      %10955 = vmatpush.msra.mxu0 0.0
      %10956 = vmatpush.msra.mxu0 0.0
      %10957 = vmatpush.msra.mxu0 0.0
      %10958 = vmatpush.msra.mxu0 0.0
      %10959 = vmatpush.msra.mxu0 0.0
      %10960 = vmatpush.msra.mxu0 0.0
      %10961 = vmatpush.msra.mxu0 %v10917
      %10962 = vmatmul.f32.gmra.mxu0 %v10911
      %v10963 = vpop.f32.mrf.mxu0
      %v10964 = vadd.f32 0.0, %v10963
      %10965 = vmatmul.f32.gmra.mxu0 %v10913
      %v10966 = vpop.f32.mrf.mxu0
      %v10967 = vadd.f32 0.0, %v10966
      %10968 = vdwg.mxu0
      %10969 = vmatpush.msra.mxu0 0.0
      %10970 = vmatpush.msra.mxu0 0.0
      %10971 = vmatpush.msra.mxu0 0.0
      %10972 = vmatpush.msra.mxu0 0.0
      %10973 = vmatpush.msra.mxu0 0.0
      %10974 = vmatpush.msra.mxu0 0.0
      %10975 = vmatpush.msra.mxu0 0.0
      %10976 = vmatpush.msra.mxu0 0.0
      %10977 = vmatpush.msra.mxu0 0.0
      %10978 = vmatpush.msra.mxu0 0.0
      %10979 = vmatpush.msra.mxu0 0.0
      %10980 = vmatpush.msra.mxu0 0.0
      %10981 = vmatpush.msra.mxu0 0.0
      %10982 = vmatpush.msra.mxu0 0.0
      %10983 = vmatpush.msra.mxu0 0.0
      %10984 = vmatpush.msra.mxu0 %v10919
      %10985 = vmatmul.f32.gmra.mxu0 %v10911
      %v10986 = vpop.f32.mrf.mxu0
      %v10987 = vadd.f32 0.0, %v10986
      %10988 = vmatmul.f32.gmra.mxu0 %v10913
      %v10989 = vpop.f32.mrf.mxu0
      %v10990 = vadd.f32 0.0, %v10989
      %10991 = vdwg.mxu0
      %10992 = vmatpush.msra.mxu0 0.0
      %10993 = vmatpush.msra.mxu0 0.0
      %10994 = vmatpush.msra.mxu0 0.0
      %10995 = vmatpush.msra.mxu0 0.0
      %10996 = vmatpush.msra.mxu0 0.0
      %10997 = vmatpush.msra.mxu0 0.0
      %10998 = vmatpush.msra.mxu0 0.0
      %10999 = vmatpush.msra.mxu0 0.0
      %11000 = vmatpush.msra.mxu0 0.0
      %11001 = vmatpush.msra.mxu0 0.0
      %11002 = vmatpush.msra.mxu0 0.0
      %11003 = vmatpush.msra.mxu0 0.0
      %11004 = vmatpush.msra.mxu0 0.0
      %11005 = vmatpush.msra.mxu0 0.0
      %11006 = vmatpush.msra.mxu0 0.0
      %11007 = vmatpush.msra.mxu0 %v10921
      %11008 = vmatmul.f32.gmra.mxu0 %v10911
      %v11009 = vpop.f32.mrf.mxu0
      %v11010 = vadd.f32 0.0, %v11009
      %11011 = vmatmul.f32.gmra.mxu0 %v10913
      %v11012 = vpop.f32.mrf.mxu0
      %v11013 = vadd.f32 0.0, %v11012
      %11014 = vdwg.mxu0
      %v11015 = vadd.f32 %v10883, %v10941
      %v11016 = vadd.f32 %v10884, %v10964
      %v11017 = vadd.f32 %v10885, %v10987
      %v11018 = vadd.f32 %v10886, %v11010
      %v11019 = vadd.f32 %v10887, %v10944
      %v11020 = vadd.f32 %v10888, %v10967
      %v11021 = vadd.f32 %v10889, %v10990
      %v11022 = vadd.f32 %v10890, %v11013
      %v11023 = vld [vmem:[%s10] sm:$0xff]
      %v11024 = vld [vmem:[%s10 + $0x8] sm:$0xff]
      %11026 = vset.pattern.permute.xlu0 0
      %11027 = vperm.xlu0 %11026, %v11023
      %v11028 = vpop.permute.xlu0 %11027
      %11031 = vset.pattern.permute.xlu0 0
      %11032 = vperm.xlu0 %11031, %v11024
      %v11033 = vpop.permute.xlu0 %11032
      %v11035 = vadd.f32 %v11015, %v11028
      %v11036 = vadd.f32 %v11016, %v11028
      %v11037 = vadd.f32 %v11017, %v11028
      %v11038 = vadd.f32 %v11018, %v11028
      %v11039 = vadd.f32 %v11019, %v11033
      %v11040 = vadd.f32 %v11020, %v11033
      %v11041 = vadd.f32 %v11021, %v11033
      %v11042 = vadd.f32 %v11022, %v11033
      %vm11043 = vcmp.gt.f32.partialorder %v11035, 0.0
      %vm11044 = vcmp.gt.f32.partialorder %v11036, 0.0
      %vm11045 = vcmp.gt.f32.partialorder %v11037, 0.0
      %vm11046 = vcmp.gt.f32.partialorder %v11038, 0.0
      %vm11047 = vcmp.gt.f32.partialorder %v11039, 0.0
      %vm11048 = vcmp.gt.f32.partialorder %v11040, 0.0
      %vm11049 = vcmp.gt.f32.partialorder %v11041, 0.0
      %vm11050 = vcmp.gt.f32.partialorder %v11042, 0.0
      %v11051 = vmin.f32 %v11035, 0.0
      %v11052 = vmin.f32 %v11036, 0.0
      %v11053 = vmin.f32 %v11037, 0.0
      %v11054 = vmin.f32 %v11038, 0.0
      %v11055 = vmin.f32 %v11039, 0.0
      %v11056 = vmin.f32 %v11040, 0.0
      %v11057 = vmin.f32 %v11041, 0.0
      %v11058 = vmin.f32 %v11042, 0.0
      %v11059 = vmul.f32 %v11051, 1.442695
      %v11060 = vpow.pop %v11059
      %v11061 = vmul.f32 %v11052, 1.442695
      %v11062 = vpow.pop %v11061
      %v11063 = vmul.f32 %v11053, 1.442695
      %v11064 = vpow.pop %v11063
      %v11065 = vmul.f32 %v11054, 1.442695
      %v11066 = vpow.pop %v11065
      %v11067 = vmul.f32 %v11055, 1.442695
      %v11068 = vpow.pop %v11067
      %v11069 = vmul.f32 %v11056, 1.442695
      %v11070 = vpow.pop %v11069
      %v11071 = vmul.f32 %v11057, 1.442695
      %v11072 = vpow.pop %v11071
      %v11073 = vmul.f32 %v11058, 1.442695
      %v11074 = vpow.pop %v11073
      %v11075 = vsub.f32 %v11060, 1.0
      %v11076 = vsub.f32 %v11062, 1.0
      %v11077 = vsub.f32 %v11064, 1.0
      %v11078 = vsub.f32 %v11066, 1.0
      %v11079 = vsub.f32 %v11068, 1.0
      %v11080 = vsub.f32 %v11070, 1.0
      %v11081 = vsub.f32 %v11072, 1.0
      %v11082 = vsub.f32 %v11074, 1.0
      %v11083 = vsel %vm11043, %v11035, %v11075
      %v11084 = vsel %vm11044, %v11036, %v11076
      %v11085 = vsel %vm11045, %v11037, %v11077
      %v11086 = vsel %vm11046, %v11038, %v11078
      %v11087 = vsel %vm11047, %v11039, %v11079
      %v11088 = vsel %vm11048, %v11040, %v11080
      %v11089 = vsel %vm11049, %v11041, %v11081
      %v11090 = vsel %vm11050, %v11042, %v11082
      %v11091 = vld [vmem:[%s5] sm:$0xff]
      %v11092 = vld [vmem:[%s5 + $0x8] sm:$0xff]
      %11094 = vset.pattern.permute.xlu0 0
      %11095 = vperm.xlu0 %11094, %v11091
      %v11096 = vpop.permute.xlu0 %11095
      %11099 = vset.pattern.permute.xlu0 0
      %11100 = vperm.xlu0 %11099, %v11092
      %v11101 = vpop.permute.xlu0 %11100
      %v11103 = vmul.f32 %v11096, %v456
      %v11104 = vmul.f32 %v11096, %v457
      %v11105 = vmul.f32 %v11096, %v458
      %v11106 = vmul.f32 %v11096, %v459
      %v11107 = vmul.f32 %v11101, %v456
      %v11108 = vmul.f32 %v11101, %v457
      %v11109 = vmul.f32 %v11101, %v458
      %v11110 = vmul.f32 %v11101, %v459
      %v11111 = vld [vmem:[%s6] sm:$0xff]
      %v11112 = vld [vmem:[%s6 + $0x8] sm:$0xff]
      %11114 = vset.pattern.permute.xlu0 0
      %11115 = vperm.xlu0 %11114, %v11111
      %v11116 = vpop.permute.xlu0 %11115
      %11119 = vset.pattern.permute.xlu0 0
      %11120 = vperm.xlu0 %11119, %v11112
      %v11121 = vpop.permute.xlu0 %11120
      %v11123 = vadd.f32 %v11103, %v11116
      %v11124 = vadd.f32 %v11104, %v11116
      %v11125 = vadd.f32 %v11105, %v11116
      %v11126 = vadd.f32 %v11106, %v11116
      %v11127 = vadd.f32 %v11107, %v11121
      %v11128 = vadd.f32 %v11108, %v11121
      %v11129 = vadd.f32 %v11109, %v11121
      %v11130 = vadd.f32 %v11110, %v11121
      %vm11131 = vcmp.gt.f32.partialorder %v11123, 0.0
      %vm11132 = vcmp.gt.f32.partialorder %v11124, 0.0
      %vm11133 = vcmp.gt.f32.partialorder %v11125, 0.0
      %vm11134 = vcmp.gt.f32.partialorder %v11126, 0.0
      %vm11135 = vcmp.gt.f32.partialorder %v11127, 0.0
      %vm11136 = vcmp.gt.f32.partialorder %v11128, 0.0
      %vm11137 = vcmp.gt.f32.partialorder %v11129, 0.0
      %vm11138 = vcmp.gt.f32.partialorder %v11130, 0.0
      %v11139 = vmin.f32 %v11123, 0.0
      %v11140 = vmin.f32 %v11124, 0.0
      %v11141 = vmin.f32 %v11125, 0.0
      %v11142 = vmin.f32 %v11126, 0.0
      %v11143 = vmin.f32 %v11127, 0.0
      %v11144 = vmin.f32 %v11128, 0.0
      %v11145 = vmin.f32 %v11129, 0.0
      %v11146 = vmin.f32 %v11130, 0.0
      %v11147 = vmul.f32 %v11139, 1.442695
      %v11148 = vpow.pop %v11147
      %v11149 = vmul.f32 %v11140, 1.442695
      %v11150 = vpow.pop %v11149
      %v11151 = vmul.f32 %v11141, 1.442695
      %v11152 = vpow.pop %v11151
      %v11153 = vmul.f32 %v11142, 1.442695
      %v11154 = vpow.pop %v11153
      %v11155 = vmul.f32 %v11143, 1.442695
      %v11156 = vpow.pop %v11155
      %v11157 = vmul.f32 %v11144, 1.442695
      %v11158 = vpow.pop %v11157
      %v11159 = vmul.f32 %v11145, 1.442695
      %v11160 = vpow.pop %v11159
      %v11161 = vmul.f32 %v11146, 1.442695
      %v11162 = vpow.pop %v11161
      %v11163 = vsub.f32 %v11148, 1.0
      %v11164 = vsub.f32 %v11150, 1.0
      %v11165 = vsub.f32 %v11152, 1.0
      %v11166 = vsub.f32 %v11154, 1.0
      %v11167 = vsub.f32 %v11156, 1.0
      %v11168 = vsub.f32 %v11158, 1.0
      %v11169 = vsub.f32 %v11160, 1.0
      %v11170 = vsub.f32 %v11162, 1.0
      %v11171 = vsel %vm11131, %v11123, %v11163
      %v11172 = vsel %vm11132, %v11124, %v11164
      %v11173 = vsel %vm11133, %v11125, %v11165
      %v11174 = vsel %vm11134, %v11126, %v11166
      %v11175 = vsel %vm11135, %v11127, %v11167
      %v11176 = vsel %vm11136, %v11128, %v11168
      %v11177 = vsel %vm11137, %v11129, %v11169
      %v11178 = vsel %vm11138, %v11130, %v11170
      %11187 = vrot.lane.b32.xlu0 %v11083, 100
      %v11188 = vpop.permute.xlu0 %11187
      %11189 = vrot.lane.b32.xlu0 %v11084, 100
      %v11190 = vpop.permute.xlu0 %11189
      %11191 = vrot.lane.b32.xlu0 %v11085, 100
      %v11192 = vpop.permute.xlu0 %11191
      %11193 = vrot.lane.b32.xlu0 %v11086, 100
      %v11194 = vpop.permute.xlu0 %11193
      %11195 = vrot.lane.b32.xlu0 %v11087, 100
      %v11196 = vpop.permute.xlu0 %11195
      %11197 = vrot.lane.b32.xlu0 %v11088, 100
      %v11198 = vpop.permute.xlu0 %11197
      %11199 = vrot.lane.b32.xlu0 %v11089, 100
      %v11200 = vpop.permute.xlu0 %11199
      %11201 = vrot.lane.b32.xlu0 %v11090, 100
      %v11202 = vpop.permute.xlu0 %11201
      %v11203 = vsel %vm2184, %v11188, %v11190
      %v11204 = vsel %vm2184, %v11190, %v11192
      %v11205 = vsel %vm2184, %v11192, %v11194
      %v11206 = vsel %vm2184, %v11196, %v11198
      %v11207 = vsel %vm2184, %v11198, %v11200
      %v11208 = vsel %vm2184, %v11200, %v11202
      %v11217 = vadd.f32 %v11171, %v11188
      %v11218 = vadd.f32 %v11172, %v11203
      %v11219 = vadd.f32 %v11173, %v11204
      %v11220 = vadd.f32 %v11174, %v11205
      %v11221 = vadd.f32 %v11175, %v11196
      %v11222 = vadd.f32 %v11176, %v11206
      %v11223 = vadd.f32 %v11177, %v11207
      %v11224 = vadd.f32 %v11178, %v11208
      %11233 = vrot.lane.b32.xlu0 %v11217, 28
      %v11234 = vpop.permute.xlu0 %11233
      %11235 = vrot.lane.b32.xlu0 %v11218, 28
      %v11236 = vpop.permute.xlu0 %11235
      %11237 = vrot.lane.b32.xlu0 %v11219, 28
      %v11238 = vpop.permute.xlu0 %11237
      %11239 = vrot.lane.b32.xlu0 %v11220, 28
      %v11240 = vpop.permute.xlu0 %11239
      %11241 = vrot.lane.b32.xlu0 %v11221, 28
      %v11242 = vpop.permute.xlu0 %11241
      %11243 = vrot.lane.b32.xlu0 %v11222, 28
      %v11244 = vpop.permute.xlu0 %11243
      %11245 = vrot.lane.b32.xlu0 %v11223, 28
      %v11246 = vpop.permute.xlu0 %11245
      %11247 = vrot.lane.b32.xlu0 %v11224, 28
      %v11248 = vpop.permute.xlu0 %11247
      %v11249 = vsel %vm8708, %v11234, %v11236
      %v11250 = vsel %vm8708, %v11236, %v11238
      %v11251 = vsel %vm8708, %v11238, %v11240
      %v11252 = vsel %vm8708, %v11242, %v11244
      %v11253 = vsel %vm8708, %v11244, %v11246
      %v11254 = vsel %vm8708, %v11246, %v11248
      %11263 = vst [vmem:[%s438] sm:$0xff] %v11249
      %11264 = vst [vmem:[%s438 + $0x8] sm:$0xff] %v11250
      %11265 = vst [vmem:[%s438 + $0x10] sm:$0xff] %v11251
      %vm11266 = vcmask 130048
      %11267 = vst.msk [vmem:[%s438 + $0x18] sm:$0xff] %vm11266, %v11240
      %11268 = vst [vmem:[%s438 + $0x20] sm:$0xff] %v11252
      %11269 = vst [vmem:[%s438 + $0x28] sm:$0xff] %v11253
      %11270 = vst [vmem:[%s438 + $0x30] sm:$0xff] %v11254
      %11271 = vst.msk [vmem:[%s438 + $0x38] sm:$0xff] %vm11266, %v11248
      %p11272 = scmp.lt.s32.totalorder %s28, 1
      %s11273 = scalar_select %p11272, %s28, 1
      %p11274 = scmp.lt.s32.totalorder %s29, 1
      %s11275 = scalar_select %p11274, %s29, 1
      %s11276 = smul.addr %s11275, 8
      %s11277 = smul.addr %s11273, 16
      %s11278 = sadd.s32 %s11276, %s11277
      %s11279 = smul.addr %s11278, 8
      %s11280 = scalar_lea.vmem %s11, %s11279
      // Predicated region
      $region65: #{res_block_forward1.1} parent=63 // pred_check
        %p11281 = pneg %p299
      $region66: #{res_block_forward1.1} parent=63 // pred_check_branch
        %11283 = sbr.rel (%p11281) target = $region68
      $region67: #{res_block_forward1.1} parent=63 // pred_region
        _
      $region68: #{res_block_forward1.1} parent=63 // pred_fallthru
        _
    $region64: #{res_block_forward1.1} parent=5 // pred_fallthru
      _
    %p11284 = scmp.le.s32.totalorder 2, %s19
    // Predicated region
    $region69: #{res_block_forward1.1} parent=5 // pred_check
      %p11285 = pneg %p11284
    $region70: #{res_block_forward1.1} parent=5 // pred_check_branch
      %11287 = sbr.rel (%p11285) target = $region72
    $region71: #{res_block_forward1.1} parent=5 // pred_region
      %s11288 = ssub.s32 %s19, 2
      // Predicated region
      $region73: #{res_block_forward1.1} parent=71 // pred_check
        %p11289 = pneg %p305
      $region74: #{res_block_forward1.1} parent=71 // pred_check_branch
        %11291 = sbr.rel (%p11289) target = $region76
      $region75: #{res_block_forward1.1} parent=71 // pred_region
        %p11292 = scmp.lt.s32.totalorder %s30, 1
        %s11293 = scalar_select %p11292, %s30, 1
        %p11294 = scmp.lt.s32.totalorder %s31, 1
        %s11295 = scalar_select %p11294, %s31, 1
        %s11296 = smul.addr %s11295, 8
        %s11297 = smul.addr %s11293, 16
        %s11298 = sadd.s32 %s11296, %s11297
        %s11299 = smul.addr %s11298, 8
        %s11300 = scalar_lea.vmem %s11, %s11299
      $region76: #{res_block_forward1.1} parent=71 // pred_fallthru
        _
    $region72: #{res_block_forward1.1} parent=5 // pred_fallthru
      _
  $region6: #{res_block_forward1.1} parent=0 // loop_footer
    %s23 = sadd.s32 1, %s19
  $region7: #{res_block_forward1.1} parent=0 // loop_footer_branch
    %18 = sbr.rel target = $region3
  $region8: #{res_block_forward1.1} parent=0 // loop_exit
    _

</llo_original>
